<compile_context>
chip_gen: v7x
topology: tpu7x:2x2x1
jax: 0.10.0
libtpu: 0.0.40
codegen_flags: <defaults>
</compile_context>

<pallas_src>
import functools

import jax
import jax.numpy as jnp
from jax import lax
from jax.experimental import pallas as pl
from jax.experimental.pallas import tpu as pltpu


# ----------------------------------------------------------------------------
# Small helpers
# ----------------------------------------------------------------------------
def _round_up(n, m):
    return ((n + m - 1) // m) * m


def _pick_time_chunk(T, max_chunk=16):
    """Largest divisor of T that is <= max_chunk (keeps the unrolled inner
    per-chunk loop bounded and the grid evenly divided)."""
    for c in range(min(T, max_chunk), 0, -1):
        if T % c == 0:
            return c
    return 1


def _vmem_limit(nbytes):
    """Explicit scoped-VMEM request: 2x the estimated live bytes, floored at
    the 32 MiB default and capped at v7x's 64 MiB physical."""
    return int(min(64 << 20, max(32 << 20, 2 * int(nbytes))))


# ----------------------------------------------------------------------------
# Pallas kernels
# ----------------------------------------------------------------------------
def _lstm_encoder_kernel(x_ref, wih_ref, whh_ref, b_ref, h_ref, xg_ref, c_ref):
    """Time-streamed single-layer LSTM; emits only the final hidden state.

    Grid axis 0 walks time chunks ("arbitrary").
    x_ref:   (Tt, Bp, Ip)   bf16 time chunk of the padded time-major input
    wih_ref: (Ip, 4*Hp)     bf16 input->gate weights, gate order [i, f, o, g]
    whh_ref: (Hp, 4*Hp)     bf16 hidden->gate weights
    b_ref:   (1, 4*Hp)      f32 combined bias (b_ih + b_hh)
    h_ref:   (Bp, Hp)       f32 output block (resident across the grid; doubles
                            as the carried h state) -> h_T after the last chunk
    xg_ref:  (Tt, Bp, 4*Hp) f32 scratch: per-chunk precomputed input projection
    c_ref:   (Bp, Hp)       f32 scratch: carried cell state
    """
    Tt, Bp, Ip = x_ref.shape
    Hp = whh_ref.shape[0]

    @pl.when(pl.program_id(0) == 0)
    def _():
        h_ref[...] = jnp.zeros_like(h_ref)
        c_ref[...] = jnp.zeros_like(c_ref)

    # Pre-pass: one MXU-efficient (Tt*Bp, Ip) x (Ip, 4Hp) matmul per chunk,
    # bias folded in.  Leading-dim reshape is layout-free (Bp multiple of 8).
    x_all = x_ref[...].reshape(Tt * Bp, Ip)
    xg_ref[...] = (jnp.dot(x_all, wih_ref[...],
                           preferred_element_type=jnp.float32)
                   + b_ref[...]).reshape(Tt, Bp, 4 * Hp)

    def step(t, carry):
        gates = xg_ref[t] + jnp.dot(h_ref[...].astype(jnp.bfloat16),
                                    whh_ref[...],
                                    preferred_element_type=jnp.float32)
        sig = jax.nn.sigmoid(gates[:, :3 * Hp])       # [i | f | o] in one slab
        i_g = sig[:, 0 * Hp:1 * Hp]
        f_g = sig[:, 1 * Hp:2 * Hp]
        o_g = sig[:, 2 * Hp:3 * Hp]
        g_g = jnp.tanh(gates[:, 3 * Hp:])             # [g] slab
        c_new = f_g * c_ref[...] + i_g * g_g
        c_ref[...] = c_new
        h_ref[...] = o_g * jnp.tanh(c_new)
        return carry

    # Bounded unroll: Tt is a small static chunk (<= 16).
    lax.fori_loop(0, Tt, step, 0, unroll=True)


def _dual_decoder_kernel(rep_ref,
                         wihA_ref, whhA_ref, bA_ref,
                         wihB_ref, whhB_ref, bB_ref,
                         outA_ref, outB_ref,
                         xgA_ref, hA_ref, cA_ref,
                         xgB_ref, hB_ref, cB_ref):
    """Both decoders fused; their independent chains are interleaved per step.

    Grid axis 0 walks time chunks ("arbitrary").
    rep_ref:  (Bp, Hp)        bf16 shared representation (resident)
    wih*_ref: (Hp, 4*Op*)     bf16 input->gate weights, order [i, f, o, g]
    whh*_ref: (Op*, 4*Op*)    bf16 hidden->gate weights
    b*_ref:   (1, 4*Op*)      f32 combined bias
    out*_ref: (Tt, Bp, Op*)   f32 hidden-sequence chunk (the decoder output)
    xg*_ref:  (Bp, 4*Op*)     f32 scratch: one-time input projection
    h*/c*_ref:(Bp, Op*)       f32 scratch: carried state
    """
    OpA = whhA_ref.shape[0]
    OpB = whhB_ref.shape[0]
    Tt = outA_ref.shape[0]

    @pl.when(pl.program_id(0) == 0)
    def _():
        # Decoder input is the same vector every timestep -> project ONCE.
        xgA_ref[...] = (jnp.dot(rep_ref[...], wihA_ref[...],
                                preferred_element_type=jnp.float32)
                        + bA_ref[...])
        xgB_ref[...] = (jnp.dot(rep_ref[...], wihB_ref[...],
                                preferred_element_type=jnp.float32)
                        + bB_ref[...])
        hA_ref[...] = jnp.zeros_like(hA_ref)
        cA_ref[...] = jnp.zeros_like(cA_ref)
        hB_ref[...] = jnp.zeros_like(hB_ref)
        cB_ref[...] = jnp.zeros_like(cB_ref)

    def cell(xg, h, c, whh, Op):
        gates = xg + jnp.dot(h.astype(jnp.bfloat16), whh,
                             preferred_element_type=jnp.float32)
        sig = jax.nn.sigmoid(gates[:, :3 * Op])
        i_g = sig[:, 0 * Op:1 * Op]
        f_g = sig[:, 1 * Op:2 * Op]
        o_g = sig[:, 2 * Op:3 * Op]
        g_g = jnp.tanh(gates[:, 3 * Op:])
        c_new = f_g * c + i_g * g_g
        h_new = o_g * jnp.tanh(c_new)
        return h_new, c_new

    def step(t, carry):
        # Two independent dependency chains back-to-back: the scheduler fills
        # MXU/EUP latency bubbles of one with the other on single-TC chips.
        hA, cA = cell(xgA_ref[...], hA_ref[...], cA_ref[...], whhA_ref[...], OpA)
        hB, cB = cell(xgB_ref[...], hB_ref[...], cB_ref[...], whhB_ref[...], OpB)
        hA_ref[...] = hA
        cA_ref[...] = cA
        hB_ref[...] = hB
        cB_ref[...] = cB
        outA_ref[t] = hA                      # unmasked lane-dense vst
        outB_ref[t] = hB
        return carry

    lax.fori_loop(0, Tt, step, 0, unroll=True)


# ----------------------------------------------------------------------------
# pallas_call wrappers
# ----------------------------------------------------------------------------
def lstm_encode(x_tm_p, w_ih_p, w_hh_p, b_p, Tt):
    """x_tm_p: (T, Bp, Ip) bf16 padded time-major input.  Returns (Bp, Hp) f32."""
    T, Bp, Ip = x_tm_p.shape
    Hp = w_hh_p.shape[0]
    nbytes = (2 * Tt * Bp * Ip * 2                 # x block, double-buffered, bf16
              + Ip * 4 * Hp * 2 + Hp * 4 * Hp * 2  # weights bf16
              + 4 * Hp * 4                         # bias
              + 2 * Bp * Hp * 4                    # output block
              + Tt * Bp * 4 * Hp * 4 + Bp * Hp * 4)  # scratch xg + c
    return pl.pallas_call(
        _lstm_encoder_kernel,
        out_shape=jax.ShapeDtypeStruct((Bp, Hp), jnp.float32),
        grid_spec=pltpu.PrefetchScalarGridSpec(
            num_scalar_prefetch=0,
            grid=(T // Tt,),
            in_specs=[
                pl.BlockSpec((Tt, Bp, Ip), lambda t: (t, 0, 0)),
                pl.BlockSpec((Ip, 4 * Hp), lambda t: (0, 0)),
                pl.BlockSpec((Hp, 4 * Hp), lambda t: (0, 0)),
                pl.BlockSpec((1, 4 * Hp), lambda t: (0, 0)),
            ],
            out_specs=pl.BlockSpec((Bp, Hp), lambda t: (0, 0)),
            scratch_shapes=[pltpu.VMEM((Tt, Bp, 4 * Hp), jnp.float32),
                            pltpu.VMEM((Bp, Hp), jnp.float32)],
        ),
        compiler_params=pltpu.CompilerParams(
            dimension_semantics=("arbitrary",),
            vmem_limit_bytes=_vmem_limit(nbytes)),
    )(x_tm_p, w_ih_p, w_hh_p, b_p)


def lstm_decode_both(rep_p, dec_a, dec_b, T, Tt):
    """Run decoder_A and decoder_B fused, streaming the output over time.

    rep_p: (Bp, Hp) bf16.  dec_*: (w_ih (Hp,4Op) bf16, w_hh (Op,4Op) bf16,
    b (1,4Op) f32).  Returns ((T, Bp, OpA) f32, (T, Bp, OpB) f32)."""
    Bp, Hp = rep_p.shape
    wihA, whhA, bA = dec_a
    wihB, whhB, bB = dec_b
    OpA = whhA.shape[0]
    OpB = whhB.shape[0]
    nbytes = (Bp * Hp * 2
              + wihA.size * 2 + whhA.size * 2 + bA.size * 4
              + wihB.size * 2 + whhB.size * 2 + bB.size * 4
              + 2 * Tt * Bp * (OpA + OpB) * 4                    # output blocks x2 bufs
              + (Bp * 4 * OpA + 2 * Bp * OpA) * 4                # scratch A
              + (Bp * 4 * OpB + 2 * Bp * OpB) * 4)               # scratch B
    return pl.pallas_call(
        _dual_decoder_kernel,
        out_shape=(jax.ShapeDtypeStruct((T, Bp, OpA), jnp.float32),
                   jax.ShapeDtypeStruct((T, Bp, OpB), jnp.float32)),
        grid_spec=pltpu.PrefetchScalarGridSpec(
            num_scalar_prefetch=0,
            grid=(T // Tt,),
            in_specs=[
                pl.BlockSpec((Bp, Hp), lambda t: (0, 0)),
                pl.BlockSpec((Hp, 4 * OpA), lambda t: (0, 0)),
                pl.BlockSpec((OpA, 4 * OpA), lambda t: (0, 0)),
                pl.BlockSpec((1, 4 * OpA), lambda t: (0, 0)),
                pl.BlockSpec((Hp, 4 * OpB), lambda t: (0, 0)),
                pl.BlockSpec((OpB, 4 * OpB), lambda t: (0, 0)),
                pl.BlockSpec((1, 4 * OpB), lambda t: (0, 0)),
            ],
            out_specs=[
                pl.BlockSpec((Tt, Bp, OpA), lambda t: (t, 0, 0)),
                pl.BlockSpec((Tt, Bp, OpB), lambda t: (t, 0, 0)),
            ],
            scratch_shapes=[
                pltpu.VMEM((Bp, 4 * OpA), jnp.float32),
                pltpu.VMEM((Bp, OpA), jnp.float32),
                pltpu.VMEM((Bp, OpA), jnp.float32),
                pltpu.VMEM((Bp, 4 * OpB), jnp.float32),
                pltpu.VMEM((Bp, OpB), jnp.float32),
                pltpu.VMEM((Bp, OpB), jnp.float32),
            ],
        ),
        compiler_params=pltpu.CompilerParams(
            dimension_semantics=("arbitrary",),
            vmem_limit_bytes=_vmem_limit(nbytes)),
    )(rep_p, wihA, whhA, bA, wihB, whhB, bB)


# ----------------------------------------------------------------------------
# Parameter construction (deterministic, mimics the PyTorch module __init__)
# ----------------------------------------------------------------------------
def _make_lstm_params(key, input_size, hidden_size):
    k_ih, k_hh, k_bih, k_bhh = jax.random.split(key, 4)
    ortho = jax.nn.initializers.orthogonal()
    # PyTorch stores weight_ih_l0 as (4H, I); orthogonal-init there, transpose.
    w_ih = ortho(k_ih, (4 * hidden_size, input_size), jnp.float32).T   # (I,4H)
    w_hh = ortho(k_hh, (4 * hidden_size, hidden_size), jnp.float32).T  # (H,4H)
    bound = 1.0 / jnp.sqrt(jnp.float32(hidden_size))
    b_ih = jax.random.uniform(k_bih, (4 * hidden_size,), jnp.float32,
                              -bound, bound)
    b_hh = jax.random.uniform(k_bhh, (4 * hidden_size,), jnp.float32,
                              -bound, bound)
    b = (b_ih + b_hh).reshape(1, 4 * hidden_size)
    return (w_ih, w_hh, b)          # f32, PyTorch gate order [i, f, g, o]


def make_split_lstm_autoencoder_params(key, input_size_A, input_size_B,
                                       representation_size):
    ks = jax.random.split(key, 4)
    return {
        "encoder_A": _make_lstm_params(ks[0], input_size_A, representation_size),
        "decoder_A": _make_lstm_params(ks[1], representation_size, input_size_A),
        "encoder_B": _make_lstm_params(ks[2], input_size_B, representation_size),
        "decoder_B": _make_lstm_params(ks[3], representation_size, input_size_B),
    }


# ----------------------------------------------------------------------------
# Padding helpers (zero padding keeps the math exact; padded lanes stay zero)
# ----------------------------------------------------------------------------
def _pad_gate_cols(w, H, H_pad):
    """(rows, 4*H) -> (rows, 4*H_pad), gate order [i,f,g,o] -> [i,f,o,g] so the
    three sigmoid gates are one contiguous slab; each gate block starts on a
    lane-aligned boundary, padded lanes are zero."""
    rows = w.shape[0]
    w4 = w.reshape(rows, 4, H)
    w4 = w4[:, jnp.array([0, 1, 3, 2]), :]
    w4 = jnp.pad(w4, ((0, 0), (0, 0), (0, H_pad - H)))
    return w4.reshape(rows, 4 * H_pad)


def _pad_lstm_params(p, in_pad, hid_pad):
    w_ih, w_hh, b = p                      # (I,4H), (H,4H), (1,4H)
    I, H = w_ih.shape[0], w_hh.shape[0]
    w_ih_p = jnp.pad(_pad_gate_cols(w_ih, H, hid_pad),
                     ((0, in_pad - I), (0, 0))).astype(jnp.bfloat16)
    w_hh_p = jnp.pad(_pad_gate_cols(w_hh, H, hid_pad),
                     ((0, hid_pad - H), (0, 0))).astype(jnp.bfloat16)
    b_p = _pad_gate_cols(b, H, hid_pad)    # bias stays f32
    return w_ih_p, w_hh_p, b_p


# ----------------------------------------------------------------------------
# Forward pass (batch_first=True, matching SplitLSTMAutoEncoder.forward)
# ----------------------------------------------------------------------------
@functools.partial(jax.jit, static_argnames=("modality",))
def split_lstm_autoencoder_forward(params, x, modality):
    """x: (B, T, I_modality) batch-first.  Returns (x_prime_A, x_prime_B)."""
    assert modality in ("A", "B"), "Modality is neither A nor B"
    B, T, I_in = x.shape
    H = params["encoder_A"][1].shape[0]        # representation size
    I_A = params["decoder_A"][1].shape[0]      # decoder hidden == input_size_A
    I_B = params["decoder_B"][1].shape[0]

    Bp = _round_up(B, 8)
    Ip = _round_up(I_in, 128)
    Hp = _round_up(H, 128)
    OpA = _round_up(I_A, 128)
    OpB = _round_up(I_B, 128)
    Tt = _pick_time_chunk(T)

    enc = params["encoder_A"] if modality == "A" else params["encoder_B"]
    enc_p = _pad_lstm_params(enc, Ip, Hp)

    # TODO(synk): if xprof shows these relayouts rivalling kernel HBM traffic,
    # fold the time-major relayout into the encoder BlockSpec (load batch-major
    # slices) and keep downstream consumers time-major.
    x_tm = jnp.transpose(x, (1, 0, 2))                               # (T, B, I)
    x_tm_p = jnp.pad(x_tm, ((0, 0), (0, Bp - B),
                            (0, Ip - I_in))).astype(jnp.bfloat16)    # (T, Bp, Ip)

    rep_p = lstm_encode(x_tm_p, *enc_p, Tt)         # (Bp, Hp) f32 == out[:, -1, :]

    dA = _pad_lstm_params(params["decoder_A"], Hp, OpA)
    dB = _pad_lstm_params(params["decoder_B"], Hp, OpB)

    out_a, out_b = lstm_decode_both(rep_p.astype(jnp.bfloat16), dA, dB, T, Tt)
    x_prime_A = jnp.transpose(out_a[:, :B, :I_A], (1, 0, 2))         # (B, T, I_A)
    x_prime_B = jnp.transpose(out_b[:, :B, :I_B], (1, 0, 2))         # (B, T, I_B)
    return x_prime_A, x_prime_B


# ----------------------------------------------------------------------------
# Pure-JAX f32 reference (lax.scan) used only to sanity-check the kernels
# ----------------------------------------------------------------------------
def _lstm_seq_ref(x_tm, w_ih, w_hh, b):
    T, B, _ = x_tm.shape
    H = w_hh.shape[0]

    def step(carry, x_t):
        h, c = carry
        g = x_t @ w_ih + h @ w_hh + b
        i_g = jax.nn.sigmoid(g[:, 0 * H:1 * H])
        f_g = jax.nn.sigmoid(g[:, 1 * H:2 * H])
        g_g = jnp.tanh(g[:, 2 * H:3 * H])
        o_g = jax.nn.sigmoid(g[:, 3 * H:4 * H])
        c = f_g * c + i_g * g_g
        h = o_g * jnp.tanh(c)
        return (h, c), h

    (_, _), hs = lax.scan(step, (jnp.zeros((B, H)), jnp.zeros((B, H))), x_tm)
    return hs


def _forward_ref(params, x, modality):
    B, T, _ = x.shape
    enc = params["encoder_A"] if modality == "A" else params["encoder_B"]
    H = enc[1].shape[0]
    x_tm = jnp.transpose(x, (1, 0, 2))
    h_seq = _lstm_seq_ref(x_tm, *enc)
    rep_seq = jnp.broadcast_to(h_seq[-1][None], (T, B, H))
    xa = jnp.transpose(_lstm_seq_ref(rep_seq, *params["decoder_A"]), (1, 0, 2))
    xb = jnp.transpose(_lstm_seq_ref(rep_seq, *params["decoder_B"]), (1, 0, 2))
    return xa, xb


# ----------------------------------------------------------------------------
if __name__ == "__main__":
    B, T = 2, 8
    INPUT_A, INPUT_B, REPR = 16, 12, 32

    key = jax.random.PRNGKey(0)
    k_params, k_x = jax.random.split(key)
    params = make_split_lstm_autoencoder_params(k_params, INPUT_A, INPUT_B, REPR)

    x = jax.random.normal(k_x, (B, T, INPUT_A), jnp.float32)  # modality 'A' input

    x_prime_A, x_prime_B = split_lstm_autoencoder_forward(params, x, "A")
    jax.block_until_ready((x_prime_A, x_prime_B))

    assert x_prime_A.shape == (B, T, INPUT_A)
    assert x_prime_B.shape == (B, T, INPUT_B)
    assert bool(jnp.all(jnp.isfinite(x_prime_A)))
    assert bool(jnp.all(jnp.isfinite(x_prime_B)))

    # Tolerance deliberately relaxed from f32-tight (~1e-5) to 2e-2 because the
    # kernels use bf16 MXU operands with f32 accumulation (per perf review).
    ref_A, ref_B = _forward_ref(params, x, "A")
    assert jnp.allclose(x_prime_A, ref_A, atol=2e-2, rtol=2e-2)
    assert jnp.allclose(x_prime_B, ref_B, atol=2e-2, rtol=2e-2)

    print("KERNEL_OK")
</pallas_src>

<mosaic_0001>
module attributes {stable_mosaic.version = 11 : i64} {
  func.func @_lstm_encoder_kernel(%arg0: i32, %arg1: memref<8x8x128xbf16, #tpu.memory_space<vmem>>, %arg2: memref<128x512xbf16, #tpu.memory_space<vmem>>, %arg3: memref<128x512xbf16, #tpu.memory_space<vmem>>, %arg4: memref<1x512xf32, #tpu.memory_space<vmem>>, %arg5: memref<8x128xf32, #tpu.memory_space<vmem>>, %arg6: memref<8x8x512xf32, #tpu.memory_space<vmem>>, %arg7: memref<8x128xf32, #tpu.memory_space<vmem>>) attributes {dimension_semantics = [#tpu.dimension_semantics<arbitrary>], iteration_bounds = array<i64: 1>, scalar_prefetch = 0 : i64, scratch_operands = 2 : i64, tpu.core_type = #tpu.core_type<tc>, window_params = [{transform_indices = @transform_0, window_bounds = array<i64: 8, 8, 128>}, {pipeline_mode = #tpu.pipeline_mode<synchronous>, transform_indices = @transform_1, window_bounds = array<i64: 128, 512>}, {pipeline_mode = #tpu.pipeline_mode<synchronous>, transform_indices = @transform_2, window_bounds = array<i64: 128, 512>}, {pipeline_mode = #tpu.pipeline_mode<synchronous>, transform_indices = @transform_3, window_bounds = array<i64: 1, 512>}, {pipeline_mode = #tpu.pipeline_mode<synchronous>, transform_indices = @transform_4, window_bounds = array<i64: 8, 128>}]} {
    %c0_i32 = arith.constant 0 : i32
    %0 = arith.cmpi eq, %arg0, %c0_i32 : i32
    %1 = arith.extui %0 : i1 to i32
    %c0_i32_0 = arith.constant 0 : i32
    %2 = arith.cmpi ne, %1, %c0_i32_0 : i32
    scf.if %2 {
      %cst_123 = arith.constant 0.000000e+00 : f32
      %228 = vector.broadcast %cst_123 : f32 to vector<8x128xf32>
      %c0_124 = arith.constant 0 : index
      %c0_125 = arith.constant 0 : index
      %229 = vector.load %arg5[%c0_124, %c0_125] : memref<8x128xf32, #tpu.memory_space<vmem>>, vector<8x128xf32>
      tpu.vector_store %arg5[%c0_124, %c0_125], %228 {strides = array<i32>} : memref<8x128xf32, #tpu.memory_space<vmem>>, vector<8x128xf32>,
      %cst_126 = arith.constant 0.000000e+00 : f32
      %230 = vector.broadcast %cst_126 : f32 to vector<8x128xf32>
      %c0_127 = arith.constant 0 : index
      %c0_128 = arith.constant 0 : index
      %231 = vector.load %arg7[%c0_127, %c0_128] : memref<8x128xf32, #tpu.memory_space<vmem>>, vector<8x128xf32>
      tpu.vector_store %arg7[%c0_127, %c0_128], %230 {strides = array<i32>} : memref<8x128xf32, #tpu.memory_space<vmem>>, vector<8x128xf32>,
    } else {
    }
    %c0 = arith.constant 0 : index
    %c0_1 = arith.constant 0 : index
    %c0_2 = arith.constant 0 : index
    %3 = vector.load %arg1[%c0, %c0_1, %c0_2] : memref<8x8x128xbf16, #tpu.memory_space<vmem>>, vector<8x8x128xbf16>
    %4 = vector.shape_cast %3 : vector<8x8x128xbf16> to vector<64x128xbf16>
    %c0_3 = arith.constant 0 : index
    %c0_4 = arith.constant 0 : index
    %5 = vector.load %arg2[%c0_3, %c0_4] : memref<128x512xbf16, #tpu.memory_space<vmem>>, vector<128x512xbf16>
    %cst = arith.constant dense<0.000000e+00> : vector<64x512xf32>
    %6 = tpu.matmul %4, %5, %cst {dimension_numbers = #tpu.dot_dimension_numbers<[1], [0], [0], [1], [0, 0, 1, 1], [], []>} : vector<64x128xbf16>, vector<128x512xbf16>, vector<64x512xf32> -> vector<64x512xf32>
    %c0_5 = arith.constant 0 : index
    %c0_6 = arith.constant 0 : index
    %7 = vector.load %arg4[%c0_5, %c0_6] : memref<1x512xf32, #tpu.memory_space<vmem>>, vector<1x512xf32>
    %8 = vector.broadcast %7 : vector<1x512xf32> to vector<64x512xf32>
    %9 = arith.addf %6, %8 : vector<64x512xf32>
    %10 = vector.shape_cast %9 : vector<64x512xf32> to vector<8x8x512xf32>
    %c0_7 = arith.constant 0 : index
    %c0_8 = arith.constant 0 : index
    %c0_9 = arith.constant 0 : index
    %11 = vector.load %arg6[%c0_7, %c0_8, %c0_9] : memref<8x8x512xf32, #tpu.memory_space<vmem>>, vector<8x8x512xf32>
    tpu.vector_store %arg6[%c0_7, %c0_8, %c0_9], %10 {strides = array<i32>} : memref<8x8x512xf32, #tpu.memory_space<vmem>>, vector<8x8x512xf32>,
    %c0_i32_10 = arith.constant 0 : i32
    %12 = arith.index_cast %c0_i32_10 : i32 to index
    %c0_11 = arith.constant 0 : index
    %c0_12 = arith.constant 0 : index
    %13 = vector.load %arg6[%12, %c0_11, %c0_12] : memref<8x8x512xf32, #tpu.memory_space<vmem>>, vector<1x8x512xf32>
    %14 = vector.shape_cast %13 : vector<1x8x512xf32> to vector<8x512xf32>
    %c0_13 = arith.constant 0 : index
    %c0_14 = arith.constant 0 : index
    %15 = vector.load %arg5[%c0_13, %c0_14] : memref<8x128xf32, #tpu.memory_space<vmem>>, vector<8x128xf32>
    %16 = arith.truncf %15 : vector<8x128xf32> to vector<8x128xbf16>
    %c0_15 = arith.constant 0 : index
    %c0_16 = arith.constant 0 : index
    %17 = vector.load %arg3[%c0_15, %c0_16] : memref<128x512xbf16, #tpu.memory_space<vmem>>, vector<128x512xbf16>
    %cst_17 = arith.constant dense<0.000000e+00> : vector<8x512xf32>
    %18 = tpu.matmul %16, %17, %cst_17 {dimension_numbers = #tpu.dot_dimension_numbers<[1], [0], [0], [1], [0, 0, 1, 1], [], []>} : vector<8x128xbf16>, vector<128x512xbf16>, vector<8x512xf32> -> vector<8x512xf32>
    %19 = arith.addf %14, %18 : vector<8x512xf32>
    %20 = vector.extract_strided_slice %19 {offsets = [0, 0], sizes = [8, 384], strides = [1, 1]} : vector<8x512xf32> to vector<8x384xf32>
    %21 = arith.negf %20 : vector<8x384xf32>
    %22 = math.exp %21 : vector<8x384xf32>
    %cst_18 = arith.constant 1.000000e+00 : f32
    %23 = vector.broadcast %cst_18 : f32 to vector<8x384xf32>
    %24 = arith.addf %23, %22 : vector<8x384xf32>
    %25 = arith.divf %23, %24 : vector<8x384xf32>
    %26 = vector.extract_strided_slice %25 {offsets = [0, 0], sizes = [8, 128], strides = [1, 1]} : vector<8x384xf32> to vector<8x128xf32>
    %27 = vector.extract_strided_slice %25 {offsets = [0, 128], sizes = [8, 128], strides = [1, 1]} : vector<8x384xf32> to vector<8x128xf32>
    %28 = vector.extract_strided_slice %25 {offsets = [0, 256], sizes = [8, 128], strides = [1, 1]} : vector<8x384xf32> to vector<8x128xf32>
    %29 = vector.extract_strided_slice %19 {offsets = [0, 384], sizes = [8, 128], strides = [1, 1]} : vector<8x512xf32> to vector<8x128xf32>
    %30 = math.tanh %29 : vector<8x128xf32>
    %c0_19 = arith.constant 0 : index
    %c0_20 = arith.constant 0 : index
    %31 = vector.load %arg7[%c0_19, %c0_20] : memref<8x128xf32, #tpu.memory_space<vmem>>, vector<8x128xf32>
    %32 = arith.mulf %27, %31 : vector<8x128xf32>
    %33 = arith.mulf %26, %30 : vector<8x128xf32>
    %34 = arith.addf %32, %33 : vector<8x128xf32>
    %c0_21 = arith.constant 0 : index
    %c0_22 = arith.constant 0 : index
    %35 = vector.load %arg7[%c0_21, %c0_22] : memref<8x128xf32, #tpu.memory_space<vmem>>, vector<8x128xf32>
    tpu.vector_store %arg7[%c0_21, %c0_22], %34 {strides = array<i32>} : memref<8x128xf32, #tpu.memory_space<vmem>>, vector<8x128xf32>,
    %36 = math.tanh %34 : vector<8x128xf32>
    %37 = arith.mulf %28, %36 : vector<8x128xf32>
    %c0_23 = arith.constant 0 : index
    %c0_24 = arith.constant 0 : index
    %38 = vector.load %arg5[%c0_23, %c0_24] : memref<8x128xf32, #tpu.memory_space<vmem>>, vector<8x128xf32>
    tpu.vector_store %arg5[%c0_23, %c0_24], %37 {strides = array<i32>} : memref<8x128xf32, #tpu.memory_space<vmem>>, vector<8x128xf32>,
    %c1_i32 = arith.constant 1 : i32
    %39 = arith.index_cast %c1_i32 : i32 to index
    %c0_25 = arith.constant 0 : index
    %c0_26 = arith.constant 0 : index
    %40 = vector.load %arg6[%39, %c0_25, %c0_26] : memref<8x8x512xf32, #tpu.memory_space<vmem>>, vector<1x8x512xf32>
    %41 = vector.shape_cast %40 : vector<1x8x512xf32> to vector<8x512xf32>
    %c0_27 = arith.constant 0 : index
    %c0_28 = arith.constant 0 : index
    %42 = vector.load %arg5[%c0_27, %c0_28] : memref<8x128xf32, #tpu.memory_space<vmem>>, vector<8x128xf32>
    %43 = arith.truncf %42 : vector<8x128xf32> to vector<8x128xbf16>
    %c0_29 = arith.constant 0 : index
    %c0_30 = arith.constant 0 : index
    %44 = vector.load %arg3[%c0_29, %c0_30] : memref<128x512xbf16, #tpu.memory_space<vmem>>, vector<128x512xbf16>
    %cst_31 = arith.constant dense<0.000000e+00> : vector<8x512xf32>
    %45 = tpu.matmul %43, %44, %cst_31 {dimension_numbers = #tpu.dot_dimension_numbers<[1], [0], [0], [1], [0, 0, 1, 1], [], []>} : vector<8x128xbf16>, vector<128x512xbf16>, vector<8x512xf32> -> vector<8x512xf32>
    %46 = arith.addf %41, %45 : vector<8x512xf32>
    %47 = vector.extract_strided_slice %46 {offsets = [0, 0], sizes = [8, 384], strides = [1, 1]} : vector<8x512xf32> to vector<8x384xf32>
    %48 = arith.negf %47 : vector<8x384xf32>
    %49 = math.exp %48 : vector<8x384xf32>
    %cst_32 = arith.constant 1.000000e+00 : f32
    %50 = vector.broadcast %cst_32 : f32 to vector<8x384xf32>
    %51 = arith.addf %50, %49 : vector<8x384xf32>
    %52 = arith.divf %50, %51 : vector<8x384xf32>
    %53 = vector.extract_strided_slice %52 {offsets = [0, 0], sizes = [8, 128], strides = [1, 1]} : vector<8x384xf32> to vector<8x128xf32>
    %54 = vector.extract_strided_slice %52 {offsets = [0, 128], sizes = [8, 128], strides = [1, 1]} : vector<8x384xf32> to vector<8x128xf32>
    %55 = vector.extract_strided_slice %52 {offsets = [0, 256], sizes = [8, 128], strides = [1, 1]} : vector<8x384xf32> to vector<8x128xf32>
    %56 = vector.extract_strided_slice %46 {offsets = [0, 384], sizes = [8, 128], strides = [1, 1]} : vector<8x512xf32> to vector<8x128xf32>
    %57 = math.tanh %56 : vector<8x128xf32>
    %c0_33 = arith.constant 0 : index
    %c0_34 = arith.constant 0 : index
    %58 = vector.load %arg7[%c0_33, %c0_34] : memref<8x128xf32, #tpu.memory_space<vmem>>, vector<8x128xf32>
    %59 = arith.mulf %54, %58 : vector<8x128xf32>
    %60 = arith.mulf %53, %57 : vector<8x128xf32>
    %61 = arith.addf %59, %60 : vector<8x128xf32>
    %c0_35 = arith.constant 0 : index
    %c0_36 = arith.constant 0 : index
    %62 = vector.load %arg7[%c0_35, %c0_36] : memref<8x128xf32, #tpu.memory_space<vmem>>, vector<8x128xf32>
    tpu.vector_store %arg7[%c0_35, %c0_36], %61 {strides = array<i32>} : memref<8x128xf32, #tpu.memory_space<vmem>>, vector<8x128xf32>,
    %63 = math.tanh %61 : vector<8x128xf32>
    %64 = arith.mulf %55, %63 : vector<8x128xf32>
    %c0_37 = arith.constant 0 : index
    %c0_38 = arith.constant 0 : index
    %65 = vector.load %arg5[%c0_37, %c0_38] : memref<8x128xf32, #tpu.memory_space<vmem>>, vector<8x128xf32>
    tpu.vector_store %arg5[%c0_37, %c0_38], %64 {strides = array<i32>} : memref<8x128xf32, #tpu.memory_space<vmem>>, vector<8x128xf32>,
    %c2_i32 = arith.constant 2 : i32
    %66 = arith.index_cast %c2_i32 : i32 to index
    %c0_39 = arith.constant 0 : index
    %c0_40 = arith.constant 0 : index
    %67 = vector.load %arg6[%66, %c0_39, %c0_40] : memref<8x8x512xf32, #tpu.memory_space<vmem>>, vector<1x8x512xf32>
    %68 = vector.shape_cast %67 : vector<1x8x512xf32> to vector<8x512xf32>
    %c0_41 = arith.constant 0 : index
    %c0_42 = arith.constant 0 : index
    %69 = vector.load %arg5[%c0_41, %c0_42] : memref<8x128xf32, #tpu.memory_space<vmem>>, vector<8x128xf32>
    %70 = arith.truncf %69 : vector<8x128xf32> to vector<8x128xbf16>
    %c0_43 = arith.constant 0 : index
    %c0_44 = arith.constant 0 : index
    %71 = vector.load %arg3[%c0_43, %c0_44] : memref<128x512xbf16, #tpu.memory_space<vmem>>, vector<128x512xbf16>
    %cst_45 = arith.constant dense<0.000000e+00> : vector<8x512xf32>
    %72 = tpu.matmul %70, %71, %cst_45 {dimension_numbers = #tpu.dot_dimension_numbers<[1], [0], [0], [1], [0, 0, 1, 1], [], []>} : vector<8x128xbf16>, vector<128x512xbf16>, vector<8x512xf32> -> vector<8x512xf32>
    %73 = arith.addf %68, %72 : vector<8x512xf32>
    %74 = vector.extract_strided_slice %73 {offsets = [0, 0], sizes = [8, 384], strides = [1, 1]} : vector<8x512xf32> to vector<8x384xf32>
    %75 = arith.negf %74 : vector<8x384xf32>
    %76 = math.exp %75 : vector<8x384xf32>
    %cst_46 = arith.constant 1.000000e+00 : f32
    %77 = vector.broadcast %cst_46 : f32 to vector<8x384xf32>
    %78 = arith.addf %77, %76 : vector<8x384xf32>
    %79 = arith.divf %77, %78 : vector<8x384xf32>
    %80 = vector.extract_strided_slice %79 {offsets = [0, 0], sizes = [8, 128], strides = [1, 1]} : vector<8x384xf32> to vector<8x128xf32>
    %81 = vector.extract_strided_slice %79 {offsets = [0, 128], sizes = [8, 128], strides = [1, 1]} : vector<8x384xf32> to vector<8x128xf32>
    %82 = vector.extract_strided_slice %79 {offsets = [0, 256], sizes = [8, 128], strides = [1, 1]} : vector<8x384xf32> to vector<8x128xf32>
    %83 = vector.extract_strided_slice %73 {offsets = [0, 384], sizes = [8, 128], strides = [1, 1]} : vector<8x512xf32> to vector<8x128xf32>
    %84 = math.tanh %83 : vector<8x128xf32>
    %c0_47 = arith.constant 0 : index
    %c0_48 = arith.constant 0 : index
    %85 = vector.load %arg7[%c0_47, %c0_48] : memref<8x128xf32, #tpu.memory_space<vmem>>, vector<8x128xf32>
    %86 = arith.mulf %81, %85 : vector<8x128xf32>
    %87 = arith.mulf %80, %84 : vector<8x128xf32>
    %88 = arith.addf %86, %87 : vector<8x128xf32>
    %c0_49 = arith.constant 0 : index
    %c0_50 = arith.constant 0 : index
    %89 = vector.load %arg7[%c0_49, %c0_50] : memref<8x128xf32, #tpu.memory_space<vmem>>, vector<8x128xf32>
    tpu.vector_store %arg7[%c0_49, %c0_50], %88 {strides = array<i32>} : memref<8x128xf32, #tpu.memory_space<vmem>>, vector<8x128xf32>,
    %90 = math.tanh %88 : vector<8x128xf32>
    %91 = arith.mulf %82, %90 : vector<8x128xf32>
    %c0_51 = arith.constant 0 : index
    %c0_52 = arith.constant 0 : index
    %92 = vector.load %arg5[%c0_51, %c0_52] : memref<8x128xf32, #tpu.memory_space<vmem>>, vector<8x128xf32>
    tpu.vector_store %arg5[%c0_51, %c0_52], %91 {strides = array<i32>} : memref<8x128xf32, #tpu.memory_space<vmem>>, vector<8x128xf32>,
    %c3_i32 = arith.constant 3 : i32
    %93 = arith.index_cast %c3_i32 : i32 to index
    %c0_53 = arith.constant 0 : index
    %c0_54 = arith.constant 0 : index
    %94 = vector.load %arg6[%93, %c0_53, %c0_54] : memref<8x8x512xf32, #tpu.memory_space<vmem>>, vector<1x8x512xf32>
    %95 = vector.shape_cast %94 : vector<1x8x512xf32> to vector<8x512xf32>
    %c0_55 = arith.constant 0 : index
    %c0_56 = arith.constant 0 : index
    %96 = vector.load %arg5[%c0_55, %c0_56] : memref<8x128xf32, #tpu.memory_space<vmem>>, vector<8x128xf32>
    %97 = arith.truncf %96 : vector<8x128xf32> to vector<8x128xbf16>
    %c0_57 = arith.constant 0 : index
    %c0_58 = arith.constant 0 : index
    %98 = vector.load %arg3[%c0_57, %c0_58] : memref<128x512xbf16, #tpu.memory_space<vmem>>, vector<128x512xbf16>
    %cst_59 = arith.constant dense<0.000000e+00> : vector<8x512xf32>
    %99 = tpu.matmul %97, %98, %cst_59 {dimension_numbers = #tpu.dot_dimension_numbers<[1], [0], [0], [1], [0, 0, 1, 1], [], []>} : vector<8x128xbf16>, vector<128x512xbf16>, vector<8x512xf32> -> vector<8x512xf32>
    %100 = arith.addf %95, %99 : vector<8x512xf32>
    %101 = vector.extract_strided_slice %100 {offsets = [0, 0], sizes = [8, 384], strides = [1, 1]} : vector<8x512xf32> to vector<8x384xf32>
    %102 = arith.negf %101 : vector<8x384xf32>
    %103 = math.exp %102 : vector<8x384xf32>
    %cst_60 = arith.constant 1.000000e+00 : f32
    %104 = vector.broadcast %cst_60 : f32 to vector<8x384xf32>
    %105 = arith.addf %104, %103 : vector<8x384xf32>
    %106 = arith.divf %104, %105 : vector<8x384xf32>
    %107 = vector.extract_strided_slice %106 {offsets = [0, 0], sizes = [8, 128], strides = [1, 1]} : vector<8x384xf32> to vector<8x128xf32>
    %108 = vector.extract_strided_slice %106 {offsets = [0, 128], sizes = [8, 128], strides = [1, 1]} : vector<8x384xf32> to vector<8x128xf32>
    %109 = vector.extract_strided_slice %106 {offsets = [0, 256], sizes = [8, 128], strides = [1, 1]} : vector<8x384xf32> to vector<8x128xf32>
    %110 = vector.extract_strided_slice %100 {offsets = [0, 384], sizes = [8, 128], strides = [1, 1]} : vector<8x512xf32> to vector<8x128xf32>
    %111 = math.tanh %110 : vector<8x128xf32>
    %c0_61 = arith.constant 0 : index
    %c0_62 = arith.constant 0 : index
    %112 = vector.load %arg7[%c0_61, %c0_62] : memref<8x128xf32, #tpu.memory_space<vmem>>, vector<8x128xf32>
    %113 = arith.mulf %108, %112 : vector<8x128xf32>
    %114 = arith.mulf %107, %111 : vector<8x128xf32>
    %115 = arith.addf %113, %114 : vector<8x128xf32>
    %c0_63 = arith.constant 0 : index
    %c0_64 = arith.constant 0 : index
    %116 = vector.load %arg7[%c0_63, %c0_64] : memref<8x128xf32, #tpu.memory_space<vmem>>, vector<8x128xf32>
    tpu.vector_store %arg7[%c0_63, %c0_64], %115 {strides = array<i32>} : memref<8x128xf32, #tpu.memory_space<vmem>>, vector<8x128xf32>,
    %117 = math.tanh %115 : vector<8x128xf32>
    %118 = arith.mulf %109, %117 : vector<8x128xf32>
    %c0_65 = arith.constant 0 : index
    %c0_66 = arith.constant 0 : index
    %119 = vector.load %arg5[%c0_65, %c0_66] : memref<8x128xf32, #tpu.memory_space<vmem>>, vector<8x128xf32>
    tpu.vector_store %arg5[%c0_65, %c0_66], %118 {strides = array<i32>} : memref<8x128xf32, #tpu.memory_space<vmem>>, vector<8x128xf32>,
    %c4_i32 = arith.constant 4 : i32
    %120 = arith.index_cast %c4_i32 : i32 to index
    %c0_67 = arith.constant 0 : index
    %c0_68 = arith.constant 0 : index
    %121 = vector.load %arg6[%120, %c0_67, %c0_68] : memref<8x8x512xf32, #tpu.memory_space<vmem>>, vector<1x8x512xf32>
    %122 = vector.shape_cast %121 : vector<1x8x512xf32> to vector<8x512xf32>
    %c0_69 = arith.constant 0 : index
    %c0_70 = arith.constant 0 : index
    %123 = vector.load %arg5[%c0_69, %c0_70] : memref<8x128xf32, #tpu.memory_space<vmem>>, vector<8x128xf32>
    %124 = arith.truncf %123 : vector<8x128xf32> to vector<8x128xbf16>
    %c0_71 = arith.constant 0 : index
    %c0_72 = arith.constant 0 : index
    %125 = vector.load %arg3[%c0_71, %c0_72] : memref<128x512xbf16, #tpu.memory_space<vmem>>, vector<128x512xbf16>
    %cst_73 = arith.constant dense<0.000000e+00> : vector<8x512xf32>
    %126 = tpu.matmul %124, %125, %cst_73 {dimension_numbers = #tpu.dot_dimension_numbers<[1], [0], [0], [1], [0, 0, 1, 1], [], []>} : vector<8x128xbf16>, vector<128x512xbf16>, vector<8x512xf32> -> vector<8x512xf32>
    %127 = arith.addf %122, %126 : vector<8x512xf32>
    %128 = vector.extract_strided_slice %127 {offsets = [0, 0], sizes = [8, 384], strides = [1, 1]} : vector<8x512xf32> to vector<8x384xf32>
    %129 = arith.negf %128 : vector<8x384xf32>
    %130 = math.exp %129 : vector<8x384xf32>
    %cst_74 = arith.constant 1.000000e+00 : f32
    %131 = vector.broadcast %cst_74 : f32 to vector<8x384xf32>
    %132 = arith.addf %131, %130 : vector<8x384xf32>
    %133 = arith.divf %131, %132 : vector<8x384xf32>
    %134 = vector.extract_strided_slice %133 {offsets = [0, 0], sizes = [8, 128], strides = [1, 1]} : vector<8x384xf32> to vector<8x128xf32>
    %135 = vector.extract_strided_slice %133 {offsets = [0, 128], sizes = [8, 128], strides = [1, 1]} : vector<8x384xf32> to vector<8x128xf32>
    %136 = vector.extract_strided_slice %133 {offsets = [0, 256], sizes = [8, 128], strides = [1, 1]} : vector<8x384xf32> to vector<8x128xf32>
    %137 = vector.extract_strided_slice %127 {offsets = [0, 384], sizes = [8, 128], strides = [1, 1]} : vector<8x512xf32> to vector<8x128xf32>
    %138 = math.tanh %137 : vector<8x128xf32>
    %c0_75 = arith.constant 0 : index
    %c0_76 = arith.constant 0 : index
    %139 = vector.load %arg7[%c0_75, %c0_76] : memref<8x128xf32, #tpu.memory_space<vmem>>, vector<8x128xf32>
    %140 = arith.mulf %135, %139 : vector<8x128xf32>
    %141 = arith.mulf %134, %138 : vector<8x128xf32>
    %142 = arith.addf %140, %141 : vector<8x128xf32>
    %c0_77 = arith.constant 0 : index
    %c0_78 = arith.constant 0 : index
    %143 = vector.load %arg7[%c0_77, %c0_78] : memref<8x128xf32, #tpu.memory_space<vmem>>, vector<8x128xf32>
    tpu.vector_store %arg7[%c0_77, %c0_78], %142 {strides = array<i32>} : memref<8x128xf32, #tpu.memory_space<vmem>>, vector<8x128xf32>,
    %144 = math.tanh %142 : vector<8x128xf32>
    %145 = arith.mulf %136, %144 : vector<8x128xf32>
    %c0_79 = arith.constant 0 : index
    %c0_80 = arith.constant 0 : index
    %146 = vector.load %arg5[%c0_79, %c0_80] : memref<8x128xf32, #tpu.memory_space<vmem>>, vector<8x128xf32>
    tpu.vector_store %arg5[%c0_79, %c0_80], %145 {strides = array<i32>} : memref<8x128xf32, #tpu.memory_space<vmem>>, vector<8x128xf32>,
    %c5_i32 = arith.constant 5 : i32
    %147 = arith.index_cast %c5_i32 : i32 to index
    %c0_81 = arith.constant 0 : index
    %c0_82 = arith.constant 0 : index
    %148 = vector.load %arg6[%147, %c0_81, %c0_82] : memref<8x8x512xf32, #tpu.memory_space<vmem>>, vector<1x8x512xf32>
    %149 = vector.shape_cast %148 : vector<1x8x512xf32> to vector<8x512xf32>
    %c0_83 = arith.constant 0 : index
    %c0_84 = arith.constant 0 : index
    %150 = vector.load %arg5[%c0_83, %c0_84] : memref<8x128xf32, #tpu.memory_space<vmem>>, vector<8x128xf32>
    %151 = arith.truncf %150 : vector<8x128xf32> to vector<8x128xbf16>
    %c0_85 = arith.constant 0 : index
    %c0_86 = arith.constant 0 : index
    %152 = vector.load %arg3[%c0_85, %c0_86] : memref<128x512xbf16, #tpu.memory_space<vmem>>, vector<128x512xbf16>
    %cst_87 = arith.constant dense<0.000000e+00> : vector<8x512xf32>
    %153 = tpu.matmul %151, %152, %cst_87 {dimension_numbers = #tpu.dot_dimension_numbers<[1], [0], [0], [1], [0, 0, 1, 1], [], []>} : vector<8x128xbf16>, vector<128x512xbf16>, vector<8x512xf32> -> vector<8x512xf32>
    %154 = arith.addf %149, %153 : vector<8x512xf32>
    %155 = vector.extract_strided_slice %154 {offsets = [0, 0], sizes = [8, 384], strides = [1, 1]} : vector<8x512xf32> to vector<8x384xf32>
    %156 = arith.negf %155 : vector<8x384xf32>
    %157 = math.exp %156 : vector<8x384xf32>
    %cst_88 = arith.constant 1.000000e+00 : f32
    %158 = vector.broadcast %cst_88 : f32 to vector<8x384xf32>
    %159 = arith.addf %158, %157 : vector<8x384xf32>
    %160 = arith.divf %158, %159 : vector<8x384xf32>
    %161 = vector.extract_strided_slice %160 {offsets = [0, 0], sizes = [8, 128], strides = [1, 1]} : vector<8x384xf32> to vector<8x128xf32>
    %162 = vector.extract_strided_slice %160 {offsets = [0, 128], sizes = [8, 128], strides = [1, 1]} : vector<8x384xf32> to vector<8x128xf32>
    %163 = vector.extract_strided_slice %160 {offsets = [0, 256], sizes = [8, 128], strides = [1, 1]} : vector<8x384xf32> to vector<8x128xf32>
    %164 = vector.extract_strided_slice %154 {offsets = [0, 384], sizes = [8, 128], strides = [1, 1]} : vector<8x512xf32> to vector<8x128xf32>
    %165 = math.tanh %164 : vector<8x128xf32>
    %c0_89 = arith.constant 0 : index
    %c0_90 = arith.constant 0 : index
    %166 = vector.load %arg7[%c0_89, %c0_90] : memref<8x128xf32, #tpu.memory_space<vmem>>, vector<8x128xf32>
    %167 = arith.mulf %162, %166 : vector<8x128xf32>
    %168 = arith.mulf %161, %165 : vector<8x128xf32>
    %169 = arith.addf %167, %168 : vector<8x128xf32>
    %c0_91 = arith.constant 0 : index
    %c0_92 = arith.constant 0 : index
    %170 = vector.load %arg7[%c0_91, %c0_92] : memref<8x128xf32, #tpu.memory_space<vmem>>, vector<8x128xf32>
    tpu.vector_store %arg7[%c0_91, %c0_92], %169 {strides = array<i32>} : memref<8x128xf32, #tpu.memory_space<vmem>>, vector<8x128xf32>,
    %171 = math.tanh %169 : vector<8x128xf32>
    %172 = arith.mulf %163, %171 : vector<8x128xf32>
    %c0_93 = arith.constant 0 : index
    %c0_94 = arith.constant 0 : index
    %173 = vector.load %arg5[%c0_93, %c0_94] : memref<8x128xf32, #tpu.memory_space<vmem>>, vector<8x128xf32>
    tpu.vector_store %arg5[%c0_93, %c0_94], %172 {strides = array<i32>} : memref<8x128xf32, #tpu.memory_space<vmem>>, vector<8x128xf32>,
    %c6_i32 = arith.constant 6 : i32
    %174 = arith.index_cast %c6_i32 : i32 to index
    %c0_95 = arith.constant 0 : index
    %c0_96 = arith.constant 0 : index
    %175 = vector.load %arg6[%174, %c0_95, %c0_96] : memref<8x8x512xf32, #tpu.memory_space<vmem>>, vector<1x8x512xf32>
    %176 = vector.shape_cast %175 : vector<1x8x512xf32> to vector<8x512xf32>
    %c0_97 = arith.constant 0 : index
    %c0_98 = arith.constant 0 : index
    %177 = vector.load %arg5[%c0_97, %c0_98] : memref<8x128xf32, #tpu.memory_space<vmem>>, vector<8x128xf32>
    %178 = arith.truncf %177 : vector<8x128xf32> to vector<8x128xbf16>
    %c0_99 = arith.constant 0 : index
    %c0_100 = arith.constant 0 : index
    %179 = vector.load %arg3[%c0_99, %c0_100] : memref<128x512xbf16, #tpu.memory_space<vmem>>, vector<128x512xbf16>
    %cst_101 = arith.constant dense<0.000000e+00> : vector<8x512xf32>
    %180 = tpu.matmul %178, %179, %cst_101 {dimension_numbers = #tpu.dot_dimension_numbers<[1], [0], [0], [1], [0, 0, 1, 1], [], []>} : vector<8x128xbf16>, vector<128x512xbf16>, vector<8x512xf32> -> vector<8x512xf32>
    %181 = arith.addf %176, %180 : vector<8x512xf32>
    %182 = vector.extract_strided_slice %181 {offsets = [0, 0], sizes = [8, 384], strides = [1, 1]} : vector<8x512xf32> to vector<8x384xf32>
    %183 = arith.negf %182 : vector<8x384xf32>
    %184 = math.exp %183 : vector<8x384xf32>
    %cst_102 = arith.constant 1.000000e+00 : f32
    %185 = vector.broadcast %cst_102 : f32 to vector<8x384xf32>
    %186 = arith.addf %185, %184 : vector<8x384xf32>
    %187 = arith.divf %185, %186 : vector<8x384xf32>
    %188 = vector.extract_strided_slice %187 {offsets = [0, 0], sizes = [8, 128], strides = [1, 1]} : vector<8x384xf32> to vector<8x128xf32>
    %189 = vector.extract_strided_slice %187 {offsets = [0, 128], sizes = [8, 128], strides = [1, 1]} : vector<8x384xf32> to vector<8x128xf32>
    %190 = vector.extract_strided_slice %187 {offsets = [0, 256], sizes = [8, 128], strides = [1, 1]} : vector<8x384xf32> to vector<8x128xf32>
    %191 = vector.extract_strided_slice %181 {offsets = [0, 384], sizes = [8, 128], strides = [1, 1]} : vector<8x512xf32> to vector<8x128xf32>
    %192 = math.tanh %191 : vector<8x128xf32>
    %c0_103 = arith.constant 0 : index
    %c0_104 = arith.constant 0 : index
    %193 = vector.load %arg7[%c0_103, %c0_104] : memref<8x128xf32, #tpu.memory_space<vmem>>, vector<8x128xf32>
    %194 = arith.mulf %189, %193 : vector<8x128xf32>
    %195 = arith.mulf %188, %192 : vector<8x128xf32>
    %196 = arith.addf %194, %195 : vector<8x128xf32>
    %c0_105 = arith.constant 0 : index
    %c0_106 = arith.constant 0 : index
    %197 = vector.load %arg7[%c0_105, %c0_106] : memref<8x128xf32, #tpu.memory_space<vmem>>, vector<8x128xf32>
    tpu.vector_store %arg7[%c0_105, %c0_106], %196 {strides = array<i32>} : memref<8x128xf32, #tpu.memory_space<vmem>>, vector<8x128xf32>,
    %198 = math.tanh %196 : vector<8x128xf32>
    %199 = arith.mulf %190, %198 : vector<8x128xf32>
    %c0_107 = arith.constant 0 : index
    %c0_108 = arith.constant 0 : index
    %200 = vector.load %arg5[%c0_107, %c0_108] : memref<8x128xf32, #tpu.memory_space<vmem>>, vector<8x128xf32>
    tpu.vector_store %arg5[%c0_107, %c0_108], %199 {strides = array<i32>} : memref<8x128xf32, #tpu.memory_space<vmem>>, vector<8x128xf32>,
    %c7_i32 = arith.constant 7 : i32
    %201 = arith.index_cast %c7_i32 : i32 to index
    %c0_109 = arith.constant 0 : index
    %c0_110 = arith.constant 0 : index
    %202 = vector.load %arg6[%201, %c0_109, %c0_110] : memref<8x8x512xf32, #tpu.memory_space<vmem>>, vector<1x8x512xf32>
    %203 = vector.shape_cast %202 : vector<1x8x512xf32> to vector<8x512xf32>
    %c0_111 = arith.constant 0 : index
    %c0_112 = arith.constant 0 : index
    %204 = vector.load %arg5[%c0_111, %c0_112] : memref<8x128xf32, #tpu.memory_space<vmem>>, vector<8x128xf32>
    %205 = arith.truncf %204 : vector<8x128xf32> to vector<8x128xbf16>
    %c0_113 = arith.constant 0 : index
    %c0_114 = arith.constant 0 : index
    %206 = vector.load %arg3[%c0_113, %c0_114] : memref<128x512xbf16, #tpu.memory_space<vmem>>, vector<128x512xbf16>
    %cst_115 = arith.constant dense<0.000000e+00> : vector<8x512xf32>
    %207 = tpu.matmul %205, %206, %cst_115 {dimension_numbers = #tpu.dot_dimension_numbers<[1], [0], [0], [1], [0, 0, 1, 1], [], []>} : vector<8x128xbf16>, vector<128x512xbf16>, vector<8x512xf32> -> vector<8x512xf32>
    %208 = arith.addf %203, %207 : vector<8x512xf32>
    %209 = vector.extract_strided_slice %208 {offsets = [0, 0], sizes = [8, 384], strides = [1, 1]} : vector<8x512xf32> to vector<8x384xf32>
    %210 = arith.negf %209 : vector<8x384xf32>
    %211 = math.exp %210 : vector<8x384xf32>
    %cst_116 = arith.constant 1.000000e+00 : f32
    %212 = vector.broadcast %cst_116 : f32 to vector<8x384xf32>
    %213 = arith.addf %212, %211 : vector<8x384xf32>
    %214 = arith.divf %212, %213 : vector<8x384xf32>
    %215 = vector.extract_strided_slice %214 {offsets = [0, 0], sizes = [8, 128], strides = [1, 1]} : vector<8x384xf32> to vector<8x128xf32>
    %216 = vector.extract_strided_slice %214 {offsets = [0, 128], sizes = [8, 128], strides = [1, 1]} : vector<8x384xf32> to vector<8x128xf32>
    %217 = vector.extract_strided_slice %214 {offsets = [0, 256], sizes = [8, 128], strides = [1, 1]} : vector<8x384xf32> to vector<8x128xf32>
    %218 = vector.extract_strided_slice %208 {offsets = [0, 384], sizes = [8, 128], strides = [1, 1]} : vector<8x512xf32> to vector<8x128xf32>
    %219 = math.tanh %218 : vector<8x128xf32>
    %c0_117 = arith.constant 0 : index
    %c0_118 = arith.constant 0 : index
    %220 = vector.load %arg7[%c0_117, %c0_118] : memref<8x128xf32, #tpu.memory_space<vmem>>, vector<8x128xf32>
    %221 = arith.mulf %216, %220 : vector<8x128xf32>
    %222 = arith.mulf %215, %219 : vector<8x128xf32>
    %223 = arith.addf %221, %222 : vector<8x128xf32>
    %c0_119 = arith.constant 0 : index
    %c0_120 = arith.constant 0 : index
    %224 = vector.load %arg7[%c0_119, %c0_120] : memref<8x128xf32, #tpu.memory_space<vmem>>, vector<8x128xf32>
    tpu.vector_store %arg7[%c0_119, %c0_120], %223 {strides = array<i32>} : memref<8x128xf32, #tpu.memory_space<vmem>>, vector<8x128xf32>,
    %225 = math.tanh %223 : vector<8x128xf32>
    %226 = arith.mulf %217, %225 : vector<8x128xf32>
    %c0_121 = arith.constant 0 : index
    %c0_122 = arith.constant 0 : index
    %227 = vector.load %arg5[%c0_121, %c0_122] : memref<8x128xf32, #tpu.memory_space<vmem>>, vector<8x128xf32>
    tpu.vector_store %arg5[%c0_121, %c0_122], %226 {strides = array<i32>} : memref<8x128xf32, #tpu.memory_space<vmem>>, vector<8x128xf32>,
    %c8_i32 = arith.constant 8 : i32
    return
  }
  func.func @transform_0(%arg0: i32) -> (i32, i32, i32) {
    %c0_i32 = arith.constant 0 : i32
    %c0_i32_0 = arith.constant 0 : i32
    %c0_i32_1 = arith.constant 0 : i32
    return %arg0, %c0_i32, %c0_i32_0 : i32, i32, i32
  }
  func.func @transform_1(%arg0: i32) -> (i32, i32) {
    %c0_i32 = arith.constant 0 : i32
    %c0_i32_0 = arith.constant 0 : i32
    %c0_i32_1 = arith.constant 0 : i32
    return %c0_i32, %c0_i32_0 : i32, i32
  }
  func.func @transform_2(%arg0: i32) -> (i32, i32) {
    %c0_i32 = arith.constant 0 : i32
    %c0_i32_0 = arith.constant 0 : i32
    %c0_i32_1 = arith.constant 0 : i32
    return %c0_i32, %c0_i32_0 : i32, i32
  }
  func.func @transform_3(%arg0: i32) -> (i32, i32) {
    %c0_i32 = arith.constant 0 : i32
    %c0_i32_0 = arith.constant 0 : i32
    %c0_i32_1 = arith.constant 0 : i32
    return %c0_i32, %c0_i32_0 : i32, i32
  }
  func.func @transform_4(%arg0: i32) -> (i32, i32) {
    %c0_i32 = arith.constant 0 : i32
    %c0_i32_0 = arith.constant 0 : i32
    %c0_i32_1 = arith.constant 0 : i32
    return %c0_i32, %c0_i32_0 : i32, i32
  }
}

module attributes {stable_mosaic.version = 11 : i64} {
  func.func @_dual_decoder_kernel(%arg0: i32, %arg1: memref<8x128xbf16, #tpu.memory_space<vmem>>, %arg2: memref<128x512xbf16, #tpu.memory_space<vmem>>, %arg3: memref<128x512xbf16, #tpu.memory_space<vmem>>, %arg4: memref<1x512xf32, #tpu.memory_space<vmem>>, %arg5: memref<128x512xbf16, #tpu.memory_space<vmem>>, %arg6: memref<128x512xbf16, #tpu.memory_space<vmem>>, %arg7: memref<1x512xf32, #tpu.memory_space<vmem>>, %arg8: memref<8x8x128xf32, #tpu.memory_space<vmem>>, %arg9: memref<8x8x128xf32, #tpu.memory_space<vmem>>, %arg10: memref<8x512xf32, #tpu.memory_space<vmem>>, %arg11: memref<8x128xf32, #tpu.memory_space<vmem>>, %arg12: memref<8x128xf32, #tpu.memory_space<vmem>>, %arg13: memref<8x512xf32, #tpu.memory_space<vmem>>, %arg14: memref<8x128xf32, #tpu.memory_space<vmem>>, %arg15: memref<8x128xf32, #tpu.memory_space<vmem>>) attributes {dimension_semantics = [#tpu.dimension_semantics<arbitrary>], iteration_bounds = array<i64: 1>, scalar_prefetch = 0 : i64, scratch_operands = 6 : i64, tpu.core_type = #tpu.core_type<tc>, window_params = [{pipeline_mode = #tpu.pipeline_mode<synchronous>, transform_indices = @transform_0, window_bounds = array<i64: 8, 128>}, {pipeline_mode = #tpu.pipeline_mode<synchronous>, transform_indices = @transform_1, window_bounds = array<i64: 128, 512>}, {pipeline_mode = #tpu.pipeline_mode<synchronous>, transform_indices = @transform_2, window_bounds = array<i64: 128, 512>}, {pipeline_mode = #tpu.pipeline_mode<synchronous>, transform_indices = @transform_3, window_bounds = array<i64: 1, 512>}, {pipeline_mode = #tpu.pipeline_mode<synchronous>, transform_indices = @transform_4, window_bounds = array<i64: 128, 512>}, {pipeline_mode = #tpu.pipeline_mode<synchronous>, transform_indices = @transform_5, window_bounds = array<i64: 128, 512>}, {pipeline_mode = #tpu.pipeline_mode<synchronous>, transform_indices = @transform_6, window_bounds = array<i64: 1, 512>}, {transform_indices = @transform_7, window_bounds = array<i64: 8, 8, 128>}, {transform_indices = @transform_8, window_bounds = array<i64: 8, 8, 128>}]} {
    %c0_i32 = arith.constant 0 : i32
    %0 = arith.cmpi eq, %arg0, %c0_i32 : i32
    %1 = arith.extui %0 : i1 to i32
    %c0_i32_0 = arith.constant 0 : i32
    %2 = arith.cmpi ne, %1, %c0_i32_0 : i32
    scf.if %2 {
      %c0_256 = arith.constant 0 : index
      %c0_257 = arith.constant 0 : index
      %467 = vector.load %arg1[%c0_256, %c0_257] : memref<8x128xbf16, #tpu.memory_space<vmem>>, vector<8x128xbf16>
      %c0_258 = arith.constant 0 : index
      %c0_259 = arith.constant 0 : index
      %468 = vector.load %arg2[%c0_258, %c0_259] : memref<128x512xbf16, #tpu.memory_space<vmem>>, vector<128x512xbf16>
      %cst_260 = arith.constant dense<0.000000e+00> : vector<8x512xf32>
      %469 = tpu.matmul %467, %468, %cst_260 {dimension_numbers = #tpu.dot_dimension_numbers<[1], [0], [0], [1], [0, 0, 1, 1], [], []>} : vector<8x128xbf16>, vector<128x512xbf16>, vector<8x512xf32> -> vector<8x512xf32>
      %c0_261 = arith.constant 0 : index
      %c0_262 = arith.constant 0 : index
      %470 = vector.load %arg4[%c0_261, %c0_262] : memref<1x512xf32, #tpu.memory_space<vmem>>, vector<1x512xf32>
      %471 = vector.broadcast %470 : vector<1x512xf32> to vector<8x512xf32>
      %472 = arith.addf %469, %471 : vector<8x512xf32>
      %c0_263 = arith.constant 0 : index
      %c0_264 = arith.constant 0 : index
      %473 = vector.load %arg10[%c0_263, %c0_264] : memref<8x512xf32, #tpu.memory_space<vmem>>, vector<8x512xf32>
      tpu.vector_store %arg10[%c0_263, %c0_264], %472 {strides = array<i32>} : memref<8x512xf32, #tpu.memory_space<vmem>>, vector<8x512xf32>,
      %c0_265 = arith.constant 0 : index
      %c0_266 = arith.constant 0 : index
      %474 = vector.load %arg1[%c0_265, %c0_266] : memref<8x128xbf16, #tpu.memory_space<vmem>>, vector<8x128xbf16>
      %c0_267 = arith.constant 0 : index
      %c0_268 = arith.constant 0 : index
      %475 = vector.load %arg5[%c0_267, %c0_268] : memref<128x512xbf16, #tpu.memory_space<vmem>>, vector<128x512xbf16>
      %cst_269 = arith.constant dense<0.000000e+00> : vector<8x512xf32>
      %476 = tpu.matmul %474, %475, %cst_269 {dimension_numbers = #tpu.dot_dimension_numbers<[1], [0], [0], [1], [0, 0, 1, 1], [], []>} : vector<8x128xbf16>, vector<128x512xbf16>, vector<8x512xf32> -> vector<8x512xf32>
      %c0_270 = arith.constant 0 : index
      %c0_271 = arith.constant 0 : index
      %477 = vector.load %arg7[%c0_270, %c0_271] : memref<1x512xf32, #tpu.memory_space<vmem>>, vector<1x512xf32>
      %478 = vector.broadcast %477 : vector<1x512xf32> to vector<8x512xf32>
      %479 = arith.addf %476, %478 : vector<8x512xf32>
      %c0_272 = arith.constant 0 : index
      %c0_273 = arith.constant 0 : index
      %480 = vector.load %arg13[%c0_272, %c0_273] : memref<8x512xf32, #tpu.memory_space<vmem>>, vector<8x512xf32>
      tpu.vector_store %arg13[%c0_272, %c0_273], %479 {strides = array<i32>} : memref<8x512xf32, #tpu.memory_space<vmem>>, vector<8x512xf32>,
      %cst_274 = arith.constant 0.000000e+00 : f32
      %481 = vector.broadcast %cst_274 : f32 to vector<8x128xf32>
      %c0_275 = arith.constant 0 : index
      %c0_276 = arith.constant 0 : index
      %482 = vector.load %arg11[%c0_275, %c0_276] : memref<8x128xf32, #tpu.memory_space<vmem>>, vector<8x128xf32>
      tpu.vector_store %arg11[%c0_275, %c0_276], %481 {strides = array<i32>} : memref<8x128xf32, #tpu.memory_space<vmem>>, vector<8x128xf32>,
      %cst_277 = arith.constant 0.000000e+00 : f32
      %483 = vector.broadcast %cst_277 : f32 to vector<8x128xf32>
      %c0_278 = arith.constant 0 : index
      %c0_279 = arith.constant 0 : index
      %484 = vector.load %arg12[%c0_278, %c0_279] : memref<8x128xf32, #tpu.memory_space<vmem>>, vector<8x128xf32>
      tpu.vector_store %arg12[%c0_278, %c0_279], %483 {strides = array<i32>} : memref<8x128xf32, #tpu.memory_space<vmem>>, vector<8x128xf32>,
      %cst_280 = arith.constant 0.000000e+00 : f32
      %485 = vector.broadcast %cst_280 : f32 to vector<8x128xf32>
      %c0_281 = arith.constant 0 : index
      %c0_282 = arith.constant 0 : index
      %486 = vector.load %arg14[%c0_281, %c0_282] : memref<8x128xf32, #tpu.memory_space<vmem>>, vector<8x128xf32>
      tpu.vector_store %arg14[%c0_281, %c0_282], %485 {strides = array<i32>} : memref<8x128xf32, #tpu.memory_space<vmem>>, vector<8x128xf32>,
      %cst_283 = arith.constant 0.000000e+00 : f32
      %487 = vector.broadcast %cst_283 : f32 to vector<8x128xf32>
      %c0_284 = arith.constant 0 : index
      %c0_285 = arith.constant 0 : index
      %488 = vector.load %arg15[%c0_284, %c0_285] : memref<8x128xf32, #tpu.memory_space<vmem>>, vector<8x128xf32>
      tpu.vector_store %arg15[%c0_284, %c0_285], %487 {strides = array<i32>} : memref<8x128xf32, #tpu.memory_space<vmem>>, vector<8x128xf32>,
    } else {
    }
    %c0_i32_1 = arith.constant 0 : i32
    %c0 = arith.constant 0 : index
    %c0_2 = arith.constant 0 : index
    %3 = vector.load %arg10[%c0, %c0_2] : memref<8x512xf32, #tpu.memory_space<vmem>>, vector<8x512xf32>
    %c0_3 = arith.constant 0 : index
    %c0_4 = arith.constant 0 : index
    %4 = vector.load %arg11[%c0_3, %c0_4] : memref<8x128xf32, #tpu.memory_space<vmem>>, vector<8x128xf32>
    %c0_5 = arith.constant 0 : index
    %c0_6 = arith.constant 0 : index
    %5 = vector.load %arg12[%c0_5, %c0_6] : memref<8x128xf32, #tpu.memory_space<vmem>>, vector<8x128xf32>
    %c0_7 = arith.constant 0 : index
    %c0_8 = arith.constant 0 : index
    %6 = vector.load %arg3[%c0_7, %c0_8] : memref<128x512xbf16, #tpu.memory_space<vmem>>, vector<128x512xbf16>
    %7 = arith.truncf %4 : vector<8x128xf32> to vector<8x128xbf16>
    %cst = arith.constant dense<0.000000e+00> : vector<8x512xf32>
    %8 = tpu.matmul %7, %6, %cst {dimension_numbers = #tpu.dot_dimension_numbers<[1], [0], [0], [1], [0, 0, 1, 1], [], []>} : vector<8x128xbf16>, vector<128x512xbf16>, vector<8x512xf32> -> vector<8x512xf32>
    %9 = arith.addf %3, %8 : vector<8x512xf32>
    %10 = vector.extract_strided_slice %9 {offsets = [0, 0], sizes = [8, 384], strides = [1, 1]} : vector<8x512xf32> to vector<8x384xf32>
    %11 = arith.negf %10 : vector<8x384xf32>
    %12 = math.exp %11 : vector<8x384xf32>
    %cst_9 = arith.constant 1.000000e+00 : f32
    %13 = vector.broadcast %cst_9 : f32 to vector<8x384xf32>
    %14 = arith.addf %13, %12 : vector<8x384xf32>
    %15 = arith.divf %13, %14 : vector<8x384xf32>
    %16 = vector.extract_strided_slice %15 {offsets = [0, 0], sizes = [8, 128], strides = [1, 1]} : vector<8x384xf32> to vector<8x128xf32>
    %17 = vector.extract_strided_slice %15 {offsets = [0, 128], sizes = [8, 128], strides = [1, 1]} : vector<8x384xf32> to vector<8x128xf32>
    %18 = vector.extract_strided_slice %15 {offsets = [0, 256], sizes = [8, 128], strides = [1, 1]} : vector<8x384xf32> to vector<8x128xf32>
    %19 = vector.extract_strided_slice %9 {offsets = [0, 384], sizes = [8, 128], strides = [1, 1]} : vector<8x512xf32> to vector<8x128xf32>
    %20 = math.tanh %19 : vector<8x128xf32>
    %21 = arith.mulf %17, %5 : vector<8x128xf32>
    %22 = arith.mulf %16, %20 : vector<8x128xf32>
    %23 = arith.addf %21, %22 : vector<8x128xf32>
    %24 = math.tanh %23 : vector<8x128xf32>
    %25 = arith.mulf %18, %24 : vector<8x128xf32>
    %c0_10 = arith.constant 0 : index
    %c0_11 = arith.constant 0 : index
    %26 = vector.load %arg13[%c0_10, %c0_11] : memref<8x512xf32, #tpu.memory_space<vmem>>, vector<8x512xf32>
    %c0_12 = arith.constant 0 : index
    %c0_13 = arith.constant 0 : index
    %27 = vector.load %arg14[%c0_12, %c0_13] : memref<8x128xf32, #tpu.memory_space<vmem>>, vector<8x128xf32>
    %c0_14 = arith.constant 0 : index
    %c0_15 = arith.constant 0 : index
    %28 = vector.load %arg15[%c0_14, %c0_15] : memref<8x128xf32, #tpu.memory_space<vmem>>, vector<8x128xf32>
    %c0_16 = arith.constant 0 : index
    %c0_17 = arith.constant 0 : index
    %29 = vector.load %arg6[%c0_16, %c0_17] : memref<128x512xbf16, #tpu.memory_space<vmem>>, vector<128x512xbf16>
    %30 = arith.truncf %27 : vector<8x128xf32> to vector<8x128xbf16>
    %cst_18 = arith.constant dense<0.000000e+00> : vector<8x512xf32>
    %31 = tpu.matmul %30, %29, %cst_18 {dimension_numbers = #tpu.dot_dimension_numbers<[1], [0], [0], [1], [0, 0, 1, 1], [], []>} : vector<8x128xbf16>, vector<128x512xbf16>, vector<8x512xf32> -> vector<8x512xf32>
    %32 = arith.addf %26, %31 : vector<8x512xf32>
    %33 = vector.extract_strided_slice %32 {offsets = [0, 0], sizes = [8, 384], strides = [1, 1]} : vector<8x512xf32> to vector<8x384xf32>
    %34 = arith.negf %33 : vector<8x384xf32>
    %35 = math.exp %34 : vector<8x384xf32>
    %cst_19 = arith.constant 1.000000e+00 : f32
    %36 = vector.broadcast %cst_19 : f32 to vector<8x384xf32>
    %37 = arith.addf %36, %35 : vector<8x384xf32>
    %38 = arith.divf %36, %37 : vector<8x384xf32>
    %39 = vector.extract_strided_slice %38 {offsets = [0, 0], sizes = [8, 128], strides = [1, 1]} : vector<8x384xf32> to vector<8x128xf32>
    %40 = vector.extract_strided_slice %38 {offsets = [0, 128], sizes = [8, 128], strides = [1, 1]} : vector<8x384xf32> to vector<8x128xf32>
    %41 = vector.extract_strided_slice %38 {offsets = [0, 256], sizes = [8, 128], strides = [1, 1]} : vector<8x384xf32> to vector<8x128xf32>
    %42 = vector.extract_strided_slice %32 {offsets = [0, 384], sizes = [8, 128], strides = [1, 1]} : vector<8x512xf32> to vector<8x128xf32>
    %43 = math.tanh %42 : vector<8x128xf32>
    %44 = arith.mulf %40, %28 : vector<8x128xf32>
    %45 = arith.mulf %39, %43 : vector<8x128xf32>
    %46 = arith.addf %44, %45 : vector<8x128xf32>
    %47 = math.tanh %46 : vector<8x128xf32>
    %48 = arith.mulf %41, %47 : vector<8x128xf32>
    %c0_20 = arith.constant 0 : index
    %c0_21 = arith.constant 0 : index
    %49 = vector.load %arg11[%c0_20, %c0_21] : memref<8x128xf32, #tpu.memory_space<vmem>>, vector<8x128xf32>
    tpu.vector_store %arg11[%c0_20, %c0_21], %25 {strides = array<i32>} : memref<8x128xf32, #tpu.memory_space<vmem>>, vector<8x128xf32>,
    %c0_22 = arith.constant 0 : index
    %c0_23 = arith.constant 0 : index
    %50 = vector.load %arg12[%c0_22, %c0_23] : memref<8x128xf32, #tpu.memory_space<vmem>>, vector<8x128xf32>
    tpu.vector_store %arg12[%c0_22, %c0_23], %23 {strides = array<i32>} : memref<8x128xf32, #tpu.memory_space<vmem>>, vector<8x128xf32>,
    %c0_24 = arith.constant 0 : index
    %c0_25 = arith.constant 0 : index
    %51 = vector.load %arg14[%c0_24, %c0_25] : memref<8x128xf32, #tpu.memory_space<vmem>>, vector<8x128xf32>
    tpu.vector_store %arg14[%c0_24, %c0_25], %48 {strides = array<i32>} : memref<8x128xf32, #tpu.memory_space<vmem>>, vector<8x128xf32>,
    %c0_26 = arith.constant 0 : index
    %c0_27 = arith.constant 0 : index
    %52 = vector.load %arg15[%c0_26, %c0_27] : memref<8x128xf32, #tpu.memory_space<vmem>>, vector<8x128xf32>
    tpu.vector_store %arg15[%c0_26, %c0_27], %46 {strides = array<i32>} : memref<8x128xf32, #tpu.memory_space<vmem>>, vector<8x128xf32>,
    %53 = arith.index_cast %c0_i32_1 : i32 to index
    %c0_28 = arith.constant 0 : index
    %c0_29 = arith.constant 0 : index
    %54 = vector.load %arg8[%53, %c0_28, %c0_29] : memref<8x8x128xf32, #tpu.memory_space<vmem>>, vector<1x8x128xf32>
    %55 = vector.shape_cast %54 : vector<1x8x128xf32> to vector<8x128xf32>
    %56 = vector.shape_cast %25 : vector<8x128xf32> to vector<1x8x128xf32>
    tpu.vector_store %arg8[%53, %c0_28, %c0_29], %56 {strides = array<i32>} : memref<8x8x128xf32, #tpu.memory_space<vmem>>, vector<1x8x128xf32>,
    %57 = arith.index_cast %c0_i32_1 : i32 to index
    %c0_30 = arith.constant 0 : index
    %c0_31 = arith.constant 0 : index
    %58 = vector.load %arg9[%57, %c0_30, %c0_31] : memref<8x8x128xf32, #tpu.memory_space<vmem>>, vector<1x8x128xf32>
    %59 = vector.shape_cast %58 : vector<1x8x128xf32> to vector<8x128xf32>
    %60 = vector.shape_cast %48 : vector<8x128xf32> to vector<1x8x128xf32>
    tpu.vector_store %arg9[%57, %c0_30, %c0_31], %60 {strides = array<i32>} : memref<8x8x128xf32, #tpu.memory_space<vmem>>, vector<1x8x128xf32>,
    %c1_i32 = arith.constant 1 : i32
    %c0_32 = arith.constant 0 : index
    %c0_33 = arith.constant 0 : index
    %61 = vector.load %arg10[%c0_32, %c0_33] : memref<8x512xf32, #tpu.memory_space<vmem>>, vector<8x512xf32>
    %c0_34 = arith.constant 0 : index
    %c0_35 = arith.constant 0 : index
    %62 = vector.load %arg11[%c0_34, %c0_35] : memref<8x128xf32, #tpu.memory_space<vmem>>, vector<8x128xf32>
    %c0_36 = arith.constant 0 : index
    %c0_37 = arith.constant 0 : index
    %63 = vector.load %arg12[%c0_36, %c0_37] : memref<8x128xf32, #tpu.memory_space<vmem>>, vector<8x128xf32>
    %c0_38 = arith.constant 0 : index
    %c0_39 = arith.constant 0 : index
    %64 = vector.load %arg3[%c0_38, %c0_39] : memref<128x512xbf16, #tpu.memory_space<vmem>>, vector<128x512xbf16>
    %65 = arith.truncf %62 : vector<8x128xf32> to vector<8x128xbf16>
    %cst_40 = arith.constant dense<0.000000e+00> : vector<8x512xf32>
    %66 = tpu.matmul %65, %64, %cst_40 {dimension_numbers = #tpu.dot_dimension_numbers<[1], [0], [0], [1], [0, 0, 1, 1], [], []>} : vector<8x128xbf16>, vector<128x512xbf16>, vector<8x512xf32> -> vector<8x512xf32>
    %67 = arith.addf %61, %66 : vector<8x512xf32>
    %68 = vector.extract_strided_slice %67 {offsets = [0, 0], sizes = [8, 384], strides = [1, 1]} : vector<8x512xf32> to vector<8x384xf32>
    %69 = arith.negf %68 : vector<8x384xf32>
    %70 = math.exp %69 : vector<8x384xf32>
    %cst_41 = arith.constant 1.000000e+00 : f32
    %71 = vector.broadcast %cst_41 : f32 to vector<8x384xf32>
    %72 = arith.addf %71, %70 : vector<8x384xf32>
    %73 = arith.divf %71, %72 : vector<8x384xf32>
    %74 = vector.extract_strided_slice %73 {offsets = [0, 0], sizes = [8, 128], strides = [1, 1]} : vector<8x384xf32> to vector<8x128xf32>
    %75 = vector.extract_strided_slice %73 {offsets = [0, 128], sizes = [8, 128], strides = [1, 1]} : vector<8x384xf32> to vector<8x128xf32>
    %76 = vector.extract_strided_slice %73 {offsets = [0, 256], sizes = [8, 128], strides = [1, 1]} : vector<8x384xf32> to vector<8x128xf32>
    %77 = vector.extract_strided_slice %67 {offsets = [0, 384], sizes = [8, 128], strides = [1, 1]} : vector<8x512xf32> to vector<8x128xf32>
    %78 = math.tanh %77 : vector<8x128xf32>
    %79 = arith.mulf %75, %63 : vector<8x128xf32>
    %80 = arith.mulf %74, %78 : vector<8x128xf32>
    %81 = arith.addf %79, %80 : vector<8x128xf32>
    %82 = math.tanh %81 : vector<8x128xf32>
    %83 = arith.mulf %76, %82 : vector<8x128xf32>
    %c0_42 = arith.constant 0 : index
    %c0_43 = arith.constant 0 : index
    %84 = vector.load %arg13[%c0_42, %c0_43] : memref<8x512xf32, #tpu.memory_space<vmem>>, vector<8x512xf32>
    %c0_44 = arith.constant 0 : index
    %c0_45 = arith.constant 0 : index
    %85 = vector.load %arg14[%c0_44, %c0_45] : memref<8x128xf32, #tpu.memory_space<vmem>>, vector<8x128xf32>
    %c0_46 = arith.constant 0 : index
    %c0_47 = arith.constant 0 : index
    %86 = vector.load %arg15[%c0_46, %c0_47] : memref<8x128xf32, #tpu.memory_space<vmem>>, vector<8x128xf32>
    %c0_48 = arith.constant 0 : index
    %c0_49 = arith.constant 0 : index
    %87 = vector.load %arg6[%c0_48, %c0_49] : memref<128x512xbf16, #tpu.memory_space<vmem>>, vector<128x512xbf16>
    %88 = arith.truncf %85 : vector<8x128xf32> to vector<8x128xbf16>
    %cst_50 = arith.constant dense<0.000000e+00> : vector<8x512xf32>
    %89 = tpu.matmul %88, %87, %cst_50 {dimension_numbers = #tpu.dot_dimension_numbers<[1], [0], [0], [1], [0, 0, 1, 1], [], []>} : vector<8x128xbf16>, vector<128x512xbf16>, vector<8x512xf32> -> vector<8x512xf32>
    %90 = arith.addf %84, %89 : vector<8x512xf32>
    %91 = vector.extract_strided_slice %90 {offsets = [0, 0], sizes = [8, 384], strides = [1, 1]} : vector<8x512xf32> to vector<8x384xf32>
    %92 = arith.negf %91 : vector<8x384xf32>
    %93 = math.exp %92 : vector<8x384xf32>
    %cst_51 = arith.constant 1.000000e+00 : f32
    %94 = vector.broadcast %cst_51 : f32 to vector<8x384xf32>
    %95 = arith.addf %94, %93 : vector<8x384xf32>
    %96 = arith.divf %94, %95 : vector<8x384xf32>
    %97 = vector.extract_strided_slice %96 {offsets = [0, 0], sizes = [8, 128], strides = [1, 1]} : vector<8x384xf32> to vector<8x128xf32>
    %98 = vector.extract_strided_slice %96 {offsets = [0, 128], sizes = [8, 128], strides = [1, 1]} : vector<8x384xf32> to vector<8x128xf32>
    %99 = vector.extract_strided_slice %96 {offsets = [0, 256], sizes = [8, 128], strides = [1, 1]} : vector<8x384xf32> to vector<8x128xf32>
    %100 = vector.extract_strided_slice %90 {offsets = [0, 384], sizes = [8, 128], strides = [1, 1]} : vector<8x512xf32> to vector<8x128xf32>
    %101 = math.tanh %100 : vector<8x128xf32>
    %102 = arith.mulf %98, %86 : vector<8x128xf32>
    %103 = arith.mulf %97, %101 : vector<8x128xf32>
    %104 = arith.addf %102, %103 : vector<8x128xf32>
    %105 = math.tanh %104 : vector<8x128xf32>
    %106 = arith.mulf %99, %105 : vector<8x128xf32>
    %c0_52 = arith.constant 0 : index
    %c0_53 = arith.constant 0 : index
    %107 = vector.load %arg11[%c0_52, %c0_53] : memref<8x128xf32, #tpu.memory_space<vmem>>, vector<8x128xf32>
    tpu.vector_store %arg11[%c0_52, %c0_53], %83 {strides = array<i32>} : memref<8x128xf32, #tpu.memory_space<vmem>>, vector<8x128xf32>,
    %c0_54 = arith.constant 0 : index
    %c0_55 = arith.constant 0 : index
    %108 = vector.load %arg12[%c0_54, %c0_55] : memref<8x128xf32, #tpu.memory_space<vmem>>, vector<8x128xf32>
    tpu.vector_store %arg12[%c0_54, %c0_55], %81 {strides = array<i32>} : memref<8x128xf32, #tpu.memory_space<vmem>>, vector<8x128xf32>,
    %c0_56 = arith.constant 0 : index
    %c0_57 = arith.constant 0 : index
    %109 = vector.load %arg14[%c0_56, %c0_57] : memref<8x128xf32, #tpu.memory_space<vmem>>, vector<8x128xf32>
    tpu.vector_store %arg14[%c0_56, %c0_57], %106 {strides = array<i32>} : memref<8x128xf32, #tpu.memory_space<vmem>>, vector<8x128xf32>,
    %c0_58 = arith.constant 0 : index
    %c0_59 = arith.constant 0 : index
    %110 = vector.load %arg15[%c0_58, %c0_59] : memref<8x128xf32, #tpu.memory_space<vmem>>, vector<8x128xf32>
    tpu.vector_store %arg15[%c0_58, %c0_59], %104 {strides = array<i32>} : memref<8x128xf32, #tpu.memory_space<vmem>>, vector<8x128xf32>,
    %111 = arith.index_cast %c1_i32 : i32 to index
    %c0_60 = arith.constant 0 : index
    %c0_61 = arith.constant 0 : index
    %112 = vector.load %arg8[%111, %c0_60, %c0_61] : memref<8x8x128xf32, #tpu.memory_space<vmem>>, vector<1x8x128xf32>
    %113 = vector.shape_cast %112 : vector<1x8x128xf32> to vector<8x128xf32>
    %114 = vector.shape_cast %83 : vector<8x128xf32> to vector<1x8x128xf32>
    tpu.vector_store %arg8[%111, %c0_60, %c0_61], %114 {strides = array<i32>} : memref<8x8x128xf32, #tpu.memory_space<vmem>>, vector<1x8x128xf32>,
    %115 = arith.index_cast %c1_i32 : i32 to index
    %c0_62 = arith.constant 0 : index
    %c0_63 = arith.constant 0 : index
    %116 = vector.load %arg9[%115, %c0_62, %c0_63] : memref<8x8x128xf32, #tpu.memory_space<vmem>>, vector<1x8x128xf32>
    %117 = vector.shape_cast %116 : vector<1x8x128xf32> to vector<8x128xf32>
    %118 = vector.shape_cast %106 : vector<8x128xf32> to vector<1x8x128xf32>
    tpu.vector_store %arg9[%115, %c0_62, %c0_63], %118 {strides = array<i32>} : memref<8x8x128xf32, #tpu.memory_space<vmem>>, vector<1x8x128xf32>,
    %c2_i32 = arith.constant 2 : i32
    %c0_64 = arith.constant 0 : index
    %c0_65 = arith.constant 0 : index
    %119 = vector.load %arg10[%c0_64, %c0_65] : memref<8x512xf32, #tpu.memory_space<vmem>>, vector<8x512xf32>
    %c0_66 = arith.constant 0 : index
    %c0_67 = arith.constant 0 : index
    %120 = vector.load %arg11[%c0_66, %c0_67] : memref<8x128xf32, #tpu.memory_space<vmem>>, vector<8x128xf32>
    %c0_68 = arith.constant 0 : index
    %c0_69 = arith.constant 0 : index
    %121 = vector.load %arg12[%c0_68, %c0_69] : memref<8x128xf32, #tpu.memory_space<vmem>>, vector<8x128xf32>
    %c0_70 = arith.constant 0 : index
    %c0_71 = arith.constant 0 : index
    %122 = vector.load %arg3[%c0_70, %c0_71] : memref<128x512xbf16, #tpu.memory_space<vmem>>, vector<128x512xbf16>
    %123 = arith.truncf %120 : vector<8x128xf32> to vector<8x128xbf16>
    %cst_72 = arith.constant dense<0.000000e+00> : vector<8x512xf32>
    %124 = tpu.matmul %123, %122, %cst_72 {dimension_numbers = #tpu.dot_dimension_numbers<[1], [0], [0], [1], [0, 0, 1, 1], [], []>} : vector<8x128xbf16>, vector<128x512xbf16>, vector<8x512xf32> -> vector<8x512xf32>
    %125 = arith.addf %119, %124 : vector<8x512xf32>
    %126 = vector.extract_strided_slice %125 {offsets = [0, 0], sizes = [8, 384], strides = [1, 1]} : vector<8x512xf32> to vector<8x384xf32>
    %127 = arith.negf %126 : vector<8x384xf32>
    %128 = math.exp %127 : vector<8x384xf32>
    %cst_73 = arith.constant 1.000000e+00 : f32
    %129 = vector.broadcast %cst_73 : f32 to vector<8x384xf32>
    %130 = arith.addf %129, %128 : vector<8x384xf32>
    %131 = arith.divf %129, %130 : vector<8x384xf32>
    %132 = vector.extract_strided_slice %131 {offsets = [0, 0], sizes = [8, 128], strides = [1, 1]} : vector<8x384xf32> to vector<8x128xf32>
    %133 = vector.extract_strided_slice %131 {offsets = [0, 128], sizes = [8, 128], strides = [1, 1]} : vector<8x384xf32> to vector<8x128xf32>
    %134 = vector.extract_strided_slice %131 {offsets = [0, 256], sizes = [8, 128], strides = [1, 1]} : vector<8x384xf32> to vector<8x128xf32>
    %135 = vector.extract_strided_slice %125 {offsets = [0, 384], sizes = [8, 128], strides = [1, 1]} : vector<8x512xf32> to vector<8x128xf32>
    %136 = math.tanh %135 : vector<8x128xf32>
    %137 = arith.mulf %133, %121 : vector<8x128xf32>
    %138 = arith.mulf %132, %136 : vector<8x128xf32>
    %139 = arith.addf %137, %138 : vector<8x128xf32>
    %140 = math.tanh %139 : vector<8x128xf32>
    %141 = arith.mulf %134, %140 : vector<8x128xf32>
    %c0_74 = arith.constant 0 : index
    %c0_75 = arith.constant 0 : index
    %142 = vector.load %arg13[%c0_74, %c0_75] : memref<8x512xf32, #tpu.memory_space<vmem>>, vector<8x512xf32>
    %c0_76 = arith.constant 0 : index
    %c0_77 = arith.constant 0 : index
    %143 = vector.load %arg14[%c0_76, %c0_77] : memref<8x128xf32, #tpu.memory_space<vmem>>, vector<8x128xf32>
    %c0_78 = arith.constant 0 : index
    %c0_79 = arith.constant 0 : index
    %144 = vector.load %arg15[%c0_78, %c0_79] : memref<8x128xf32, #tpu.memory_space<vmem>>, vector<8x128xf32>
    %c0_80 = arith.constant 0 : index
    %c0_81 = arith.constant 0 : index
    %145 = vector.load %arg6[%c0_80, %c0_81] : memref<128x512xbf16, #tpu.memory_space<vmem>>, vector<128x512xbf16>
    %146 = arith.truncf %143 : vector<8x128xf32> to vector<8x128xbf16>
    %cst_82 = arith.constant dense<0.000000e+00> : vector<8x512xf32>
    %147 = tpu.matmul %146, %145, %cst_82 {dimension_numbers = #tpu.dot_dimension_numbers<[1], [0], [0], [1], [0, 0, 1, 1], [], []>} : vector<8x128xbf16>, vector<128x512xbf16>, vector<8x512xf32> -> vector<8x512xf32>
    %148 = arith.addf %142, %147 : vector<8x512xf32>
    %149 = vector.extract_strided_slice %148 {offsets = [0, 0], sizes = [8, 384], strides = [1, 1]} : vector<8x512xf32> to vector<8x384xf32>
    %150 = arith.negf %149 : vector<8x384xf32>
    %151 = math.exp %150 : vector<8x384xf32>
    %cst_83 = arith.constant 1.000000e+00 : f32
    %152 = vector.broadcast %cst_83 : f32 to vector<8x384xf32>
    %153 = arith.addf %152, %151 : vector<8x384xf32>
    %154 = arith.divf %152, %153 : vector<8x384xf32>
    %155 = vector.extract_strided_slice %154 {offsets = [0, 0], sizes = [8, 128], strides = [1, 1]} : vector<8x384xf32> to vector<8x128xf32>
    %156 = vector.extract_strided_slice %154 {offsets = [0, 128], sizes = [8, 128], strides = [1, 1]} : vector<8x384xf32> to vector<8x128xf32>
    %157 = vector.extract_strided_slice %154 {offsets = [0, 256], sizes = [8, 128], strides = [1, 1]} : vector<8x384xf32> to vector<8x128xf32>
    %158 = vector.extract_strided_slice %148 {offsets = [0, 384], sizes = [8, 128], strides = [1, 1]} : vector<8x512xf32> to vector<8x128xf32>
    %159 = math.tanh %158 : vector<8x128xf32>
    %160 = arith.mulf %156, %144 : vector<8x128xf32>
    %161 = arith.mulf %155, %159 : vector<8x128xf32>
    %162 = arith.addf %160, %161 : vector<8x128xf32>
    %163 = math.tanh %162 : vector<8x128xf32>
    %164 = arith.mulf %157, %163 : vector<8x128xf32>
    %c0_84 = arith.constant 0 : index
    %c0_85 = arith.constant 0 : index
    %165 = vector.load %arg11[%c0_84, %c0_85] : memref<8x128xf32, #tpu.memory_space<vmem>>, vector<8x128xf32>
    tpu.vector_store %arg11[%c0_84, %c0_85], %141 {strides = array<i32>} : memref<8x128xf32, #tpu.memory_space<vmem>>, vector<8x128xf32>,
    %c0_86 = arith.constant 0 : index
    %c0_87 = arith.constant 0 : index
    %166 = vector.load %arg12[%c0_86, %c0_87] : memref<8x128xf32, #tpu.memory_space<vmem>>, vector<8x128xf32>
    tpu.vector_store %arg12[%c0_86, %c0_87], %139 {strides = array<i32>} : memref<8x128xf32, #tpu.memory_space<vmem>>, vector<8x128xf32>,
    %c0_88 = arith.constant 0 : index
    %c0_89 = arith.constant 0 : index
    %167 = vector.load %arg14[%c0_88, %c0_89] : memref<8x128xf32, #tpu.memory_space<vmem>>, vector<8x128xf32>
    tpu.vector_store %arg14[%c0_88, %c0_89], %164 {strides = array<i32>} : memref<8x128xf32, #tpu.memory_space<vmem>>, vector<8x128xf32>,
    %c0_90 = arith.constant 0 : index
    %c0_91 = arith.constant 0 : index
    %168 = vector.load %arg15[%c0_90, %c0_91] : memref<8x128xf32, #tpu.memory_space<vmem>>, vector<8x128xf32>
    tpu.vector_store %arg15[%c0_90, %c0_91], %162 {strides = array<i32>} : memref<8x128xf32, #tpu.memory_space<vmem>>, vector<8x128xf32>,
    %169 = arith.index_cast %c2_i32 : i32 to index
    %c0_92 = arith.constant 0 : index
    %c0_93 = arith.constant 0 : index
    %170 = vector.load %arg8[%169, %c0_92, %c0_93] : memref<8x8x128xf32, #tpu.memory_space<vmem>>, vector<1x8x128xf32>
    %171 = vector.shape_cast %170 : vector<1x8x128xf32> to vector<8x128xf32>
    %172 = vector.shape_cast %141 : vector<8x128xf32> to vector<1x8x128xf32>
    tpu.vector_store %arg8[%169, %c0_92, %c0_93], %172 {strides = array<i32>} : memref<8x8x128xf32, #tpu.memory_space<vmem>>, vector<1x8x128xf32>,
    %173 = arith.index_cast %c2_i32 : i32 to index
    %c0_94 = arith.constant 0 : index
    %c0_95 = arith.constant 0 : index
    %174 = vector.load %arg9[%173, %c0_94, %c0_95] : memref<8x8x128xf32, #tpu.memory_space<vmem>>, vector<1x8x128xf32>
    %175 = vector.shape_cast %174 : vector<1x8x128xf32> to vector<8x128xf32>
    %176 = vector.shape_cast %164 : vector<8x128xf32> to vector<1x8x128xf32>
    tpu.vector_store %arg9[%173, %c0_94, %c0_95], %176 {strides = array<i32>} : memref<8x8x128xf32, #tpu.memory_space<vmem>>, vector<1x8x128xf32>,
    %c3_i32 = arith.constant 3 : i32
    %c0_96 = arith.constant 0 : index
    %c0_97 = arith.constant 0 : index
    %177 = vector.load %arg10[%c0_96, %c0_97] : memref<8x512xf32, #tpu.memory_space<vmem>>, vector<8x512xf32>
    %c0_98 = arith.constant 0 : index
    %c0_99 = arith.constant 0 : index
    %178 = vector.load %arg11[%c0_98, %c0_99] : memref<8x128xf32, #tpu.memory_space<vmem>>, vector<8x128xf32>
    %c0_100 = arith.constant 0 : index
    %c0_101 = arith.constant 0 : index
    %179 = vector.load %arg12[%c0_100, %c0_101] : memref<8x128xf32, #tpu.memory_space<vmem>>, vector<8x128xf32>
    %c0_102 = arith.constant 0 : index
    %c0_103 = arith.constant 0 : index
    %180 = vector.load %arg3[%c0_102, %c0_103] : memref<128x512xbf16, #tpu.memory_space<vmem>>, vector<128x512xbf16>
    %181 = arith.truncf %178 : vector<8x128xf32> to vector<8x128xbf16>
    %cst_104 = arith.constant dense<0.000000e+00> : vector<8x512xf32>
    %182 = tpu.matmul %181, %180, %cst_104 {dimension_numbers = #tpu.dot_dimension_numbers<[1], [0], [0], [1], [0, 0, 1, 1], [], []>} : vector<8x128xbf16>, vector<128x512xbf16>, vector<8x512xf32> -> vector<8x512xf32>
    %183 = arith.addf %177, %182 : vector<8x512xf32>
    %184 = vector.extract_strided_slice %183 {offsets = [0, 0], sizes = [8, 384], strides = [1, 1]} : vector<8x512xf32> to vector<8x384xf32>
    %185 = arith.negf %184 : vector<8x384xf32>
    %186 = math.exp %185 : vector<8x384xf32>
    %cst_105 = arith.constant 1.000000e+00 : f32
    %187 = vector.broadcast %cst_105 : f32 to vector<8x384xf32>
    %188 = arith.addf %187, %186 : vector<8x384xf32>
    %189 = arith.divf %187, %188 : vector<8x384xf32>
    %190 = vector.extract_strided_slice %189 {offsets = [0, 0], sizes = [8, 128], strides = [1, 1]} : vector<8x384xf32> to vector<8x128xf32>
    %191 = vector.extract_strided_slice %189 {offsets = [0, 128], sizes = [8, 128], strides = [1, 1]} : vector<8x384xf32> to vector<8x128xf32>
    %192 = vector.extract_strided_slice %189 {offsets = [0, 256], sizes = [8, 128], strides = [1, 1]} : vector<8x384xf32> to vector<8x128xf32>
    %193 = vector.extract_strided_slice %183 {offsets = [0, 384], sizes = [8, 128], strides = [1, 1]} : vector<8x512xf32> to vector<8x128xf32>
    %194 = math.tanh %193 : vector<8x128xf32>
    %195 = arith.mulf %191, %179 : vector<8x128xf32>
    %196 = arith.mulf %190, %194 : vector<8x128xf32>
    %197 = arith.addf %195, %196 : vector<8x128xf32>
    %198 = math.tanh %197 : vector<8x128xf32>
    %199 = arith.mulf %192, %198 : vector<8x128xf32>
    %c0_106 = arith.constant 0 : index
    %c0_107 = arith.constant 0 : index
    %200 = vector.load %arg13[%c0_106, %c0_107] : memref<8x512xf32, #tpu.memory_space<vmem>>, vector<8x512xf32>
    %c0_108 = arith.constant 0 : index
    %c0_109 = arith.constant 0 : index
    %201 = vector.load %arg14[%c0_108, %c0_109] : memref<8x128xf32, #tpu.memory_space<vmem>>, vector<8x128xf32>
    %c0_110 = arith.constant 0 : index
    %c0_111 = arith.constant 0 : index
    %202 = vector.load %arg15[%c0_110, %c0_111] : memref<8x128xf32, #tpu.memory_space<vmem>>, vector<8x128xf32>
    %c0_112 = arith.constant 0 : index
    %c0_113 = arith.constant 0 : index
    %203 = vector.load %arg6[%c0_112, %c0_113] : memref<128x512xbf16, #tpu.memory_space<vmem>>, vector<128x512xbf16>
    %204 = arith.truncf %201 : vector<8x128xf32> to vector<8x128xbf16>
    %cst_114 = arith.constant dense<0.000000e+00> : vector<8x512xf32>
    %205 = tpu.matmul %204, %203, %cst_114 {dimension_numbers = #tpu.dot_dimension_numbers<[1], [0], [0], [1], [0, 0, 1, 1], [], []>} : vector<8x128xbf16>, vector<128x512xbf16>, vector<8x512xf32> -> vector<8x512xf32>
    %206 = arith.addf %200, %205 : vector<8x512xf32>
    %207 = vector.extract_strided_slice %206 {offsets = [0, 0], sizes = [8, 384], strides = [1, 1]} : vector<8x512xf32> to vector<8x384xf32>
    %208 = arith.negf %207 : vector<8x384xf32>
    %209 = math.exp %208 : vector<8x384xf32>
    %cst_115 = arith.constant 1.000000e+00 : f32
    %210 = vector.broadcast %cst_115 : f32 to vector<8x384xf32>
    %211 = arith.addf %210, %209 : vector<8x384xf32>
    %212 = arith.divf %210, %211 : vector<8x384xf32>
    %213 = vector.extract_strided_slice %212 {offsets = [0, 0], sizes = [8, 128], strides = [1, 1]} : vector<8x384xf32> to vector<8x128xf32>
    %214 = vector.extract_strided_slice %212 {offsets = [0, 128], sizes = [8, 128], strides = [1, 1]} : vector<8x384xf32> to vector<8x128xf32>
    %215 = vector.extract_strided_slice %212 {offsets = [0, 256], sizes = [8, 128], strides = [1, 1]} : vector<8x384xf32> to vector<8x128xf32>
    %216 = vector.extract_strided_slice %206 {offsets = [0, 384], sizes = [8, 128], strides = [1, 1]} : vector<8x512xf32> to vector<8x128xf32>
    %217 = math.tanh %216 : vector<8x128xf32>
    %218 = arith.mulf %214, %202 : vector<8x128xf32>
    %219 = arith.mulf %213, %217 : vector<8x128xf32>
    %220 = arith.addf %218, %219 : vector<8x128xf32>
    %221 = math.tanh %220 : vector<8x128xf32>
    %222 = arith.mulf %215, %221 : vector<8x128xf32>
    %c0_116 = arith.constant 0 : index
    %c0_117 = arith.constant 0 : index
    %223 = vector.load %arg11[%c0_116, %c0_117] : memref<8x128xf32, #tpu.memory_space<vmem>>, vector<8x128xf32>
    tpu.vector_store %arg11[%c0_116, %c0_117], %199 {strides = array<i32>} : memref<8x128xf32, #tpu.memory_space<vmem>>, vector<8x128xf32>,
    %c0_118 = arith.constant 0 : index
    %c0_119 = arith.constant 0 : index
    %224 = vector.load %arg12[%c0_118, %c0_119] : memref<8x128xf32, #tpu.memory_space<vmem>>, vector<8x128xf32>
    tpu.vector_store %arg12[%c0_118, %c0_119], %197 {strides = array<i32>} : memref<8x128xf32, #tpu.memory_space<vmem>>, vector<8x128xf32>,
    %c0_120 = arith.constant 0 : index
    %c0_121 = arith.constant 0 : index
    %225 = vector.load %arg14[%c0_120, %c0_121] : memref<8x128xf32, #tpu.memory_space<vmem>>, vector<8x128xf32>
    tpu.vector_store %arg14[%c0_120, %c0_121], %222 {strides = array<i32>} : memref<8x128xf32, #tpu.memory_space<vmem>>, vector<8x128xf32>,
    %c0_122 = arith.constant 0 : index
    %c0_123 = arith.constant 0 : index
    %226 = vector.load %arg15[%c0_122, %c0_123] : memref<8x128xf32, #tpu.memory_space<vmem>>, vector<8x128xf32>
    tpu.vector_store %arg15[%c0_122, %c0_123], %220 {strides = array<i32>} : memref<8x128xf32, #tpu.memory_space<vmem>>, vector<8x128xf32>,
    %227 = arith.index_cast %c3_i32 : i32 to index
    %c0_124 = arith.constant 0 : index
    %c0_125 = arith.constant 0 : index
    %228 = vector.load %arg8[%227, %c0_124, %c0_125] : memref<8x8x128xf32, #tpu.memory_space<vmem>>, vector<1x8x128xf32>
    %229 = vector.shape_cast %228 : vector<1x8x128xf32> to vector<8x128xf32>
    %230 = vector.shape_cast %199 : vector<8x128xf32> to vector<1x8x128xf32>
    tpu.vector_store %arg8[%227, %c0_124, %c0_125], %230 {strides = array<i32>} : memref<8x8x128xf32, #tpu.memory_space<vmem>>, vector<1x8x128xf32>,
    %231 = arith.index_cast %c3_i32 : i32 to index
    %c0_126 = arith.constant 0 : index
    %c0_127 = arith.constant 0 : index
    %232 = vector.load %arg9[%231, %c0_126, %c0_127] : memref<8x8x128xf32, #tpu.memory_space<vmem>>, vector<1x8x128xf32>
    %233 = vector.shape_cast %232 : vector<1x8x128xf32> to vector<8x128xf32>
    %234 = vector.shape_cast %222 : vector<8x128xf32> to vector<1x8x128xf32>
    tpu.vector_store %arg9[%231, %c0_126, %c0_127], %234 {strides = array<i32>} : memref<8x8x128xf32, #tpu.memory_space<vmem>>, vector<1x8x128xf32>,
    %c4_i32 = arith.constant 4 : i32
    %c0_128 = arith.constant 0 : index
    %c0_129 = arith.constant 0 : index
    %235 = vector.load %arg10[%c0_128, %c0_129] : memref<8x512xf32, #tpu.memory_space<vmem>>, vector<8x512xf32>
    %c0_130 = arith.constant 0 : index
    %c0_131 = arith.constant 0 : index
    %236 = vector.load %arg11[%c0_130, %c0_131] : memref<8x128xf32, #tpu.memory_space<vmem>>, vector<8x128xf32>
    %c0_132 = arith.constant 0 : index
    %c0_133 = arith.constant 0 : index
    %237 = vector.load %arg12[%c0_132, %c0_133] : memref<8x128xf32, #tpu.memory_space<vmem>>, vector<8x128xf32>
    %c0_134 = arith.constant 0 : index
    %c0_135 = arith.constant 0 : index
    %238 = vector.load %arg3[%c0_134, %c0_135] : memref<128x512xbf16, #tpu.memory_space<vmem>>, vector<128x512xbf16>
    %239 = arith.truncf %236 : vector<8x128xf32> to vector<8x128xbf16>
    %cst_136 = arith.constant dense<0.000000e+00> : vector<8x512xf32>
    %240 = tpu.matmul %239, %238, %cst_136 {dimension_numbers = #tpu.dot_dimension_numbers<[1], [0], [0], [1], [0, 0, 1, 1], [], []>} : vector<8x128xbf16>, vector<128x512xbf16>, vector<8x512xf32> -> vector<8x512xf32>
    %241 = arith.addf %235, %240 : vector<8x512xf32>
    %242 = vector.extract_strided_slice %241 {offsets = [0, 0], sizes = [8, 384], strides = [1, 1]} : vector<8x512xf32> to vector<8x384xf32>
    %243 = arith.negf %242 : vector<8x384xf32>
    %244 = math.exp %243 : vector<8x384xf32>
    %cst_137 = arith.constant 1.000000e+00 : f32
    %245 = vector.broadcast %cst_137 : f32 to vector<8x384xf32>
    %246 = arith.addf %245, %244 : vector<8x384xf32>
    %247 = arith.divf %245, %246 : vector<8x384xf32>
    %248 = vector.extract_strided_slice %247 {offsets = [0, 0], sizes = [8, 128], strides = [1, 1]} : vector<8x384xf32> to vector<8x128xf32>
    %249 = vector.extract_strided_slice %247 {offsets = [0, 128], sizes = [8, 128], strides = [1, 1]} : vector<8x384xf32> to vector<8x128xf32>
    %250 = vector.extract_strided_slice %247 {offsets = [0, 256], sizes = [8, 128], strides = [1, 1]} : vector<8x384xf32> to vector<8x128xf32>
    %251 = vector.extract_strided_slice %241 {offsets = [0, 384], sizes = [8, 128], strides = [1, 1]} : vector<8x512xf32> to vector<8x128xf32>
    %252 = math.tanh %251 : vector<8x128xf32>
    %253 = arith.mulf %249, %237 : vector<8x128xf32>
    %254 = arith.mulf %248, %252 : vector<8x128xf32>
    %255 = arith.addf %253, %254 : vector<8x128xf32>
    %256 = math.tanh %255 : vector<8x128xf32>
    %257 = arith.mulf %250, %256 : vector<8x128xf32>
    %c0_138 = arith.constant 0 : index
    %c0_139 = arith.constant 0 : index
    %258 = vector.load %arg13[%c0_138, %c0_139] : memref<8x512xf32, #tpu.memory_space<vmem>>, vector<8x512xf32>
    %c0_140 = arith.constant 0 : index
    %c0_141 = arith.constant 0 : index
    %259 = vector.load %arg14[%c0_140, %c0_141] : memref<8x128xf32, #tpu.memory_space<vmem>>, vector<8x128xf32>
    %c0_142 = arith.constant 0 : index
    %c0_143 = arith.constant 0 : index
    %260 = vector.load %arg15[%c0_142, %c0_143] : memref<8x128xf32, #tpu.memory_space<vmem>>, vector<8x128xf32>
    %c0_144 = arith.constant 0 : index
    %c0_145 = arith.constant 0 : index
    %261 = vector.load %arg6[%c0_144, %c0_145] : memref<128x512xbf16, #tpu.memory_space<vmem>>, vector<128x512xbf16>
    %262 = arith.truncf %259 : vector<8x128xf32> to vector<8x128xbf16>
    %cst_146 = arith.constant dense<0.000000e+00> : vector<8x512xf32>
    %263 = tpu.matmul %262, %261, %cst_146 {dimension_numbers = #tpu.dot_dimension_numbers<[1], [0], [0], [1], [0, 0, 1, 1], [], []>} : vector<8x128xbf16>, vector<128x512xbf16>, vector<8x512xf32> -> vector<8x512xf32>
    %264 = arith.addf %258, %263 : vector<8x512xf32>
    %265 = vector.extract_strided_slice %264 {offsets = [0, 0], sizes = [8, 384], strides = [1, 1]} : vector<8x512xf32> to vector<8x384xf32>
    %266 = arith.negf %265 : vector<8x384xf32>
    %267 = math.exp %266 : vector<8x384xf32>
    %cst_147 = arith.constant 1.000000e+00 : f32
    %268 = vector.broadcast %cst_147 : f32 to vector<8x384xf32>
    %269 = arith.addf %268, %267 : vector<8x384xf32>
    %270 = arith.divf %268, %269 : vector<8x384xf32>
    %271 = vector.extract_strided_slice %270 {offsets = [0, 0], sizes = [8, 128], strides = [1, 1]} : vector<8x384xf32> to vector<8x128xf32>
    %272 = vector.extract_strided_slice %270 {offsets = [0, 128], sizes = [8, 128], strides = [1, 1]} : vector<8x384xf32> to vector<8x128xf32>
    %273 = vector.extract_strided_slice %270 {offsets = [0, 256], sizes = [8, 128], strides = [1, 1]} : vector<8x384xf32> to vector<8x128xf32>
    %274 = vector.extract_strided_slice %264 {offsets = [0, 384], sizes = [8, 128], strides = [1, 1]} : vector<8x512xf32> to vector<8x128xf32>
    %275 = math.tanh %274 : vector<8x128xf32>
    %276 = arith.mulf %272, %260 : vector<8x128xf32>
    %277 = arith.mulf %271, %275 : vector<8x128xf32>
    %278 = arith.addf %276, %277 : vector<8x128xf32>
    %279 = math.tanh %278 : vector<8x128xf32>
    %280 = arith.mulf %273, %279 : vector<8x128xf32>
    %c0_148 = arith.constant 0 : index
    %c0_149 = arith.constant 0 : index
    %281 = vector.load %arg11[%c0_148, %c0_149] : memref<8x128xf32, #tpu.memory_space<vmem>>, vector<8x128xf32>
    tpu.vector_store %arg11[%c0_148, %c0_149], %257 {strides = array<i32>} : memref<8x128xf32, #tpu.memory_space<vmem>>, vector<8x128xf32>,
    %c0_150 = arith.constant 0 : index
    %c0_151 = arith.constant 0 : index
    %282 = vector.load %arg12[%c0_150, %c0_151] : memref<8x128xf32, #tpu.memory_space<vmem>>, vector<8x128xf32>
    tpu.vector_store %arg12[%c0_150, %c0_151], %255 {strides = array<i32>} : memref<8x128xf32, #tpu.memory_space<vmem>>, vector<8x128xf32>,
    %c0_152 = arith.constant 0 : index
    %c0_153 = arith.constant 0 : index
    %283 = vector.load %arg14[%c0_152, %c0_153] : memref<8x128xf32, #tpu.memory_space<vmem>>, vector<8x128xf32>
    tpu.vector_store %arg14[%c0_152, %c0_153], %280 {strides = array<i32>} : memref<8x128xf32, #tpu.memory_space<vmem>>, vector<8x128xf32>,
    %c0_154 = arith.constant 0 : index
    %c0_155 = arith.constant 0 : index
    %284 = vector.load %arg15[%c0_154, %c0_155] : memref<8x128xf32, #tpu.memory_space<vmem>>, vector<8x128xf32>
    tpu.vector_store %arg15[%c0_154, %c0_155], %278 {strides = array<i32>} : memref<8x128xf32, #tpu.memory_space<vmem>>, vector<8x128xf32>,
    %285 = arith.index_cast %c4_i32 : i32 to index
    %c0_156 = arith.constant 0 : index
    %c0_157 = arith.constant 0 : index
    %286 = vector.load %arg8[%285, %c0_156, %c0_157] : memref<8x8x128xf32, #tpu.memory_space<vmem>>, vector<1x8x128xf32>
    %287 = vector.shape_cast %286 : vector<1x8x128xf32> to vector<8x128xf32>
    %288 = vector.shape_cast %257 : vector<8x128xf32> to vector<1x8x128xf32>
    tpu.vector_store %arg8[%285, %c0_156, %c0_157], %288 {strides = array<i32>} : memref<8x8x128xf32, #tpu.memory_space<vmem>>, vector<1x8x128xf32>,
    %289 = arith.index_cast %c4_i32 : i32 to index
    %c0_158 = arith.constant 0 : index
    %c0_159 = arith.constant 0 : index
    %290 = vector.load %arg9[%289, %c0_158, %c0_159] : memref<8x8x128xf32, #tpu.memory_space<vmem>>, vector<1x8x128xf32>
    %291 = vector.shape_cast %290 : vector<1x8x128xf32> to vector<8x128xf32>
    %292 = vector.shape_cast %280 : vector<8x128xf32> to vector<1x8x128xf32>
    tpu.vector_store %arg9[%289, %c0_158, %c0_159], %292 {strides = array<i32>} : memref<8x8x128xf32, #tpu.memory_space<vmem>>, vector<1x8x128xf32>,
    %c5_i32 = arith.constant 5 : i32
    %c0_160 = arith.constant 0 : index
    %c0_161 = arith.constant 0 : index
    %293 = vector.load %arg10[%c0_160, %c0_161] : memref<8x512xf32, #tpu.memory_space<vmem>>, vector<8x512xf32>
    %c0_162 = arith.constant 0 : index
    %c0_163 = arith.constant 0 : index
    %294 = vector.load %arg11[%c0_162, %c0_163] : memref<8x128xf32, #tpu.memory_space<vmem>>, vector<8x128xf32>
    %c0_164 = arith.constant 0 : index
    %c0_165 = arith.constant 0 : index
    %295 = vector.load %arg12[%c0_164, %c0_165] : memref<8x128xf32, #tpu.memory_space<vmem>>, vector<8x128xf32>
    %c0_166 = arith.constant 0 : index
    %c0_167 = arith.constant 0 : index
    %296 = vector.load %arg3[%c0_166, %c0_167] : memref<128x512xbf16, #tpu.memory_space<vmem>>, vector<128x512xbf16>
    %297 = arith.truncf %294 : vector<8x128xf32> to vector<8x128xbf16>
    %cst_168 = arith.constant dense<0.000000e+00> : vector<8x512xf32>
    %298 = tpu.matmul %297, %296, %cst_168 {dimension_numbers = #tpu.dot_dimension_numbers<[1], [0], [0], [1], [0, 0, 1, 1], [], []>} : vector<8x128xbf16>, vector<128x512xbf16>, vector<8x512xf32> -> vector<8x512xf32>
    %299 = arith.addf %293, %298 : vector<8x512xf32>
    %300 = vector.extract_strided_slice %299 {offsets = [0, 0], sizes = [8, 384], strides = [1, 1]} : vector<8x512xf32> to vector<8x384xf32>
    %301 = arith.negf %300 : vector<8x384xf32>
    %302 = math.exp %301 : vector<8x384xf32>
    %cst_169 = arith.constant 1.000000e+00 : f32
    %303 = vector.broadcast %cst_169 : f32 to vector<8x384xf32>
    %304 = arith.addf %303, %302 : vector<8x384xf32>
    %305 = arith.divf %303, %304 : vector<8x384xf32>
    %306 = vector.extract_strided_slice %305 {offsets = [0, 0], sizes = [8, 128], strides = [1, 1]} : vector<8x384xf32> to vector<8x128xf32>
    %307 = vector.extract_strided_slice %305 {offsets = [0, 128], sizes = [8, 128], strides = [1, 1]} : vector<8x384xf32> to vector<8x128xf32>
    %308 = vector.extract_strided_slice %305 {offsets = [0, 256], sizes = [8, 128], strides = [1, 1]} : vector<8x384xf32> to vector<8x128xf32>
    %309 = vector.extract_strided_slice %299 {offsets = [0, 384], sizes = [8, 128], strides = [1, 1]} : vector<8x512xf32> to vector<8x128xf32>
    %310 = math.tanh %309 : vector<8x128xf32>
    %311 = arith.mulf %307, %295 : vector<8x128xf32>
    %312 = arith.mulf %306, %310 : vector<8x128xf32>
    %313 = arith.addf %311, %312 : vector<8x128xf32>
    %314 = math.tanh %313 : vector<8x128xf32>
    %315 = arith.mulf %308, %314 : vector<8x128xf32>
    %c0_170 = arith.constant 0 : index
    %c0_171 = arith.constant 0 : index
    %316 = vector.load %arg13[%c0_170, %c0_171] : memref<8x512xf32, #tpu.memory_space<vmem>>, vector<8x512xf32>
    %c0_172 = arith.constant 0 : index
    %c0_173 = arith.constant 0 : index
    %317 = vector.load %arg14[%c0_172, %c0_173] : memref<8x128xf32, #tpu.memory_space<vmem>>, vector<8x128xf32>
    %c0_174 = arith.constant 0 : index
    %c0_175 = arith.constant 0 : index
    %318 = vector.load %arg15[%c0_174, %c0_175] : memref<8x128xf32, #tpu.memory_space<vmem>>, vector<8x128xf32>
    %c0_176 = arith.constant 0 : index
    %c0_177 = arith.constant 0 : index
    %319 = vector.load %arg6[%c0_176, %c0_177] : memref<128x512xbf16, #tpu.memory_space<vmem>>, vector<128x512xbf16>
    %320 = arith.truncf %317 : vector<8x128xf32> to vector<8x128xbf16>
    %cst_178 = arith.constant dense<0.000000e+00> : vector<8x512xf32>
    %321 = tpu.matmul %320, %319, %cst_178 {dimension_numbers = #tpu.dot_dimension_numbers<[1], [0], [0], [1], [0, 0, 1, 1], [], []>} : vector<8x128xbf16>, vector<128x512xbf16>, vector<8x512xf32> -> vector<8x512xf32>
    %322 = arith.addf %316, %321 : vector<8x512xf32>
    %323 = vector.extract_strided_slice %322 {offsets = [0, 0], sizes = [8, 384], strides = [1, 1]} : vector<8x512xf32> to vector<8x384xf32>
    %324 = arith.negf %323 : vector<8x384xf32>
    %325 = math.exp %324 : vector<8x384xf32>
    %cst_179 = arith.constant 1.000000e+00 : f32
    %326 = vector.broadcast %cst_179 : f32 to vector<8x384xf32>
    %327 = arith.addf %326, %325 : vector<8x384xf32>
    %328 = arith.divf %326, %327 : vector<8x384xf32>
    %329 = vector.extract_strided_slice %328 {offsets = [0, 0], sizes = [8, 128], strides = [1, 1]} : vector<8x384xf32> to vector<8x128xf32>
    %330 = vector.extract_strided_slice %328 {offsets = [0, 128], sizes = [8, 128], strides = [1, 1]} : vector<8x384xf32> to vector<8x128xf32>
    %331 = vector.extract_strided_slice %328 {offsets = [0, 256], sizes = [8, 128], strides = [1, 1]} : vector<8x384xf32> to vector<8x128xf32>
    %332 = vector.extract_strided_slice %322 {offsets = [0, 384], sizes = [8, 128], strides = [1, 1]} : vector<8x512xf32> to vector<8x128xf32>
    %333 = math.tanh %332 : vector<8x128xf32>
    %334 = arith.mulf %330, %318 : vector<8x128xf32>
    %335 = arith.mulf %329, %333 : vector<8x128xf32>
    %336 = arith.addf %334, %335 : vector<8x128xf32>
    %337 = math.tanh %336 : vector<8x128xf32>
    %338 = arith.mulf %331, %337 : vector<8x128xf32>
    %c0_180 = arith.constant 0 : index
    %c0_181 = arith.constant 0 : index
    %339 = vector.load %arg11[%c0_180, %c0_181] : memref<8x128xf32, #tpu.memory_space<vmem>>, vector<8x128xf32>
    tpu.vector_store %arg11[%c0_180, %c0_181], %315 {strides = array<i32>} : memref<8x128xf32, #tpu.memory_space<vmem>>, vector<8x128xf32>,
    %c0_182 = arith.constant 0 : index
    %c0_183 = arith.constant 0 : index
    %340 = vector.load %arg12[%c0_182, %c0_183] : memref<8x128xf32, #tpu.memory_space<vmem>>, vector<8x128xf32>
    tpu.vector_store %arg12[%c0_182, %c0_183], %313 {strides = array<i32>} : memref<8x128xf32, #tpu.memory_space<vmem>>, vector<8x128xf32>,
    %c0_184 = arith.constant 0 : index
    %c0_185 = arith.constant 0 : index
    %341 = vector.load %arg14[%c0_184, %c0_185] : memref<8x128xf32, #tpu.memory_space<vmem>>, vector<8x128xf32>
    tpu.vector_store %arg14[%c0_184, %c0_185], %338 {strides = array<i32>} : memref<8x128xf32, #tpu.memory_space<vmem>>, vector<8x128xf32>,
    %c0_186 = arith.constant 0 : index
    %c0_187 = arith.constant 0 : index
    %342 = vector.load %arg15[%c0_186, %c0_187] : memref<8x128xf32, #tpu.memory_space<vmem>>, vector<8x128xf32>
    tpu.vector_store %arg15[%c0_186, %c0_187], %336 {strides = array<i32>} : memref<8x128xf32, #tpu.memory_space<vmem>>, vector<8x128xf32>,
    %343 = arith.index_cast %c5_i32 : i32 to index
    %c0_188 = arith.constant 0 : index
    %c0_189 = arith.constant 0 : index
    %344 = vector.load %arg8[%343, %c0_188, %c0_189] : memref<8x8x128xf32, #tpu.memory_space<vmem>>, vector<1x8x128xf32>
    %345 = vector.shape_cast %344 : vector<1x8x128xf32> to vector<8x128xf32>
    %346 = vector.shape_cast %315 : vector<8x128xf32> to vector<1x8x128xf32>
    tpu.vector_store %arg8[%343, %c0_188, %c0_189], %346 {strides = array<i32>} : memref<8x8x128xf32, #tpu.memory_space<vmem>>, vector<1x8x128xf32>,
    %347 = arith.index_cast %c5_i32 : i32 to index
    %c0_190 = arith.constant 0 : index
    %c0_191 = arith.constant 0 : index
    %348 = vector.load %arg9[%347, %c0_190, %c0_191] : memref<8x8x128xf32, #tpu.memory_space<vmem>>, vector<1x8x128xf32>
    %349 = vector.shape_cast %348 : vector<1x8x128xf32> to vector<8x128xf32>
    %350 = vector.shape_cast %338 : vector<8x128xf32> to vector<1x8x128xf32>
    tpu.vector_store %arg9[%347, %c0_190, %c0_191], %350 {strides = array<i32>} : memref<8x8x128xf32, #tpu.memory_space<vmem>>, vector<1x8x128xf32>,
    %c6_i32 = arith.constant 6 : i32
    %c0_192 = arith.constant 0 : index
    %c0_193 = arith.constant 0 : index
    %351 = vector.load %arg10[%c0_192, %c0_193] : memref<8x512xf32, #tpu.memory_space<vmem>>, vector<8x512xf32>
    %c0_194 = arith.constant 0 : index
    %c0_195 = arith.constant 0 : index
    %352 = vector.load %arg11[%c0_194, %c0_195] : memref<8x128xf32, #tpu.memory_space<vmem>>, vector<8x128xf32>
    %c0_196 = arith.constant 0 : index
    %c0_197 = arith.constant 0 : index
    %353 = vector.load %arg12[%c0_196, %c0_197] : memref<8x128xf32, #tpu.memory_space<vmem>>, vector<8x128xf32>
    %c0_198 = arith.constant 0 : index
    %c0_199 = arith.constant 0 : index
    %354 = vector.load %arg3[%c0_198, %c0_199] : memref<128x512xbf16, #tpu.memory_space<vmem>>, vector<128x512xbf16>
    %355 = arith.truncf %352 : vector<8x128xf32> to vector<8x128xbf16>
    %cst_200 = arith.constant dense<0.000000e+00> : vector<8x512xf32>
    %356 = tpu.matmul %355, %354, %cst_200 {dimension_numbers = #tpu.dot_dimension_numbers<[1], [0], [0], [1], [0, 0, 1, 1], [], []>} : vector<8x128xbf16>, vector<128x512xbf16>, vector<8x512xf32> -> vector<8x512xf32>
    %357 = arith.addf %351, %356 : vector<8x512xf32>
    %358 = vector.extract_strided_slice %357 {offsets = [0, 0], sizes = [8, 384], strides = [1, 1]} : vector<8x512xf32> to vector<8x384xf32>
    %359 = arith.negf %358 : vector<8x384xf32>
    %360 = math.exp %359 : vector<8x384xf32>
    %cst_201 = arith.constant 1.000000e+00 : f32
    %361 = vector.broadcast %cst_201 : f32 to vector<8x384xf32>
    %362 = arith.addf %361, %360 : vector<8x384xf32>
    %363 = arith.divf %361, %362 : vector<8x384xf32>
    %364 = vector.extract_strided_slice %363 {offsets = [0, 0], sizes = [8, 128], strides = [1, 1]} : vector<8x384xf32> to vector<8x128xf32>
    %365 = vector.extract_strided_slice %363 {offsets = [0, 128], sizes = [8, 128], strides = [1, 1]} : vector<8x384xf32> to vector<8x128xf32>
    %366 = vector.extract_strided_slice %363 {offsets = [0, 256], sizes = [8, 128], strides = [1, 1]} : vector<8x384xf32> to vector<8x128xf32>
    %367 = vector.extract_strided_slice %357 {offsets = [0, 384], sizes = [8, 128], strides = [1, 1]} : vector<8x512xf32> to vector<8x128xf32>
    %368 = math.tanh %367 : vector<8x128xf32>
    %369 = arith.mulf %365, %353 : vector<8x128xf32>
    %370 = arith.mulf %364, %368 : vector<8x128xf32>
    %371 = arith.addf %369, %370 : vector<8x128xf32>
    %372 = math.tanh %371 : vector<8x128xf32>
    %373 = arith.mulf %366, %372 : vector<8x128xf32>
    %c0_202 = arith.constant 0 : index
    %c0_203 = arith.constant 0 : index
    %374 = vector.load %arg13[%c0_202, %c0_203] : memref<8x512xf32, #tpu.memory_space<vmem>>, vector<8x512xf32>
    %c0_204 = arith.constant 0 : index
    %c0_205 = arith.constant 0 : index
    %375 = vector.load %arg14[%c0_204, %c0_205] : memref<8x128xf32, #tpu.memory_space<vmem>>, vector<8x128xf32>
    %c0_206 = arith.constant 0 : index
    %c0_207 = arith.constant 0 : index
    %376 = vector.load %arg15[%c0_206, %c0_207] : memref<8x128xf32, #tpu.memory_space<vmem>>, vector<8x128xf32>
    %c0_208 = arith.constant 0 : index
    %c0_209 = arith.constant 0 : index
    %377 = vector.load %arg6[%c0_208, %c0_209] : memref<128x512xbf16, #tpu.memory_space<vmem>>, vector<128x512xbf16>
    %378 = arith.truncf %375 : vector<8x128xf32> to vector<8x128xbf16>
    %cst_210 = arith.constant dense<0.000000e+00> : vector<8x512xf32>
    %379 = tpu.matmul %378, %377, %cst_210 {dimension_numbers = #tpu.dot_dimension_numbers<[1], [0], [0], [1], [0, 0, 1, 1], [], []>} : vector<8x128xbf16>, vector<128x512xbf16>, vector<8x512xf32> -> vector<8x512xf32>
    %380 = arith.addf %374, %379 : vector<8x512xf32>
    %381 = vector.extract_strided_slice %380 {offsets = [0, 0], sizes = [8, 384], strides = [1, 1]} : vector<8x512xf32> to vector<8x384xf32>
    %382 = arith.negf %381 : vector<8x384xf32>
    %383 = math.exp %382 : vector<8x384xf32>
    %cst_211 = arith.constant 1.000000e+00 : f32
    %384 = vector.broadcast %cst_211 : f32 to vector<8x384xf32>
    %385 = arith.addf %384, %383 : vector<8x384xf32>
    %386 = arith.divf %384, %385 : vector<8x384xf32>
    %387 = vector.extract_strided_slice %386 {offsets = [0, 0], sizes = [8, 128], strides = [1, 1]} : vector<8x384xf32> to vector<8x128xf32>
    %388 = vector.extract_strided_slice %386 {offsets = [0, 128], sizes = [8, 128], strides = [1, 1]} : vector<8x384xf32> to vector<8x128xf32>
    %389 = vector.extract_strided_slice %386 {offsets = [0, 256], sizes = [8, 128], strides = [1, 1]} : vector<8x384xf32> to vector<8x128xf32>
    %390 = vector.extract_strided_slice %380 {offsets = [0, 384], sizes = [8, 128], strides = [1, 1]} : vector<8x512xf32> to vector<8x128xf32>
    %391 = math.tanh %390 : vector<8x128xf32>
    %392 = arith.mulf %388, %376 : vector<8x128xf32>
    %393 = arith.mulf %387, %391 : vector<8x128xf32>
    %394 = arith.addf %392, %393 : vector<8x128xf32>
    %395 = math.tanh %394 : vector<8x128xf32>
    %396 = arith.mulf %389, %395 : vector<8x128xf32>
    %c0_212 = arith.constant 0 : index
    %c0_213 = arith.constant 0 : index
    %397 = vector.load %arg11[%c0_212, %c0_213] : memref<8x128xf32, #tpu.memory_space<vmem>>, vector<8x128xf32>
    tpu.vector_store %arg11[%c0_212, %c0_213], %373 {strides = array<i32>} : memref<8x128xf32, #tpu.memory_space<vmem>>, vector<8x128xf32>,
    %c0_214 = arith.constant 0 : index
    %c0_215 = arith.constant 0 : index
    %398 = vector.load %arg12[%c0_214, %c0_215] : memref<8x128xf32, #tpu.memory_space<vmem>>, vector<8x128xf32>
    tpu.vector_store %arg12[%c0_214, %c0_215], %371 {strides = array<i32>} : memref<8x128xf32, #tpu.memory_space<vmem>>, vector<8x128xf32>,
    %c0_216 = arith.constant 0 : index
    %c0_217 = arith.constant 0 : index
    %399 = vector.load %arg14[%c0_216, %c0_217] : memref<8x128xf32, #tpu.memory_space<vmem>>, vector<8x128xf32>
    tpu.vector_store %arg14[%c0_216, %c0_217], %396 {strides = array<i32>} : memref<8x128xf32, #tpu.memory_space<vmem>>, vector<8x128xf32>,
    %c0_218 = arith.constant 0 : index
    %c0_219 = arith.constant 0 : index
    %400 = vector.load %arg15[%c0_218, %c0_219] : memref<8x128xf32, #tpu.memory_space<vmem>>, vector<8x128xf32>
    tpu.vector_store %arg15[%c0_218, %c0_219], %394 {strides = array<i32>} : memref<8x128xf32, #tpu.memory_space<vmem>>, vector<8x128xf32>,
    %401 = arith.index_cast %c6_i32 : i32 to index
    %c0_220 = arith.constant 0 : index
    %c0_221 = arith.constant 0 : index
    %402 = vector.load %arg8[%401, %c0_220, %c0_221] : memref<8x8x128xf32, #tpu.memory_space<vmem>>, vector<1x8x128xf32>
    %403 = vector.shape_cast %402 : vector<1x8x128xf32> to vector<8x128xf32>
    %404 = vector.shape_cast %373 : vector<8x128xf32> to vector<1x8x128xf32>
    tpu.vector_store %arg8[%401, %c0_220, %c0_221], %404 {strides = array<i32>} : memref<8x8x128xf32, #tpu.memory_space<vmem>>, vector<1x8x128xf32>,
    %405 = arith.index_cast %c6_i32 : i32 to index
    %c0_222 = arith.constant 0 : index
    %c0_223 = arith.constant 0 : index
    %406 = vector.load %arg9[%405, %c0_222, %c0_223] : memref<8x8x128xf32, #tpu.memory_space<vmem>>, vector<1x8x128xf32>
    %407 = vector.shape_cast %406 : vector<1x8x128xf32> to vector<8x128xf32>
    %408 = vector.shape_cast %396 : vector<8x128xf32> to vector<1x8x128xf32>
    tpu.vector_store %arg9[%405, %c0_222, %c0_223], %408 {strides = array<i32>} : memref<8x8x128xf32, #tpu.memory_space<vmem>>, vector<1x8x128xf32>,
    %c7_i32 = arith.constant 7 : i32
    %c0_224 = arith.constant 0 : index
    %c0_225 = arith.constant 0 : index
    %409 = vector.load %arg10[%c0_224, %c0_225] : memref<8x512xf32, #tpu.memory_space<vmem>>, vector<8x512xf32>
    %c0_226 = arith.constant 0 : index
    %c0_227 = arith.constant 0 : index
    %410 = vector.load %arg11[%c0_226, %c0_227] : memref<8x128xf32, #tpu.memory_space<vmem>>, vector<8x128xf32>
    %c0_228 = arith.constant 0 : index
    %c0_229 = arith.constant 0 : index
    %411 = vector.load %arg12[%c0_228, %c0_229] : memref<8x128xf32, #tpu.memory_space<vmem>>, vector<8x128xf32>
    %c0_230 = arith.constant 0 : index
    %c0_231 = arith.constant 0 : index
    %412 = vector.load %arg3[%c0_230, %c0_231] : memref<128x512xbf16, #tpu.memory_space<vmem>>, vector<128x512xbf16>
    %413 = arith.truncf %410 : vector<8x128xf32> to vector<8x128xbf16>
    %cst_232 = arith.constant dense<0.000000e+00> : vector<8x512xf32>
    %414 = tpu.matmul %413, %412, %cst_232 {dimension_numbers = #tpu.dot_dimension_numbers<[1], [0], [0], [1], [0, 0, 1, 1], [], []>} : vector<8x128xbf16>, vector<128x512xbf16>, vector<8x512xf32> -> vector<8x512xf32>
    %415 = arith.addf %409, %414 : vector<8x512xf32>
    %416 = vector.extract_strided_slice %415 {offsets = [0, 0], sizes = [8, 384], strides = [1, 1]} : vector<8x512xf32> to vector<8x384xf32>
    %417 = arith.negf %416 : vector<8x384xf32>
    %418 = math.exp %417 : vector<8x384xf32>
    %cst_233 = arith.constant 1.000000e+00 : f32
    %419 = vector.broadcast %cst_233 : f32 to vector<8x384xf32>
    %420 = arith.addf %419, %418 : vector<8x384xf32>
    %421 = arith.divf %419, %420 : vector<8x384xf32>
    %422 = vector.extract_strided_slice %421 {offsets = [0, 0], sizes = [8, 128], strides = [1, 1]} : vector<8x384xf32> to vector<8x128xf32>
    %423 = vector.extract_strided_slice %421 {offsets = [0, 128], sizes = [8, 128], strides = [1, 1]} : vector<8x384xf32> to vector<8x128xf32>
    %424 = vector.extract_strided_slice %421 {offsets = [0, 256], sizes = [8, 128], strides = [1, 1]} : vector<8x384xf32> to vector<8x128xf32>
    %425 = vector.extract_strided_slice %415 {offsets = [0, 384], sizes = [8, 128], strides = [1, 1]} : vector<8x512xf32> to vector<8x128xf32>
    %426 = math.tanh %425 : vector<8x128xf32>
    %427 = arith.mulf %423, %411 : vector<8x128xf32>
    %428 = arith.mulf %422, %426 : vector<8x128xf32>
    %429 = arith.addf %427, %428 : vector<8x128xf32>
    %430 = math.tanh %429 : vector<8x128xf32>
    %431 = arith.mulf %424, %430 : vector<8x128xf32>
    %c0_234 = arith.constant 0 : index
    %c0_235 = arith.constant 0 : index
    %432 = vector.load %arg13[%c0_234, %c0_235] : memref<8x512xf32, #tpu.memory_space<vmem>>, vector<8x512xf32>
    %c0_236 = arith.constant 0 : index
    %c0_237 = arith.constant 0 : index
    %433 = vector.load %arg14[%c0_236, %c0_237] : memref<8x128xf32, #tpu.memory_space<vmem>>, vector<8x128xf32>
    %c0_238 = arith.constant 0 : index
    %c0_239 = arith.constant 0 : index
    %434 = vector.load %arg15[%c0_238, %c0_239] : memref<8x128xf32, #tpu.memory_space<vmem>>, vector<8x128xf32>
    %c0_240 = arith.constant 0 : index
    %c0_241 = arith.constant 0 : index
    %435 = vector.load %arg6[%c0_240, %c0_241] : memref<128x512xbf16, #tpu.memory_space<vmem>>, vector<128x512xbf16>
    %436 = arith.truncf %433 : vector<8x128xf32> to vector<8x128xbf16>
    %cst_242 = arith.constant dense<0.000000e+00> : vector<8x512xf32>
    %437 = tpu.matmul %436, %435, %cst_242 {dimension_numbers = #tpu.dot_dimension_numbers<[1], [0], [0], [1], [0, 0, 1, 1], [], []>} : vector<8x128xbf16>, vector<128x512xbf16>, vector<8x512xf32> -> vector<8x512xf32>
    %438 = arith.addf %432, %437 : vector<8x512xf32>
    %439 = vector.extract_strided_slice %438 {offsets = [0, 0], sizes = [8, 384], strides = [1, 1]} : vector<8x512xf32> to vector<8x384xf32>
    %440 = arith.negf %439 : vector<8x384xf32>
    %441 = math.exp %440 : vector<8x384xf32>
    %cst_243 = arith.constant 1.000000e+00 : f32
    %442 = vector.broadcast %cst_243 : f32 to vector<8x384xf32>
    %443 = arith.addf %442, %441 : vector<8x384xf32>
    %444 = arith.divf %442, %443 : vector<8x384xf32>
    %445 = vector.extract_strided_slice %444 {offsets = [0, 0], sizes = [8, 128], strides = [1, 1]} : vector<8x384xf32> to vector<8x128xf32>
    %446 = vector.extract_strided_slice %444 {offsets = [0, 128], sizes = [8, 128], strides = [1, 1]} : vector<8x384xf32> to vector<8x128xf32>
    %447 = vector.extract_strided_slice %444 {offsets = [0, 256], sizes = [8, 128], strides = [1, 1]} : vector<8x384xf32> to vector<8x128xf32>
    %448 = vector.extract_strided_slice %438 {offsets = [0, 384], sizes = [8, 128], strides = [1, 1]} : vector<8x512xf32> to vector<8x128xf32>
    %449 = math.tanh %448 : vector<8x128xf32>
    %450 = arith.mulf %446, %434 : vector<8x128xf32>
    %451 = arith.mulf %445, %449 : vector<8x128xf32>
    %452 = arith.addf %450, %451 : vector<8x128xf32>
    %453 = math.tanh %452 : vector<8x128xf32>
    %454 = arith.mulf %447, %453 : vector<8x128xf32>
    %c0_244 = arith.constant 0 : index
    %c0_245 = arith.constant 0 : index
    %455 = vector.load %arg11[%c0_244, %c0_245] : memref<8x128xf32, #tpu.memory_space<vmem>>, vector<8x128xf32>
    tpu.vector_store %arg11[%c0_244, %c0_245], %431 {strides = array<i32>} : memref<8x128xf32, #tpu.memory_space<vmem>>, vector<8x128xf32>,
    %c0_246 = arith.constant 0 : index
    %c0_247 = arith.constant 0 : index
    %456 = vector.load %arg12[%c0_246, %c0_247] : memref<8x128xf32, #tpu.memory_space<vmem>>, vector<8x128xf32>
    tpu.vector_store %arg12[%c0_246, %c0_247], %429 {strides = array<i32>} : memref<8x128xf32, #tpu.memory_space<vmem>>, vector<8x128xf32>,
    %c0_248 = arith.constant 0 : index
    %c0_249 = arith.constant 0 : index
    %457 = vector.load %arg14[%c0_248, %c0_249] : memref<8x128xf32, #tpu.memory_space<vmem>>, vector<8x128xf32>
    tpu.vector_store %arg14[%c0_248, %c0_249], %454 {strides = array<i32>} : memref<8x128xf32, #tpu.memory_space<vmem>>, vector<8x128xf32>,
    %c0_250 = arith.constant 0 : index
    %c0_251 = arith.constant 0 : index
    %458 = vector.load %arg15[%c0_250, %c0_251] : memref<8x128xf32, #tpu.memory_space<vmem>>, vector<8x128xf32>
    tpu.vector_store %arg15[%c0_250, %c0_251], %452 {strides = array<i32>} : memref<8x128xf32, #tpu.memory_space<vmem>>, vector<8x128xf32>,
    %459 = arith.index_cast %c7_i32 : i32 to index
    %c0_252 = arith.constant 0 : index
    %c0_253 = arith.constant 0 : index
    %460 = vector.load %arg8[%459, %c0_252, %c0_253] : memref<8x8x128xf32, #tpu.memory_space<vmem>>, vector<1x8x128xf32>
    %461 = vector.shape_cast %460 : vector<1x8x128xf32> to vector<8x128xf32>
    %462 = vector.shape_cast %431 : vector<8x128xf32> to vector<1x8x128xf32>
    tpu.vector_store %arg8[%459, %c0_252, %c0_253], %462 {strides = array<i32>} : memref<8x8x128xf32, #tpu.memory_space<vmem>>, vector<1x8x128xf32>,
    %463 = arith.index_cast %c7_i32 : i32 to index
    %c0_254 = arith.constant 0 : index
    %c0_255 = arith.constant 0 : index
    %464 = vector.load %arg9[%463, %c0_254, %c0_255] : memref<8x8x128xf32, #tpu.memory_space<vmem>>, vector<1x8x128xf32>
    %465 = vector.shape_cast %464 : vector<1x8x128xf32> to vector<8x128xf32>
    %466 = vector.shape_cast %454 : vector<8x128xf32> to vector<1x8x128xf32>
    tpu.vector_store %arg9[%463, %c0_254, %c0_255], %466 {strides = array<i32>} : memref<8x8x128xf32, #tpu.memory_space<vmem>>, vector<1x8x128xf32>,
    %c8_i32 = arith.constant 8 : i32
    return
  }
  func.func @transform_0(%arg0: i32) -> (i32, i32) {
    %c0_i32 = arith.constant 0 : i32
    %c0_i32_0 = arith.constant 0 : i32
    %c0_i32_1 = arith.constant 0 : i32
    return %c0_i32, %c0_i32_0 : i32, i32
  }
  func.func @transform_1(%arg0: i32) -> (i32, i32) {
    %c0_i32 = arith.constant 0 : i32
    %c0_i32_0 = arith.constant 0 : i32
    %c0_i32_1 = arith.constant 0 : i32
    return %c0_i32, %c0_i32_0 : i32, i32
  }
  func.func @transform_2(%arg0: i32) -> (i32, i32) {
    %c0_i32 = arith.constant 0 : i32
    %c0_i32_0 = arith.constant 0 : i32
    %c0_i32_1 = arith.constant 0 : i32
    return %c0_i32, %c0_i32_0 : i32, i32
  }
  func.func @transform_3(%arg0: i32) -> (i32, i32) {
    %c0_i32 = arith.constant 0 : i32
    %c0_i32_0 = arith.constant 0 : i32
    %c0_i32_1 = arith.constant 0 : i32
    return %c0_i32, %c0_i32_0 : i32, i32
  }
  func.func @transform_4(%arg0: i32) -> (i32, i32) {
    %c0_i32 = arith.constant 0 : i32
    %c0_i32_0 = arith.constant 0 : i32
    %c0_i32_1 = arith.constant 0 : i32
    return %c0_i32, %c0_i32_0 : i32, i32
  }
  func.func @transform_5(%arg0: i32) -> (i32, i32) {
    %c0_i32 = arith.constant 0 : i32
    %c0_i32_0 = arith.constant 0 : i32
    %c0_i32_1 = arith.constant 0 : i32
    return %c0_i32, %c0_i32_0 : i32, i32
  }
  func.func @transform_6(%arg0: i32) -> (i32, i32) {
    %c0_i32 = arith.constant 0 : i32
    %c0_i32_0 = arith.constant 0 : i32
    %c0_i32_1 = arith.constant 0 : i32
    return %c0_i32, %c0_i32_0 : i32, i32
  }
  func.func @transform_7(%arg0: i32) -> (i32, i32, i32) {
    %c0_i32 = arith.constant 0 : i32
    %c0_i32_0 = arith.constant 0 : i32
    %c0_i32_1 = arith.constant 0 : i32
    return %arg0, %c0_i32, %c0_i32_0 : i32, i32, i32
  }
  func.func @transform_8(%arg0: i32) -> (i32, i32, i32) {
    %c0_i32 = arith.constant 0 : i32
    %c0_i32_0 = arith.constant 0 : i32
    %c0_i32_1 = arith.constant 0 : i32
    return %arg0, %c0_i32, %c0_i32_0 : i32, i32, i32
  }
}

</mosaic_0001>

<llo_original>
// kernel: split_lstm_autoencoder_forward.2
$region0: #{split_lstm_autoencoder_forward.2}
  #allocation0 [shape = 'u32[]', space=smem, size = 0x4, offset = 0x4, fixed_abs, tag = 'smem constant byte address 0x4 - core index']
  #allocation1 [shape = 'u32[144,128]{1,0:T(1,128)}', space=vmem, size = 0x12000, scoped, tag = 'internal scratch']
  #allocation2 [shape = 'f32[8,8,512]{2,1,0:T(8,128)}', space=vmem, size = 0x20000, scoped, tag = 'scratch operand']
  #allocation3 [shape = 'f32[8,128]{1,0:T(8,128)}', space=vmem, size = 0x1000, scoped, tag = 'scratch operand']
  %s0 = inlined_call_operand.vmem [shape: bf16[8,8,128], index: 0, kind: input, shape index: {}]
  %s1 = inlined_call_operand.vmem [shape: bf16[128,512], index: 1, kind: input, shape index: {}]
  %s2 = inlined_call_operand.vmem [shape: bf16[128,512], index: 2, kind: input, shape index: {}]
  %s3 = inlined_call_operand.vmem [shape: f32[1,512], index: 3, kind: input, shape index: {}]
  %s4 = inlined_call_operand.vmem [shape: f32[8,128], index: 4, kind: output, shape index: {}]
  %s5 = sld [smem:[#allocation0]]
  $region30: #{split_lstm_autoencoder_forward.2} parent=0
    _
  %s7 = ssub.s32 1, %s5
  %s8 = scalar_select 0, %s7, %s5
  // Predicated region
  $region2: #{split_lstm_autoencoder_forward.2} parent=0 // pred_check
    _
  $region3: #{split_lstm_autoencoder_forward.2} parent=0 // pred_check_branch
    %10 = sbr.rel (0) target = $region5
  $region4: #{split_lstm_autoencoder_forward.2} parent=0 // pred_region
    _
  $region5: #{split_lstm_autoencoder_forward.2} parent=0 // pred_fallthru
    _
  // Predicated region
  $region6: #{split_lstm_autoencoder_forward.2} parent=0 // pred_check
    _
  $region7: #{split_lstm_autoencoder_forward.2} parent=0 // pred_check_branch
    %12 = sbr.rel (0) target = $region9
  $region8: #{split_lstm_autoencoder_forward.2} parent=0 // pred_region
    _
  $region9: #{split_lstm_autoencoder_forward.2} parent=0 // pred_fallthru
    _
  // Predicated region
  $region10: #{split_lstm_autoencoder_forward.2} parent=0 // pred_check
    _
  $region11: #{split_lstm_autoencoder_forward.2} parent=0 // pred_check_branch
    %14 = sbr.rel (0) target = $region13
  $region12: #{split_lstm_autoencoder_forward.2} parent=0 // pred_region
    _
  $region13: #{split_lstm_autoencoder_forward.2} parent=0 // pred_fallthru
    _
  // Predicated region
  $region14: #{split_lstm_autoencoder_forward.2} parent=0 // pred_check
    _
  $region15: #{split_lstm_autoencoder_forward.2} parent=0 // pred_check_branch
    %16 = sbr.rel (0) target = $region17
  $region16: #{split_lstm_autoencoder_forward.2} parent=0 // pred_region
    _
  $region17: #{split_lstm_autoencoder_forward.2} parent=0 // pred_fallthru
    _
  %p18 = scmp.eq.s32.totalorder 0, 0
  // Predicated region
  $region18: #{split_lstm_autoencoder_forward.2} parent=0 // pred_check
    %p19 = pneg %p18
  $region19: #{split_lstm_autoencoder_forward.2} parent=0 // pred_check_branch
    %21 = sbr.rel (%p19) target = $region21
  $region20: #{split_lstm_autoencoder_forward.2} parent=0 // pred_region
    %22 = vst [vmem:[%s4] sm:$0xff] 0.0
    %23 = vst [vmem:[#allocation3] sm:$0xff] 0.0
  $region21: #{split_lstm_autoencoder_forward.2} parent=0 // pred_fallthru
    _
  %v24 = vld [vmem:[%s0] sm:$0xf]
  %v25 = vld [vmem:[%s0 + $0x4] sm:$0xf]
  %v26 = vld [vmem:[%s0 + $0x8] sm:$0xf]
  %v27 = vld [vmem:[%s0 + $0xc] sm:$0xf]
  %v28 = vld [vmem:[%s0 + $0x10] sm:$0xf]
  %v29 = vld [vmem:[%s0 + $0x14] sm:$0xf]
  %v30 = vld [vmem:[%s0 + $0x18] sm:$0xf]
  %v31 = vld [vmem:[%s0 + $0x1c] sm:$0xf]
  %v32 = vld [vmem:[%s1] sm:$0xff]
  %v33 = vld [vmem:[%s1 + $0x8] sm:$0xff]
  %v34 = vld [vmem:[%s1 + $0x10] sm:$0xff]
  %v35 = vld [vmem:[%s1 + $0x18] sm:$0xff]
  %v36 = vld [vmem:[%s1 + $0x20] sm:$0xff]
  %v37 = vld [vmem:[%s1 + $0x28] sm:$0xff]
  %v38 = vld [vmem:[%s1 + $0x30] sm:$0xff]
  %v39 = vld [vmem:[%s1 + $0x38] sm:$0xff]
  %v40 = vld [vmem:[%s1 + $0x40] sm:$0xff]
  %v41 = vld [vmem:[%s1 + $0x48] sm:$0xff]
  %v42 = vld [vmem:[%s1 + $0x50] sm:$0xff]
  %v43 = vld [vmem:[%s1 + $0x58] sm:$0xff]
  %v44 = vld [vmem:[%s1 + $0x60] sm:$0xff]
  %v45 = vld [vmem:[%s1 + $0x68] sm:$0xff]
  %v46 = vld [vmem:[%s1 + $0x70] sm:$0xff]
  %v47 = vld [vmem:[%s1 + $0x78] sm:$0xff]
  %v48 = vld [vmem:[%s1 + $0x80] sm:$0xff]
  %v49 = vld [vmem:[%s1 + $0x88] sm:$0xff]
  %v50 = vld [vmem:[%s1 + $0x90] sm:$0xff]
  %v51 = vld [vmem:[%s1 + $0x98] sm:$0xff]
  %v52 = vld [vmem:[%s1 + $0xa0] sm:$0xff]
  %v53 = vld [vmem:[%s1 + $0xa8] sm:$0xff]
  %v54 = vld [vmem:[%s1 + $0xb0] sm:$0xff]
  %v55 = vld [vmem:[%s1 + $0xb8] sm:$0xff]
  %v56 = vld [vmem:[%s1 + $0xc0] sm:$0xff]
  %v57 = vld [vmem:[%s1 + $0xc8] sm:$0xff]
  %v58 = vld [vmem:[%s1 + $0xd0] sm:$0xff]
  %v59 = vld [vmem:[%s1 + $0xd8] sm:$0xff]
  %v60 = vld [vmem:[%s1 + $0xe0] sm:$0xff]
  %v61 = vld [vmem:[%s1 + $0xe8] sm:$0xff]
  %v62 = vld [vmem:[%s1 + $0xf0] sm:$0xff]
  %v63 = vld [vmem:[%s1 + $0xf8] sm:$0xff]
  %v64 = vld [vmem:[%s3] sm:$0xf]
  %v66 = vlaneseq
  %v67 = vshrl.u32 %v66, 7
  %v68 = vsub.s32 0, %v67
  %v69 = vrot.slane %v64, %v68
  %v70 = vlaneseq
  %v71 = vshrl.u32 %v70, 7
  %v72 = vsub.s32 1, %v71
  %v73 = vrot.slane %v64, %v72
  %v74 = vlaneseq
  %v75 = vshrl.u32 %v74, 7
  %v76 = vsub.s32 2, %v75
  %v77 = vrot.slane %v64, %v76
  %v78 = vlaneseq
  %v79 = vshrl.u32 %v78, 7
  %v80 = vsub.s32 3, %v79
  %v81 = vrot.slane %v64, %v80
  %v94 = vunpack.c.l.b16 %v24
  %v95 = vunpack.c.l.b16 %v25
  %v96 = vunpack.c.l.b16 %v26
  %v97 = vunpack.c.l.b16 %v27
  %v98 = vunpack.c.l.b16 %v28
  %v99 = vunpack.c.l.b16 %v29
  %v100 = vunpack.c.l.b16 %v30
  %v101 = vunpack.c.l.b16 %v31
  %v102 = vpack.c.b16 %v95, %v94
  %v103 = vpack.c.b16 %v97, %v96
  %v104 = vpack.c.b16 %v99, %v98
  %v105 = vpack.c.b16 %v101, %v100
  %v142 = vunpack.c.l.b16 %v32
  %v143 = vunpack.c.h.b16 %v32
  %v144 = vunpack.c.l.b16 %v33
  %v145 = vunpack.c.h.b16 %v33
  %v146 = vunpack.c.l.b16 %v34
  %v147 = vunpack.c.h.b16 %v34
  %v148 = vunpack.c.l.b16 %v35
  %v149 = vunpack.c.h.b16 %v35
  %v150 = vunpack.c.l.b16 %v36
  %v151 = vunpack.c.h.b16 %v36
  %v152 = vunpack.c.l.b16 %v37
  %v153 = vunpack.c.h.b16 %v37
  %v154 = vunpack.c.l.b16 %v38
  %v155 = vunpack.c.h.b16 %v38
  %v156 = vunpack.c.l.b16 %v39
  %v157 = vunpack.c.h.b16 %v39
  %v158 = vunpack.c.l.b16 %v40
  %v159 = vunpack.c.h.b16 %v40
  %v160 = vunpack.c.l.b16 %v41
  %v161 = vunpack.c.h.b16 %v41
  %v162 = vunpack.c.l.b16 %v42
  %v163 = vunpack.c.h.b16 %v42
  %v164 = vunpack.c.l.b16 %v43
  %v165 = vunpack.c.h.b16 %v43
  %v166 = vunpack.c.l.b16 %v44
  %v167 = vunpack.c.h.b16 %v44
  %v168 = vunpack.c.l.b16 %v45
  %v169 = vunpack.c.h.b16 %v45
  %v170 = vunpack.c.l.b16 %v46
  %v171 = vunpack.c.h.b16 %v46
  %v172 = vunpack.c.l.b16 %v47
  %v173 = vunpack.c.h.b16 %v47
  %v174 = vunpack.c.l.b16 %v48
  %v175 = vunpack.c.h.b16 %v48
  %v176 = vunpack.c.l.b16 %v49
  %v177 = vunpack.c.h.b16 %v49
  %v178 = vunpack.c.l.b16 %v50
  %v179 = vunpack.c.h.b16 %v50
  %v180 = vunpack.c.l.b16 %v51
  %v181 = vunpack.c.h.b16 %v51
  %v182 = vunpack.c.l.b16 %v52
  %v183 = vunpack.c.h.b16 %v52
  %v184 = vunpack.c.l.b16 %v53
  %v185 = vunpack.c.h.b16 %v53
  %v186 = vunpack.c.l.b16 %v54
  %v187 = vunpack.c.h.b16 %v54
  %v188 = vunpack.c.l.b16 %v55
  %v189 = vunpack.c.h.b16 %v55
  %v190 = vunpack.c.l.b16 %v56
  %v191 = vunpack.c.h.b16 %v56
  %v192 = vunpack.c.l.b16 %v57
  %v193 = vunpack.c.h.b16 %v57
  %v194 = vunpack.c.l.b16 %v58
  %v195 = vunpack.c.h.b16 %v58
  %v196 = vunpack.c.l.b16 %v59
  %v197 = vunpack.c.h.b16 %v59
  %v198 = vunpack.c.l.b16 %v60
  %v199 = vunpack.c.h.b16 %v60
  %v200 = vunpack.c.l.b16 %v61
  %v201 = vunpack.c.h.b16 %v61
  %v202 = vunpack.c.l.b16 %v62
  %v203 = vunpack.c.h.b16 %v62
  %v204 = vunpack.c.l.b16 %v63
  %v205 = vunpack.c.h.b16 %v63
  %v206 = vpack.c.b16 %v146, %v142
  %v207 = vpack.c.b16 %v147, %v143
  %v208 = vpack.c.b16 %v148, %v144
  %v209 = vpack.c.b16 %v149, %v145
  %v210 = vpack.c.b16 %v154, %v150
  %v211 = vpack.c.b16 %v155, %v151
  %v212 = vpack.c.b16 %v156, %v152
  %v213 = vpack.c.b16 %v157, %v153
  %v214 = vpack.c.b16 %v162, %v158
  %v215 = vpack.c.b16 %v163, %v159
  %v216 = vpack.c.b16 %v164, %v160
  %v217 = vpack.c.b16 %v165, %v161
  %v218 = vpack.c.b16 %v170, %v166
  %v219 = vpack.c.b16 %v171, %v167
  %v220 = vpack.c.b16 %v172, %v168
  %v221 = vpack.c.b16 %v173, %v169
  %v222 = vpack.c.b16 %v178, %v174
  %v223 = vpack.c.b16 %v179, %v175
  %v224 = vpack.c.b16 %v180, %v176
  %v225 = vpack.c.b16 %v181, %v177
  %v226 = vpack.c.b16 %v186, %v182
  %v227 = vpack.c.b16 %v187, %v183
  %v228 = vpack.c.b16 %v188, %v184
  %v229 = vpack.c.b16 %v189, %v185
  %v230 = vpack.c.b16 %v194, %v190
  %v231 = vpack.c.b16 %v195, %v191
  %v232 = vpack.c.b16 %v196, %v192
  %v233 = vpack.c.b16 %v197, %v193
  %v234 = vpack.c.b16 %v202, %v198
  %v235 = vpack.c.b16 %v203, %v199
  %v236 = vpack.c.b16 %v204, %v200
  %v237 = vpack.c.b16 %v205, %v201
  %270 = vmatprep.subr.bf16.mxu0 %v207
  %271 = vmatpush1.bf16.msra.mxu0 %v206
  %272 = vmatprep.subr.bf16.mxu0 %v211
  %273 = vmatpush1.bf16.msra.mxu0 %v210
  %274 = vmatprep.subr.bf16.mxu0 %v215
  %275 = vmatpush1.bf16.msra.mxu0 %v214
  %276 = vmatprep.subr.bf16.mxu0 %v219
  %277 = vmatpush1.bf16.msra.mxu0 %v218
  %278 = vmatprep.subr.bf16.mxu0 %v223
  %279 = vmatpush1.bf16.msra.mxu0 %v222
  %280 = vmatprep.subr.bf16.mxu0 %v227
  %281 = vmatpush1.bf16.msra.mxu0 %v226
  %282 = vmatprep.subr.bf16.mxu0 %v231
  %283 = vmatpush1.bf16.msra.mxu0 %v230
  %284 = vmatprep.subr.bf16.mxu0 %v235
  %285 = vmatpush1.bf16.msra.mxu0 %v234
  %286 = vmatprep.subr.bf16.mxu0 0
  %287 = vmatpush1.bf16.msra.mxu0 0
  %288 = vmatprep.subr.bf16.mxu0 0
  %289 = vmatpush1.bf16.msra.mxu0 0
  %290 = vmatprep.subr.bf16.mxu0 0
  %291 = vmatpush1.bf16.msra.mxu0 0
  %292 = vmatprep.subr.bf16.mxu0 0
  %293 = vmatpush1.bf16.msra.mxu0 0
  %294 = vmatprep.subr.bf16.mxu0 0
  %295 = vmatpush1.bf16.msra.mxu0 0
  %296 = vmatprep.subr.bf16.mxu0 0
  %297 = vmatpush1.bf16.msra.mxu0 0
  %298 = vmatprep.subr.bf16.mxu0 0
  %299 = vmatpush1.bf16.msra.mxu0 0
  %300 = vmatprep.subr.bf16.mxu0 0
  %301 = vmatpush1.bf16.msra.mxu0 0
  %302 = vmatprep.mubr.bf16.mxu0 0
  %303 = vmatmul.mubr.bf16.gmra.mrb[0].mxu0 %v102
  %v304 = vpop.f32.mrb[0].mxu0
  %v305 = vadd.f32 %v69, %v304
  %v306 = vpop.f32.mrb[0].mxu0
  %v307 = vadd.f32 %v73, %v306
  %v308 = vpop.f32.mrb[0].mxu0
  %v309 = vadd.f32 %v69, %v308
  %v310 = vpop.f32.mrb[0].mxu0
  %v311 = vadd.f32 %v73, %v310
  %312 = vmatprep.mubr.bf16.mxu0 0
  %313 = vmatmul.mubr.bf16.gmra.mrb[0].mxu0 %v103
  %v314 = vpop.f32.mrb[0].mxu0
  %v315 = vadd.f32 %v69, %v314
  %v316 = vpop.f32.mrb[0].mxu0
  %v317 = vadd.f32 %v73, %v316
  %v318 = vpop.f32.mrb[0].mxu0
  %v319 = vadd.f32 %v69, %v318
  %v320 = vpop.f32.mrb[0].mxu0
  %v321 = vadd.f32 %v73, %v320
  %322 = vmatprep.mubr.bf16.mxu0 0
  %323 = vmatmul.mubr.bf16.gmra.mrb[0].mxu0 %v104
  %v324 = vpop.f32.mrb[0].mxu0
  %v325 = vadd.f32 %v69, %v324
  %v326 = vpop.f32.mrb[0].mxu0
  %v327 = vadd.f32 %v73, %v326
  %v328 = vpop.f32.mrb[0].mxu0
  %v329 = vadd.f32 %v69, %v328
  %v330 = vpop.f32.mrb[0].mxu0
  %v331 = vadd.f32 %v73, %v330
  %332 = vmatprep.mubr.bf16.mxu0 0
  %333 = vmatmul.mubr.bf16.gmra.mrb[0].mxu0 %v105
  %v334 = vpop.f32.mrb[0].mxu0
  %v335 = vadd.f32 %v69, %v334
  %v336 = vpop.f32.mrb[0].mxu0
  %v337 = vadd.f32 %v73, %v336
  %v338 = vpop.f32.mrb[0].mxu0
  %v339 = vadd.f32 %v69, %v338
  %v340 = vpop.f32.mrb[0].mxu0
  %v341 = vadd.f32 %v73, %v340
  %342 = vdwg.mxu0
  %343 = vmatprep.subr.bf16.mxu0 %v209
  %344 = vmatpush1.bf16.msra.mxu0 %v208
  %345 = vmatprep.subr.bf16.mxu0 %v213
  %346 = vmatpush1.bf16.msra.mxu0 %v212
  %347 = vmatprep.subr.bf16.mxu0 %v217
  %348 = vmatpush1.bf16.msra.mxu0 %v216
  %349 = vmatprep.subr.bf16.mxu0 %v221
  %350 = vmatpush1.bf16.msra.mxu0 %v220
  %351 = vmatprep.subr.bf16.mxu0 %v225
  %352 = vmatpush1.bf16.msra.mxu0 %v224
  %353 = vmatprep.subr.bf16.mxu0 %v229
  %354 = vmatpush1.bf16.msra.mxu0 %v228
  %355 = vmatprep.subr.bf16.mxu0 %v233
  %356 = vmatpush1.bf16.msra.mxu0 %v232
  %357 = vmatprep.subr.bf16.mxu0 %v237
  %358 = vmatpush1.bf16.msra.mxu0 %v236
  %359 = vmatprep.subr.bf16.mxu0 0
  %360 = vmatpush1.bf16.msra.mxu0 0
  %361 = vmatprep.subr.bf16.mxu0 0
  %362 = vmatpush1.bf16.msra.mxu0 0
  %363 = vmatprep.subr.bf16.mxu0 0
  %364 = vmatpush1.bf16.msra.mxu0 0
  %365 = vmatprep.subr.bf16.mxu0 0
  %366 = vmatpush1.bf16.msra.mxu0 0
  %367 = vmatprep.subr.bf16.mxu0 0
  %368 = vmatpush1.bf16.msra.mxu0 0
  %369 = vmatprep.subr.bf16.mxu0 0
  %370 = vmatpush1.bf16.msra.mxu0 0
  %371 = vmatprep.subr.bf16.mxu0 0
  %372 = vmatpush1.bf16.msra.mxu0 0
  %373 = vmatprep.subr.bf16.mxu0 0
  %374 = vmatpush1.bf16.msra.mxu0 0
  %375 = vmatprep.mubr.bf16.mxu0 0
  %376 = vmatmul.mubr.bf16.gmra.mrb[0].mxu0 %v102
  %v377 = vpop.f32.mrb[0].mxu0
  %v378 = vadd.f32 %v77, %v377
  %v379 = vpop.f32.mrb[0].mxu0
  %v380 = vadd.f32 %v81, %v379
  %v381 = vpop.f32.mrb[0].mxu0
  %v382 = vadd.f32 %v77, %v381
  %v383 = vpop.f32.mrb[0].mxu0
  %v384 = vadd.f32 %v81, %v383
  %385 = vmatprep.mubr.bf16.mxu0 0
  %386 = vmatmul.mubr.bf16.gmra.mrb[0].mxu0 %v103
  %v387 = vpop.f32.mrb[0].mxu0
  %v388 = vadd.f32 %v77, %v387
  %v389 = vpop.f32.mrb[0].mxu0
  %v390 = vadd.f32 %v81, %v389
  %v391 = vpop.f32.mrb[0].mxu0
  %v392 = vadd.f32 %v77, %v391
  %v393 = vpop.f32.mrb[0].mxu0
  %v394 = vadd.f32 %v81, %v393
  %395 = vmatprep.mubr.bf16.mxu0 0
  %396 = vmatmul.mubr.bf16.gmra.mrb[0].mxu0 %v104
  %v397 = vpop.f32.mrb[0].mxu0
  %v398 = vadd.f32 %v77, %v397
  %v399 = vpop.f32.mrb[0].mxu0
  %v400 = vadd.f32 %v81, %v399
  %v401 = vpop.f32.mrb[0].mxu0
  %v402 = vadd.f32 %v77, %v401
  %v403 = vpop.f32.mrb[0].mxu0
  %v404 = vadd.f32 %v81, %v403
  %405 = vmatprep.mubr.bf16.mxu0 0
  %406 = vmatmul.mubr.bf16.gmra.mrb[0].mxu0 %v105
  %v407 = vpop.f32.mrb[0].mxu0
  %v408 = vadd.f32 %v77, %v407
  %v409 = vpop.f32.mrb[0].mxu0
  %v410 = vadd.f32 %v81, %v409
  %v411 = vpop.f32.mrb[0].mxu0
  %v412 = vadd.f32 %v77, %v411
  %v413 = vpop.f32.mrb[0].mxu0
  %v414 = vadd.f32 %v81, %v413
  %415 = vdwg.mxu0
  %416 = vst [vmem:[#allocation2] sm:$0xff] %v305
  %417 = vst [vmem:[#allocation2 + $0x8] sm:$0xff] %v307
  %418 = vst [vmem:[#allocation2 + $0x10] sm:$0xff] %v378
  %419 = vst [vmem:[#allocation2 + $0x18] sm:$0xff] %v380
  %420 = vst [vmem:[#allocation2 + $0x20] sm:$0xff] %v309
  %421 = vst [vmem:[#allocation2 + $0x28] sm:$0xff] %v311
  %422 = vst [vmem:[#allocation2 + $0x30] sm:$0xff] %v382
  %423 = vst [vmem:[#allocation2 + $0x38] sm:$0xff] %v384
  %424 = vst [vmem:[#allocation2 + $0x40] sm:$0xff] %v315
  %425 = vst [vmem:[#allocation2 + $0x48] sm:$0xff] %v317
  %426 = vst [vmem:[#allocation2 + $0x50] sm:$0xff] %v388
  %427 = vst [vmem:[#allocation2 + $0x58] sm:$0xff] %v390
  %428 = vst [vmem:[#allocation2 + $0x60] sm:$0xff] %v319
  %429 = vst [vmem:[#allocation2 + $0x68] sm:$0xff] %v321
  %430 = vst [vmem:[#allocation2 + $0x70] sm:$0xff] %v392
  %431 = vst [vmem:[#allocation2 + $0x78] sm:$0xff] %v394
  %432 = vst [vmem:[#allocation2 + $0x80] sm:$0xff] %v325
  %433 = vst [vmem:[#allocation2 + $0x88] sm:$0xff] %v327
  %434 = vst [vmem:[#allocation2 + $0x90] sm:$0xff] %v398
  %435 = vst [vmem:[#allocation2 + $0x98] sm:$0xff] %v400
  %436 = vst [vmem:[#allocation2 + $0xa0] sm:$0xff] %v329
  %437 = vst [vmem:[#allocation2 + $0xa8] sm:$0xff] %v331
  %438 = vst [vmem:[#allocation2 + $0xb0] sm:$0xff] %v402
  %439 = vst [vmem:[#allocation2 + $0xb8] sm:$0xff] %v404
  %440 = vst [vmem:[#allocation2 + $0xc0] sm:$0xff] %v335
  %441 = vst [vmem:[#allocation2 + $0xc8] sm:$0xff] %v337
  %442 = vst [vmem:[#allocation2 + $0xd0] sm:$0xff] %v408
  %443 = vst [vmem:[#allocation2 + $0xd8] sm:$0xff] %v410
  %444 = vst [vmem:[#allocation2 + $0xe0] sm:$0xff] %v339
  %445 = vst [vmem:[#allocation2 + $0xe8] sm:$0xff] %v341
  %446 = vst [vmem:[#allocation2 + $0xf0] sm:$0xff] %v412
  %447 = vst [vmem:[#allocation2 + $0xf8] sm:$0xff] %v414
  %v448 = vld [vmem:[#allocation2] sm:$0xff]
  %v449 = vld [vmem:[#allocation2 + $0x8] sm:$0xff]
  %v450 = vld [vmem:[#allocation2 + $0x10] sm:$0xff]
  %v451 = vld [vmem:[#allocation2 + $0x18] sm:$0xff]
  %v452 = vld [vmem:[%s4] sm:$0xff]
  %v453 = vpack.c.bf16 %v452, %v452
  %v454 = vld [vmem:[%s2] sm:$0xff]
  %v455 = vld [vmem:[%s2 + $0x8] sm:$0xff]
  %v456 = vld [vmem:[%s2 + $0x10] sm:$0xff]
  %v457 = vld [vmem:[%s2 + $0x18] sm:$0xff]
  %v458 = vld [vmem:[%s2 + $0x20] sm:$0xff]
  %v459 = vld [vmem:[%s2 + $0x28] sm:$0xff]
  %v460 = vld [vmem:[%s2 + $0x30] sm:$0xff]
  %v461 = vld [vmem:[%s2 + $0x38] sm:$0xff]
  %v462 = vld [vmem:[%s2 + $0x40] sm:$0xff]
  %v463 = vld [vmem:[%s2 + $0x48] sm:$0xff]
  %v464 = vld [vmem:[%s2 + $0x50] sm:$0xff]
  %v465 = vld [vmem:[%s2 + $0x58] sm:$0xff]
  %v466 = vld [vmem:[%s2 + $0x60] sm:$0xff]
  %v467 = vld [vmem:[%s2 + $0x68] sm:$0xff]
  %v468 = vld [vmem:[%s2 + $0x70] sm:$0xff]
  %v469 = vld [vmem:[%s2 + $0x78] sm:$0xff]
  %v470 = vld [vmem:[%s2 + $0x80] sm:$0xff]
  %v471 = vld [vmem:[%s2 + $0x88] sm:$0xff]
  %v472 = vld [vmem:[%s2 + $0x90] sm:$0xff]
  %v473 = vld [vmem:[%s2 + $0x98] sm:$0xff]
  %v474 = vld [vmem:[%s2 + $0xa0] sm:$0xff]
  %v475 = vld [vmem:[%s2 + $0xa8] sm:$0xff]
  %v476 = vld [vmem:[%s2 + $0xb0] sm:$0xff]
  %v477 = vld [vmem:[%s2 + $0xb8] sm:$0xff]
  %v478 = vld [vmem:[%s2 + $0xc0] sm:$0xff]
  %v479 = vld [vmem:[%s2 + $0xc8] sm:$0xff]
  %v480 = vld [vmem:[%s2 + $0xd0] sm:$0xff]
  %v481 = vld [vmem:[%s2 + $0xd8] sm:$0xff]
  %v482 = vld [vmem:[%s2 + $0xe0] sm:$0xff]
  %v483 = vld [vmem:[%s2 + $0xe8] sm:$0xff]
  %v484 = vld [vmem:[%s2 + $0xf0] sm:$0xff]
  %v485 = vld [vmem:[%s2 + $0xf8] sm:$0xff]
  %v518 = vunpack.c.l.b16 %v454
  %v519 = vunpack.c.h.b16 %v454
  %v520 = vunpack.c.l.b16 %v455
  %v521 = vunpack.c.h.b16 %v455
  %v522 = vunpack.c.l.b16 %v456
  %v523 = vunpack.c.h.b16 %v456
  %v524 = vunpack.c.l.b16 %v457
  %v525 = vunpack.c.h.b16 %v457
  %v526 = vunpack.c.l.b16 %v458
  %v527 = vunpack.c.h.b16 %v458
  %v528 = vunpack.c.l.b16 %v459
  %v529 = vunpack.c.h.b16 %v459
  %v530 = vunpack.c.l.b16 %v460
  %v531 = vunpack.c.h.b16 %v460
  %v532 = vunpack.c.l.b16 %v461
  %v533 = vunpack.c.h.b16 %v461
  %v534 = vunpack.c.l.b16 %v462
  %v535 = vunpack.c.h.b16 %v462
  %v536 = vunpack.c.l.b16 %v463
  %v537 = vunpack.c.h.b16 %v463
  %v538 = vunpack.c.l.b16 %v464
  %v539 = vunpack.c.h.b16 %v464
  %v540 = vunpack.c.l.b16 %v465
  %v541 = vunpack.c.h.b16 %v465
  %v542 = vunpack.c.l.b16 %v466
  %v543 = vunpack.c.h.b16 %v466
  %v544 = vunpack.c.l.b16 %v467
  %v545 = vunpack.c.h.b16 %v467
  %v546 = vunpack.c.l.b16 %v468
  %v547 = vunpack.c.h.b16 %v468
  %v548 = vunpack.c.l.b16 %v469
  %v549 = vunpack.c.h.b16 %v469
  %v550 = vunpack.c.l.b16 %v470
  %v551 = vunpack.c.h.b16 %v470
  %v552 = vunpack.c.l.b16 %v471
  %v553 = vunpack.c.h.b16 %v471
  %v554 = vunpack.c.l.b16 %v472
  %v555 = vunpack.c.h.b16 %v472
  %v556 = vunpack.c.l.b16 %v473
  %v557 = vunpack.c.h.b16 %v473
  %v558 = vunpack.c.l.b16 %v474
  %v559 = vunpack.c.h.b16 %v474
  %v560 = vunpack.c.l.b16 %v475
  %v561 = vunpack.c.h.b16 %v475
  %v562 = vunpack.c.l.b16 %v476
  %v563 = vunpack.c.h.b16 %v476
  %v564 = vunpack.c.l.b16 %v477
  %v565 = vunpack.c.h.b16 %v477
  %v566 = vunpack.c.l.b16 %v478
  %v567 = vunpack.c.h.b16 %v478
  %v568 = vunpack.c.l.b16 %v479
  %v569 = vunpack.c.h.b16 %v479
  %v570 = vunpack.c.l.b16 %v480
  %v571 = vunpack.c.h.b16 %v480
  %v572 = vunpack.c.l.b16 %v481
  %v573 = vunpack.c.h.b16 %v481
  %v574 = vunpack.c.l.b16 %v482
  %v575 = vunpack.c.h.b16 %v482
  %v576 = vunpack.c.l.b16 %v483
  %v577 = vunpack.c.h.b16 %v483
  %v578 = vunpack.c.l.b16 %v484
  %v579 = vunpack.c.h.b16 %v484
  %v580 = vunpack.c.l.b16 %v485
  %v581 = vunpack.c.h.b16 %v485
  %v582 = vpack.c.b16 %v522, %v518
  %v583 = vpack.c.b16 %v523, %v519
  %v584 = vpack.c.b16 %v524, %v520
  %v585 = vpack.c.b16 %v525, %v521
  %v586 = vpack.c.b16 %v530, %v526
  %v587 = vpack.c.b16 %v531, %v527
  %v588 = vpack.c.b16 %v532, %v528
  %v589 = vpack.c.b16 %v533, %v529
  %v590 = vpack.c.b16 %v538, %v534
  %v591 = vpack.c.b16 %v539, %v535
  %v592 = vpack.c.b16 %v540, %v536
  %v593 = vpack.c.b16 %v541, %v537
  %v594 = vpack.c.b16 %v546, %v542
  %v595 = vpack.c.b16 %v547, %v543
  %v596 = vpack.c.b16 %v548, %v544
  %v597 = vpack.c.b16 %v549, %v545
  %v598 = vpack.c.b16 %v554, %v550
  %v599 = vpack.c.b16 %v555, %v551
  %v600 = vpack.c.b16 %v556, %v552
  %v601 = vpack.c.b16 %v557, %v553
  %v602 = vpack.c.b16 %v562, %v558
  %v603 = vpack.c.b16 %v563, %v559
  %v604 = vpack.c.b16 %v564, %v560
  %v605 = vpack.c.b16 %v565, %v561
  %v606 = vpack.c.b16 %v570, %v566
  %v607 = vpack.c.b16 %v571, %v567
  %v608 = vpack.c.b16 %v572, %v568
  %v609 = vpack.c.b16 %v573, %v569
  %v610 = vpack.c.b16 %v578, %v574
  %v611 = vpack.c.b16 %v579, %v575
  %v612 = vpack.c.b16 %v580, %v576
  %v613 = vpack.c.b16 %v581, %v577
  %646 = vmatprep.subr.bf16.mxu0 %v583
  %647 = vmatpush1.bf16.msra.mxu0 %v582
  %648 = vmatprep.subr.bf16.mxu0 %v587
  %649 = vmatpush1.bf16.msra.mxu0 %v586
  %650 = vmatprep.subr.bf16.mxu0 %v591
  %651 = vmatpush1.bf16.msra.mxu0 %v590
  %652 = vmatprep.subr.bf16.mxu0 %v595
  %653 = vmatpush1.bf16.msra.mxu0 %v594
  %654 = vmatprep.subr.bf16.mxu0 %v599
  %655 = vmatpush1.bf16.msra.mxu0 %v598
  %656 = vmatprep.subr.bf16.mxu0 %v603
  %657 = vmatpush1.bf16.msra.mxu0 %v602
  %658 = vmatprep.subr.bf16.mxu0 %v607
  %659 = vmatpush1.bf16.msra.mxu0 %v606
  %660 = vmatprep.subr.bf16.mxu0 %v611
  %661 = vmatpush1.bf16.msra.mxu0 %v610
  %662 = vmatprep.subr.bf16.mxu0 0
  %663 = vmatpush1.bf16.msra.mxu0 0
  %664 = vmatprep.subr.bf16.mxu0 0
  %665 = vmatpush1.bf16.msra.mxu0 0
  %666 = vmatprep.subr.bf16.mxu0 0
  %667 = vmatpush1.bf16.msra.mxu0 0
  %668 = vmatprep.subr.bf16.mxu0 0
  %669 = vmatpush1.bf16.msra.mxu0 0
  %670 = vmatprep.subr.bf16.mxu0 0
  %671 = vmatpush1.bf16.msra.mxu0 0
  %672 = vmatprep.subr.bf16.mxu0 0
  %673 = vmatpush1.bf16.msra.mxu0 0
  %674 = vmatprep.subr.bf16.mxu0 0
  %675 = vmatpush1.bf16.msra.mxu0 0
  %676 = vmatprep.subr.bf16.mxu0 0
  %677 = vmatpush1.bf16.msra.mxu0 0
  %678 = vmatprep.mubr.bf16.mxu0 0
  %679 = vmatmul.mubr.bf16.gmra.mrb[0].mxu0 %v453
  %v680 = vpop.f32.mrb[0].mxu0
  %v681 = vadd.f32 0.0, %v680
  %v682 = vpop.f32.mrb[0].mxu0
  %v683 = vadd.f32 0.0, %v682
  %v684 = vpop.f32.mrb[0].mxu0
  %v685 = vpop.f32.mrb[0].mxu0
  %686 = vdwg.mxu0
  %687 = vmatprep.subr.bf16.mxu0 %v585
  %688 = vmatpush1.bf16.msra.mxu0 %v584
  %689 = vmatprep.subr.bf16.mxu0 %v589
  %690 = vmatpush1.bf16.msra.mxu0 %v588
  %691 = vmatprep.subr.bf16.mxu0 %v593
  %692 = vmatpush1.bf16.msra.mxu0 %v592
  %693 = vmatprep.subr.bf16.mxu0 %v597
  %694 = vmatpush1.bf16.msra.mxu0 %v596
  %695 = vmatprep.subr.bf16.mxu0 %v601
  %696 = vmatpush1.bf16.msra.mxu0 %v600
  %697 = vmatprep.subr.bf16.mxu0 %v605
  %698 = vmatpush1.bf16.msra.mxu0 %v604
  %699 = vmatprep.subr.bf16.mxu0 %v609
  %700 = vmatpush1.bf16.msra.mxu0 %v608
  %701 = vmatprep.subr.bf16.mxu0 %v613
  %702 = vmatpush1.bf16.msra.mxu0 %v612
  %703 = vmatprep.subr.bf16.mxu0 0
  %704 = vmatpush1.bf16.msra.mxu0 0
  %705 = vmatprep.subr.bf16.mxu0 0
  %706 = vmatpush1.bf16.msra.mxu0 0
  %707 = vmatprep.subr.bf16.mxu0 0
  %708 = vmatpush1.bf16.msra.mxu0 0
  %709 = vmatprep.subr.bf16.mxu0 0
  %710 = vmatpush1.bf16.msra.mxu0 0
  %711 = vmatprep.subr.bf16.mxu0 0
  %712 = vmatpush1.bf16.msra.mxu0 0
  %713 = vmatprep.subr.bf16.mxu0 0
  %714 = vmatpush1.bf16.msra.mxu0 0
  %715 = vmatprep.subr.bf16.mxu0 0
  %716 = vmatpush1.bf16.msra.mxu0 0
  %717 = vmatprep.subr.bf16.mxu0 0
  %718 = vmatpush1.bf16.msra.mxu0 0
  %719 = vmatprep.mubr.bf16.mxu0 0
  %720 = vmatmul.mubr.bf16.gmra.mrb[0].mxu0 %v453
  %v721 = vpop.f32.mrb[0].mxu0
  %v722 = vadd.f32 0.0, %v721
  %v723 = vpop.f32.mrb[0].mxu0
  %v724 = vadd.f32 0.0, %v723
  %v725 = vpop.f32.mrb[0].mxu0
  %v726 = vpop.f32.mrb[0].mxu0
  %727 = vdwg.mxu0
  %v728 = vadd.f32 %v448, %v681
  %v729 = vadd.f32 %v449, %v683
  %v730 = vadd.f32 %v450, %v722
  %v731 = vadd.f32 %v451, %v724
  %v732 = vxor.u32 %v728, 2147483648
  %v733 = vxor.u32 %v729, 2147483648
  %v734 = vxor.u32 %v730, 2147483648
  %v735 = vmul.f32 %v732, 1.442695
  %v736 = vpow.pop %v735
  %v737 = vmul.f32 %v733, 1.442695
  %v738 = vpow.pop %v737
  %v739 = vmul.f32 %v734, 1.442695
  %v740 = vpow.pop %v739
  %v741 = vadd.f32 %v736, 1.0
  %v742 = vadd.f32 %v738, 1.0
  %v743 = vadd.f32 %v740, 1.0
  %v744 = vrcp.pop %v741
  %v745 = vmul.f32 1.0, %v744
  %v746 = vrcp.pop %v742
  %v747 = vmul.f32 1.0, %v746
  %v748 = vrcp.pop %v743
  %v749 = vmul.f32 1.0, %v748
  %v750 = vtanh.pop %v731
  %v751 = vld [vmem:[#allocation3] sm:$0xff]
  %v752 = vmul.f32 %v747, %v751
  %v753 = vmul.f32 %v745, %v750
  %v754 = vadd.f32 %v752, %v753
  %755 = vst [vmem:[#allocation3] sm:$0xff] %v754
  %v756 = vtanh.pop %v754
  %v757 = vmul.f32 %v749, %v756
  %758 = vst [vmem:[%s4] sm:$0xff] %v757
  %s759 = scalar_lea.vmem [#allocation2], 32
  %v760 = vld [vmem:[%s759] sm:$0xff]
  %v761 = vld [vmem:[%s759 + $0x8] sm:$0xff]
  %v762 = vld [vmem:[%s759 + $0x10] sm:$0xff]
  %v763 = vld [vmem:[%s759 + $0x18] sm:$0xff]
  %v764 = vld [vmem:[%s4] sm:$0xff]
  %v765 = vpack.c.bf16 %v764, %v764
  %v766 = vld [vmem:[%s2] sm:$0xff]
  %v767 = vld [vmem:[%s2 + $0x8] sm:$0xff]
  %v768 = vld [vmem:[%s2 + $0x10] sm:$0xff]
  %v769 = vld [vmem:[%s2 + $0x18] sm:$0xff]
  %v770 = vld [vmem:[%s2 + $0x20] sm:$0xff]
  %v771 = vld [vmem:[%s2 + $0x28] sm:$0xff]
  %v772 = vld [vmem:[%s2 + $0x30] sm:$0xff]
  %v773 = vld [vmem:[%s2 + $0x38] sm:$0xff]
  %v774 = vld [vmem:[%s2 + $0x40] sm:$0xff]
  %v775 = vld [vmem:[%s2 + $0x48] sm:$0xff]
  %v776 = vld [vmem:[%s2 + $0x50] sm:$0xff]
  %v777 = vld [vmem:[%s2 + $0x58] sm:$0xff]
  %v778 = vld [vmem:[%s2 + $0x60] sm:$0xff]
  %v779 = vld [vmem:[%s2 + $0x68] sm:$0xff]
  %v780 = vld [vmem:[%s2 + $0x70] sm:$0xff]
  %v781 = vld [vmem:[%s2 + $0x78] sm:$0xff]
  %v782 = vld [vmem:[%s2 + $0x80] sm:$0xff]
  %v783 = vld [vmem:[%s2 + $0x88] sm:$0xff]
  %v784 = vld [vmem:[%s2 + $0x90] sm:$0xff]
  %v785 = vld [vmem:[%s2 + $0x98] sm:$0xff]
  %v786 = vld [vmem:[%s2 + $0xa0] sm:$0xff]
  %v787 = vld [vmem:[%s2 + $0xa8] sm:$0xff]
  %v788 = vld [vmem:[%s2 + $0xb0] sm:$0xff]
  %v789 = vld [vmem:[%s2 + $0xb8] sm:$0xff]
  %v790 = vld [vmem:[%s2 + $0xc0] sm:$0xff]
  %v791 = vld [vmem:[%s2 + $0xc8] sm:$0xff]
  %v792 = vld [vmem:[%s2 + $0xd0] sm:$0xff]
  %v793 = vld [vmem:[%s2 + $0xd8] sm:$0xff]
  %v794 = vld [vmem:[%s2 + $0xe0] sm:$0xff]
  %v795 = vld [vmem:[%s2 + $0xe8] sm:$0xff]
  %v796 = vld [vmem:[%s2 + $0xf0] sm:$0xff]
  %v797 = vld [vmem:[%s2 + $0xf8] sm:$0xff]
  %v830 = vunpack.c.l.b16 %v766
  %v831 = vunpack.c.h.b16 %v766
  %v832 = vunpack.c.l.b16 %v767
  %v833 = vunpack.c.h.b16 %v767
  %v834 = vunpack.c.l.b16 %v768
  %v835 = vunpack.c.h.b16 %v768
  %v836 = vunpack.c.l.b16 %v769
  %v837 = vunpack.c.h.b16 %v769
  %v838 = vunpack.c.l.b16 %v770
  %v839 = vunpack.c.h.b16 %v770
  %v840 = vunpack.c.l.b16 %v771
  %v841 = vunpack.c.h.b16 %v771
  %v842 = vunpack.c.l.b16 %v772
  %v843 = vunpack.c.h.b16 %v772
  %v844 = vunpack.c.l.b16 %v773
  %v845 = vunpack.c.h.b16 %v773
  %v846 = vunpack.c.l.b16 %v774
  %v847 = vunpack.c.h.b16 %v774
  %v848 = vunpack.c.l.b16 %v775
  %v849 = vunpack.c.h.b16 %v775
  %v850 = vunpack.c.l.b16 %v776
  %v851 = vunpack.c.h.b16 %v776
  %v852 = vunpack.c.l.b16 %v777
  %v853 = vunpack.c.h.b16 %v777
  %v854 = vunpack.c.l.b16 %v778
  %v855 = vunpack.c.h.b16 %v778
  %v856 = vunpack.c.l.b16 %v779
  %v857 = vunpack.c.h.b16 %v779
  %v858 = vunpack.c.l.b16 %v780
  %v859 = vunpack.c.h.b16 %v780
  %v860 = vunpack.c.l.b16 %v781
  %v861 = vunpack.c.h.b16 %v781
  %v862 = vunpack.c.l.b16 %v782
  %v863 = vunpack.c.h.b16 %v782
  %v864 = vunpack.c.l.b16 %v783
  %v865 = vunpack.c.h.b16 %v783
  %v866 = vunpack.c.l.b16 %v784
  %v867 = vunpack.c.h.b16 %v784
  %v868 = vunpack.c.l.b16 %v785
  %v869 = vunpack.c.h.b16 %v785
  %v870 = vunpack.c.l.b16 %v786
  %v871 = vunpack.c.h.b16 %v786
  %v872 = vunpack.c.l.b16 %v787
  %v873 = vunpack.c.h.b16 %v787
  %v874 = vunpack.c.l.b16 %v788
  %v875 = vunpack.c.h.b16 %v788
  %v876 = vunpack.c.l.b16 %v789
  %v877 = vunpack.c.h.b16 %v789
  %v878 = vunpack.c.l.b16 %v790
  %v879 = vunpack.c.h.b16 %v790
  %v880 = vunpack.c.l.b16 %v791
  %v881 = vunpack.c.h.b16 %v791
  %v882 = vunpack.c.l.b16 %v792
  %v883 = vunpack.c.h.b16 %v792
  %v884 = vunpack.c.l.b16 %v793
  %v885 = vunpack.c.h.b16 %v793
  %v886 = vunpack.c.l.b16 %v794
  %v887 = vunpack.c.h.b16 %v794
  %v888 = vunpack.c.l.b16 %v795
  %v889 = vunpack.c.h.b16 %v795
  %v890 = vunpack.c.l.b16 %v796
  %v891 = vunpack.c.h.b16 %v796
  %v892 = vunpack.c.l.b16 %v797
  %v893 = vunpack.c.h.b16 %v797
  %v894 = vpack.c.b16 %v834, %v830
  %v895 = vpack.c.b16 %v835, %v831
  %v896 = vpack.c.b16 %v836, %v832
  %v897 = vpack.c.b16 %v837, %v833
  %v898 = vpack.c.b16 %v842, %v838
  %v899 = vpack.c.b16 %v843, %v839
  %v900 = vpack.c.b16 %v844, %v840
  %v901 = vpack.c.b16 %v845, %v841
  %v902 = vpack.c.b16 %v850, %v846
  %v903 = vpack.c.b16 %v851, %v847
  %v904 = vpack.c.b16 %v852, %v848
  %v905 = vpack.c.b16 %v853, %v849
  %v906 = vpack.c.b16 %v858, %v854
  %v907 = vpack.c.b16 %v859, %v855
  %v908 = vpack.c.b16 %v860, %v856
  %v909 = vpack.c.b16 %v861, %v857
  %v910 = vpack.c.b16 %v866, %v862
  %v911 = vpack.c.b16 %v867, %v863
  %v912 = vpack.c.b16 %v868, %v864
  %v913 = vpack.c.b16 %v869, %v865
  %v914 = vpack.c.b16 %v874, %v870
  %v915 = vpack.c.b16 %v875, %v871
  %v916 = vpack.c.b16 %v876, %v872
  %v917 = vpack.c.b16 %v877, %v873
  %v918 = vpack.c.b16 %v882, %v878
  %v919 = vpack.c.b16 %v883, %v879
  %v920 = vpack.c.b16 %v884, %v880
  %v921 = vpack.c.b16 %v885, %v881
  %v922 = vpack.c.b16 %v890, %v886
  %v923 = vpack.c.b16 %v891, %v887
  %v924 = vpack.c.b16 %v892, %v888
  %v925 = vpack.c.b16 %v893, %v889
  %958 = vmatprep.subr.bf16.mxu0 %v895
  %959 = vmatpush1.bf16.msra.mxu0 %v894
  %960 = vmatprep.subr.bf16.mxu0 %v899
  %961 = vmatpush1.bf16.msra.mxu0 %v898
  %962 = vmatprep.subr.bf16.mxu0 %v903
  %963 = vmatpush1.bf16.msra.mxu0 %v902
  %964 = vmatprep.subr.bf16.mxu0 %v907
  %965 = vmatpush1.bf16.msra.mxu0 %v906
  %966 = vmatprep.subr.bf16.mxu0 %v911
  %967 = vmatpush1.bf16.msra.mxu0 %v910
  %968 = vmatprep.subr.bf16.mxu0 %v915
  %969 = vmatpush1.bf16.msra.mxu0 %v914
  %970 = vmatprep.subr.bf16.mxu0 %v919
  %971 = vmatpush1.bf16.msra.mxu0 %v918
  %972 = vmatprep.subr.bf16.mxu0 %v923
  %973 = vmatpush1.bf16.msra.mxu0 %v922
  %974 = vmatprep.subr.bf16.mxu0 0
  %975 = vmatpush1.bf16.msra.mxu0 0
  %976 = vmatprep.subr.bf16.mxu0 0
  %977 = vmatpush1.bf16.msra.mxu0 0
  %978 = vmatprep.subr.bf16.mxu0 0
  %979 = vmatpush1.bf16.msra.mxu0 0
  %980 = vmatprep.subr.bf16.mxu0 0
  %981 = vmatpush1.bf16.msra.mxu0 0
  %982 = vmatprep.subr.bf16.mxu0 0
  %983 = vmatpush1.bf16.msra.mxu0 0
  %984 = vmatprep.subr.bf16.mxu0 0
  %985 = vmatpush1.bf16.msra.mxu0 0
  %986 = vmatprep.subr.bf16.mxu0 0
  %987 = vmatpush1.bf16.msra.mxu0 0
  %988 = vmatprep.subr.bf16.mxu0 0
  %989 = vmatpush1.bf16.msra.mxu0 0
  %990 = vmatprep.mubr.bf16.mxu0 0
  %991 = vmatmul.mubr.bf16.gmra.mrb[0].mxu0 %v765
  %v992 = vpop.f32.mrb[0].mxu0
  %v993 = vadd.f32 0.0, %v992
  %v994 = vpop.f32.mrb[0].mxu0
  %v995 = vadd.f32 0.0, %v994
  %v996 = vpop.f32.mrb[0].mxu0
  %v997 = vpop.f32.mrb[0].mxu0
  %998 = vdwg.mxu0
  %999 = vmatprep.subr.bf16.mxu0 %v897
  %1000 = vmatpush1.bf16.msra.mxu0 %v896
  %1001 = vmatprep.subr.bf16.mxu0 %v901
  %1002 = vmatpush1.bf16.msra.mxu0 %v900
  %1003 = vmatprep.subr.bf16.mxu0 %v905
  %1004 = vmatpush1.bf16.msra.mxu0 %v904
  %1005 = vmatprep.subr.bf16.mxu0 %v909
  %1006 = vmatpush1.bf16.msra.mxu0 %v908
  %1007 = vmatprep.subr.bf16.mxu0 %v913
  %1008 = vmatpush1.bf16.msra.mxu0 %v912
  %1009 = vmatprep.subr.bf16.mxu0 %v917
  %1010 = vmatpush1.bf16.msra.mxu0 %v916
  %1011 = vmatprep.subr.bf16.mxu0 %v921
  %1012 = vmatpush1.bf16.msra.mxu0 %v920
  %1013 = vmatprep.subr.bf16.mxu0 %v925
  %1014 = vmatpush1.bf16.msra.mxu0 %v924
  %1015 = vmatprep.subr.bf16.mxu0 0
  %1016 = vmatpush1.bf16.msra.mxu0 0
  %1017 = vmatprep.subr.bf16.mxu0 0
  %1018 = vmatpush1.bf16.msra.mxu0 0
  %1019 = vmatprep.subr.bf16.mxu0 0
  %1020 = vmatpush1.bf16.msra.mxu0 0
  %1021 = vmatprep.subr.bf16.mxu0 0
  %1022 = vmatpush1.bf16.msra.mxu0 0
  %1023 = vmatprep.subr.bf16.mxu0 0
  %1024 = vmatpush1.bf16.msra.mxu0 0
  %1025 = vmatprep.subr.bf16.mxu0 0
  %1026 = vmatpush1.bf16.msra.mxu0 0
  %1027 = vmatprep.subr.bf16.mxu0 0
  %1028 = vmatpush1.bf16.msra.mxu0 0
  %1029 = vmatprep.subr.bf16.mxu0 0
  %1030 = vmatpush1.bf16.msra.mxu0 0
  %1031 = vmatprep.mubr.bf16.mxu0 0
  %1032 = vmatmul.mubr.bf16.gmra.mrb[0].mxu0 %v765
  %v1033 = vpop.f32.mrb[0].mxu0
  %v1034 = vadd.f32 0.0, %v1033
  %v1035 = vpop.f32.mrb[0].mxu0
  %v1036 = vadd.f32 0.0, %v1035
  %v1037 = vpop.f32.mrb[0].mxu0
  %v1038 = vpop.f32.mrb[0].mxu0
  %1039 = vdwg.mxu0
  %v1040 = vadd.f32 %v760, %v993
  %v1041 = vadd.f32 %v761, %v995
  %v1042 = vadd.f32 %v762, %v1034
  %v1043 = vadd.f32 %v763, %v1036
  %v1044 = vxor.u32 %v1040, 2147483648
  %v1045 = vxor.u32 %v1041, 2147483648
  %v1046 = vxor.u32 %v1042, 2147483648
  %v1047 = vmul.f32 %v1044, 1.442695
  %v1048 = vpow.pop %v1047
  %v1049 = vmul.f32 %v1045, 1.442695
  %v1050 = vpow.pop %v1049
  %v1051 = vmul.f32 %v1046, 1.442695
  %v1052 = vpow.pop %v1051
  %v1053 = vadd.f32 %v1048, 1.0
  %v1054 = vadd.f32 %v1050, 1.0
  %v1055 = vadd.f32 %v1052, 1.0
  %v1056 = vrcp.pop %v1053
  %v1057 = vmul.f32 1.0, %v1056
  %v1058 = vrcp.pop %v1054
  %v1059 = vmul.f32 1.0, %v1058
  %v1060 = vrcp.pop %v1055
  %v1061 = vmul.f32 1.0, %v1060
  %v1062 = vtanh.pop %v1043
  %v1063 = vld [vmem:[#allocation3] sm:$0xff]
  %v1064 = vmul.f32 %v1059, %v1063
  %v1065 = vmul.f32 %v1057, %v1062
  %v1066 = vadd.f32 %v1064, %v1065
  %1067 = vst [vmem:[#allocation3] sm:$0xff] %v1066
  %v1068 = vtanh.pop %v1066
  %v1069 = vmul.f32 %v1061, %v1068
  %1070 = vst [vmem:[%s4] sm:$0xff] %v1069
  %s1071 = scalar_lea.vmem [#allocation2], 64
  %v1072 = vld [vmem:[%s1071] sm:$0xff]
  %v1073 = vld [vmem:[%s1071 + $0x8] sm:$0xff]
  %v1074 = vld [vmem:[%s1071 + $0x10] sm:$0xff]
  %v1075 = vld [vmem:[%s1071 + $0x18] sm:$0xff]
  %v1076 = vld [vmem:[%s4] sm:$0xff]
  %v1077 = vpack.c.bf16 %v1076, %v1076
  %v1078 = vld [vmem:[%s2] sm:$0xff]
  %v1079 = vld [vmem:[%s2 + $0x8] sm:$0xff]
  %v1080 = vld [vmem:[%s2 + $0x10] sm:$0xff]
  %v1081 = vld [vmem:[%s2 + $0x18] sm:$0xff]
  %v1082 = vld [vmem:[%s2 + $0x20] sm:$0xff]
  %v1083 = vld [vmem:[%s2 + $0x28] sm:$0xff]
  %v1084 = vld [vmem:[%s2 + $0x30] sm:$0xff]
  %v1085 = vld [vmem:[%s2 + $0x38] sm:$0xff]
  %v1086 = vld [vmem:[%s2 + $0x40] sm:$0xff]
  %v1087 = vld [vmem:[%s2 + $0x48] sm:$0xff]
  %v1088 = vld [vmem:[%s2 + $0x50] sm:$0xff]
  %v1089 = vld [vmem:[%s2 + $0x58] sm:$0xff]
  %v1090 = vld [vmem:[%s2 + $0x60] sm:$0xff]
  %v1091 = vld [vmem:[%s2 + $0x68] sm:$0xff]
  %v1092 = vld [vmem:[%s2 + $0x70] sm:$0xff]
  %v1093 = vld [vmem:[%s2 + $0x78] sm:$0xff]
  %v1094 = vld [vmem:[%s2 + $0x80] sm:$0xff]
  %v1095 = vld [vmem:[%s2 + $0x88] sm:$0xff]
  %v1096 = vld [vmem:[%s2 + $0x90] sm:$0xff]
  %v1097 = vld [vmem:[%s2 + $0x98] sm:$0xff]
  %v1098 = vld [vmem:[%s2 + $0xa0] sm:$0xff]
  %v1099 = vld [vmem:[%s2 + $0xa8] sm:$0xff]
  %v1100 = vld [vmem:[%s2 + $0xb0] sm:$0xff]
  %v1101 = vld [vmem:[%s2 + $0xb8] sm:$0xff]
  %v1102 = vld [vmem:[%s2 + $0xc0] sm:$0xff]
  %v1103 = vld [vmem:[%s2 + $0xc8] sm:$0xff]
  %v1104 = vld [vmem:[%s2 + $0xd0] sm:$0xff]
  %v1105 = vld [vmem:[%s2 + $0xd8] sm:$0xff]
  %v1106 = vld [vmem:[%s2 + $0xe0] sm:$0xff]
  %v1107 = vld [vmem:[%s2 + $0xe8] sm:$0xff]
  %v1108 = vld [vmem:[%s2 + $0xf0] sm:$0xff]
  %v1109 = vld [vmem:[%s2 + $0xf8] sm:$0xff]
  %v1142 = vunpack.c.l.b16 %v1078
  %v1143 = vunpack.c.h.b16 %v1078
  %v1144 = vunpack.c.l.b16 %v1079
  %v1145 = vunpack.c.h.b16 %v1079
  %v1146 = vunpack.c.l.b16 %v1080
  %v1147 = vunpack.c.h.b16 %v1080
  %v1148 = vunpack.c.l.b16 %v1081
  %v1149 = vunpack.c.h.b16 %v1081
  %v1150 = vunpack.c.l.b16 %v1082
  %v1151 = vunpack.c.h.b16 %v1082
  %v1152 = vunpack.c.l.b16 %v1083
  %v1153 = vunpack.c.h.b16 %v1083
  %v1154 = vunpack.c.l.b16 %v1084
  %v1155 = vunpack.c.h.b16 %v1084
  %v1156 = vunpack.c.l.b16 %v1085
  %v1157 = vunpack.c.h.b16 %v1085
  %v1158 = vunpack.c.l.b16 %v1086
  %v1159 = vunpack.c.h.b16 %v1086
  %v1160 = vunpack.c.l.b16 %v1087
  %v1161 = vunpack.c.h.b16 %v1087
  %v1162 = vunpack.c.l.b16 %v1088
  %v1163 = vunpack.c.h.b16 %v1088
  %v1164 = vunpack.c.l.b16 %v1089
  %v1165 = vunpack.c.h.b16 %v1089
  %v1166 = vunpack.c.l.b16 %v1090
  %v1167 = vunpack.c.h.b16 %v1090
  %v1168 = vunpack.c.l.b16 %v1091
  %v1169 = vunpack.c.h.b16 %v1091
  %v1170 = vunpack.c.l.b16 %v1092
  %v1171 = vunpack.c.h.b16 %v1092
  %v1172 = vunpack.c.l.b16 %v1093
  %v1173 = vunpack.c.h.b16 %v1093
  %v1174 = vunpack.c.l.b16 %v1094
  %v1175 = vunpack.c.h.b16 %v1094
  %v1176 = vunpack.c.l.b16 %v1095
  %v1177 = vunpack.c.h.b16 %v1095
  %v1178 = vunpack.c.l.b16 %v1096
  %v1179 = vunpack.c.h.b16 %v1096
  %v1180 = vunpack.c.l.b16 %v1097
  %v1181 = vunpack.c.h.b16 %v1097
  %v1182 = vunpack.c.l.b16 %v1098
  %v1183 = vunpack.c.h.b16 %v1098
  %v1184 = vunpack.c.l.b16 %v1099
  %v1185 = vunpack.c.h.b16 %v1099
  %v1186 = vunpack.c.l.b16 %v1100
  %v1187 = vunpack.c.h.b16 %v1100
  %v1188 = vunpack.c.l.b16 %v1101
  %v1189 = vunpack.c.h.b16 %v1101
  %v1190 = vunpack.c.l.b16 %v1102
  %v1191 = vunpack.c.h.b16 %v1102
  %v1192 = vunpack.c.l.b16 %v1103
  %v1193 = vunpack.c.h.b16 %v1103
  %v1194 = vunpack.c.l.b16 %v1104
  %v1195 = vunpack.c.h.b16 %v1104
  %v1196 = vunpack.c.l.b16 %v1105
  %v1197 = vunpack.c.h.b16 %v1105
  %v1198 = vunpack.c.l.b16 %v1106
  %v1199 = vunpack.c.h.b16 %v1106
  %v1200 = vunpack.c.l.b16 %v1107
  %v1201 = vunpack.c.h.b16 %v1107
  %v1202 = vunpack.c.l.b16 %v1108
  %v1203 = vunpack.c.h.b16 %v1108
  %v1204 = vunpack.c.l.b16 %v1109
  %v1205 = vunpack.c.h.b16 %v1109
  %v1206 = vpack.c.b16 %v1146, %v1142
  %v1207 = vpack.c.b16 %v1147, %v1143
  %v1208 = vpack.c.b16 %v1148, %v1144
  %v1209 = vpack.c.b16 %v1149, %v1145
  %v1210 = vpack.c.b16 %v1154, %v1150
  %v1211 = vpack.c.b16 %v1155, %v1151
  %v1212 = vpack.c.b16 %v1156, %v1152
  %v1213 = vpack.c.b16 %v1157, %v1153
  %v1214 = vpack.c.b16 %v1162, %v1158
  %v1215 = vpack.c.b16 %v1163, %v1159
  %v1216 = vpack.c.b16 %v1164, %v1160
  %v1217 = vpack.c.b16 %v1165, %v1161
  %v1218 = vpack.c.b16 %v1170, %v1166
  %v1219 = vpack.c.b16 %v1171, %v1167
  %v1220 = vpack.c.b16 %v1172, %v1168
  %v1221 = vpack.c.b16 %v1173, %v1169
  %v1222 = vpack.c.b16 %v1178, %v1174
  %v1223 = vpack.c.b16 %v1179, %v1175
  %v1224 = vpack.c.b16 %v1180, %v1176
  %v1225 = vpack.c.b16 %v1181, %v1177
  %v1226 = vpack.c.b16 %v1186, %v1182
  %v1227 = vpack.c.b16 %v1187, %v1183
  %v1228 = vpack.c.b16 %v1188, %v1184
  %v1229 = vpack.c.b16 %v1189, %v1185
  %v1230 = vpack.c.b16 %v1194, %v1190
  %v1231 = vpack.c.b16 %v1195, %v1191
  %v1232 = vpack.c.b16 %v1196, %v1192
  %v1233 = vpack.c.b16 %v1197, %v1193
  %v1234 = vpack.c.b16 %v1202, %v1198
  %v1235 = vpack.c.b16 %v1203, %v1199
  %v1236 = vpack.c.b16 %v1204, %v1200
  %v1237 = vpack.c.b16 %v1205, %v1201
  %1270 = vmatprep.subr.bf16.mxu0 %v1207
  %1271 = vmatpush1.bf16.msra.mxu0 %v1206
  %1272 = vmatprep.subr.bf16.mxu0 %v1211
  %1273 = vmatpush1.bf16.msra.mxu0 %v1210
  %1274 = vmatprep.subr.bf16.mxu0 %v1215
  %1275 = vmatpush1.bf16.msra.mxu0 %v1214
  %1276 = vmatprep.subr.bf16.mxu0 %v1219
  %1277 = vmatpush1.bf16.msra.mxu0 %v1218
  %1278 = vmatprep.subr.bf16.mxu0 %v1223
  %1279 = vmatpush1.bf16.msra.mxu0 %v1222
  %1280 = vmatprep.subr.bf16.mxu0 %v1227
  %1281 = vmatpush1.bf16.msra.mxu0 %v1226
  %1282 = vmatprep.subr.bf16.mxu0 %v1231
  %1283 = vmatpush1.bf16.msra.mxu0 %v1230
  %1284 = vmatprep.subr.bf16.mxu0 %v1235
  %1285 = vmatpush1.bf16.msra.mxu0 %v1234
  %1286 = vmatprep.subr.bf16.mxu0 0
  %1287 = vmatpush1.bf16.msra.mxu0 0
  %1288 = vmatprep.subr.bf16.mxu0 0
  %1289 = vmatpush1.bf16.msra.mxu0 0
  %1290 = vmatprep.subr.bf16.mxu0 0
  %1291 = vmatpush1.bf16.msra.mxu0 0
  %1292 = vmatprep.subr.bf16.mxu0 0
  %1293 = vmatpush1.bf16.msra.mxu0 0
  %1294 = vmatprep.subr.bf16.mxu0 0
  %1295 = vmatpush1.bf16.msra.mxu0 0
  %1296 = vmatprep.subr.bf16.mxu0 0
  %1297 = vmatpush1.bf16.msra.mxu0 0
  %1298 = vmatprep.subr.bf16.mxu0 0
  %1299 = vmatpush1.bf16.msra.mxu0 0
  %1300 = vmatprep.subr.bf16.mxu0 0
  %1301 = vmatpush1.bf16.msra.mxu0 0
  %1302 = vmatprep.mubr.bf16.mxu0 0
  %1303 = vmatmul.mubr.bf16.gmra.mrb[0].mxu0 %v1077
  %v1304 = vpop.f32.mrb[0].mxu0
  %v1305 = vadd.f32 0.0, %v1304
  %v1306 = vpop.f32.mrb[0].mxu0
  %v1307 = vadd.f32 0.0, %v1306
  %v1308 = vpop.f32.mrb[0].mxu0
  %v1309 = vpop.f32.mrb[0].mxu0
  %1310 = vdwg.mxu0
  %1311 = vmatprep.subr.bf16.mxu0 %v1209
  %1312 = vmatpush1.bf16.msra.mxu0 %v1208
  %1313 = vmatprep.subr.bf16.mxu0 %v1213
  %1314 = vmatpush1.bf16.msra.mxu0 %v1212
  %1315 = vmatprep.subr.bf16.mxu0 %v1217
  %1316 = vmatpush1.bf16.msra.mxu0 %v1216
  %1317 = vmatprep.subr.bf16.mxu0 %v1221
  %1318 = vmatpush1.bf16.msra.mxu0 %v1220
  %1319 = vmatprep.subr.bf16.mxu0 %v1225
  %1320 = vmatpush1.bf16.msra.mxu0 %v1224
  %1321 = vmatprep.subr.bf16.mxu0 %v1229
  %1322 = vmatpush1.bf16.msra.mxu0 %v1228
  %1323 = vmatprep.subr.bf16.mxu0 %v1233
  %1324 = vmatpush1.bf16.msra.mxu0 %v1232
  %1325 = vmatprep.subr.bf16.mxu0 %v1237
  %1326 = vmatpush1.bf16.msra.mxu0 %v1236
  %1327 = vmatprep.subr.bf16.mxu0 0
  %1328 = vmatpush1.bf16.msra.mxu0 0
  %1329 = vmatprep.subr.bf16.mxu0 0
  %1330 = vmatpush1.bf16.msra.mxu0 0
  %1331 = vmatprep.subr.bf16.mxu0 0
  %1332 = vmatpush1.bf16.msra.mxu0 0
  %1333 = vmatprep.subr.bf16.mxu0 0
  %1334 = vmatpush1.bf16.msra.mxu0 0
  %1335 = vmatprep.subr.bf16.mxu0 0
  %1336 = vmatpush1.bf16.msra.mxu0 0
  %1337 = vmatprep.subr.bf16.mxu0 0
  %1338 = vmatpush1.bf16.msra.mxu0 0
  %1339 = vmatprep.subr.bf16.mxu0 0
  %1340 = vmatpush1.bf16.msra.mxu0 0
  %1341 = vmatprep.subr.bf16.mxu0 0
  %1342 = vmatpush1.bf16.msra.mxu0 0
  %1343 = vmatprep.mubr.bf16.mxu0 0
  %1344 = vmatmul.mubr.bf16.gmra.mrb[0].mxu0 %v1077
  %v1345 = vpop.f32.mrb[0].mxu0
  %v1346 = vadd.f32 0.0, %v1345
  %v1347 = vpop.f32.mrb[0].mxu0
  %v1348 = vadd.f32 0.0, %v1347
  %v1349 = vpop.f32.mrb[0].mxu0
  %v1350 = vpop.f32.mrb[0].mxu0
  %1351 = vdwg.mxu0
  %v1352 = vadd.f32 %v1072, %v1305
  %v1353 = vadd.f32 %v1073, %v1307
  %v1354 = vadd.f32 %v1074, %v1346
  %v1355 = vadd.f32 %v1075, %v1348
  %v1356 = vxor.u32 %v1352, 2147483648
  %v1357 = vxor.u32 %v1353, 2147483648
  %v1358 = vxor.u32 %v1354, 2147483648
  %v1359 = vmul.f32 %v1356, 1.442695
  %v1360 = vpow.pop %v1359
  %v1361 = vmul.f32 %v1357, 1.442695
  %v1362 = vpow.pop %v1361
  %v1363 = vmul.f32 %v1358, 1.442695
  %v1364 = vpow.pop %v1363
  %v1365 = vadd.f32 %v1360, 1.0
  %v1366 = vadd.f32 %v1362, 1.0
  %v1367 = vadd.f32 %v1364, 1.0
  %v1368 = vrcp.pop %v1365
  %v1369 = vmul.f32 1.0, %v1368
  %v1370 = vrcp.pop %v1366
  %v1371 = vmul.f32 1.0, %v1370
  %v1372 = vrcp.pop %v1367
  %v1373 = vmul.f32 1.0, %v1372
  %v1374 = vtanh.pop %v1355
  %v1375 = vld [vmem:[#allocation3] sm:$0xff]
  %v1376 = vmul.f32 %v1371, %v1375
  %v1377 = vmul.f32 %v1369, %v1374
  %v1378 = vadd.f32 %v1376, %v1377
  %1379 = vst [vmem:[#allocation3] sm:$0xff] %v1378
  %v1380 = vtanh.pop %v1378
  %v1381 = vmul.f32 %v1373, %v1380
  %1382 = vst [vmem:[%s4] sm:$0xff] %v1381
  %s1383 = scalar_lea.vmem [#allocation2], 96
  %v1384 = vld [vmem:[%s1383] sm:$0xff]
  %v1385 = vld [vmem:[%s1383 + $0x8] sm:$0xff]
  %v1386 = vld [vmem:[%s1383 + $0x10] sm:$0xff]
  %v1387 = vld [vmem:[%s1383 + $0x18] sm:$0xff]
  %v1388 = vld [vmem:[%s4] sm:$0xff]
  %v1389 = vpack.c.bf16 %v1388, %v1388
  %v1390 = vld [vmem:[%s2] sm:$0xff]
  %v1391 = vld [vmem:[%s2 + $0x8] sm:$0xff]
  %v1392 = vld [vmem:[%s2 + $0x10] sm:$0xff]
  %v1393 = vld [vmem:[%s2 + $0x18] sm:$0xff]
  %v1394 = vld [vmem:[%s2 + $0x20] sm:$0xff]
  %v1395 = vld [vmem:[%s2 + $0x28] sm:$0xff]
  %v1396 = vld [vmem:[%s2 + $0x30] sm:$0xff]
  %v1397 = vld [vmem:[%s2 + $0x38] sm:$0xff]
  %v1398 = vld [vmem:[%s2 + $0x40] sm:$0xff]
  %v1399 = vld [vmem:[%s2 + $0x48] sm:$0xff]
  %v1400 = vld [vmem:[%s2 + $0x50] sm:$0xff]
  %v1401 = vld [vmem:[%s2 + $0x58] sm:$0xff]
  %v1402 = vld [vmem:[%s2 + $0x60] sm:$0xff]
  %v1403 = vld [vmem:[%s2 + $0x68] sm:$0xff]
  %v1404 = vld [vmem:[%s2 + $0x70] sm:$0xff]
  %v1405 = vld [vmem:[%s2 + $0x78] sm:$0xff]
  %v1406 = vld [vmem:[%s2 + $0x80] sm:$0xff]
  %v1407 = vld [vmem:[%s2 + $0x88] sm:$0xff]
  %v1408 = vld [vmem:[%s2 + $0x90] sm:$0xff]
  %v1409 = vld [vmem:[%s2 + $0x98] sm:$0xff]
  %v1410 = vld [vmem:[%s2 + $0xa0] sm:$0xff]
  %v1411 = vld [vmem:[%s2 + $0xa8] sm:$0xff]
  %v1412 = vld [vmem:[%s2 + $0xb0] sm:$0xff]
  %v1413 = vld [vmem:[%s2 + $0xb8] sm:$0xff]
  %v1414 = vld [vmem:[%s2 + $0xc0] sm:$0xff]
  %v1415 = vld [vmem:[%s2 + $0xc8] sm:$0xff]
  %v1416 = vld [vmem:[%s2 + $0xd0] sm:$0xff]
  %v1417 = vld [vmem:[%s2 + $0xd8] sm:$0xff]
  %v1418 = vld [vmem:[%s2 + $0xe0] sm:$0xff]
  %v1419 = vld [vmem:[%s2 + $0xe8] sm:$0xff]
  %v1420 = vld [vmem:[%s2 + $0xf0] sm:$0xff]
  %v1421 = vld [vmem:[%s2 + $0xf8] sm:$0xff]
  %v1454 = vunpack.c.l.b16 %v1390
  %v1455 = vunpack.c.h.b16 %v1390
  %v1456 = vunpack.c.l.b16 %v1391
  %v1457 = vunpack.c.h.b16 %v1391
  %v1458 = vunpack.c.l.b16 %v1392
  %v1459 = vunpack.c.h.b16 %v1392
  %v1460 = vunpack.c.l.b16 %v1393
  %v1461 = vunpack.c.h.b16 %v1393
  %v1462 = vunpack.c.l.b16 %v1394
  %v1463 = vunpack.c.h.b16 %v1394
  %v1464 = vunpack.c.l.b16 %v1395
  %v1465 = vunpack.c.h.b16 %v1395
  %v1466 = vunpack.c.l.b16 %v1396
  %v1467 = vunpack.c.h.b16 %v1396
  %v1468 = vunpack.c.l.b16 %v1397
  %v1469 = vunpack.c.h.b16 %v1397
  %v1470 = vunpack.c.l.b16 %v1398
  %v1471 = vunpack.c.h.b16 %v1398
  %v1472 = vunpack.c.l.b16 %v1399
  %v1473 = vunpack.c.h.b16 %v1399
  %v1474 = vunpack.c.l.b16 %v1400
  %v1475 = vunpack.c.h.b16 %v1400
  %v1476 = vunpack.c.l.b16 %v1401
  %v1477 = vunpack.c.h.b16 %v1401
  %v1478 = vunpack.c.l.b16 %v1402
  %v1479 = vunpack.c.h.b16 %v1402
  %v1480 = vunpack.c.l.b16 %v1403
  %v1481 = vunpack.c.h.b16 %v1403
  %v1482 = vunpack.c.l.b16 %v1404
  %v1483 = vunpack.c.h.b16 %v1404
  %v1484 = vunpack.c.l.b16 %v1405
  %v1485 = vunpack.c.h.b16 %v1405
  %v1486 = vunpack.c.l.b16 %v1406
  %v1487 = vunpack.c.h.b16 %v1406
  %v1488 = vunpack.c.l.b16 %v1407
  %v1489 = vunpack.c.h.b16 %v1407
  %v1490 = vunpack.c.l.b16 %v1408
  %v1491 = vunpack.c.h.b16 %v1408
  %v1492 = vunpack.c.l.b16 %v1409
  %v1493 = vunpack.c.h.b16 %v1409
  %v1494 = vunpack.c.l.b16 %v1410
  %v1495 = vunpack.c.h.b16 %v1410
  %v1496 = vunpack.c.l.b16 %v1411
  %v1497 = vunpack.c.h.b16 %v1411
  %v1498 = vunpack.c.l.b16 %v1412
  %v1499 = vunpack.c.h.b16 %v1412
  %v1500 = vunpack.c.l.b16 %v1413
  %v1501 = vunpack.c.h.b16 %v1413
  %v1502 = vunpack.c.l.b16 %v1414
  %v1503 = vunpack.c.h.b16 %v1414
  %v1504 = vunpack.c.l.b16 %v1415
  %v1505 = vunpack.c.h.b16 %v1415
  %v1506 = vunpack.c.l.b16 %v1416
  %v1507 = vunpack.c.h.b16 %v1416
  %v1508 = vunpack.c.l.b16 %v1417
  %v1509 = vunpack.c.h.b16 %v1417
  %v1510 = vunpack.c.l.b16 %v1418
  %v1511 = vunpack.c.h.b16 %v1418
  %v1512 = vunpack.c.l.b16 %v1419
  %v1513 = vunpack.c.h.b16 %v1419
  %v1514 = vunpack.c.l.b16 %v1420
  %v1515 = vunpack.c.h.b16 %v1420
  %v1516 = vunpack.c.l.b16 %v1421
  %v1517 = vunpack.c.h.b16 %v1421
  %v1518 = vpack.c.b16 %v1458, %v1454
  %v1519 = vpack.c.b16 %v1459, %v1455
  %v1520 = vpack.c.b16 %v1460, %v1456
  %v1521 = vpack.c.b16 %v1461, %v1457
  %v1522 = vpack.c.b16 %v1466, %v1462
  %v1523 = vpack.c.b16 %v1467, %v1463
  %v1524 = vpack.c.b16 %v1468, %v1464
  %v1525 = vpack.c.b16 %v1469, %v1465
  %v1526 = vpack.c.b16 %v1474, %v1470
  %v1527 = vpack.c.b16 %v1475, %v1471
  %v1528 = vpack.c.b16 %v1476, %v1472
  %v1529 = vpack.c.b16 %v1477, %v1473
  %v1530 = vpack.c.b16 %v1482, %v1478
  %v1531 = vpack.c.b16 %v1483, %v1479
  %v1532 = vpack.c.b16 %v1484, %v1480
  %v1533 = vpack.c.b16 %v1485, %v1481
  %v1534 = vpack.c.b16 %v1490, %v1486
  %v1535 = vpack.c.b16 %v1491, %v1487
  %v1536 = vpack.c.b16 %v1492, %v1488
  %v1537 = vpack.c.b16 %v1493, %v1489
  %v1538 = vpack.c.b16 %v1498, %v1494
  %v1539 = vpack.c.b16 %v1499, %v1495
  %v1540 = vpack.c.b16 %v1500, %v1496
  %v1541 = vpack.c.b16 %v1501, %v1497
  %v1542 = vpack.c.b16 %v1506, %v1502
  %v1543 = vpack.c.b16 %v1507, %v1503
  %v1544 = vpack.c.b16 %v1508, %v1504
  %v1545 = vpack.c.b16 %v1509, %v1505
  %v1546 = vpack.c.b16 %v1514, %v1510
  %v1547 = vpack.c.b16 %v1515, %v1511
  %v1548 = vpack.c.b16 %v1516, %v1512
  %v1549 = vpack.c.b16 %v1517, %v1513
  %1582 = vmatprep.subr.bf16.mxu0 %v1519
  %1583 = vmatpush1.bf16.msra.mxu0 %v1518
  %1584 = vmatprep.subr.bf16.mxu0 %v1523
  %1585 = vmatpush1.bf16.msra.mxu0 %v1522
  %1586 = vmatprep.subr.bf16.mxu0 %v1527
  %1587 = vmatpush1.bf16.msra.mxu0 %v1526
  %1588 = vmatprep.subr.bf16.mxu0 %v1531
  %1589 = vmatpush1.bf16.msra.mxu0 %v1530
  %1590 = vmatprep.subr.bf16.mxu0 %v1535
  %1591 = vmatpush1.bf16.msra.mxu0 %v1534
  %1592 = vmatprep.subr.bf16.mxu0 %v1539
  %1593 = vmatpush1.bf16.msra.mxu0 %v1538
  %1594 = vmatprep.subr.bf16.mxu0 %v1543
  %1595 = vmatpush1.bf16.msra.mxu0 %v1542
  %1596 = vmatprep.subr.bf16.mxu0 %v1547
  %1597 = vmatpush1.bf16.msra.mxu0 %v1546
  %1598 = vmatprep.subr.bf16.mxu0 0
  %1599 = vmatpush1.bf16.msra.mxu0 0
  %1600 = vmatprep.subr.bf16.mxu0 0
  %1601 = vmatpush1.bf16.msra.mxu0 0
  %1602 = vmatprep.subr.bf16.mxu0 0
  %1603 = vmatpush1.bf16.msra.mxu0 0
  %1604 = vmatprep.subr.bf16.mxu0 0
  %1605 = vmatpush1.bf16.msra.mxu0 0
  %1606 = vmatprep.subr.bf16.mxu0 0
  %1607 = vmatpush1.bf16.msra.mxu0 0
  %1608 = vmatprep.subr.bf16.mxu0 0
  %1609 = vmatpush1.bf16.msra.mxu0 0
  %1610 = vmatprep.subr.bf16.mxu0 0
  %1611 = vmatpush1.bf16.msra.mxu0 0
  %1612 = vmatprep.subr.bf16.mxu0 0
  %1613 = vmatpush1.bf16.msra.mxu0 0
  %1614 = vmatprep.mubr.bf16.mxu0 0
  %1615 = vmatmul.mubr.bf16.gmra.mrb[0].mxu0 %v1389
  %v1616 = vpop.f32.mrb[0].mxu0
  %v1617 = vadd.f32 0.0, %v1616
  %v1618 = vpop.f32.mrb[0].mxu0
  %v1619 = vadd.f32 0.0, %v1618
  %v1620 = vpop.f32.mrb[0].mxu0
  %v1621 = vpop.f32.mrb[0].mxu0
  %1622 = vdwg.mxu0
  %1623 = vmatprep.subr.bf16.mxu0 %v1521
  %1624 = vmatpush1.bf16.msra.mxu0 %v1520
  %1625 = vmatprep.subr.bf16.mxu0 %v1525
  %1626 = vmatpush1.bf16.msra.mxu0 %v1524
  %1627 = vmatprep.subr.bf16.mxu0 %v1529
  %1628 = vmatpush1.bf16.msra.mxu0 %v1528
  %1629 = vmatprep.subr.bf16.mxu0 %v1533
  %1630 = vmatpush1.bf16.msra.mxu0 %v1532
  %1631 = vmatprep.subr.bf16.mxu0 %v1537
  %1632 = vmatpush1.bf16.msra.mxu0 %v1536
  %1633 = vmatprep.subr.bf16.mxu0 %v1541
  %1634 = vmatpush1.bf16.msra.mxu0 %v1540
  %1635 = vmatprep.subr.bf16.mxu0 %v1545
  %1636 = vmatpush1.bf16.msra.mxu0 %v1544
  %1637 = vmatprep.subr.bf16.mxu0 %v1549
  %1638 = vmatpush1.bf16.msra.mxu0 %v1548
  %1639 = vmatprep.subr.bf16.mxu0 0
  %1640 = vmatpush1.bf16.msra.mxu0 0
  %1641 = vmatprep.subr.bf16.mxu0 0
  %1642 = vmatpush1.bf16.msra.mxu0 0
  %1643 = vmatprep.subr.bf16.mxu0 0
  %1644 = vmatpush1.bf16.msra.mxu0 0
  %1645 = vmatprep.subr.bf16.mxu0 0
  %1646 = vmatpush1.bf16.msra.mxu0 0
  %1647 = vmatprep.subr.bf16.mxu0 0
  %1648 = vmatpush1.bf16.msra.mxu0 0
  %1649 = vmatprep.subr.bf16.mxu0 0
  %1650 = vmatpush1.bf16.msra.mxu0 0
  %1651 = vmatprep.subr.bf16.mxu0 0
  %1652 = vmatpush1.bf16.msra.mxu0 0
  %1653 = vmatprep.subr.bf16.mxu0 0
  %1654 = vmatpush1.bf16.msra.mxu0 0
  %1655 = vmatprep.mubr.bf16.mxu0 0
  %1656 = vmatmul.mubr.bf16.gmra.mrb[0].mxu0 %v1389
  %v1657 = vpop.f32.mrb[0].mxu0
  %v1658 = vadd.f32 0.0, %v1657
  %v1659 = vpop.f32.mrb[0].mxu0
  %v1660 = vadd.f32 0.0, %v1659
  %v1661 = vpop.f32.mrb[0].mxu0
  %v1662 = vpop.f32.mrb[0].mxu0
  %1663 = vdwg.mxu0
  %v1664 = vadd.f32 %v1384, %v1617
  %v1665 = vadd.f32 %v1385, %v1619
  %v1666 = vadd.f32 %v1386, %v1658
  %v1667 = vadd.f32 %v1387, %v1660
  %v1668 = vxor.u32 %v1664, 2147483648
  %v1669 = vxor.u32 %v1665, 2147483648
  %v1670 = vxor.u32 %v1666, 2147483648
  %v1671 = vmul.f32 %v1668, 1.442695
  %v1672 = vpow.pop %v1671
  %v1673 = vmul.f32 %v1669, 1.442695
  %v1674 = vpow.pop %v1673
  %v1675 = vmul.f32 %v1670, 1.442695
  %v1676 = vpow.pop %v1675
  %v1677 = vadd.f32 %v1672, 1.0
  %v1678 = vadd.f32 %v1674, 1.0
  %v1679 = vadd.f32 %v1676, 1.0
  %v1680 = vrcp.pop %v1677
  %v1681 = vmul.f32 1.0, %v1680
  %v1682 = vrcp.pop %v1678
  %v1683 = vmul.f32 1.0, %v1682
  %v1684 = vrcp.pop %v1679
  %v1685 = vmul.f32 1.0, %v1684
  %v1686 = vtanh.pop %v1667
  %v1687 = vld [vmem:[#allocation3] sm:$0xff]
  %v1688 = vmul.f32 %v1683, %v1687
  %v1689 = vmul.f32 %v1681, %v1686
  %v1690 = vadd.f32 %v1688, %v1689
  %1691 = vst [vmem:[#allocation3] sm:$0xff] %v1690
  %v1692 = vtanh.pop %v1690
  %v1693 = vmul.f32 %v1685, %v1692
  %1694 = vst [vmem:[%s4] sm:$0xff] %v1693
  %s1695 = scalar_lea.vmem [#allocation2], 128
  %v1696 = vld [vmem:[%s1695] sm:$0xff]
  %v1697 = vld [vmem:[%s1695 + $0x8] sm:$0xff]
  %v1698 = vld [vmem:[%s1695 + $0x10] sm:$0xff]
  %v1699 = vld [vmem:[%s1695 + $0x18] sm:$0xff]
  %v1700 = vld [vmem:[%s4] sm:$0xff]
  %v1701 = vpack.c.bf16 %v1700, %v1700
  %v1702 = vld [vmem:[%s2] sm:$0xff]
  %v1703 = vld [vmem:[%s2 + $0x8] sm:$0xff]
  %v1704 = vld [vmem:[%s2 + $0x10] sm:$0xff]
  %v1705 = vld [vmem:[%s2 + $0x18] sm:$0xff]
  %v1706 = vld [vmem:[%s2 + $0x20] sm:$0xff]
  %v1707 = vld [vmem:[%s2 + $0x28] sm:$0xff]
  %v1708 = vld [vmem:[%s2 + $0x30] sm:$0xff]
  %v1709 = vld [vmem:[%s2 + $0x38] sm:$0xff]
  %v1710 = vld [vmem:[%s2 + $0x40] sm:$0xff]
  %v1711 = vld [vmem:[%s2 + $0x48] sm:$0xff]
  %v1712 = vld [vmem:[%s2 + $0x50] sm:$0xff]
  %v1713 = vld [vmem:[%s2 + $0x58] sm:$0xff]
  %v1714 = vld [vmem:[%s2 + $0x60] sm:$0xff]
  %v1715 = vld [vmem:[%s2 + $0x68] sm:$0xff]
  %v1716 = vld [vmem:[%s2 + $0x70] sm:$0xff]
  %v1717 = vld [vmem:[%s2 + $0x78] sm:$0xff]
  %v1718 = vld [vmem:[%s2 + $0x80] sm:$0xff]
  %v1719 = vld [vmem:[%s2 + $0x88] sm:$0xff]
  %v1720 = vld [vmem:[%s2 + $0x90] sm:$0xff]
  %v1721 = vld [vmem:[%s2 + $0x98] sm:$0xff]
  %v1722 = vld [vmem:[%s2 + $0xa0] sm:$0xff]
  %v1723 = vld [vmem:[%s2 + $0xa8] sm:$0xff]
  %v1724 = vld [vmem:[%s2 + $0xb0] sm:$0xff]
  %v1725 = vld [vmem:[%s2 + $0xb8] sm:$0xff]
  %v1726 = vld [vmem:[%s2 + $0xc0] sm:$0xff]
  %v1727 = vld [vmem:[%s2 + $0xc8] sm:$0xff]
  %v1728 = vld [vmem:[%s2 + $0xd0] sm:$0xff]
  %v1729 = vld [vmem:[%s2 + $0xd8] sm:$0xff]
  %v1730 = vld [vmem:[%s2 + $0xe0] sm:$0xff]
  %v1731 = vld [vmem:[%s2 + $0xe8] sm:$0xff]
  %v1732 = vld [vmem:[%s2 + $0xf0] sm:$0xff]
  %v1733 = vld [vmem:[%s2 + $0xf8] sm:$0xff]
  %v1766 = vunpack.c.l.b16 %v1702
  %v1767 = vunpack.c.h.b16 %v1702
  %v1768 = vunpack.c.l.b16 %v1703
  %v1769 = vunpack.c.h.b16 %v1703
  %v1770 = vunpack.c.l.b16 %v1704
  %v1771 = vunpack.c.h.b16 %v1704
  %v1772 = vunpack.c.l.b16 %v1705
  %v1773 = vunpack.c.h.b16 %v1705
  %v1774 = vunpack.c.l.b16 %v1706
  %v1775 = vunpack.c.h.b16 %v1706
  %v1776 = vunpack.c.l.b16 %v1707
  %v1777 = vunpack.c.h.b16 %v1707
  %v1778 = vunpack.c.l.b16 %v1708
  %v1779 = vunpack.c.h.b16 %v1708
  %v1780 = vunpack.c.l.b16 %v1709
  %v1781 = vunpack.c.h.b16 %v1709
  %v1782 = vunpack.c.l.b16 %v1710
  %v1783 = vunpack.c.h.b16 %v1710
  %v1784 = vunpack.c.l.b16 %v1711
  %v1785 = vunpack.c.h.b16 %v1711
  %v1786 = vunpack.c.l.b16 %v1712
  %v1787 = vunpack.c.h.b16 %v1712
  %v1788 = vunpack.c.l.b16 %v1713
  %v1789 = vunpack.c.h.b16 %v1713
  %v1790 = vunpack.c.l.b16 %v1714
  %v1791 = vunpack.c.h.b16 %v1714
  %v1792 = vunpack.c.l.b16 %v1715
  %v1793 = vunpack.c.h.b16 %v1715
  %v1794 = vunpack.c.l.b16 %v1716
  %v1795 = vunpack.c.h.b16 %v1716
  %v1796 = vunpack.c.l.b16 %v1717
  %v1797 = vunpack.c.h.b16 %v1717
  %v1798 = vunpack.c.l.b16 %v1718
  %v1799 = vunpack.c.h.b16 %v1718
  %v1800 = vunpack.c.l.b16 %v1719
  %v1801 = vunpack.c.h.b16 %v1719
  %v1802 = vunpack.c.l.b16 %v1720
  %v1803 = vunpack.c.h.b16 %v1720
  %v1804 = vunpack.c.l.b16 %v1721
  %v1805 = vunpack.c.h.b16 %v1721
  %v1806 = vunpack.c.l.b16 %v1722
  %v1807 = vunpack.c.h.b16 %v1722
  %v1808 = vunpack.c.l.b16 %v1723
  %v1809 = vunpack.c.h.b16 %v1723
  %v1810 = vunpack.c.l.b16 %v1724
  %v1811 = vunpack.c.h.b16 %v1724
  %v1812 = vunpack.c.l.b16 %v1725
  %v1813 = vunpack.c.h.b16 %v1725
  %v1814 = vunpack.c.l.b16 %v1726
  %v1815 = vunpack.c.h.b16 %v1726
  %v1816 = vunpack.c.l.b16 %v1727
  %v1817 = vunpack.c.h.b16 %v1727
  %v1818 = vunpack.c.l.b16 %v1728
  %v1819 = vunpack.c.h.b16 %v1728
  %v1820 = vunpack.c.l.b16 %v1729
  %v1821 = vunpack.c.h.b16 %v1729
  %v1822 = vunpack.c.l.b16 %v1730
  %v1823 = vunpack.c.h.b16 %v1730
  %v1824 = vunpack.c.l.b16 %v1731
  %v1825 = vunpack.c.h.b16 %v1731
  %v1826 = vunpack.c.l.b16 %v1732
  %v1827 = vunpack.c.h.b16 %v1732
  %v1828 = vunpack.c.l.b16 %v1733
  %v1829 = vunpack.c.h.b16 %v1733
  %v1830 = vpack.c.b16 %v1770, %v1766
  %v1831 = vpack.c.b16 %v1771, %v1767
  %v1832 = vpack.c.b16 %v1772, %v1768
  %v1833 = vpack.c.b16 %v1773, %v1769
  %v1834 = vpack.c.b16 %v1778, %v1774
  %v1835 = vpack.c.b16 %v1779, %v1775
  %v1836 = vpack.c.b16 %v1780, %v1776
  %v1837 = vpack.c.b16 %v1781, %v1777
  %v1838 = vpack.c.b16 %v1786, %v1782
  %v1839 = vpack.c.b16 %v1787, %v1783
  %v1840 = vpack.c.b16 %v1788, %v1784
  %v1841 = vpack.c.b16 %v1789, %v1785
  %v1842 = vpack.c.b16 %v1794, %v1790
  %v1843 = vpack.c.b16 %v1795, %v1791
  %v1844 = vpack.c.b16 %v1796, %v1792
  %v1845 = vpack.c.b16 %v1797, %v1793
  %v1846 = vpack.c.b16 %v1802, %v1798
  %v1847 = vpack.c.b16 %v1803, %v1799
  %v1848 = vpack.c.b16 %v1804, %v1800
  %v1849 = vpack.c.b16 %v1805, %v1801
  %v1850 = vpack.c.b16 %v1810, %v1806
  %v1851 = vpack.c.b16 %v1811, %v1807
  %v1852 = vpack.c.b16 %v1812, %v1808
  %v1853 = vpack.c.b16 %v1813, %v1809
  %v1854 = vpack.c.b16 %v1818, %v1814
  %v1855 = vpack.c.b16 %v1819, %v1815
  %v1856 = vpack.c.b16 %v1820, %v1816
  %v1857 = vpack.c.b16 %v1821, %v1817
  %v1858 = vpack.c.b16 %v1826, %v1822
  %v1859 = vpack.c.b16 %v1827, %v1823
  %v1860 = vpack.c.b16 %v1828, %v1824
  %v1861 = vpack.c.b16 %v1829, %v1825
  %1894 = vmatprep.subr.bf16.mxu0 %v1831
  %1895 = vmatpush1.bf16.msra.mxu0 %v1830
  %1896 = vmatprep.subr.bf16.mxu0 %v1835
  %1897 = vmatpush1.bf16.msra.mxu0 %v1834
  %1898 = vmatprep.subr.bf16.mxu0 %v1839
  %1899 = vmatpush1.bf16.msra.mxu0 %v1838
  %1900 = vmatprep.subr.bf16.mxu0 %v1843
  %1901 = vmatpush1.bf16.msra.mxu0 %v1842
  %1902 = vmatprep.subr.bf16.mxu0 %v1847
  %1903 = vmatpush1.bf16.msra.mxu0 %v1846
  %1904 = vmatprep.subr.bf16.mxu0 %v1851
  %1905 = vmatpush1.bf16.msra.mxu0 %v1850
  %1906 = vmatprep.subr.bf16.mxu0 %v1855
  %1907 = vmatpush1.bf16.msra.mxu0 %v1854
  %1908 = vmatprep.subr.bf16.mxu0 %v1859
  %1909 = vmatpush1.bf16.msra.mxu0 %v1858
  %1910 = vmatprep.subr.bf16.mxu0 0
  %1911 = vmatpush1.bf16.msra.mxu0 0
  %1912 = vmatprep.subr.bf16.mxu0 0
  %1913 = vmatpush1.bf16.msra.mxu0 0
  %1914 = vmatprep.subr.bf16.mxu0 0
  %1915 = vmatpush1.bf16.msra.mxu0 0
  %1916 = vmatprep.subr.bf16.mxu0 0
  %1917 = vmatpush1.bf16.msra.mxu0 0
  %1918 = vmatprep.subr.bf16.mxu0 0
  %1919 = vmatpush1.bf16.msra.mxu0 0
  %1920 = vmatprep.subr.bf16.mxu0 0
  %1921 = vmatpush1.bf16.msra.mxu0 0
  %1922 = vmatprep.subr.bf16.mxu0 0
  %1923 = vmatpush1.bf16.msra.mxu0 0
  %1924 = vmatprep.subr.bf16.mxu0 0
  %1925 = vmatpush1.bf16.msra.mxu0 0
  %1926 = vmatprep.mubr.bf16.mxu0 0
  %1927 = vmatmul.mubr.bf16.gmra.mrb[0].mxu0 %v1701
  %v1928 = vpop.f32.mrb[0].mxu0
  %v1929 = vadd.f32 0.0, %v1928
  %v1930 = vpop.f32.mrb[0].mxu0
  %v1931 = vadd.f32 0.0, %v1930
  %v1932 = vpop.f32.mrb[0].mxu0
  %v1933 = vpop.f32.mrb[0].mxu0
  %1934 = vdwg.mxu0
  %1935 = vmatprep.subr.bf16.mxu0 %v1833
  %1936 = vmatpush1.bf16.msra.mxu0 %v1832
  %1937 = vmatprep.subr.bf16.mxu0 %v1837
  %1938 = vmatpush1.bf16.msra.mxu0 %v1836
  %1939 = vmatprep.subr.bf16.mxu0 %v1841
  %1940 = vmatpush1.bf16.msra.mxu0 %v1840
  %1941 = vmatprep.subr.bf16.mxu0 %v1845
  %1942 = vmatpush1.bf16.msra.mxu0 %v1844
  %1943 = vmatprep.subr.bf16.mxu0 %v1849
  %1944 = vmatpush1.bf16.msra.mxu0 %v1848
  %1945 = vmatprep.subr.bf16.mxu0 %v1853
  %1946 = vmatpush1.bf16.msra.mxu0 %v1852
  %1947 = vmatprep.subr.bf16.mxu0 %v1857
  %1948 = vmatpush1.bf16.msra.mxu0 %v1856
  %1949 = vmatprep.subr.bf16.mxu0 %v1861
  %1950 = vmatpush1.bf16.msra.mxu0 %v1860
  %1951 = vmatprep.subr.bf16.mxu0 0
  %1952 = vmatpush1.bf16.msra.mxu0 0
  %1953 = vmatprep.subr.bf16.mxu0 0
  %1954 = vmatpush1.bf16.msra.mxu0 0
  %1955 = vmatprep.subr.bf16.mxu0 0
  %1956 = vmatpush1.bf16.msra.mxu0 0
  %1957 = vmatprep.subr.bf16.mxu0 0
  %1958 = vmatpush1.bf16.msra.mxu0 0
  %1959 = vmatprep.subr.bf16.mxu0 0
  %1960 = vmatpush1.bf16.msra.mxu0 0
  %1961 = vmatprep.subr.bf16.mxu0 0
  %1962 = vmatpush1.bf16.msra.mxu0 0
  %1963 = vmatprep.subr.bf16.mxu0 0
  %1964 = vmatpush1.bf16.msra.mxu0 0
  %1965 = vmatprep.subr.bf16.mxu0 0
  %1966 = vmatpush1.bf16.msra.mxu0 0
  %1967 = vmatprep.mubr.bf16.mxu0 0
  %1968 = vmatmul.mubr.bf16.gmra.mrb[0].mxu0 %v1701
  %v1969 = vpop.f32.mrb[0].mxu0
  %v1970 = vadd.f32 0.0, %v1969
  %v1971 = vpop.f32.mrb[0].mxu0
  %v1972 = vadd.f32 0.0, %v1971
  %v1973 = vpop.f32.mrb[0].mxu0
  %v1974 = vpop.f32.mrb[0].mxu0
  %1975 = vdwg.mxu0
  %v1976 = vadd.f32 %v1696, %v1929
  %v1977 = vadd.f32 %v1697, %v1931
  %v1978 = vadd.f32 %v1698, %v1970
  %v1979 = vadd.f32 %v1699, %v1972
  %v1980 = vxor.u32 %v1976, 2147483648
  %v1981 = vxor.u32 %v1977, 2147483648
  %v1982 = vxor.u32 %v1978, 2147483648
  %v1983 = vmul.f32 %v1980, 1.442695
  %v1984 = vpow.pop %v1983
  %v1985 = vmul.f32 %v1981, 1.442695
  %v1986 = vpow.pop %v1985
  %v1987 = vmul.f32 %v1982, 1.442695
  %v1988 = vpow.pop %v1987
  %v1989 = vadd.f32 %v1984, 1.0
  %v1990 = vadd.f32 %v1986, 1.0
  %v1991 = vadd.f32 %v1988, 1.0
  %v1992 = vrcp.pop %v1989
  %v1993 = vmul.f32 1.0, %v1992
  %v1994 = vrcp.pop %v1990
  %v1995 = vmul.f32 1.0, %v1994
  %v1996 = vrcp.pop %v1991
  %v1997 = vmul.f32 1.0, %v1996
  %v1998 = vtanh.pop %v1979
  %v1999 = vld [vmem:[#allocation3] sm:$0xff]
  %v2000 = vmul.f32 %v1995, %v1999
  %v2001 = vmul.f32 %v1993, %v1998
  %v2002 = vadd.f32 %v2000, %v2001
  %2003 = vst [vmem:[#allocation3] sm:$0xff] %v2002
  %v2004 = vtanh.pop %v2002
  %v2005 = vmul.f32 %v1997, %v2004
  %2006 = vst [vmem:[%s4] sm:$0xff] %v2005
  %s2007 = scalar_lea.vmem [#allocation2], 160
  %v2008 = vld [vmem:[%s2007] sm:$0xff]
  %v2009 = vld [vmem:[%s2007 + $0x8] sm:$0xff]
  %v2010 = vld [vmem:[%s2007 + $0x10] sm:$0xff]
  %v2011 = vld [vmem:[%s2007 + $0x18] sm:$0xff]
  %v2012 = vld [vmem:[%s4] sm:$0xff]
  %v2013 = vpack.c.bf16 %v2012, %v2012
  %v2014 = vld [vmem:[%s2] sm:$0xff]
  %v2015 = vld [vmem:[%s2 + $0x8] sm:$0xff]
  %v2016 = vld [vmem:[%s2 + $0x10] sm:$0xff]
  %v2017 = vld [vmem:[%s2 + $0x18] sm:$0xff]
  %v2018 = vld [vmem:[%s2 + $0x20] sm:$0xff]
  %v2019 = vld [vmem:[%s2 + $0x28] sm:$0xff]
  %v2020 = vld [vmem:[%s2 + $0x30] sm:$0xff]
  %v2021 = vld [vmem:[%s2 + $0x38] sm:$0xff]
  %v2022 = vld [vmem:[%s2 + $0x40] sm:$0xff]
  %v2023 = vld [vmem:[%s2 + $0x48] sm:$0xff]
  %v2024 = vld [vmem:[%s2 + $0x50] sm:$0xff]
  %v2025 = vld [vmem:[%s2 + $0x58] sm:$0xff]
  %v2026 = vld [vmem:[%s2 + $0x60] sm:$0xff]
  %v2027 = vld [vmem:[%s2 + $0x68] sm:$0xff]
  %v2028 = vld [vmem:[%s2 + $0x70] sm:$0xff]
  %v2029 = vld [vmem:[%s2 + $0x78] sm:$0xff]
  %v2030 = vld [vmem:[%s2 + $0x80] sm:$0xff]
  %v2031 = vld [vmem:[%s2 + $0x88] sm:$0xff]
  %v2032 = vld [vmem:[%s2 + $0x90] sm:$0xff]
  %v2033 = vld [vmem:[%s2 + $0x98] sm:$0xff]
  %v2034 = vld [vmem:[%s2 + $0xa0] sm:$0xff]
  %v2035 = vld [vmem:[%s2 + $0xa8] sm:$0xff]
  %v2036 = vld [vmem:[%s2 + $0xb0] sm:$0xff]
  %v2037 = vld [vmem:[%s2 + $0xb8] sm:$0xff]
  %v2038 = vld [vmem:[%s2 + $0xc0] sm:$0xff]
  %v2039 = vld [vmem:[%s2 + $0xc8] sm:$0xff]
  %v2040 = vld [vmem:[%s2 + $0xd0] sm:$0xff]
  %v2041 = vld [vmem:[%s2 + $0xd8] sm:$0xff]
  %v2042 = vld [vmem:[%s2 + $0xe0] sm:$0xff]
  %v2043 = vld [vmem:[%s2 + $0xe8] sm:$0xff]
  %v2044 = vld [vmem:[%s2 + $0xf0] sm:$0xff]
  %v2045 = vld [vmem:[%s2 + $0xf8] sm:$0xff]
  %v2078 = vunpack.c.l.b16 %v2014
  %v2079 = vunpack.c.h.b16 %v2014
  %v2080 = vunpack.c.l.b16 %v2015
  %v2081 = vunpack.c.h.b16 %v2015
  %v2082 = vunpack.c.l.b16 %v2016
  %v2083 = vunpack.c.h.b16 %v2016
  %v2084 = vunpack.c.l.b16 %v2017
  %v2085 = vunpack.c.h.b16 %v2017
  %v2086 = vunpack.c.l.b16 %v2018
  %v2087 = vunpack.c.h.b16 %v2018
  %v2088 = vunpack.c.l.b16 %v2019
  %v2089 = vunpack.c.h.b16 %v2019
  %v2090 = vunpack.c.l.b16 %v2020
  %v2091 = vunpack.c.h.b16 %v2020
  %v2092 = vunpack.c.l.b16 %v2021
  %v2093 = vunpack.c.h.b16 %v2021
  %v2094 = vunpack.c.l.b16 %v2022
  %v2095 = vunpack.c.h.b16 %v2022
  %v2096 = vunpack.c.l.b16 %v2023
  %v2097 = vunpack.c.h.b16 %v2023
  %v2098 = vunpack.c.l.b16 %v2024
  %v2099 = vunpack.c.h.b16 %v2024
  %v2100 = vunpack.c.l.b16 %v2025
  %v2101 = vunpack.c.h.b16 %v2025
  %v2102 = vunpack.c.l.b16 %v2026
  %v2103 = vunpack.c.h.b16 %v2026
  %v2104 = vunpack.c.l.b16 %v2027
  %v2105 = vunpack.c.h.b16 %v2027
  %v2106 = vunpack.c.l.b16 %v2028
  %v2107 = vunpack.c.h.b16 %v2028
  %v2108 = vunpack.c.l.b16 %v2029
  %v2109 = vunpack.c.h.b16 %v2029
  %v2110 = vunpack.c.l.b16 %v2030
  %v2111 = vunpack.c.h.b16 %v2030
  %v2112 = vunpack.c.l.b16 %v2031
  %v2113 = vunpack.c.h.b16 %v2031
  %v2114 = vunpack.c.l.b16 %v2032
  %v2115 = vunpack.c.h.b16 %v2032
  %v2116 = vunpack.c.l.b16 %v2033
  %v2117 = vunpack.c.h.b16 %v2033
  %v2118 = vunpack.c.l.b16 %v2034
  %v2119 = vunpack.c.h.b16 %v2034
  %v2120 = vunpack.c.l.b16 %v2035
  %v2121 = vunpack.c.h.b16 %v2035
  %v2122 = vunpack.c.l.b16 %v2036
  %v2123 = vunpack.c.h.b16 %v2036
  %v2124 = vunpack.c.l.b16 %v2037
  %v2125 = vunpack.c.h.b16 %v2037
  %v2126 = vunpack.c.l.b16 %v2038
  %v2127 = vunpack.c.h.b16 %v2038
  %v2128 = vunpack.c.l.b16 %v2039
  %v2129 = vunpack.c.h.b16 %v2039
  %v2130 = vunpack.c.l.b16 %v2040
  %v2131 = vunpack.c.h.b16 %v2040
  %v2132 = vunpack.c.l.b16 %v2041
  %v2133 = vunpack.c.h.b16 %v2041
  %v2134 = vunpack.c.l.b16 %v2042
  %v2135 = vunpack.c.h.b16 %v2042
  %v2136 = vunpack.c.l.b16 %v2043
  %v2137 = vunpack.c.h.b16 %v2043
  %v2138 = vunpack.c.l.b16 %v2044
  %v2139 = vunpack.c.h.b16 %v2044
  %v2140 = vunpack.c.l.b16 %v2045
  %v2141 = vunpack.c.h.b16 %v2045
  %v2142 = vpack.c.b16 %v2082, %v2078
  %v2143 = vpack.c.b16 %v2083, %v2079
  %v2144 = vpack.c.b16 %v2084, %v2080
  %v2145 = vpack.c.b16 %v2085, %v2081
  %v2146 = vpack.c.b16 %v2090, %v2086
  %v2147 = vpack.c.b16 %v2091, %v2087
  %v2148 = vpack.c.b16 %v2092, %v2088
  %v2149 = vpack.c.b16 %v2093, %v2089
  %v2150 = vpack.c.b16 %v2098, %v2094
  %v2151 = vpack.c.b16 %v2099, %v2095
  %v2152 = vpack.c.b16 %v2100, %v2096
  %v2153 = vpack.c.b16 %v2101, %v2097
  %v2154 = vpack.c.b16 %v2106, %v2102
  %v2155 = vpack.c.b16 %v2107, %v2103
  %v2156 = vpack.c.b16 %v2108, %v2104
  %v2157 = vpack.c.b16 %v2109, %v2105
  %v2158 = vpack.c.b16 %v2114, %v2110
  %v2159 = vpack.c.b16 %v2115, %v2111
  %v2160 = vpack.c.b16 %v2116, %v2112
  %v2161 = vpack.c.b16 %v2117, %v2113
  %v2162 = vpack.c.b16 %v2122, %v2118
  %v2163 = vpack.c.b16 %v2123, %v2119
  %v2164 = vpack.c.b16 %v2124, %v2120
  %v2165 = vpack.c.b16 %v2125, %v2121
  %v2166 = vpack.c.b16 %v2130, %v2126
  %v2167 = vpack.c.b16 %v2131, %v2127
  %v2168 = vpack.c.b16 %v2132, %v2128
  %v2169 = vpack.c.b16 %v2133, %v2129
  %v2170 = vpack.c.b16 %v2138, %v2134
  %v2171 = vpack.c.b16 %v2139, %v2135
  %v2172 = vpack.c.b16 %v2140, %v2136
  %v2173 = vpack.c.b16 %v2141, %v2137
  %2206 = vmatprep.subr.bf16.mxu0 %v2143
  %2207 = vmatpush1.bf16.msra.mxu0 %v2142
  %2208 = vmatprep.subr.bf16.mxu0 %v2147
  %2209 = vmatpush1.bf16.msra.mxu0 %v2146
  %2210 = vmatprep.subr.bf16.mxu0 %v2151
  %2211 = vmatpush1.bf16.msra.mxu0 %v2150
  %2212 = vmatprep.subr.bf16.mxu0 %v2155
  %2213 = vmatpush1.bf16.msra.mxu0 %v2154
  %2214 = vmatprep.subr.bf16.mxu0 %v2159
  %2215 = vmatpush1.bf16.msra.mxu0 %v2158
  %2216 = vmatprep.subr.bf16.mxu0 %v2163
  %2217 = vmatpush1.bf16.msra.mxu0 %v2162
  %2218 = vmatprep.subr.bf16.mxu0 %v2167
  %2219 = vmatpush1.bf16.msra.mxu0 %v2166
  %2220 = vmatprep.subr.bf16.mxu0 %v2171
  %2221 = vmatpush1.bf16.msra.mxu0 %v2170
  %2222 = vmatprep.subr.bf16.mxu0 0
  %2223 = vmatpush1.bf16.msra.mxu0 0
  %2224 = vmatprep.subr.bf16.mxu0 0
  %2225 = vmatpush1.bf16.msra.mxu0 0
  %2226 = vmatprep.subr.bf16.mxu0 0
  %2227 = vmatpush1.bf16.msra.mxu0 0
  %2228 = vmatprep.subr.bf16.mxu0 0
  %2229 = vmatpush1.bf16.msra.mxu0 0
  %2230 = vmatprep.subr.bf16.mxu0 0
  %2231 = vmatpush1.bf16.msra.mxu0 0
  %2232 = vmatprep.subr.bf16.mxu0 0
  %2233 = vmatpush1.bf16.msra.mxu0 0
  %2234 = vmatprep.subr.bf16.mxu0 0
  %2235 = vmatpush1.bf16.msra.mxu0 0
  %2236 = vmatprep.subr.bf16.mxu0 0
  %2237 = vmatpush1.bf16.msra.mxu0 0
  %2238 = vmatprep.mubr.bf16.mxu0 0
  %2239 = vmatmul.mubr.bf16.gmra.mrb[0].mxu0 %v2013
  %v2240 = vpop.f32.mrb[0].mxu0
  %v2241 = vadd.f32 0.0, %v2240
  %v2242 = vpop.f32.mrb[0].mxu0
  %v2243 = vadd.f32 0.0, %v2242
  %v2244 = vpop.f32.mrb[0].mxu0
  %v2245 = vpop.f32.mrb[0].mxu0
  %2246 = vdwg.mxu0
  %2247 = vmatprep.subr.bf16.mxu0 %v2145
  %2248 = vmatpush1.bf16.msra.mxu0 %v2144
  %2249 = vmatprep.subr.bf16.mxu0 %v2149
  %2250 = vmatpush1.bf16.msra.mxu0 %v2148
  %2251 = vmatprep.subr.bf16.mxu0 %v2153
  %2252 = vmatpush1.bf16.msra.mxu0 %v2152
  %2253 = vmatprep.subr.bf16.mxu0 %v2157
  %2254 = vmatpush1.bf16.msra.mxu0 %v2156
  %2255 = vmatprep.subr.bf16.mxu0 %v2161
  %2256 = vmatpush1.bf16.msra.mxu0 %v2160
  %2257 = vmatprep.subr.bf16.mxu0 %v2165
  %2258 = vmatpush1.bf16.msra.mxu0 %v2164
  %2259 = vmatprep.subr.bf16.mxu0 %v2169
  %2260 = vmatpush1.bf16.msra.mxu0 %v2168
  %2261 = vmatprep.subr.bf16.mxu0 %v2173
  %2262 = vmatpush1.bf16.msra.mxu0 %v2172
  %2263 = vmatprep.subr.bf16.mxu0 0
  %2264 = vmatpush1.bf16.msra.mxu0 0
  %2265 = vmatprep.subr.bf16.mxu0 0
  %2266 = vmatpush1.bf16.msra.mxu0 0
  %2267 = vmatprep.subr.bf16.mxu0 0
  %2268 = vmatpush1.bf16.msra.mxu0 0
  %2269 = vmatprep.subr.bf16.mxu0 0
  %2270 = vmatpush1.bf16.msra.mxu0 0
  %2271 = vmatprep.subr.bf16.mxu0 0
  %2272 = vmatpush1.bf16.msra.mxu0 0
  %2273 = vmatprep.subr.bf16.mxu0 0
  %2274 = vmatpush1.bf16.msra.mxu0 0
  %2275 = vmatprep.subr.bf16.mxu0 0
  %2276 = vmatpush1.bf16.msra.mxu0 0
  %2277 = vmatprep.subr.bf16.mxu0 0
  %2278 = vmatpush1.bf16.msra.mxu0 0
  %2279 = vmatprep.mubr.bf16.mxu0 0
  %2280 = vmatmul.mubr.bf16.gmra.mrb[0].mxu0 %v2013
  %v2281 = vpop.f32.mrb[0].mxu0
  %v2282 = vadd.f32 0.0, %v2281
  %v2283 = vpop.f32.mrb[0].mxu0
  %v2284 = vadd.f32 0.0, %v2283
  %v2285 = vpop.f32.mrb[0].mxu0
  %v2286 = vpop.f32.mrb[0].mxu0
  %2287 = vdwg.mxu0
  %v2288 = vadd.f32 %v2008, %v2241
  %v2289 = vadd.f32 %v2009, %v2243
  %v2290 = vadd.f32 %v2010, %v2282
  %v2291 = vadd.f32 %v2011, %v2284
  %v2292 = vxor.u32 %v2288, 2147483648
  %v2293 = vxor.u32 %v2289, 2147483648
  %v2294 = vxor.u32 %v2290, 2147483648
  %v2295 = vmul.f32 %v2292, 1.442695
  %v2296 = vpow.pop %v2295
  %v2297 = vmul.f32 %v2293, 1.442695
  %v2298 = vpow.pop %v2297
  %v2299 = vmul.f32 %v2294, 1.442695
  %v2300 = vpow.pop %v2299
  %v2301 = vadd.f32 %v2296, 1.0
  %v2302 = vadd.f32 %v2298, 1.0
  %v2303 = vadd.f32 %v2300, 1.0
  %v2304 = vrcp.pop %v2301
  %v2305 = vmul.f32 1.0, %v2304
  %v2306 = vrcp.pop %v2302
  %v2307 = vmul.f32 1.0, %v2306
  %v2308 = vrcp.pop %v2303
  %v2309 = vmul.f32 1.0, %v2308
  %v2310 = vtanh.pop %v2291
  %v2311 = vld [vmem:[#allocation3] sm:$0xff]
  %v2312 = vmul.f32 %v2307, %v2311
  %v2313 = vmul.f32 %v2305, %v2310
  %v2314 = vadd.f32 %v2312, %v2313
  %2315 = vst [vmem:[#allocation3] sm:$0xff] %v2314
  %v2316 = vtanh.pop %v2314
  %v2317 = vmul.f32 %v2309, %v2316
  %2318 = vst [vmem:[%s4] sm:$0xff] %v2317
  %s2319 = scalar_lea.vmem [#allocation2], 192
  %v2320 = vld [vmem:[%s2319] sm:$0xff]
  %v2321 = vld [vmem:[%s2319 + $0x8] sm:$0xff]
  %v2322 = vld [vmem:[%s2319 + $0x10] sm:$0xff]
  %v2323 = vld [vmem:[%s2319 + $0x18] sm:$0xff]
  %v2324 = vld [vmem:[%s4] sm:$0xff]
  %v2325 = vpack.c.bf16 %v2324, %v2324
  %v2326 = vld [vmem:[%s2] sm:$0xff]
  %v2327 = vld [vmem:[%s2 + $0x8] sm:$0xff]
  %v2328 = vld [vmem:[%s2 + $0x10] sm:$0xff]
  %v2329 = vld [vmem:[%s2 + $0x18] sm:$0xff]
  %v2330 = vld [vmem:[%s2 + $0x20] sm:$0xff]
  %v2331 = vld [vmem:[%s2 + $0x28] sm:$0xff]
  %v2332 = vld [vmem:[%s2 + $0x30] sm:$0xff]
  %v2333 = vld [vmem:[%s2 + $0x38] sm:$0xff]
  %v2334 = vld [vmem:[%s2 + $0x40] sm:$0xff]
  %v2335 = vld [vmem:[%s2 + $0x48] sm:$0xff]
  %v2336 = vld [vmem:[%s2 + $0x50] sm:$0xff]
  %v2337 = vld [vmem:[%s2 + $0x58] sm:$0xff]
  %v2338 = vld [vmem:[%s2 + $0x60] sm:$0xff]
  %v2339 = vld [vmem:[%s2 + $0x68] sm:$0xff]
  %v2340 = vld [vmem:[%s2 + $0x70] sm:$0xff]
  %v2341 = vld [vmem:[%s2 + $0x78] sm:$0xff]
  %v2342 = vld [vmem:[%s2 + $0x80] sm:$0xff]
  %v2343 = vld [vmem:[%s2 + $0x88] sm:$0xff]
  %v2344 = vld [vmem:[%s2 + $0x90] sm:$0xff]
  %v2345 = vld [vmem:[%s2 + $0x98] sm:$0xff]
  %v2346 = vld [vmem:[%s2 + $0xa0] sm:$0xff]
  %v2347 = vld [vmem:[%s2 + $0xa8] sm:$0xff]
  %v2348 = vld [vmem:[%s2 + $0xb0] sm:$0xff]
  %v2349 = vld [vmem:[%s2 + $0xb8] sm:$0xff]
  %v2350 = vld [vmem:[%s2 + $0xc0] sm:$0xff]
  %v2351 = vld [vmem:[%s2 + $0xc8] sm:$0xff]
  %v2352 = vld [vmem:[%s2 + $0xd0] sm:$0xff]
  %v2353 = vld [vmem:[%s2 + $0xd8] sm:$0xff]
  %v2354 = vld [vmem:[%s2 + $0xe0] sm:$0xff]
  %v2355 = vld [vmem:[%s2 + $0xe8] sm:$0xff]
  %v2356 = vld [vmem:[%s2 + $0xf0] sm:$0xff]
  %v2357 = vld [vmem:[%s2 + $0xf8] sm:$0xff]
  %v2390 = vunpack.c.l.b16 %v2326
  %v2391 = vunpack.c.h.b16 %v2326
  %v2392 = vunpack.c.l.b16 %v2327
  %v2393 = vunpack.c.h.b16 %v2327
  %v2394 = vunpack.c.l.b16 %v2328
  %v2395 = vunpack.c.h.b16 %v2328
  %v2396 = vunpack.c.l.b16 %v2329
  %v2397 = vunpack.c.h.b16 %v2329
  %v2398 = vunpack.c.l.b16 %v2330
  %v2399 = vunpack.c.h.b16 %v2330
  %v2400 = vunpack.c.l.b16 %v2331
  %v2401 = vunpack.c.h.b16 %v2331
  %v2402 = vunpack.c.l.b16 %v2332
  %v2403 = vunpack.c.h.b16 %v2332
  %v2404 = vunpack.c.l.b16 %v2333
  %v2405 = vunpack.c.h.b16 %v2333
  %v2406 = vunpack.c.l.b16 %v2334
  %v2407 = vunpack.c.h.b16 %v2334
  %v2408 = vunpack.c.l.b16 %v2335
  %v2409 = vunpack.c.h.b16 %v2335
  %v2410 = vunpack.c.l.b16 %v2336
  %v2411 = vunpack.c.h.b16 %v2336
  %v2412 = vunpack.c.l.b16 %v2337
  %v2413 = vunpack.c.h.b16 %v2337
  %v2414 = vunpack.c.l.b16 %v2338
  %v2415 = vunpack.c.h.b16 %v2338
  %v2416 = vunpack.c.l.b16 %v2339
  %v2417 = vunpack.c.h.b16 %v2339
  %v2418 = vunpack.c.l.b16 %v2340
  %v2419 = vunpack.c.h.b16 %v2340
  %v2420 = vunpack.c.l.b16 %v2341
  %v2421 = vunpack.c.h.b16 %v2341
  %v2422 = vunpack.c.l.b16 %v2342
  %v2423 = vunpack.c.h.b16 %v2342
  %v2424 = vunpack.c.l.b16 %v2343
  %v2425 = vunpack.c.h.b16 %v2343
  %v2426 = vunpack.c.l.b16 %v2344
  %v2427 = vunpack.c.h.b16 %v2344
  %v2428 = vunpack.c.l.b16 %v2345
  %v2429 = vunpack.c.h.b16 %v2345
  %v2430 = vunpack.c.l.b16 %v2346
  %v2431 = vunpack.c.h.b16 %v2346
  %v2432 = vunpack.c.l.b16 %v2347
  %v2433 = vunpack.c.h.b16 %v2347
  %v2434 = vunpack.c.l.b16 %v2348
  %v2435 = vunpack.c.h.b16 %v2348
  %v2436 = vunpack.c.l.b16 %v2349
  %v2437 = vunpack.c.h.b16 %v2349
  %v2438 = vunpack.c.l.b16 %v2350
  %v2439 = vunpack.c.h.b16 %v2350
  %v2440 = vunpack.c.l.b16 %v2351
  %v2441 = vunpack.c.h.b16 %v2351
  %v2442 = vunpack.c.l.b16 %v2352
  %v2443 = vunpack.c.h.b16 %v2352
  %v2444 = vunpack.c.l.b16 %v2353
  %v2445 = vunpack.c.h.b16 %v2353
  %v2446 = vunpack.c.l.b16 %v2354
  %v2447 = vunpack.c.h.b16 %v2354
  %v2448 = vunpack.c.l.b16 %v2355
  %v2449 = vunpack.c.h.b16 %v2355
  %v2450 = vunpack.c.l.b16 %v2356
  %v2451 = vunpack.c.h.b16 %v2356
  %v2452 = vunpack.c.l.b16 %v2357
  %v2453 = vunpack.c.h.b16 %v2357
  %v2454 = vpack.c.b16 %v2394, %v2390
  %v2455 = vpack.c.b16 %v2395, %v2391
  %v2456 = vpack.c.b16 %v2396, %v2392
  %v2457 = vpack.c.b16 %v2397, %v2393
  %v2458 = vpack.c.b16 %v2402, %v2398
  %v2459 = vpack.c.b16 %v2403, %v2399
  %v2460 = vpack.c.b16 %v2404, %v2400
  %v2461 = vpack.c.b16 %v2405, %v2401
  %v2462 = vpack.c.b16 %v2410, %v2406
  %v2463 = vpack.c.b16 %v2411, %v2407
  %v2464 = vpack.c.b16 %v2412, %v2408
  %v2465 = vpack.c.b16 %v2413, %v2409
  %v2466 = vpack.c.b16 %v2418, %v2414
  %v2467 = vpack.c.b16 %v2419, %v2415
  %v2468 = vpack.c.b16 %v2420, %v2416
  %v2469 = vpack.c.b16 %v2421, %v2417
  %v2470 = vpack.c.b16 %v2426, %v2422
  %v2471 = vpack.c.b16 %v2427, %v2423
  %v2472 = vpack.c.b16 %v2428, %v2424
  %v2473 = vpack.c.b16 %v2429, %v2425
  %v2474 = vpack.c.b16 %v2434, %v2430
  %v2475 = vpack.c.b16 %v2435, %v2431
  %v2476 = vpack.c.b16 %v2436, %v2432
  %v2477 = vpack.c.b16 %v2437, %v2433
  %v2478 = vpack.c.b16 %v2442, %v2438
  %v2479 = vpack.c.b16 %v2443, %v2439
  %v2480 = vpack.c.b16 %v2444, %v2440
  %v2481 = vpack.c.b16 %v2445, %v2441
  %v2482 = vpack.c.b16 %v2450, %v2446
  %v2483 = vpack.c.b16 %v2451, %v2447
  %v2484 = vpack.c.b16 %v2452, %v2448
  %v2485 = vpack.c.b16 %v2453, %v2449
  %2518 = vmatprep.subr.bf16.mxu0 %v2455
  %2519 = vmatpush1.bf16.msra.mxu0 %v2454
  %2520 = vmatprep.subr.bf16.mxu0 %v2459
  %2521 = vmatpush1.bf16.msra.mxu0 %v2458
  %2522 = vmatprep.subr.bf16.mxu0 %v2463
  %2523 = vmatpush1.bf16.msra.mxu0 %v2462
  %2524 = vmatprep.subr.bf16.mxu0 %v2467
  %2525 = vmatpush1.bf16.msra.mxu0 %v2466
  %2526 = vmatprep.subr.bf16.mxu0 %v2471
  %2527 = vmatpush1.bf16.msra.mxu0 %v2470
  %2528 = vmatprep.subr.bf16.mxu0 %v2475
  %2529 = vmatpush1.bf16.msra.mxu0 %v2474
  %2530 = vmatprep.subr.bf16.mxu0 %v2479
  %2531 = vmatpush1.bf16.msra.mxu0 %v2478
  %2532 = vmatprep.subr.bf16.mxu0 %v2483
  %2533 = vmatpush1.bf16.msra.mxu0 %v2482
  %2534 = vmatprep.subr.bf16.mxu0 0
  %2535 = vmatpush1.bf16.msra.mxu0 0
  %2536 = vmatprep.subr.bf16.mxu0 0
  %2537 = vmatpush1.bf16.msra.mxu0 0
  %2538 = vmatprep.subr.bf16.mxu0 0
  %2539 = vmatpush1.bf16.msra.mxu0 0
  %2540 = vmatprep.subr.bf16.mxu0 0
  %2541 = vmatpush1.bf16.msra.mxu0 0
  %2542 = vmatprep.subr.bf16.mxu0 0
  %2543 = vmatpush1.bf16.msra.mxu0 0
  %2544 = vmatprep.subr.bf16.mxu0 0
  %2545 = vmatpush1.bf16.msra.mxu0 0
  %2546 = vmatprep.subr.bf16.mxu0 0
  %2547 = vmatpush1.bf16.msra.mxu0 0
  %2548 = vmatprep.subr.bf16.mxu0 0
  %2549 = vmatpush1.bf16.msra.mxu0 0
  %2550 = vmatprep.mubr.bf16.mxu0 0
  %2551 = vmatmul.mubr.bf16.gmra.mrb[0].mxu0 %v2325
  %v2552 = vpop.f32.mrb[0].mxu0
  %v2553 = vadd.f32 0.0, %v2552
  %v2554 = vpop.f32.mrb[0].mxu0
  %v2555 = vadd.f32 0.0, %v2554
  %v2556 = vpop.f32.mrb[0].mxu0
  %v2557 = vpop.f32.mrb[0].mxu0
  %2558 = vdwg.mxu0
  %2559 = vmatprep.subr.bf16.mxu0 %v2457
  %2560 = vmatpush1.bf16.msra.mxu0 %v2456
  %2561 = vmatprep.subr.bf16.mxu0 %v2461
  %2562 = vmatpush1.bf16.msra.mxu0 %v2460
  %2563 = vmatprep.subr.bf16.mxu0 %v2465
  %2564 = vmatpush1.bf16.msra.mxu0 %v2464
  %2565 = vmatprep.subr.bf16.mxu0 %v2469
  %2566 = vmatpush1.bf16.msra.mxu0 %v2468
  %2567 = vmatprep.subr.bf16.mxu0 %v2473
  %2568 = vmatpush1.bf16.msra.mxu0 %v2472
  %2569 = vmatprep.subr.bf16.mxu0 %v2477
  %2570 = vmatpush1.bf16.msra.mxu0 %v2476
  %2571 = vmatprep.subr.bf16.mxu0 %v2481
  %2572 = vmatpush1.bf16.msra.mxu0 %v2480
  %2573 = vmatprep.subr.bf16.mxu0 %v2485
  %2574 = vmatpush1.bf16.msra.mxu0 %v2484
  %2575 = vmatprep.subr.bf16.mxu0 0
  %2576 = vmatpush1.bf16.msra.mxu0 0
  %2577 = vmatprep.subr.bf16.mxu0 0
  %2578 = vmatpush1.bf16.msra.mxu0 0
  %2579 = vmatprep.subr.bf16.mxu0 0
  %2580 = vmatpush1.bf16.msra.mxu0 0
  %2581 = vmatprep.subr.bf16.mxu0 0
  %2582 = vmatpush1.bf16.msra.mxu0 0
  %2583 = vmatprep.subr.bf16.mxu0 0
  %2584 = vmatpush1.bf16.msra.mxu0 0
  %2585 = vmatprep.subr.bf16.mxu0 0
  %2586 = vmatpush1.bf16.msra.mxu0 0
  %2587 = vmatprep.subr.bf16.mxu0 0
  %2588 = vmatpush1.bf16.msra.mxu0 0
  %2589 = vmatprep.subr.bf16.mxu0 0
  %2590 = vmatpush1.bf16.msra.mxu0 0
  %2591 = vmatprep.mubr.bf16.mxu0 0
  %2592 = vmatmul.mubr.bf16.gmra.mrb[0].mxu0 %v2325
  %v2593 = vpop.f32.mrb[0].mxu0
  %v2594 = vadd.f32 0.0, %v2593
  %v2595 = vpop.f32.mrb[0].mxu0
  %v2596 = vadd.f32 0.0, %v2595
  %v2597 = vpop.f32.mrb[0].mxu0
  %v2598 = vpop.f32.mrb[0].mxu0
  %2599 = vdwg.mxu0
  %v2600 = vadd.f32 %v2320, %v2553
  %v2601 = vadd.f32 %v2321, %v2555
  %v2602 = vadd.f32 %v2322, %v2594
  %v2603 = vadd.f32 %v2323, %v2596
  %v2604 = vxor.u32 %v2600, 2147483648
  %v2605 = vxor.u32 %v2601, 2147483648
  %v2606 = vxor.u32 %v2602, 2147483648
  %v2607 = vmul.f32 %v2604, 1.442695
  %v2608 = vpow.pop %v2607
  %v2609 = vmul.f32 %v2605, 1.442695
  %v2610 = vpow.pop %v2609
  %v2611 = vmul.f32 %v2606, 1.442695
  %v2612 = vpow.pop %v2611
  %v2613 = vadd.f32 %v2608, 1.0
  %v2614 = vadd.f32 %v2610, 1.0
  %v2615 = vadd.f32 %v2612, 1.0
  %v2616 = vrcp.pop %v2613
  %v2617 = vmul.f32 1.0, %v2616
  %v2618 = vrcp.pop %v2614
  %v2619 = vmul.f32 1.0, %v2618
  %v2620 = vrcp.pop %v2615
  %v2621 = vmul.f32 1.0, %v2620
  %v2622 = vtanh.pop %v2603
  %v2623 = vld [vmem:[#allocation3] sm:$0xff]
  %v2624 = vmul.f32 %v2619, %v2623
  %v2625 = vmul.f32 %v2617, %v2622
  %v2626 = vadd.f32 %v2624, %v2625
  %2627 = vst [vmem:[#allocation3] sm:$0xff] %v2626
  %v2628 = vtanh.pop %v2626
  %v2629 = vmul.f32 %v2621, %v2628
  %2630 = vst [vmem:[%s4] sm:$0xff] %v2629
  %s2631 = scalar_lea.vmem [#allocation2], 224
  %v2632 = vld [vmem:[%s2631] sm:$0xff]
  %v2633 = vld [vmem:[%s2631 + $0x8] sm:$0xff]
  %v2634 = vld [vmem:[%s2631 + $0x10] sm:$0xff]
  %v2635 = vld [vmem:[%s2631 + $0x18] sm:$0xff]
  %v2636 = vld [vmem:[%s4] sm:$0xff]
  %v2637 = vpack.c.bf16 %v2636, %v2636
  %v2638 = vld [vmem:[%s2] sm:$0xff]
  %v2639 = vld [vmem:[%s2 + $0x8] sm:$0xff]
  %v2640 = vld [vmem:[%s2 + $0x10] sm:$0xff]
  %v2641 = vld [vmem:[%s2 + $0x18] sm:$0xff]
  %v2642 = vld [vmem:[%s2 + $0x20] sm:$0xff]
  %v2643 = vld [vmem:[%s2 + $0x28] sm:$0xff]
  %v2644 = vld [vmem:[%s2 + $0x30] sm:$0xff]
  %v2645 = vld [vmem:[%s2 + $0x38] sm:$0xff]
  %v2646 = vld [vmem:[%s2 + $0x40] sm:$0xff]
  %v2647 = vld [vmem:[%s2 + $0x48] sm:$0xff]
  %v2648 = vld [vmem:[%s2 + $0x50] sm:$0xff]
  %v2649 = vld [vmem:[%s2 + $0x58] sm:$0xff]
  %v2650 = vld [vmem:[%s2 + $0x60] sm:$0xff]
  %v2651 = vld [vmem:[%s2 + $0x68] sm:$0xff]
  %v2652 = vld [vmem:[%s2 + $0x70] sm:$0xff]
  %v2653 = vld [vmem:[%s2 + $0x78] sm:$0xff]
  %v2654 = vld [vmem:[%s2 + $0x80] sm:$0xff]
  %v2655 = vld [vmem:[%s2 + $0x88] sm:$0xff]
  %v2656 = vld [vmem:[%s2 + $0x90] sm:$0xff]
  %v2657 = vld [vmem:[%s2 + $0x98] sm:$0xff]
  %v2658 = vld [vmem:[%s2 + $0xa0] sm:$0xff]
  %v2659 = vld [vmem:[%s2 + $0xa8] sm:$0xff]
  %v2660 = vld [vmem:[%s2 + $0xb0] sm:$0xff]
  %v2661 = vld [vmem:[%s2 + $0xb8] sm:$0xff]
  %v2662 = vld [vmem:[%s2 + $0xc0] sm:$0xff]
  %v2663 = vld [vmem:[%s2 + $0xc8] sm:$0xff]
  %v2664 = vld [vmem:[%s2 + $0xd0] sm:$0xff]
  %v2665 = vld [vmem:[%s2 + $0xd8] sm:$0xff]
  %v2666 = vld [vmem:[%s2 + $0xe0] sm:$0xff]
  %v2667 = vld [vmem:[%s2 + $0xe8] sm:$0xff]
  %v2668 = vld [vmem:[%s2 + $0xf0] sm:$0xff]
  %v2669 = vld [vmem:[%s2 + $0xf8] sm:$0xff]
  %v2702 = vunpack.c.l.b16 %v2638
  %v2703 = vunpack.c.h.b16 %v2638
  %v2704 = vunpack.c.l.b16 %v2639
  %v2705 = vunpack.c.h.b16 %v2639
  %v2706 = vunpack.c.l.b16 %v2640
  %v2707 = vunpack.c.h.b16 %v2640
  %v2708 = vunpack.c.l.b16 %v2641
  %v2709 = vunpack.c.h.b16 %v2641
  %v2710 = vunpack.c.l.b16 %v2642
  %v2711 = vunpack.c.h.b16 %v2642
  %v2712 = vunpack.c.l.b16 %v2643
  %v2713 = vunpack.c.h.b16 %v2643
  %v2714 = vunpack.c.l.b16 %v2644
  %v2715 = vunpack.c.h.b16 %v2644
  %v2716 = vunpack.c.l.b16 %v2645
  %v2717 = vunpack.c.h.b16 %v2645
  %v2718 = vunpack.c.l.b16 %v2646
  %v2719 = vunpack.c.h.b16 %v2646
  %v2720 = vunpack.c.l.b16 %v2647
  %v2721 = vunpack.c.h.b16 %v2647
  %v2722 = vunpack.c.l.b16 %v2648
  %v2723 = vunpack.c.h.b16 %v2648
  %v2724 = vunpack.c.l.b16 %v2649
  %v2725 = vunpack.c.h.b16 %v2649
  %v2726 = vunpack.c.l.b16 %v2650
  %v2727 = vunpack.c.h.b16 %v2650
  %v2728 = vunpack.c.l.b16 %v2651
  %v2729 = vunpack.c.h.b16 %v2651
  %v2730 = vunpack.c.l.b16 %v2652
  %v2731 = vunpack.c.h.b16 %v2652
  %v2732 = vunpack.c.l.b16 %v2653
  %v2733 = vunpack.c.h.b16 %v2653
  %v2734 = vunpack.c.l.b16 %v2654
  %v2735 = vunpack.c.h.b16 %v2654
  %v2736 = vunpack.c.l.b16 %v2655
  %v2737 = vunpack.c.h.b16 %v2655
  %v2738 = vunpack.c.l.b16 %v2656
  %v2739 = vunpack.c.h.b16 %v2656
  %v2740 = vunpack.c.l.b16 %v2657
  %v2741 = vunpack.c.h.b16 %v2657
  %v2742 = vunpack.c.l.b16 %v2658
  %v2743 = vunpack.c.h.b16 %v2658
  %v2744 = vunpack.c.l.b16 %v2659
  %v2745 = vunpack.c.h.b16 %v2659
  %v2746 = vunpack.c.l.b16 %v2660
  %v2747 = vunpack.c.h.b16 %v2660
  %v2748 = vunpack.c.l.b16 %v2661
  %v2749 = vunpack.c.h.b16 %v2661
  %v2750 = vunpack.c.l.b16 %v2662
  %v2751 = vunpack.c.h.b16 %v2662
  %v2752 = vunpack.c.l.b16 %v2663
  %v2753 = vunpack.c.h.b16 %v2663
  %v2754 = vunpack.c.l.b16 %v2664
  %v2755 = vunpack.c.h.b16 %v2664
  %v2756 = vunpack.c.l.b16 %v2665
  %v2757 = vunpack.c.h.b16 %v2665
  %v2758 = vunpack.c.l.b16 %v2666
  %v2759 = vunpack.c.h.b16 %v2666
  %v2760 = vunpack.c.l.b16 %v2667
  %v2761 = vunpack.c.h.b16 %v2667
  %v2762 = vunpack.c.l.b16 %v2668
  %v2763 = vunpack.c.h.b16 %v2668
  %v2764 = vunpack.c.l.b16 %v2669
  %v2765 = vunpack.c.h.b16 %v2669
  %v2766 = vpack.c.b16 %v2706, %v2702
  %v2767 = vpack.c.b16 %v2707, %v2703
  %v2768 = vpack.c.b16 %v2708, %v2704
  %v2769 = vpack.c.b16 %v2709, %v2705
  %v2770 = vpack.c.b16 %v2714, %v2710
  %v2771 = vpack.c.b16 %v2715, %v2711
  %v2772 = vpack.c.b16 %v2716, %v2712
  %v2773 = vpack.c.b16 %v2717, %v2713
  %v2774 = vpack.c.b16 %v2722, %v2718
  %v2775 = vpack.c.b16 %v2723, %v2719
  %v2776 = vpack.c.b16 %v2724, %v2720
  %v2777 = vpack.c.b16 %v2725, %v2721
  %v2778 = vpack.c.b16 %v2730, %v2726
  %v2779 = vpack.c.b16 %v2731, %v2727
  %v2780 = vpack.c.b16 %v2732, %v2728
  %v2781 = vpack.c.b16 %v2733, %v2729
  %v2782 = vpack.c.b16 %v2738, %v2734
  %v2783 = vpack.c.b16 %v2739, %v2735
  %v2784 = vpack.c.b16 %v2740, %v2736
  %v2785 = vpack.c.b16 %v2741, %v2737
  %v2786 = vpack.c.b16 %v2746, %v2742
  %v2787 = vpack.c.b16 %v2747, %v2743
  %v2788 = vpack.c.b16 %v2748, %v2744
  %v2789 = vpack.c.b16 %v2749, %v2745
  %v2790 = vpack.c.b16 %v2754, %v2750
  %v2791 = vpack.c.b16 %v2755, %v2751
  %v2792 = vpack.c.b16 %v2756, %v2752
  %v2793 = vpack.c.b16 %v2757, %v2753
  %v2794 = vpack.c.b16 %v2762, %v2758
  %v2795 = vpack.c.b16 %v2763, %v2759
  %v2796 = vpack.c.b16 %v2764, %v2760
  %v2797 = vpack.c.b16 %v2765, %v2761
  %2830 = vmatprep.subr.bf16.mxu0 %v2767
  %2831 = vmatpush1.bf16.msra.mxu0 %v2766
  %2832 = vmatprep.subr.bf16.mxu0 %v2771
  %2833 = vmatpush1.bf16.msra.mxu0 %v2770
  %2834 = vmatprep.subr.bf16.mxu0 %v2775
  %2835 = vmatpush1.bf16.msra.mxu0 %v2774
  %2836 = vmatprep.subr.bf16.mxu0 %v2779
  %2837 = vmatpush1.bf16.msra.mxu0 %v2778
  %2838 = vmatprep.subr.bf16.mxu0 %v2783
  %2839 = vmatpush1.bf16.msra.mxu0 %v2782
  %2840 = vmatprep.subr.bf16.mxu0 %v2787
  %2841 = vmatpush1.bf16.msra.mxu0 %v2786
  %2842 = vmatprep.subr.bf16.mxu0 %v2791
  %2843 = vmatpush1.bf16.msra.mxu0 %v2790
  %2844 = vmatprep.subr.bf16.mxu0 %v2795
  %2845 = vmatpush1.bf16.msra.mxu0 %v2794
  %2846 = vmatprep.subr.bf16.mxu0 0
  %2847 = vmatpush1.bf16.msra.mxu0 0
  %2848 = vmatprep.subr.bf16.mxu0 0
  %2849 = vmatpush1.bf16.msra.mxu0 0
  %2850 = vmatprep.subr.bf16.mxu0 0
  %2851 = vmatpush1.bf16.msra.mxu0 0
  %2852 = vmatprep.subr.bf16.mxu0 0
  %2853 = vmatpush1.bf16.msra.mxu0 0
  %2854 = vmatprep.subr.bf16.mxu0 0
  %2855 = vmatpush1.bf16.msra.mxu0 0
  %2856 = vmatprep.subr.bf16.mxu0 0
  %2857 = vmatpush1.bf16.msra.mxu0 0
  %2858 = vmatprep.subr.bf16.mxu0 0
  %2859 = vmatpush1.bf16.msra.mxu0 0
  %2860 = vmatprep.subr.bf16.mxu0 0
  %2861 = vmatpush1.bf16.msra.mxu0 0
  %2862 = vmatprep.mubr.bf16.mxu0 0
  %2863 = vmatmul.mubr.bf16.gmra.mrb[0].mxu0 %v2637
  %v2864 = vpop.f32.mrb[0].mxu0
  %v2865 = vadd.f32 0.0, %v2864
  %v2866 = vpop.f32.mrb[0].mxu0
  %v2867 = vadd.f32 0.0, %v2866
  %v2868 = vpop.f32.mrb[0].mxu0
  %v2869 = vpop.f32.mrb[0].mxu0
  %2870 = vdwg.mxu0
  %2871 = vmatprep.subr.bf16.mxu0 %v2769
  %2872 = vmatpush1.bf16.msra.mxu0 %v2768
  %2873 = vmatprep.subr.bf16.mxu0 %v2773
  %2874 = vmatpush1.bf16.msra.mxu0 %v2772
  %2875 = vmatprep.subr.bf16.mxu0 %v2777
  %2876 = vmatpush1.bf16.msra.mxu0 %v2776
  %2877 = vmatprep.subr.bf16.mxu0 %v2781
  %2878 = vmatpush1.bf16.msra.mxu0 %v2780
  %2879 = vmatprep.subr.bf16.mxu0 %v2785
  %2880 = vmatpush1.bf16.msra.mxu0 %v2784
  %2881 = vmatprep.subr.bf16.mxu0 %v2789
  %2882 = vmatpush1.bf16.msra.mxu0 %v2788
  %2883 = vmatprep.subr.bf16.mxu0 %v2793
  %2884 = vmatpush1.bf16.msra.mxu0 %v2792
  %2885 = vmatprep.subr.bf16.mxu0 %v2797
  %2886 = vmatpush1.bf16.msra.mxu0 %v2796
  %2887 = vmatprep.subr.bf16.mxu0 0
  %2888 = vmatpush1.bf16.msra.mxu0 0
  %2889 = vmatprep.subr.bf16.mxu0 0
  %2890 = vmatpush1.bf16.msra.mxu0 0
  %2891 = vmatprep.subr.bf16.mxu0 0
  %2892 = vmatpush1.bf16.msra.mxu0 0
  %2893 = vmatprep.subr.bf16.mxu0 0
  %2894 = vmatpush1.bf16.msra.mxu0 0
  %2895 = vmatprep.subr.bf16.mxu0 0
  %2896 = vmatpush1.bf16.msra.mxu0 0
  %2897 = vmatprep.subr.bf16.mxu0 0
  %2898 = vmatpush1.bf16.msra.mxu0 0
  %2899 = vmatprep.subr.bf16.mxu0 0
  %2900 = vmatpush1.bf16.msra.mxu0 0
  %2901 = vmatprep.subr.bf16.mxu0 0
  %2902 = vmatpush1.bf16.msra.mxu0 0
  %2903 = vmatprep.mubr.bf16.mxu0 0
  %2904 = vmatmul.mubr.bf16.gmra.mrb[0].mxu0 %v2637
  %v2905 = vpop.f32.mrb[0].mxu0
  %v2906 = vadd.f32 0.0, %v2905
  %v2907 = vpop.f32.mrb[0].mxu0
  %v2908 = vadd.f32 0.0, %v2907
  %v2909 = vpop.f32.mrb[0].mxu0
  %v2910 = vpop.f32.mrb[0].mxu0
  %2911 = vdwg.mxu0
  %v2912 = vadd.f32 %v2632, %v2865
  %v2913 = vadd.f32 %v2633, %v2867
  %v2914 = vadd.f32 %v2634, %v2906
  %v2915 = vadd.f32 %v2635, %v2908
  %v2916 = vxor.u32 %v2912, 2147483648
  %v2917 = vxor.u32 %v2913, 2147483648
  %v2918 = vxor.u32 %v2914, 2147483648
  %v2919 = vmul.f32 %v2916, 1.442695
  %v2920 = vpow.pop %v2919
  %v2921 = vmul.f32 %v2917, 1.442695
  %v2922 = vpow.pop %v2921
  %v2923 = vmul.f32 %v2918, 1.442695
  %v2924 = vpow.pop %v2923
  %v2925 = vadd.f32 %v2920, 1.0
  %v2926 = vadd.f32 %v2922, 1.0
  %v2927 = vadd.f32 %v2924, 1.0
  %v2928 = vrcp.pop %v2925
  %v2929 = vmul.f32 1.0, %v2928
  %v2930 = vrcp.pop %v2926
  %v2931 = vmul.f32 1.0, %v2930
  %v2932 = vrcp.pop %v2927
  %v2933 = vmul.f32 1.0, %v2932
  %v2934 = vtanh.pop %v2915
  %v2935 = vld [vmem:[#allocation3] sm:$0xff]
  %v2936 = vmul.f32 %v2931, %v2935
  %v2937 = vmul.f32 %v2929, %v2934
  %v2938 = vadd.f32 %v2936, %v2937
  %2939 = vst [vmem:[#allocation3] sm:$0xff] %v2938
  %v2940 = vtanh.pop %v2938
  %v2941 = vmul.f32 %v2933, %v2940
  %2942 = vst [vmem:[%s4] sm:$0xff] %v2941
  // Predicated region
  $region22: #{split_lstm_autoencoder_forward.2} parent=0 // pred_check
    _
  $region23: #{split_lstm_autoencoder_forward.2} parent=0 // pred_check_branch
    %2944 = sbr.rel (0) target = $region25
  $region24: #{split_lstm_autoencoder_forward.2} parent=0 // pred_region
    _
  $region25: #{split_lstm_autoencoder_forward.2} parent=0 // pred_fallthru
    _
  // Predicated region
  $region26: #{split_lstm_autoencoder_forward.2} parent=0 // pred_check
    _
  $region27: #{split_lstm_autoencoder_forward.2} parent=0 // pred_check_branch
    %2946 = sbr.rel (0) target = $region29
  $region28: #{split_lstm_autoencoder_forward.2} parent=0 // pred_region
    _
  $region29: #{split_lstm_autoencoder_forward.2} parent=0 // pred_fallthru
    _

// kernel: split_lstm_autoencoder_forward.3
$region0: #{split_lstm_autoencoder_forward.3}
  #allocation0 [shape = 'u32[]', space=smem, size = 0x4, offset = 0x4, fixed_abs, tag = 'smem constant byte address 0x4 - core index']
  #allocation1 [shape = 'u32[144,128]{1,0:T(1,128)}', space=vmem, size = 0x12000, scoped, tag = 'internal scratch']
  #allocation2 [shape = 'f32[8,512]{1,0:T(8,128)}', space=vmem, size = 0x4000, scoped, tag = 'scratch operand']
  #allocation3 [shape = 'f32[8,128]{1,0:T(8,128)}', space=vmem, size = 0x1000, scoped, tag = 'scratch operand']
  #allocation4 [shape = 'f32[8,128]{1,0:T(8,128)}', space=vmem, size = 0x1000, scoped, tag = 'scratch operand']
  #allocation5 [shape = 'f32[8,512]{1,0:T(8,128)}', space=vmem, size = 0x4000, scoped, tag = 'scratch operand']
  #allocation6 [shape = 'f32[8,128]{1,0:T(8,128)}', space=vmem, size = 0x1000, scoped, tag = 'scratch operand']
  #allocation7 [shape = 'f32[8,128]{1,0:T(8,128)}', space=vmem, size = 0x1000, scoped, tag = 'scratch operand']
  %s0 = inlined_call_operand.vmem [shape: bf16[8,128], index: 0, kind: input, shape index: {}]
  %s1 = inlined_call_operand.vmem [shape: bf16[128,512], index: 1, kind: input, shape index: {}]
  %s2 = inlined_call_operand.vmem [shape: bf16[128,512], index: 2, kind: input, shape index: {}]
  %s3 = inlined_call_operand.vmem [shape: f32[1,512], index: 3, kind: input, shape index: {}]
  %s4 = inlined_call_operand.vmem [shape: bf16[128,512], index: 4, kind: input, shape index: {}]
  %s5 = inlined_call_operand.vmem [shape: bf16[128,512], index: 5, kind: input, shape index: {}]
  %s6 = inlined_call_operand.vmem [shape: f32[1,512], index: 6, kind: input, shape index: {}]
  %s7 = inlined_call_operand.vmem [shape: f32[8,8,128], index: 7, kind: output, shape index: {0}]
  %s8 = inlined_call_operand.vmem [shape: f32[8,8,128], index: 8, kind: output, shape index: {1}]
  %9 = xla_tuple %s7, %s8
  %s10 = sld [smem:[#allocation0]]
  $region50: #{split_lstm_autoencoder_forward.3} parent=0
    _
  %s12 = ssub.s32 1, %s10
  %s13 = scalar_select 0, %s12, %s10
  // Predicated region
  $region2: #{split_lstm_autoencoder_forward.3} parent=0 // pred_check
    _
  $region3: #{split_lstm_autoencoder_forward.3} parent=0 // pred_check_branch
    %15 = sbr.rel (0) target = $region5
  $region4: #{split_lstm_autoencoder_forward.3} parent=0 // pred_region
    _
  $region5: #{split_lstm_autoencoder_forward.3} parent=0 // pred_fallthru
    _
  // Predicated region
  $region6: #{split_lstm_autoencoder_forward.3} parent=0 // pred_check
    _
  $region7: #{split_lstm_autoencoder_forward.3} parent=0 // pred_check_branch
    %17 = sbr.rel (0) target = $region9
  $region8: #{split_lstm_autoencoder_forward.3} parent=0 // pred_region
    _
  $region9: #{split_lstm_autoencoder_forward.3} parent=0 // pred_fallthru
    _
  // Predicated region
  $region10: #{split_lstm_autoencoder_forward.3} parent=0 // pred_check
    _
  $region11: #{split_lstm_autoencoder_forward.3} parent=0 // pred_check_branch
    %19 = sbr.rel (0) target = $region13
  $region12: #{split_lstm_autoencoder_forward.3} parent=0 // pred_region
    _
  $region13: #{split_lstm_autoencoder_forward.3} parent=0 // pred_fallthru
    _
  // Predicated region
  $region14: #{split_lstm_autoencoder_forward.3} parent=0 // pred_check
    _
  $region15: #{split_lstm_autoencoder_forward.3} parent=0 // pred_check_branch
    %21 = sbr.rel (0) target = $region17
  $region16: #{split_lstm_autoencoder_forward.3} parent=0 // pred_region
    _
  $region17: #{split_lstm_autoencoder_forward.3} parent=0 // pred_fallthru
    _
  // Predicated region
  $region18: #{split_lstm_autoencoder_forward.3} parent=0 // pred_check
    _
  $region19: #{split_lstm_autoencoder_forward.3} parent=0 // pred_check_branch
    %23 = sbr.rel (0) target = $region21
  $region20: #{split_lstm_autoencoder_forward.3} parent=0 // pred_region
    _
  $region21: #{split_lstm_autoencoder_forward.3} parent=0 // pred_fallthru
    _
  // Predicated region
  $region22: #{split_lstm_autoencoder_forward.3} parent=0 // pred_check
    _
  $region23: #{split_lstm_autoencoder_forward.3} parent=0 // pred_check_branch
    %25 = sbr.rel (0) target = $region25
  $region24: #{split_lstm_autoencoder_forward.3} parent=0 // pred_region
    _
  $region25: #{split_lstm_autoencoder_forward.3} parent=0 // pred_fallthru
    _
  // Predicated region
  $region26: #{split_lstm_autoencoder_forward.3} parent=0 // pred_check
    _
  $region27: #{split_lstm_autoencoder_forward.3} parent=0 // pred_check_branch
    %27 = sbr.rel (0) target = $region29
  $region28: #{split_lstm_autoencoder_forward.3} parent=0 // pred_region
    _
  $region29: #{split_lstm_autoencoder_forward.3} parent=0 // pred_fallthru
    _
  %p29 = scmp.eq.s32.totalorder 0, 0
  // Predicated region
  $region30: #{split_lstm_autoencoder_forward.3} parent=0 // pred_check
    %p30 = pneg %p29
  $region31: #{split_lstm_autoencoder_forward.3} parent=0 // pred_check_branch
    %32 = sbr.rel (%p30) target = $region33
  $region32: #{split_lstm_autoencoder_forward.3} parent=0 // pred_region
    %v33 = vld [vmem:[%s0] sm:$0xf]
    %v34 = vld [vmem:[%s1] sm:$0xff]
    %v35 = vld [vmem:[%s1 + $0x8] sm:$0xff]
    %v36 = vld [vmem:[%s1 + $0x10] sm:$0xff]
    %v37 = vld [vmem:[%s1 + $0x18] sm:$0xff]
    %v38 = vld [vmem:[%s1 + $0x20] sm:$0xff]
    %v39 = vld [vmem:[%s1 + $0x28] sm:$0xff]
    %v40 = vld [vmem:[%s1 + $0x30] sm:$0xff]
    %v41 = vld [vmem:[%s1 + $0x38] sm:$0xff]
    %v42 = vld [vmem:[%s1 + $0x40] sm:$0xff]
    %v43 = vld [vmem:[%s1 + $0x48] sm:$0xff]
    %v44 = vld [vmem:[%s1 + $0x50] sm:$0xff]
    %v45 = vld [vmem:[%s1 + $0x58] sm:$0xff]
    %v46 = vld [vmem:[%s1 + $0x60] sm:$0xff]
    %v47 = vld [vmem:[%s1 + $0x68] sm:$0xff]
    %v48 = vld [vmem:[%s1 + $0x70] sm:$0xff]
    %v49 = vld [vmem:[%s1 + $0x78] sm:$0xff]
    %v50 = vld [vmem:[%s1 + $0x80] sm:$0xff]
    %v51 = vld [vmem:[%s1 + $0x88] sm:$0xff]
    %v52 = vld [vmem:[%s1 + $0x90] sm:$0xff]
    %v53 = vld [vmem:[%s1 + $0x98] sm:$0xff]
    %v54 = vld [vmem:[%s1 + $0xa0] sm:$0xff]
    %v55 = vld [vmem:[%s1 + $0xa8] sm:$0xff]
    %v56 = vld [vmem:[%s1 + $0xb0] sm:$0xff]
    %v57 = vld [vmem:[%s1 + $0xb8] sm:$0xff]
    %v58 = vld [vmem:[%s1 + $0xc0] sm:$0xff]
    %v59 = vld [vmem:[%s1 + $0xc8] sm:$0xff]
    %v60 = vld [vmem:[%s1 + $0xd0] sm:$0xff]
    %v61 = vld [vmem:[%s1 + $0xd8] sm:$0xff]
    %v62 = vld [vmem:[%s1 + $0xe0] sm:$0xff]
    %v63 = vld [vmem:[%s1 + $0xe8] sm:$0xff]
    %v64 = vld [vmem:[%s1 + $0xf0] sm:$0xff]
    %v65 = vld [vmem:[%s1 + $0xf8] sm:$0xff]
    %v66 = vld [vmem:[%s3] sm:$0xf]
    %v68 = vlaneseq
    %v69 = vshrl.u32 %v68, 7
    %v70 = vsub.s32 0, %v69
    %v71 = vrot.slane %v66, %v70
    %v72 = vlaneseq
    %v73 = vshrl.u32 %v72, 7
    %v74 = vsub.s32 1, %v73
    %v75 = vrot.slane %v66, %v74
    %v76 = vlaneseq
    %v77 = vshrl.u32 %v76, 7
    %v78 = vsub.s32 2, %v77
    %v79 = vrot.slane %v66, %v78
    %v80 = vlaneseq
    %v81 = vshrl.u32 %v80, 7
    %v82 = vsub.s32 3, %v81
    %v83 = vrot.slane %v66, %v82
    %v120 = vunpack.c.l.b16 %v34
    %v121 = vunpack.c.h.b16 %v34
    %v122 = vunpack.c.l.b16 %v35
    %v123 = vunpack.c.h.b16 %v35
    %v124 = vunpack.c.l.b16 %v36
    %v125 = vunpack.c.h.b16 %v36
    %v126 = vunpack.c.l.b16 %v37
    %v127 = vunpack.c.h.b16 %v37
    %v128 = vunpack.c.l.b16 %v38
    %v129 = vunpack.c.h.b16 %v38
    %v130 = vunpack.c.l.b16 %v39
    %v131 = vunpack.c.h.b16 %v39
    %v132 = vunpack.c.l.b16 %v40
    %v133 = vunpack.c.h.b16 %v40
    %v134 = vunpack.c.l.b16 %v41
    %v135 = vunpack.c.h.b16 %v41
    %v136 = vunpack.c.l.b16 %v42
    %v137 = vunpack.c.h.b16 %v42
    %v138 = vunpack.c.l.b16 %v43
    %v139 = vunpack.c.h.b16 %v43
    %v140 = vunpack.c.l.b16 %v44
    %v141 = vunpack.c.h.b16 %v44
    %v142 = vunpack.c.l.b16 %v45
    %v143 = vunpack.c.h.b16 %v45
    %v144 = vunpack.c.l.b16 %v46
    %v145 = vunpack.c.h.b16 %v46
    %v146 = vunpack.c.l.b16 %v47
    %v147 = vunpack.c.h.b16 %v47
    %v148 = vunpack.c.l.b16 %v48
    %v149 = vunpack.c.h.b16 %v48
    %v150 = vunpack.c.l.b16 %v49
    %v151 = vunpack.c.h.b16 %v49
    %v152 = vunpack.c.l.b16 %v50
    %v153 = vunpack.c.h.b16 %v50
    %v154 = vunpack.c.l.b16 %v51
    %v155 = vunpack.c.h.b16 %v51
    %v156 = vunpack.c.l.b16 %v52
    %v157 = vunpack.c.h.b16 %v52
    %v158 = vunpack.c.l.b16 %v53
    %v159 = vunpack.c.h.b16 %v53
    %v160 = vunpack.c.l.b16 %v54
    %v161 = vunpack.c.h.b16 %v54
    %v162 = vunpack.c.l.b16 %v55
    %v163 = vunpack.c.h.b16 %v55
    %v164 = vunpack.c.l.b16 %v56
    %v165 = vunpack.c.h.b16 %v56
    %v166 = vunpack.c.l.b16 %v57
    %v167 = vunpack.c.h.b16 %v57
    %v168 = vunpack.c.l.b16 %v58
    %v169 = vunpack.c.h.b16 %v58
    %v170 = vunpack.c.l.b16 %v59
    %v171 = vunpack.c.h.b16 %v59
    %v172 = vunpack.c.l.b16 %v60
    %v173 = vunpack.c.h.b16 %v60
    %v174 = vunpack.c.l.b16 %v61
    %v175 = vunpack.c.h.b16 %v61
    %v176 = vunpack.c.l.b16 %v62
    %v177 = vunpack.c.h.b16 %v62
    %v178 = vunpack.c.l.b16 %v63
    %v179 = vunpack.c.h.b16 %v63
    %v180 = vunpack.c.l.b16 %v64
    %v181 = vunpack.c.h.b16 %v64
    %v182 = vunpack.c.l.b16 %v65
    %v183 = vunpack.c.h.b16 %v65
    %v184 = vpack.c.b16 %v124, %v120
    %v185 = vpack.c.b16 %v125, %v121
    %v186 = vpack.c.b16 %v126, %v122
    %v187 = vpack.c.b16 %v127, %v123
    %v188 = vpack.c.b16 %v132, %v128
    %v189 = vpack.c.b16 %v133, %v129
    %v190 = vpack.c.b16 %v134, %v130
    %v191 = vpack.c.b16 %v135, %v131
    %v192 = vpack.c.b16 %v140, %v136
    %v193 = vpack.c.b16 %v141, %v137
    %v194 = vpack.c.b16 %v142, %v138
    %v195 = vpack.c.b16 %v143, %v139
    %v196 = vpack.c.b16 %v148, %v144
    %v197 = vpack.c.b16 %v149, %v145
    %v198 = vpack.c.b16 %v150, %v146
    %v199 = vpack.c.b16 %v151, %v147
    %v200 = vpack.c.b16 %v156, %v152
    %v201 = vpack.c.b16 %v157, %v153
    %v202 = vpack.c.b16 %v158, %v154
    %v203 = vpack.c.b16 %v159, %v155
    %v204 = vpack.c.b16 %v164, %v160
    %v205 = vpack.c.b16 %v165, %v161
    %v206 = vpack.c.b16 %v166, %v162
    %v207 = vpack.c.b16 %v167, %v163
    %v208 = vpack.c.b16 %v172, %v168
    %v209 = vpack.c.b16 %v173, %v169
    %v210 = vpack.c.b16 %v174, %v170
    %v211 = vpack.c.b16 %v175, %v171
    %v212 = vpack.c.b16 %v180, %v176
    %v213 = vpack.c.b16 %v181, %v177
    %v214 = vpack.c.b16 %v182, %v178
    %v215 = vpack.c.b16 %v183, %v179
    %248 = vmatprep.subr.bf16.mxu0 %v185
    %249 = vmatpush1.bf16.msra.mxu0 %v184
    %250 = vmatprep.subr.bf16.mxu0 %v189
    %251 = vmatpush1.bf16.msra.mxu0 %v188
    %252 = vmatprep.subr.bf16.mxu0 %v193
    %253 = vmatpush1.bf16.msra.mxu0 %v192
    %254 = vmatprep.subr.bf16.mxu0 %v197
    %255 = vmatpush1.bf16.msra.mxu0 %v196
    %256 = vmatprep.subr.bf16.mxu0 %v201
    %257 = vmatpush1.bf16.msra.mxu0 %v200
    %258 = vmatprep.subr.bf16.mxu0 %v205
    %259 = vmatpush1.bf16.msra.mxu0 %v204
    %260 = vmatprep.subr.bf16.mxu0 %v209
    %261 = vmatpush1.bf16.msra.mxu0 %v208
    %262 = vmatprep.subr.bf16.mxu0 %v213
    %263 = vmatpush1.bf16.msra.mxu0 %v212
    %264 = vmatprep.subr.bf16.mxu0 0
    %265 = vmatpush1.bf16.msra.mxu0 0
    %266 = vmatprep.subr.bf16.mxu0 0
    %267 = vmatpush1.bf16.msra.mxu0 0
    %268 = vmatprep.subr.bf16.mxu0 0
    %269 = vmatpush1.bf16.msra.mxu0 0
    %270 = vmatprep.subr.bf16.mxu0 0
    %271 = vmatpush1.bf16.msra.mxu0 0
    %272 = vmatprep.subr.bf16.mxu0 0
    %273 = vmatpush1.bf16.msra.mxu0 0
    %274 = vmatprep.subr.bf16.mxu0 0
    %275 = vmatpush1.bf16.msra.mxu0 0
    %276 = vmatprep.subr.bf16.mxu0 0
    %277 = vmatpush1.bf16.msra.mxu0 0
    %278 = vmatprep.subr.bf16.mxu0 0
    %279 = vmatpush1.bf16.msra.mxu0 0
    %280 = vmatprep.mubr.bf16.mxu0 0
    %281 = vmatmul.mubr.bf16.gmra.mrb[0].mxu0 %v33
    %v282 = vpop.f32.mrb[0].mxu0
    %v283 = vadd.f32 %v71, %v282
    %v284 = vpop.f32.mrb[0].mxu0
    %v285 = vadd.f32 %v75, %v284
    %v286 = vpop.f32.mrb[0].mxu0
    %v287 = vpop.f32.mrb[0].mxu0
    %288 = vdwg.mxu0
    %289 = vmatprep.subr.bf16.mxu0 %v187
    %290 = vmatpush1.bf16.msra.mxu0 %v186
    %291 = vmatprep.subr.bf16.mxu0 %v191
    %292 = vmatpush1.bf16.msra.mxu0 %v190
    %293 = vmatprep.subr.bf16.mxu0 %v195
    %294 = vmatpush1.bf16.msra.mxu0 %v194
    %295 = vmatprep.subr.bf16.mxu0 %v199
    %296 = vmatpush1.bf16.msra.mxu0 %v198
    %297 = vmatprep.subr.bf16.mxu0 %v203
    %298 = vmatpush1.bf16.msra.mxu0 %v202
    %299 = vmatprep.subr.bf16.mxu0 %v207
    %300 = vmatpush1.bf16.msra.mxu0 %v206
    %301 = vmatprep.subr.bf16.mxu0 %v211
    %302 = vmatpush1.bf16.msra.mxu0 %v210
    %303 = vmatprep.subr.bf16.mxu0 %v215
    %304 = vmatpush1.bf16.msra.mxu0 %v214
    %305 = vmatprep.subr.bf16.mxu0 0
    %306 = vmatpush1.bf16.msra.mxu0 0
    %307 = vmatprep.subr.bf16.mxu0 0
    %308 = vmatpush1.bf16.msra.mxu0 0
    %309 = vmatprep.subr.bf16.mxu0 0
    %310 = vmatpush1.bf16.msra.mxu0 0
    %311 = vmatprep.subr.bf16.mxu0 0
    %312 = vmatpush1.bf16.msra.mxu0 0
    %313 = vmatprep.subr.bf16.mxu0 0
    %314 = vmatpush1.bf16.msra.mxu0 0
    %315 = vmatprep.subr.bf16.mxu0 0
    %316 = vmatpush1.bf16.msra.mxu0 0
    %317 = vmatprep.subr.bf16.mxu0 0
    %318 = vmatpush1.bf16.msra.mxu0 0
    %319 = vmatprep.subr.bf16.mxu0 0
    %320 = vmatpush1.bf16.msra.mxu0 0
    %321 = vmatprep.mubr.bf16.mxu0 0
    %322 = vmatmul.mubr.bf16.gmra.mrb[0].mxu0 %v33
    %v323 = vpop.f32.mrb[0].mxu0
    %v324 = vadd.f32 %v79, %v323
    %v325 = vpop.f32.mrb[0].mxu0
    %v326 = vadd.f32 %v83, %v325
    %v327 = vpop.f32.mrb[0].mxu0
    %v328 = vpop.f32.mrb[0].mxu0
    %329 = vdwg.mxu0
    %330 = vst [vmem:[#allocation2] sm:$0xff] %v283
    %331 = vst [vmem:[#allocation2 + $0x8] sm:$0xff] %v285
    %332 = vst [vmem:[#allocation2 + $0x10] sm:$0xff] %v324
    %333 = vst [vmem:[#allocation2 + $0x18] sm:$0xff] %v326
    %v334 = vld [vmem:[%s0] sm:$0xf]
    %v335 = vld [vmem:[%s4] sm:$0xff]
    %v336 = vld [vmem:[%s4 + $0x8] sm:$0xff]
    %v337 = vld [vmem:[%s4 + $0x10] sm:$0xff]
    %v338 = vld [vmem:[%s4 + $0x18] sm:$0xff]
    %v339 = vld [vmem:[%s4 + $0x20] sm:$0xff]
    %v340 = vld [vmem:[%s4 + $0x28] sm:$0xff]
    %v341 = vld [vmem:[%s4 + $0x30] sm:$0xff]
    %v342 = vld [vmem:[%s4 + $0x38] sm:$0xff]
    %v343 = vld [vmem:[%s4 + $0x40] sm:$0xff]
    %v344 = vld [vmem:[%s4 + $0x48] sm:$0xff]
    %v345 = vld [vmem:[%s4 + $0x50] sm:$0xff]
    %v346 = vld [vmem:[%s4 + $0x58] sm:$0xff]
    %v347 = vld [vmem:[%s4 + $0x60] sm:$0xff]
    %v348 = vld [vmem:[%s4 + $0x68] sm:$0xff]
    %v349 = vld [vmem:[%s4 + $0x70] sm:$0xff]
    %v350 = vld [vmem:[%s4 + $0x78] sm:$0xff]
    %v351 = vld [vmem:[%s4 + $0x80] sm:$0xff]
    %v352 = vld [vmem:[%s4 + $0x88] sm:$0xff]
    %v353 = vld [vmem:[%s4 + $0x90] sm:$0xff]
    %v354 = vld [vmem:[%s4 + $0x98] sm:$0xff]
    %v355 = vld [vmem:[%s4 + $0xa0] sm:$0xff]
    %v356 = vld [vmem:[%s4 + $0xa8] sm:$0xff]
    %v357 = vld [vmem:[%s4 + $0xb0] sm:$0xff]
    %v358 = vld [vmem:[%s4 + $0xb8] sm:$0xff]
    %v359 = vld [vmem:[%s4 + $0xc0] sm:$0xff]
    %v360 = vld [vmem:[%s4 + $0xc8] sm:$0xff]
    %v361 = vld [vmem:[%s4 + $0xd0] sm:$0xff]
    %v362 = vld [vmem:[%s4 + $0xd8] sm:$0xff]
    %v363 = vld [vmem:[%s4 + $0xe0] sm:$0xff]
    %v364 = vld [vmem:[%s4 + $0xe8] sm:$0xff]
    %v365 = vld [vmem:[%s4 + $0xf0] sm:$0xff]
    %v366 = vld [vmem:[%s4 + $0xf8] sm:$0xff]
    %v367 = vld [vmem:[%s6] sm:$0xf]
    %v369 = vlaneseq
    %v370 = vshrl.u32 %v369, 7
    %v371 = vsub.s32 0, %v370
    %v372 = vrot.slane %v367, %v371
    %v373 = vlaneseq
    %v374 = vshrl.u32 %v373, 7
    %v375 = vsub.s32 1, %v374
    %v376 = vrot.slane %v367, %v375
    %v377 = vlaneseq
    %v378 = vshrl.u32 %v377, 7
    %v379 = vsub.s32 2, %v378
    %v380 = vrot.slane %v367, %v379
    %v381 = vlaneseq
    %v382 = vshrl.u32 %v381, 7
    %v383 = vsub.s32 3, %v382
    %v384 = vrot.slane %v367, %v383
    %v421 = vunpack.c.l.b16 %v335
    %v422 = vunpack.c.h.b16 %v335
    %v423 = vunpack.c.l.b16 %v336
    %v424 = vunpack.c.h.b16 %v336
    %v425 = vunpack.c.l.b16 %v337
    %v426 = vunpack.c.h.b16 %v337
    %v427 = vunpack.c.l.b16 %v338
    %v428 = vunpack.c.h.b16 %v338
    %v429 = vunpack.c.l.b16 %v339
    %v430 = vunpack.c.h.b16 %v339
    %v431 = vunpack.c.l.b16 %v340
    %v432 = vunpack.c.h.b16 %v340
    %v433 = vunpack.c.l.b16 %v341
    %v434 = vunpack.c.h.b16 %v341
    %v435 = vunpack.c.l.b16 %v342
    %v436 = vunpack.c.h.b16 %v342
    %v437 = vunpack.c.l.b16 %v343
    %v438 = vunpack.c.h.b16 %v343
    %v439 = vunpack.c.l.b16 %v344
    %v440 = vunpack.c.h.b16 %v344
    %v441 = vunpack.c.l.b16 %v345
    %v442 = vunpack.c.h.b16 %v345
    %v443 = vunpack.c.l.b16 %v346
    %v444 = vunpack.c.h.b16 %v346
    %v445 = vunpack.c.l.b16 %v347
    %v446 = vunpack.c.h.b16 %v347
    %v447 = vunpack.c.l.b16 %v348
    %v448 = vunpack.c.h.b16 %v348
    %v449 = vunpack.c.l.b16 %v349
    %v450 = vunpack.c.h.b16 %v349
    %v451 = vunpack.c.l.b16 %v350
    %v452 = vunpack.c.h.b16 %v350
    %v453 = vunpack.c.l.b16 %v351
    %v454 = vunpack.c.h.b16 %v351
    %v455 = vunpack.c.l.b16 %v352
    %v456 = vunpack.c.h.b16 %v352
    %v457 = vunpack.c.l.b16 %v353
    %v458 = vunpack.c.h.b16 %v353
    %v459 = vunpack.c.l.b16 %v354
    %v460 = vunpack.c.h.b16 %v354
    %v461 = vunpack.c.l.b16 %v355
    %v462 = vunpack.c.h.b16 %v355
    %v463 = vunpack.c.l.b16 %v356
    %v464 = vunpack.c.h.b16 %v356
    %v465 = vunpack.c.l.b16 %v357
    %v466 = vunpack.c.h.b16 %v357
    %v467 = vunpack.c.l.b16 %v358
    %v468 = vunpack.c.h.b16 %v358
    %v469 = vunpack.c.l.b16 %v359
    %v470 = vunpack.c.h.b16 %v359
    %v471 = vunpack.c.l.b16 %v360
    %v472 = vunpack.c.h.b16 %v360
    %v473 = vunpack.c.l.b16 %v361
    %v474 = vunpack.c.h.b16 %v361
    %v475 = vunpack.c.l.b16 %v362
    %v476 = vunpack.c.h.b16 %v362
    %v477 = vunpack.c.l.b16 %v363
    %v478 = vunpack.c.h.b16 %v363
    %v479 = vunpack.c.l.b16 %v364
    %v480 = vunpack.c.h.b16 %v364
    %v481 = vunpack.c.l.b16 %v365
    %v482 = vunpack.c.h.b16 %v365
    %v483 = vunpack.c.l.b16 %v366
    %v484 = vunpack.c.h.b16 %v366
    %v485 = vpack.c.b16 %v425, %v421
    %v486 = vpack.c.b16 %v426, %v422
    %v487 = vpack.c.b16 %v427, %v423
    %v488 = vpack.c.b16 %v428, %v424
    %v489 = vpack.c.b16 %v433, %v429
    %v490 = vpack.c.b16 %v434, %v430
    %v491 = vpack.c.b16 %v435, %v431
    %v492 = vpack.c.b16 %v436, %v432
    %v493 = vpack.c.b16 %v441, %v437
    %v494 = vpack.c.b16 %v442, %v438
    %v495 = vpack.c.b16 %v443, %v439
    %v496 = vpack.c.b16 %v444, %v440
    %v497 = vpack.c.b16 %v449, %v445
    %v498 = vpack.c.b16 %v450, %v446
    %v499 = vpack.c.b16 %v451, %v447
    %v500 = vpack.c.b16 %v452, %v448
    %v501 = vpack.c.b16 %v457, %v453
    %v502 = vpack.c.b16 %v458, %v454
    %v503 = vpack.c.b16 %v459, %v455
    %v504 = vpack.c.b16 %v460, %v456
    %v505 = vpack.c.b16 %v465, %v461
    %v506 = vpack.c.b16 %v466, %v462
    %v507 = vpack.c.b16 %v467, %v463
    %v508 = vpack.c.b16 %v468, %v464
    %v509 = vpack.c.b16 %v473, %v469
    %v510 = vpack.c.b16 %v474, %v470
    %v511 = vpack.c.b16 %v475, %v471
    %v512 = vpack.c.b16 %v476, %v472
    %v513 = vpack.c.b16 %v481, %v477
    %v514 = vpack.c.b16 %v482, %v478
    %v515 = vpack.c.b16 %v483, %v479
    %v516 = vpack.c.b16 %v484, %v480
    %549 = vmatprep.subr.bf16.mxu0 %v486
    %550 = vmatpush1.bf16.msra.mxu0 %v485
    %551 = vmatprep.subr.bf16.mxu0 %v490
    %552 = vmatpush1.bf16.msra.mxu0 %v489
    %553 = vmatprep.subr.bf16.mxu0 %v494
    %554 = vmatpush1.bf16.msra.mxu0 %v493
    %555 = vmatprep.subr.bf16.mxu0 %v498
    %556 = vmatpush1.bf16.msra.mxu0 %v497
    %557 = vmatprep.subr.bf16.mxu0 %v502
    %558 = vmatpush1.bf16.msra.mxu0 %v501
    %559 = vmatprep.subr.bf16.mxu0 %v506
    %560 = vmatpush1.bf16.msra.mxu0 %v505
    %561 = vmatprep.subr.bf16.mxu0 %v510
    %562 = vmatpush1.bf16.msra.mxu0 %v509
    %563 = vmatprep.subr.bf16.mxu0 %v514
    %564 = vmatpush1.bf16.msra.mxu0 %v513
    %565 = vmatprep.subr.bf16.mxu0 0
    %566 = vmatpush1.bf16.msra.mxu0 0
    %567 = vmatprep.subr.bf16.mxu0 0
    %568 = vmatpush1.bf16.msra.mxu0 0
    %569 = vmatprep.subr.bf16.mxu0 0
    %570 = vmatpush1.bf16.msra.mxu0 0
    %571 = vmatprep.subr.bf16.mxu0 0
    %572 = vmatpush1.bf16.msra.mxu0 0
    %573 = vmatprep.subr.bf16.mxu0 0
    %574 = vmatpush1.bf16.msra.mxu0 0
    %575 = vmatprep.subr.bf16.mxu0 0
    %576 = vmatpush1.bf16.msra.mxu0 0
    %577 = vmatprep.subr.bf16.mxu0 0
    %578 = vmatpush1.bf16.msra.mxu0 0
    %579 = vmatprep.subr.bf16.mxu0 0
    %580 = vmatpush1.bf16.msra.mxu0 0
    %581 = vmatprep.mubr.bf16.mxu0 0
    %582 = vmatmul.mubr.bf16.gmra.mrb[0].mxu0 %v334
    %v583 = vpop.f32.mrb[0].mxu0
    %v584 = vadd.f32 %v372, %v583
    %v585 = vpop.f32.mrb[0].mxu0
    %v586 = vadd.f32 %v376, %v585
    %v587 = vpop.f32.mrb[0].mxu0
    %v588 = vpop.f32.mrb[0].mxu0
    %589 = vdwg.mxu0
    %590 = vmatprep.subr.bf16.mxu0 %v488
    %591 = vmatpush1.bf16.msra.mxu0 %v487
    %592 = vmatprep.subr.bf16.mxu0 %v492
    %593 = vmatpush1.bf16.msra.mxu0 %v491
    %594 = vmatprep.subr.bf16.mxu0 %v496
    %595 = vmatpush1.bf16.msra.mxu0 %v495
    %596 = vmatprep.subr.bf16.mxu0 %v500
    %597 = vmatpush1.bf16.msra.mxu0 %v499
    %598 = vmatprep.subr.bf16.mxu0 %v504
    %599 = vmatpush1.bf16.msra.mxu0 %v503
    %600 = vmatprep.subr.bf16.mxu0 %v508
    %601 = vmatpush1.bf16.msra.mxu0 %v507
    %602 = vmatprep.subr.bf16.mxu0 %v512
    %603 = vmatpush1.bf16.msra.mxu0 %v511
    %604 = vmatprep.subr.bf16.mxu0 %v516
    %605 = vmatpush1.bf16.msra.mxu0 %v515
    %606 = vmatprep.subr.bf16.mxu0 0
    %607 = vmatpush1.bf16.msra.mxu0 0
    %608 = vmatprep.subr.bf16.mxu0 0
    %609 = vmatpush1.bf16.msra.mxu0 0
    %610 = vmatprep.subr.bf16.mxu0 0
    %611 = vmatpush1.bf16.msra.mxu0 0
    %612 = vmatprep.subr.bf16.mxu0 0
    %613 = vmatpush1.bf16.msra.mxu0 0
    %614 = vmatprep.subr.bf16.mxu0 0
    %615 = vmatpush1.bf16.msra.mxu0 0
    %616 = vmatprep.subr.bf16.mxu0 0
    %617 = vmatpush1.bf16.msra.mxu0 0
    %618 = vmatprep.subr.bf16.mxu0 0
    %619 = vmatpush1.bf16.msra.mxu0 0
    %620 = vmatprep.subr.bf16.mxu0 0
    %621 = vmatpush1.bf16.msra.mxu0 0
    %622 = vmatprep.mubr.bf16.mxu0 0
    %623 = vmatmul.mubr.bf16.gmra.mrb[0].mxu0 %v334
    %v624 = vpop.f32.mrb[0].mxu0
    %v625 = vadd.f32 %v380, %v624
    %v626 = vpop.f32.mrb[0].mxu0
    %v627 = vadd.f32 %v384, %v626
    %v628 = vpop.f32.mrb[0].mxu0
    %v629 = vpop.f32.mrb[0].mxu0
    %630 = vdwg.mxu0
    %631 = vst [vmem:[#allocation5] sm:$0xff] %v584
    %632 = vst [vmem:[#allocation5 + $0x8] sm:$0xff] %v586
    %633 = vst [vmem:[#allocation5 + $0x10] sm:$0xff] %v625
    %634 = vst [vmem:[#allocation5 + $0x18] sm:$0xff] %v627
    %635 = vst [vmem:[#allocation3] sm:$0xff] 0.0
    %636 = vst [vmem:[#allocation4] sm:$0xff] 0.0
    %637 = vst [vmem:[#allocation6] sm:$0xff] 0.0
    %638 = vst [vmem:[#allocation7] sm:$0xff] 0.0
  $region33: #{split_lstm_autoencoder_forward.3} parent=0 // pred_fallthru
    _
  %v639 = vld [vmem:[#allocation2] sm:$0xff]
  %v640 = vld [vmem:[#allocation2 + $0x8] sm:$0xff]
  %v641 = vld [vmem:[#allocation2 + $0x10] sm:$0xff]
  %v642 = vld [vmem:[#allocation2 + $0x18] sm:$0xff]
  %v643 = vld [vmem:[#allocation3] sm:$0xff]
  %v644 = vld [vmem:[#allocation4] sm:$0xff]
  %v645 = vld [vmem:[%s2] sm:$0xff]
  %v646 = vld [vmem:[%s2 + $0x8] sm:$0xff]
  %v647 = vld [vmem:[%s2 + $0x10] sm:$0xff]
  %v648 = vld [vmem:[%s2 + $0x18] sm:$0xff]
  %v649 = vld [vmem:[%s2 + $0x20] sm:$0xff]
  %v650 = vld [vmem:[%s2 + $0x28] sm:$0xff]
  %v651 = vld [vmem:[%s2 + $0x30] sm:$0xff]
  %v652 = vld [vmem:[%s2 + $0x38] sm:$0xff]
  %v653 = vld [vmem:[%s2 + $0x40] sm:$0xff]
  %v654 = vld [vmem:[%s2 + $0x48] sm:$0xff]
  %v655 = vld [vmem:[%s2 + $0x50] sm:$0xff]
  %v656 = vld [vmem:[%s2 + $0x58] sm:$0xff]
  %v657 = vld [vmem:[%s2 + $0x60] sm:$0xff]
  %v658 = vld [vmem:[%s2 + $0x68] sm:$0xff]
  %v659 = vld [vmem:[%s2 + $0x70] sm:$0xff]
  %v660 = vld [vmem:[%s2 + $0x78] sm:$0xff]
  %v661 = vld [vmem:[%s2 + $0x80] sm:$0xff]
  %v662 = vld [vmem:[%s2 + $0x88] sm:$0xff]
  %v663 = vld [vmem:[%s2 + $0x90] sm:$0xff]
  %v664 = vld [vmem:[%s2 + $0x98] sm:$0xff]
  %v665 = vld [vmem:[%s2 + $0xa0] sm:$0xff]
  %v666 = vld [vmem:[%s2 + $0xa8] sm:$0xff]
  %v667 = vld [vmem:[%s2 + $0xb0] sm:$0xff]
  %v668 = vld [vmem:[%s2 + $0xb8] sm:$0xff]
  %v669 = vld [vmem:[%s2 + $0xc0] sm:$0xff]
  %v670 = vld [vmem:[%s2 + $0xc8] sm:$0xff]
  %v671 = vld [vmem:[%s2 + $0xd0] sm:$0xff]
  %v672 = vld [vmem:[%s2 + $0xd8] sm:$0xff]
  %v673 = vld [vmem:[%s2 + $0xe0] sm:$0xff]
  %v674 = vld [vmem:[%s2 + $0xe8] sm:$0xff]
  %v675 = vld [vmem:[%s2 + $0xf0] sm:$0xff]
  %v676 = vld [vmem:[%s2 + $0xf8] sm:$0xff]
  %v677 = vpack.c.bf16 %v643, %v643
  %v710 = vunpack.c.l.b16 %v645
  %v711 = vunpack.c.h.b16 %v645
  %v712 = vunpack.c.l.b16 %v646
  %v713 = vunpack.c.h.b16 %v646
  %v714 = vunpack.c.l.b16 %v647
  %v715 = vunpack.c.h.b16 %v647
  %v716 = vunpack.c.l.b16 %v648
  %v717 = vunpack.c.h.b16 %v648
  %v718 = vunpack.c.l.b16 %v649
  %v719 = vunpack.c.h.b16 %v649
  %v720 = vunpack.c.l.b16 %v650
  %v721 = vunpack.c.h.b16 %v650
  %v722 = vunpack.c.l.b16 %v651
  %v723 = vunpack.c.h.b16 %v651
  %v724 = vunpack.c.l.b16 %v652
  %v725 = vunpack.c.h.b16 %v652
  %v726 = vunpack.c.l.b16 %v653
  %v727 = vunpack.c.h.b16 %v653
  %v728 = vunpack.c.l.b16 %v654
  %v729 = vunpack.c.h.b16 %v654
  %v730 = vunpack.c.l.b16 %v655
  %v731 = vunpack.c.h.b16 %v655
  %v732 = vunpack.c.l.b16 %v656
  %v733 = vunpack.c.h.b16 %v656
  %v734 = vunpack.c.l.b16 %v657
  %v735 = vunpack.c.h.b16 %v657
  %v736 = vunpack.c.l.b16 %v658
  %v737 = vunpack.c.h.b16 %v658
  %v738 = vunpack.c.l.b16 %v659
  %v739 = vunpack.c.h.b16 %v659
  %v740 = vunpack.c.l.b16 %v660
  %v741 = vunpack.c.h.b16 %v660
  %v742 = vunpack.c.l.b16 %v661
  %v743 = vunpack.c.h.b16 %v661
  %v744 = vunpack.c.l.b16 %v662
  %v745 = vunpack.c.h.b16 %v662
  %v746 = vunpack.c.l.b16 %v663
  %v747 = vunpack.c.h.b16 %v663
  %v748 = vunpack.c.l.b16 %v664
  %v749 = vunpack.c.h.b16 %v664
  %v750 = vunpack.c.l.b16 %v665
  %v751 = vunpack.c.h.b16 %v665
  %v752 = vunpack.c.l.b16 %v666
  %v753 = vunpack.c.h.b16 %v666
  %v754 = vunpack.c.l.b16 %v667
  %v755 = vunpack.c.h.b16 %v667
  %v756 = vunpack.c.l.b16 %v668
  %v757 = vunpack.c.h.b16 %v668
  %v758 = vunpack.c.l.b16 %v669
  %v759 = vunpack.c.h.b16 %v669
  %v760 = vunpack.c.l.b16 %v670
  %v761 = vunpack.c.h.b16 %v670
  %v762 = vunpack.c.l.b16 %v671
  %v763 = vunpack.c.h.b16 %v671
  %v764 = vunpack.c.l.b16 %v672
  %v765 = vunpack.c.h.b16 %v672
  %v766 = vunpack.c.l.b16 %v673
  %v767 = vunpack.c.h.b16 %v673
  %v768 = vunpack.c.l.b16 %v674
  %v769 = vunpack.c.h.b16 %v674
  %v770 = vunpack.c.l.b16 %v675
  %v771 = vunpack.c.h.b16 %v675
  %v772 = vunpack.c.l.b16 %v676
  %v773 = vunpack.c.h.b16 %v676
  %v774 = vpack.c.b16 %v714, %v710
  %v775 = vpack.c.b16 %v715, %v711
  %v776 = vpack.c.b16 %v716, %v712
  %v777 = vpack.c.b16 %v717, %v713
  %v778 = vpack.c.b16 %v722, %v718
  %v779 = vpack.c.b16 %v723, %v719
  %v780 = vpack.c.b16 %v724, %v720
  %v781 = vpack.c.b16 %v725, %v721
  %v782 = vpack.c.b16 %v730, %v726
  %v783 = vpack.c.b16 %v731, %v727
  %v784 = vpack.c.b16 %v732, %v728
  %v785 = vpack.c.b16 %v733, %v729
  %v786 = vpack.c.b16 %v738, %v734
  %v787 = vpack.c.b16 %v739, %v735
  %v788 = vpack.c.b16 %v740, %v736
  %v789 = vpack.c.b16 %v741, %v737
  %v790 = vpack.c.b16 %v746, %v742
  %v791 = vpack.c.b16 %v747, %v743
  %v792 = vpack.c.b16 %v748, %v744
  %v793 = vpack.c.b16 %v749, %v745
  %v794 = vpack.c.b16 %v754, %v750
  %v795 = vpack.c.b16 %v755, %v751
  %v796 = vpack.c.b16 %v756, %v752
  %v797 = vpack.c.b16 %v757, %v753
  %v798 = vpack.c.b16 %v762, %v758
  %v799 = vpack.c.b16 %v763, %v759
  %v800 = vpack.c.b16 %v764, %v760
  %v801 = vpack.c.b16 %v765, %v761
  %v802 = vpack.c.b16 %v770, %v766
  %v803 = vpack.c.b16 %v771, %v767
  %v804 = vpack.c.b16 %v772, %v768
  %v805 = vpack.c.b16 %v773, %v769
  %838 = vmatprep.subr.bf16.mxu0 %v775
  %839 = vmatpush1.bf16.msra.mxu0 %v774
  %840 = vmatprep.subr.bf16.mxu0 %v779
  %841 = vmatpush1.bf16.msra.mxu0 %v778
  %842 = vmatprep.subr.bf16.mxu0 %v783
  %843 = vmatpush1.bf16.msra.mxu0 %v782
  %844 = vmatprep.subr.bf16.mxu0 %v787
  %845 = vmatpush1.bf16.msra.mxu0 %v786
  %846 = vmatprep.subr.bf16.mxu0 %v791
  %847 = vmatpush1.bf16.msra.mxu0 %v790
  %848 = vmatprep.subr.bf16.mxu0 %v795
  %849 = vmatpush1.bf16.msra.mxu0 %v794
  %850 = vmatprep.subr.bf16.mxu0 %v799
  %851 = vmatpush1.bf16.msra.mxu0 %v798
  %852 = vmatprep.subr.bf16.mxu0 %v803
  %853 = vmatpush1.bf16.msra.mxu0 %v802
  %854 = vmatprep.subr.bf16.mxu0 0
  %855 = vmatpush1.bf16.msra.mxu0 0
  %856 = vmatprep.subr.bf16.mxu0 0
  %857 = vmatpush1.bf16.msra.mxu0 0
  %858 = vmatprep.subr.bf16.mxu0 0
  %859 = vmatpush1.bf16.msra.mxu0 0
  %860 = vmatprep.subr.bf16.mxu0 0
  %861 = vmatpush1.bf16.msra.mxu0 0
  %862 = vmatprep.subr.bf16.mxu0 0
  %863 = vmatpush1.bf16.msra.mxu0 0
  %864 = vmatprep.subr.bf16.mxu0 0
  %865 = vmatpush1.bf16.msra.mxu0 0
  %866 = vmatprep.subr.bf16.mxu0 0
  %867 = vmatpush1.bf16.msra.mxu0 0
  %868 = vmatprep.subr.bf16.mxu0 0
  %869 = vmatpush1.bf16.msra.mxu0 0
  %870 = vmatprep.mubr.bf16.mxu0 0
  %871 = vmatmul.mubr.bf16.gmra.mrb[0].mxu0 %v677
  %v872 = vpop.f32.mrb[0].mxu0
  %v873 = vadd.f32 0.0, %v872
  %v874 = vpop.f32.mrb[0].mxu0
  %v875 = vadd.f32 0.0, %v874
  %v876 = vpop.f32.mrb[0].mxu0
  %v877 = vpop.f32.mrb[0].mxu0
  %878 = vdwg.mxu0
  %879 = vmatprep.subr.bf16.mxu0 %v777
  %880 = vmatpush1.bf16.msra.mxu0 %v776
  %881 = vmatprep.subr.bf16.mxu0 %v781
  %882 = vmatpush1.bf16.msra.mxu0 %v780
  %883 = vmatprep.subr.bf16.mxu0 %v785
  %884 = vmatpush1.bf16.msra.mxu0 %v784
  %885 = vmatprep.subr.bf16.mxu0 %v789
  %886 = vmatpush1.bf16.msra.mxu0 %v788
  %887 = vmatprep.subr.bf16.mxu0 %v793
  %888 = vmatpush1.bf16.msra.mxu0 %v792
  %889 = vmatprep.subr.bf16.mxu0 %v797
  %890 = vmatpush1.bf16.msra.mxu0 %v796
  %891 = vmatprep.subr.bf16.mxu0 %v801
  %892 = vmatpush1.bf16.msra.mxu0 %v800
  %893 = vmatprep.subr.bf16.mxu0 %v805
  %894 = vmatpush1.bf16.msra.mxu0 %v804
  %895 = vmatprep.subr.bf16.mxu0 0
  %896 = vmatpush1.bf16.msra.mxu0 0
  %897 = vmatprep.subr.bf16.mxu0 0
  %898 = vmatpush1.bf16.msra.mxu0 0
  %899 = vmatprep.subr.bf16.mxu0 0
  %900 = vmatpush1.bf16.msra.mxu0 0
  %901 = vmatprep.subr.bf16.mxu0 0
  %902 = vmatpush1.bf16.msra.mxu0 0
  %903 = vmatprep.subr.bf16.mxu0 0
  %904 = vmatpush1.bf16.msra.mxu0 0
  %905 = vmatprep.subr.bf16.mxu0 0
  %906 = vmatpush1.bf16.msra.mxu0 0
  %907 = vmatprep.subr.bf16.mxu0 0
  %908 = vmatpush1.bf16.msra.mxu0 0
  %909 = vmatprep.subr.bf16.mxu0 0
  %910 = vmatpush1.bf16.msra.mxu0 0
  %911 = vmatprep.mubr.bf16.mxu0 0
  %912 = vmatmul.mubr.bf16.gmra.mrb[0].mxu0 %v677
  %v913 = vpop.f32.mrb[0].mxu0
  %v914 = vadd.f32 0.0, %v913
  %v915 = vpop.f32.mrb[0].mxu0
  %v916 = vadd.f32 0.0, %v915
  %v917 = vpop.f32.mrb[0].mxu0
  %v918 = vpop.f32.mrb[0].mxu0
  %919 = vdwg.mxu0
  %v920 = vadd.f32 %v639, %v873
  %v921 = vadd.f32 %v640, %v875
  %v922 = vadd.f32 %v641, %v914
  %v923 = vadd.f32 %v642, %v916
  %v924 = vxor.u32 %v920, 2147483648
  %v925 = vxor.u32 %v921, 2147483648
  %v926 = vxor.u32 %v922, 2147483648
  %v927 = vmul.f32 %v924, 1.442695
  %v928 = vpow.pop %v927
  %v929 = vmul.f32 %v925, 1.442695
  %v930 = vpow.pop %v929
  %v931 = vmul.f32 %v926, 1.442695
  %v932 = vpow.pop %v931
  %v933 = vadd.f32 %v928, 1.0
  %v934 = vadd.f32 %v930, 1.0
  %v935 = vadd.f32 %v932, 1.0
  %v936 = vrcp.pop %v933
  %v937 = vmul.f32 1.0, %v936
  %v938 = vrcp.pop %v934
  %v939 = vmul.f32 1.0, %v938
  %v940 = vrcp.pop %v935
  %v941 = vmul.f32 1.0, %v940
  %v942 = vtanh.pop %v923
  %v943 = vmul.f32 %v939, %v644
  %v944 = vmul.f32 %v937, %v942
  %v945 = vadd.f32 %v943, %v944
  %v946 = vtanh.pop %v945
  %v947 = vmul.f32 %v941, %v946
  %v948 = vld [vmem:[#allocation5] sm:$0xff]
  %v949 = vld [vmem:[#allocation5 + $0x8] sm:$0xff]
  %v950 = vld [vmem:[#allocation5 + $0x10] sm:$0xff]
  %v951 = vld [vmem:[#allocation5 + $0x18] sm:$0xff]
  %v952 = vld [vmem:[#allocation6] sm:$0xff]
  %v953 = vld [vmem:[#allocation7] sm:$0xff]
  %v954 = vld [vmem:[%s5] sm:$0xff]
  %v955 = vld [vmem:[%s5 + $0x8] sm:$0xff]
  %v956 = vld [vmem:[%s5 + $0x10] sm:$0xff]
  %v957 = vld [vmem:[%s5 + $0x18] sm:$0xff]
  %v958 = vld [vmem:[%s5 + $0x20] sm:$0xff]
  %v959 = vld [vmem:[%s5 + $0x28] sm:$0xff]
  %v960 = vld [vmem:[%s5 + $0x30] sm:$0xff]
  %v961 = vld [vmem:[%s5 + $0x38] sm:$0xff]
  %v962 = vld [vmem:[%s5 + $0x40] sm:$0xff]
  %v963 = vld [vmem:[%s5 + $0x48] sm:$0xff]
  %v964 = vld [vmem:[%s5 + $0x50] sm:$0xff]
  %v965 = vld [vmem:[%s5 + $0x58] sm:$0xff]
  %v966 = vld [vmem:[%s5 + $0x60] sm:$0xff]
  %v967 = vld [vmem:[%s5 + $0x68] sm:$0xff]
  %v968 = vld [vmem:[%s5 + $0x70] sm:$0xff]
  %v969 = vld [vmem:[%s5 + $0x78] sm:$0xff]
  %v970 = vld [vmem:[%s5 + $0x80] sm:$0xff]
  %v971 = vld [vmem:[%s5 + $0x88] sm:$0xff]
  %v972 = vld [vmem:[%s5 + $0x90] sm:$0xff]
  %v973 = vld [vmem:[%s5 + $0x98] sm:$0xff]
  %v974 = vld [vmem:[%s5 + $0xa0] sm:$0xff]
  %v975 = vld [vmem:[%s5 + $0xa8] sm:$0xff]
  %v976 = vld [vmem:[%s5 + $0xb0] sm:$0xff]
  %v977 = vld [vmem:[%s5 + $0xb8] sm:$0xff]
  %v978 = vld [vmem:[%s5 + $0xc0] sm:$0xff]
  %v979 = vld [vmem:[%s5 + $0xc8] sm:$0xff]
  %v980 = vld [vmem:[%s5 + $0xd0] sm:$0xff]
  %v981 = vld [vmem:[%s5 + $0xd8] sm:$0xff]
  %v982 = vld [vmem:[%s5 + $0xe0] sm:$0xff]
  %v983 = vld [vmem:[%s5 + $0xe8] sm:$0xff]
  %v984 = vld [vmem:[%s5 + $0xf0] sm:$0xff]
  %v985 = vld [vmem:[%s5 + $0xf8] sm:$0xff]
  %v986 = vpack.c.bf16 %v952, %v952
  %v1019 = vunpack.c.l.b16 %v954
  %v1020 = vunpack.c.h.b16 %v954
  %v1021 = vunpack.c.l.b16 %v955
  %v1022 = vunpack.c.h.b16 %v955
  %v1023 = vunpack.c.l.b16 %v956
  %v1024 = vunpack.c.h.b16 %v956
  %v1025 = vunpack.c.l.b16 %v957
  %v1026 = vunpack.c.h.b16 %v957
  %v1027 = vunpack.c.l.b16 %v958
  %v1028 = vunpack.c.h.b16 %v958
  %v1029 = vunpack.c.l.b16 %v959
  %v1030 = vunpack.c.h.b16 %v959
  %v1031 = vunpack.c.l.b16 %v960
  %v1032 = vunpack.c.h.b16 %v960
  %v1033 = vunpack.c.l.b16 %v961
  %v1034 = vunpack.c.h.b16 %v961
  %v1035 = vunpack.c.l.b16 %v962
  %v1036 = vunpack.c.h.b16 %v962
  %v1037 = vunpack.c.l.b16 %v963
  %v1038 = vunpack.c.h.b16 %v963
  %v1039 = vunpack.c.l.b16 %v964
  %v1040 = vunpack.c.h.b16 %v964
  %v1041 = vunpack.c.l.b16 %v965
  %v1042 = vunpack.c.h.b16 %v965
  %v1043 = vunpack.c.l.b16 %v966
  %v1044 = vunpack.c.h.b16 %v966
  %v1045 = vunpack.c.l.b16 %v967
  %v1046 = vunpack.c.h.b16 %v967
  %v1047 = vunpack.c.l.b16 %v968
  %v1048 = vunpack.c.h.b16 %v968
  %v1049 = vunpack.c.l.b16 %v969
  %v1050 = vunpack.c.h.b16 %v969
  %v1051 = vunpack.c.l.b16 %v970
  %v1052 = vunpack.c.h.b16 %v970
  %v1053 = vunpack.c.l.b16 %v971
  %v1054 = vunpack.c.h.b16 %v971
  %v1055 = vunpack.c.l.b16 %v972
  %v1056 = vunpack.c.h.b16 %v972
  %v1057 = vunpack.c.l.b16 %v973
  %v1058 = vunpack.c.h.b16 %v973
  %v1059 = vunpack.c.l.b16 %v974
  %v1060 = vunpack.c.h.b16 %v974
  %v1061 = vunpack.c.l.b16 %v975
  %v1062 = vunpack.c.h.b16 %v975
  %v1063 = vunpack.c.l.b16 %v976
  %v1064 = vunpack.c.h.b16 %v976
  %v1065 = vunpack.c.l.b16 %v977
  %v1066 = vunpack.c.h.b16 %v977
  %v1067 = vunpack.c.l.b16 %v978
  %v1068 = vunpack.c.h.b16 %v978
  %v1069 = vunpack.c.l.b16 %v979
  %v1070 = vunpack.c.h.b16 %v979
  %v1071 = vunpack.c.l.b16 %v980
  %v1072 = vunpack.c.h.b16 %v980
  %v1073 = vunpack.c.l.b16 %v981
  %v1074 = vunpack.c.h.b16 %v981
  %v1075 = vunpack.c.l.b16 %v982
  %v1076 = vunpack.c.h.b16 %v982
  %v1077 = vunpack.c.l.b16 %v983
  %v1078 = vunpack.c.h.b16 %v983
  %v1079 = vunpack.c.l.b16 %v984
  %v1080 = vunpack.c.h.b16 %v984
  %v1081 = vunpack.c.l.b16 %v985
  %v1082 = vunpack.c.h.b16 %v985
  %v1083 = vpack.c.b16 %v1023, %v1019
  %v1084 = vpack.c.b16 %v1024, %v1020
  %v1085 = vpack.c.b16 %v1025, %v1021
  %v1086 = vpack.c.b16 %v1026, %v1022
  %v1087 = vpack.c.b16 %v1031, %v1027
  %v1088 = vpack.c.b16 %v1032, %v1028
  %v1089 = vpack.c.b16 %v1033, %v1029
  %v1090 = vpack.c.b16 %v1034, %v1030
  %v1091 = vpack.c.b16 %v1039, %v1035
  %v1092 = vpack.c.b16 %v1040, %v1036
  %v1093 = vpack.c.b16 %v1041, %v1037
  %v1094 = vpack.c.b16 %v1042, %v1038
  %v1095 = vpack.c.b16 %v1047, %v1043
  %v1096 = vpack.c.b16 %v1048, %v1044
  %v1097 = vpack.c.b16 %v1049, %v1045
  %v1098 = vpack.c.b16 %v1050, %v1046
  %v1099 = vpack.c.b16 %v1055, %v1051
  %v1100 = vpack.c.b16 %v1056, %v1052
  %v1101 = vpack.c.b16 %v1057, %v1053
  %v1102 = vpack.c.b16 %v1058, %v1054
  %v1103 = vpack.c.b16 %v1063, %v1059
  %v1104 = vpack.c.b16 %v1064, %v1060
  %v1105 = vpack.c.b16 %v1065, %v1061
  %v1106 = vpack.c.b16 %v1066, %v1062
  %v1107 = vpack.c.b16 %v1071, %v1067
  %v1108 = vpack.c.b16 %v1072, %v1068
  %v1109 = vpack.c.b16 %v1073, %v1069
  %v1110 = vpack.c.b16 %v1074, %v1070
  %v1111 = vpack.c.b16 %v1079, %v1075
  %v1112 = vpack.c.b16 %v1080, %v1076
  %v1113 = vpack.c.b16 %v1081, %v1077
  %v1114 = vpack.c.b16 %v1082, %v1078
  %1147 = vmatprep.subr.bf16.mxu0 %v1084
  %1148 = vmatpush1.bf16.msra.mxu0 %v1083
  %1149 = vmatprep.subr.bf16.mxu0 %v1088
  %1150 = vmatpush1.bf16.msra.mxu0 %v1087
  %1151 = vmatprep.subr.bf16.mxu0 %v1092
  %1152 = vmatpush1.bf16.msra.mxu0 %v1091
  %1153 = vmatprep.subr.bf16.mxu0 %v1096
  %1154 = vmatpush1.bf16.msra.mxu0 %v1095
  %1155 = vmatprep.subr.bf16.mxu0 %v1100
  %1156 = vmatpush1.bf16.msra.mxu0 %v1099
  %1157 = vmatprep.subr.bf16.mxu0 %v1104
  %1158 = vmatpush1.bf16.msra.mxu0 %v1103
  %1159 = vmatprep.subr.bf16.mxu0 %v1108
  %1160 = vmatpush1.bf16.msra.mxu0 %v1107
  %1161 = vmatprep.subr.bf16.mxu0 %v1112
  %1162 = vmatpush1.bf16.msra.mxu0 %v1111
  %1163 = vmatprep.subr.bf16.mxu0 0
  %1164 = vmatpush1.bf16.msra.mxu0 0
  %1165 = vmatprep.subr.bf16.mxu0 0
  %1166 = vmatpush1.bf16.msra.mxu0 0
  %1167 = vmatprep.subr.bf16.mxu0 0
  %1168 = vmatpush1.bf16.msra.mxu0 0
  %1169 = vmatprep.subr.bf16.mxu0 0
  %1170 = vmatpush1.bf16.msra.mxu0 0
  %1171 = vmatprep.subr.bf16.mxu0 0
  %1172 = vmatpush1.bf16.msra.mxu0 0
  %1173 = vmatprep.subr.bf16.mxu0 0
  %1174 = vmatpush1.bf16.msra.mxu0 0
  %1175 = vmatprep.subr.bf16.mxu0 0
  %1176 = vmatpush1.bf16.msra.mxu0 0
  %1177 = vmatprep.subr.bf16.mxu0 0
  %1178 = vmatpush1.bf16.msra.mxu0 0
  %1179 = vmatprep.mubr.bf16.mxu0 0
  %1180 = vmatmul.mubr.bf16.gmra.mrb[0].mxu0 %v986
  %v1181 = vpop.f32.mrb[0].mxu0
  %v1182 = vadd.f32 0.0, %v1181
  %v1183 = vpop.f32.mrb[0].mxu0
  %v1184 = vadd.f32 0.0, %v1183
  %v1185 = vpop.f32.mrb[0].mxu0
  %v1186 = vpop.f32.mrb[0].mxu0
  %1187 = vdwg.mxu0
  %1188 = vmatprep.subr.bf16.mxu0 %v1086
  %1189 = vmatpush1.bf16.msra.mxu0 %v1085
  %1190 = vmatprep.subr.bf16.mxu0 %v1090
  %1191 = vmatpush1.bf16.msra.mxu0 %v1089
  %1192 = vmatprep.subr.bf16.mxu0 %v1094
  %1193 = vmatpush1.bf16.msra.mxu0 %v1093
  %1194 = vmatprep.subr.bf16.mxu0 %v1098
  %1195 = vmatpush1.bf16.msra.mxu0 %v1097
  %1196 = vmatprep.subr.bf16.mxu0 %v1102
  %1197 = vmatpush1.bf16.msra.mxu0 %v1101
  %1198 = vmatprep.subr.bf16.mxu0 %v1106
  %1199 = vmatpush1.bf16.msra.mxu0 %v1105
  %1200 = vmatprep.subr.bf16.mxu0 %v1110
  %1201 = vmatpush1.bf16.msra.mxu0 %v1109
  %1202 = vmatprep.subr.bf16.mxu0 %v1114
  %1203 = vmatpush1.bf16.msra.mxu0 %v1113
  %1204 = vmatprep.subr.bf16.mxu0 0
  %1205 = vmatpush1.bf16.msra.mxu0 0
  %1206 = vmatprep.subr.bf16.mxu0 0
  %1207 = vmatpush1.bf16.msra.mxu0 0
  %1208 = vmatprep.subr.bf16.mxu0 0
  %1209 = vmatpush1.bf16.msra.mxu0 0
  %1210 = vmatprep.subr.bf16.mxu0 0
  %1211 = vmatpush1.bf16.msra.mxu0 0
  %1212 = vmatprep.subr.bf16.mxu0 0
  %1213 = vmatpush1.bf16.msra.mxu0 0
  %1214 = vmatprep.subr.bf16.mxu0 0
  %1215 = vmatpush1.bf16.msra.mxu0 0
  %1216 = vmatprep.subr.bf16.mxu0 0
  %1217 = vmatpush1.bf16.msra.mxu0 0
  %1218 = vmatprep.subr.bf16.mxu0 0
  %1219 = vmatpush1.bf16.msra.mxu0 0
  %1220 = vmatprep.mubr.bf16.mxu0 0
  %1221 = vmatmul.mubr.bf16.gmra.mrb[0].mxu0 %v986
  %v1222 = vpop.f32.mrb[0].mxu0
  %v1223 = vadd.f32 0.0, %v1222
  %v1224 = vpop.f32.mrb[0].mxu0
  %v1225 = vadd.f32 0.0, %v1224
  %v1226 = vpop.f32.mrb[0].mxu0
  %v1227 = vpop.f32.mrb[0].mxu0
  %1228 = vdwg.mxu0
  %v1229 = vadd.f32 %v948, %v1182
  %v1230 = vadd.f32 %v949, %v1184
  %v1231 = vadd.f32 %v950, %v1223
  %v1232 = vadd.f32 %v951, %v1225
  %v1233 = vxor.u32 %v1229, 2147483648
  %v1234 = vxor.u32 %v1230, 2147483648
  %v1235 = vxor.u32 %v1231, 2147483648
  %v1236 = vmul.f32 %v1233, 1.442695
  %v1237 = vpow.pop %v1236
  %v1238 = vmul.f32 %v1234, 1.442695
  %v1239 = vpow.pop %v1238
  %v1240 = vmul.f32 %v1235, 1.442695
  %v1241 = vpow.pop %v1240
  %v1242 = vadd.f32 %v1237, 1.0
  %v1243 = vadd.f32 %v1239, 1.0
  %v1244 = vadd.f32 %v1241, 1.0
  %v1245 = vrcp.pop %v1242
  %v1246 = vmul.f32 1.0, %v1245
  %v1247 = vrcp.pop %v1243
  %v1248 = vmul.f32 1.0, %v1247
  %v1249 = vrcp.pop %v1244
  %v1250 = vmul.f32 1.0, %v1249
  %v1251 = vtanh.pop %v1232
  %v1252 = vmul.f32 %v1248, %v953
  %v1253 = vmul.f32 %v1246, %v1251
  %v1254 = vadd.f32 %v1252, %v1253
  %v1255 = vtanh.pop %v1254
  %v1256 = vmul.f32 %v1250, %v1255
  %1257 = vst [vmem:[#allocation3] sm:$0xff] %v947
  %1258 = vst [vmem:[#allocation4] sm:$0xff] %v945
  %1259 = vst [vmem:[#allocation6] sm:$0xff] %v1256
  %1260 = vst [vmem:[#allocation7] sm:$0xff] %v1254
  %1261 = vst [vmem:[%s7] sm:$0xff] %v947
  %1262 = vst [vmem:[%s8] sm:$0xff] %v1256
  %v1263 = vld [vmem:[#allocation2] sm:$0xff]
  %v1264 = vld [vmem:[#allocation2 + $0x8] sm:$0xff]
  %v1265 = vld [vmem:[#allocation2 + $0x10] sm:$0xff]
  %v1266 = vld [vmem:[#allocation2 + $0x18] sm:$0xff]
  %v1267 = vld [vmem:[#allocation3] sm:$0xff]
  %v1268 = vld [vmem:[#allocation4] sm:$0xff]
  %v1269 = vld [vmem:[%s2] sm:$0xff]
  %v1270 = vld [vmem:[%s2 + $0x8] sm:$0xff]
  %v1271 = vld [vmem:[%s2 + $0x10] sm:$0xff]
  %v1272 = vld [vmem:[%s2 + $0x18] sm:$0xff]
  %v1273 = vld [vmem:[%s2 + $0x20] sm:$0xff]
  %v1274 = vld [vmem:[%s2 + $0x28] sm:$0xff]
  %v1275 = vld [vmem:[%s2 + $0x30] sm:$0xff]
  %v1276 = vld [vmem:[%s2 + $0x38] sm:$0xff]
  %v1277 = vld [vmem:[%s2 + $0x40] sm:$0xff]
  %v1278 = vld [vmem:[%s2 + $0x48] sm:$0xff]
  %v1279 = vld [vmem:[%s2 + $0x50] sm:$0xff]
  %v1280 = vld [vmem:[%s2 + $0x58] sm:$0xff]
  %v1281 = vld [vmem:[%s2 + $0x60] sm:$0xff]
  %v1282 = vld [vmem:[%s2 + $0x68] sm:$0xff]
  %v1283 = vld [vmem:[%s2 + $0x70] sm:$0xff]
  %v1284 = vld [vmem:[%s2 + $0x78] sm:$0xff]
  %v1285 = vld [vmem:[%s2 + $0x80] sm:$0xff]
  %v1286 = vld [vmem:[%s2 + $0x88] sm:$0xff]
  %v1287 = vld [vmem:[%s2 + $0x90] sm:$0xff]
  %v1288 = vld [vmem:[%s2 + $0x98] sm:$0xff]
  %v1289 = vld [vmem:[%s2 + $0xa0] sm:$0xff]
  %v1290 = vld [vmem:[%s2 + $0xa8] sm:$0xff]
  %v1291 = vld [vmem:[%s2 + $0xb0] sm:$0xff]
  %v1292 = vld [vmem:[%s2 + $0xb8] sm:$0xff]
  %v1293 = vld [vmem:[%s2 + $0xc0] sm:$0xff]
  %v1294 = vld [vmem:[%s2 + $0xc8] sm:$0xff]
  %v1295 = vld [vmem:[%s2 + $0xd0] sm:$0xff]
  %v1296 = vld [vmem:[%s2 + $0xd8] sm:$0xff]
  %v1297 = vld [vmem:[%s2 + $0xe0] sm:$0xff]
  %v1298 = vld [vmem:[%s2 + $0xe8] sm:$0xff]
  %v1299 = vld [vmem:[%s2 + $0xf0] sm:$0xff]
  %v1300 = vld [vmem:[%s2 + $0xf8] sm:$0xff]
  %v1301 = vpack.c.bf16 %v1267, %v1267
  %v1334 = vunpack.c.l.b16 %v1269
  %v1335 = vunpack.c.h.b16 %v1269
  %v1336 = vunpack.c.l.b16 %v1270
  %v1337 = vunpack.c.h.b16 %v1270
  %v1338 = vunpack.c.l.b16 %v1271
  %v1339 = vunpack.c.h.b16 %v1271
  %v1340 = vunpack.c.l.b16 %v1272
  %v1341 = vunpack.c.h.b16 %v1272
  %v1342 = vunpack.c.l.b16 %v1273
  %v1343 = vunpack.c.h.b16 %v1273
  %v1344 = vunpack.c.l.b16 %v1274
  %v1345 = vunpack.c.h.b16 %v1274
  %v1346 = vunpack.c.l.b16 %v1275
  %v1347 = vunpack.c.h.b16 %v1275
  %v1348 = vunpack.c.l.b16 %v1276
  %v1349 = vunpack.c.h.b16 %v1276
  %v1350 = vunpack.c.l.b16 %v1277
  %v1351 = vunpack.c.h.b16 %v1277
  %v1352 = vunpack.c.l.b16 %v1278
  %v1353 = vunpack.c.h.b16 %v1278
  %v1354 = vunpack.c.l.b16 %v1279
  %v1355 = vunpack.c.h.b16 %v1279
  %v1356 = vunpack.c.l.b16 %v1280
  %v1357 = vunpack.c.h.b16 %v1280
  %v1358 = vunpack.c.l.b16 %v1281
  %v1359 = vunpack.c.h.b16 %v1281
  %v1360 = vunpack.c.l.b16 %v1282
  %v1361 = vunpack.c.h.b16 %v1282
  %v1362 = vunpack.c.l.b16 %v1283
  %v1363 = vunpack.c.h.b16 %v1283
  %v1364 = vunpack.c.l.b16 %v1284
  %v1365 = vunpack.c.h.b16 %v1284
  %v1366 = vunpack.c.l.b16 %v1285
  %v1367 = vunpack.c.h.b16 %v1285
  %v1368 = vunpack.c.l.b16 %v1286
  %v1369 = vunpack.c.h.b16 %v1286
  %v1370 = vunpack.c.l.b16 %v1287
  %v1371 = vunpack.c.h.b16 %v1287
  %v1372 = vunpack.c.l.b16 %v1288
  %v1373 = vunpack.c.h.b16 %v1288
  %v1374 = vunpack.c.l.b16 %v1289
  %v1375 = vunpack.c.h.b16 %v1289
  %v1376 = vunpack.c.l.b16 %v1290
  %v1377 = vunpack.c.h.b16 %v1290
  %v1378 = vunpack.c.l.b16 %v1291
  %v1379 = vunpack.c.h.b16 %v1291
  %v1380 = vunpack.c.l.b16 %v1292
  %v1381 = vunpack.c.h.b16 %v1292
  %v1382 = vunpack.c.l.b16 %v1293
  %v1383 = vunpack.c.h.b16 %v1293
  %v1384 = vunpack.c.l.b16 %v1294
  %v1385 = vunpack.c.h.b16 %v1294
  %v1386 = vunpack.c.l.b16 %v1295
  %v1387 = vunpack.c.h.b16 %v1295
  %v1388 = vunpack.c.l.b16 %v1296
  %v1389 = vunpack.c.h.b16 %v1296
  %v1390 = vunpack.c.l.b16 %v1297
  %v1391 = vunpack.c.h.b16 %v1297
  %v1392 = vunpack.c.l.b16 %v1298
  %v1393 = vunpack.c.h.b16 %v1298
  %v1394 = vunpack.c.l.b16 %v1299
  %v1395 = vunpack.c.h.b16 %v1299
  %v1396 = vunpack.c.l.b16 %v1300
  %v1397 = vunpack.c.h.b16 %v1300
  %v1398 = vpack.c.b16 %v1338, %v1334
  %v1399 = vpack.c.b16 %v1339, %v1335
  %v1400 = vpack.c.b16 %v1340, %v1336
  %v1401 = vpack.c.b16 %v1341, %v1337
  %v1402 = vpack.c.b16 %v1346, %v1342
  %v1403 = vpack.c.b16 %v1347, %v1343
  %v1404 = vpack.c.b16 %v1348, %v1344
  %v1405 = vpack.c.b16 %v1349, %v1345
  %v1406 = vpack.c.b16 %v1354, %v1350
  %v1407 = vpack.c.b16 %v1355, %v1351
  %v1408 = vpack.c.b16 %v1356, %v1352
  %v1409 = vpack.c.b16 %v1357, %v1353
  %v1410 = vpack.c.b16 %v1362, %v1358
  %v1411 = vpack.c.b16 %v1363, %v1359
  %v1412 = vpack.c.b16 %v1364, %v1360
  %v1413 = vpack.c.b16 %v1365, %v1361
  %v1414 = vpack.c.b16 %v1370, %v1366
  %v1415 = vpack.c.b16 %v1371, %v1367
  %v1416 = vpack.c.b16 %v1372, %v1368
  %v1417 = vpack.c.b16 %v1373, %v1369
  %v1418 = vpack.c.b16 %v1378, %v1374
  %v1419 = vpack.c.b16 %v1379, %v1375
  %v1420 = vpack.c.b16 %v1380, %v1376
  %v1421 = vpack.c.b16 %v1381, %v1377
  %v1422 = vpack.c.b16 %v1386, %v1382
  %v1423 = vpack.c.b16 %v1387, %v1383
  %v1424 = vpack.c.b16 %v1388, %v1384
  %v1425 = vpack.c.b16 %v1389, %v1385
  %v1426 = vpack.c.b16 %v1394, %v1390
  %v1427 = vpack.c.b16 %v1395, %v1391
  %v1428 = vpack.c.b16 %v1396, %v1392
  %v1429 = vpack.c.b16 %v1397, %v1393
  %1462 = vmatprep.subr.bf16.mxu0 %v1399
  %1463 = vmatpush1.bf16.msra.mxu0 %v1398
  %1464 = vmatprep.subr.bf16.mxu0 %v1403
  %1465 = vmatpush1.bf16.msra.mxu0 %v1402
  %1466 = vmatprep.subr.bf16.mxu0 %v1407
  %1467 = vmatpush1.bf16.msra.mxu0 %v1406
  %1468 = vmatprep.subr.bf16.mxu0 %v1411
  %1469 = vmatpush1.bf16.msra.mxu0 %v1410
  %1470 = vmatprep.subr.bf16.mxu0 %v1415
  %1471 = vmatpush1.bf16.msra.mxu0 %v1414
  %1472 = vmatprep.subr.bf16.mxu0 %v1419
  %1473 = vmatpush1.bf16.msra.mxu0 %v1418
  %1474 = vmatprep.subr.bf16.mxu0 %v1423
  %1475 = vmatpush1.bf16.msra.mxu0 %v1422
  %1476 = vmatprep.subr.bf16.mxu0 %v1427
  %1477 = vmatpush1.bf16.msra.mxu0 %v1426
  %1478 = vmatprep.subr.bf16.mxu0 0
  %1479 = vmatpush1.bf16.msra.mxu0 0
  %1480 = vmatprep.subr.bf16.mxu0 0
  %1481 = vmatpush1.bf16.msra.mxu0 0
  %1482 = vmatprep.subr.bf16.mxu0 0
  %1483 = vmatpush1.bf16.msra.mxu0 0
  %1484 = vmatprep.subr.bf16.mxu0 0
  %1485 = vmatpush1.bf16.msra.mxu0 0
  %1486 = vmatprep.subr.bf16.mxu0 0
  %1487 = vmatpush1.bf16.msra.mxu0 0
  %1488 = vmatprep.subr.bf16.mxu0 0
  %1489 = vmatpush1.bf16.msra.mxu0 0
  %1490 = vmatprep.subr.bf16.mxu0 0
  %1491 = vmatpush1.bf16.msra.mxu0 0
  %1492 = vmatprep.subr.bf16.mxu0 0
  %1493 = vmatpush1.bf16.msra.mxu0 0
  %1494 = vmatprep.mubr.bf16.mxu0 0
  %1495 = vmatmul.mubr.bf16.gmra.mrb[0].mxu0 %v1301
  %v1496 = vpop.f32.mrb[0].mxu0
  %v1497 = vadd.f32 0.0, %v1496
  %v1498 = vpop.f32.mrb[0].mxu0
  %v1499 = vadd.f32 0.0, %v1498
  %v1500 = vpop.f32.mrb[0].mxu0
  %v1501 = vpop.f32.mrb[0].mxu0
  %1502 = vdwg.mxu0
  %1503 = vmatprep.subr.bf16.mxu0 %v1401
  %1504 = vmatpush1.bf16.msra.mxu0 %v1400
  %1505 = vmatprep.subr.bf16.mxu0 %v1405
  %1506 = vmatpush1.bf16.msra.mxu0 %v1404
  %1507 = vmatprep.subr.bf16.mxu0 %v1409
  %1508 = vmatpush1.bf16.msra.mxu0 %v1408
  %1509 = vmatprep.subr.bf16.mxu0 %v1413
  %1510 = vmatpush1.bf16.msra.mxu0 %v1412
  %1511 = vmatprep.subr.bf16.mxu0 %v1417
  %1512 = vmatpush1.bf16.msra.mxu0 %v1416
  %1513 = vmatprep.subr.bf16.mxu0 %v1421
  %1514 = vmatpush1.bf16.msra.mxu0 %v1420
  %1515 = vmatprep.subr.bf16.mxu0 %v1425
  %1516 = vmatpush1.bf16.msra.mxu0 %v1424
  %1517 = vmatprep.subr.bf16.mxu0 %v1429
  %1518 = vmatpush1.bf16.msra.mxu0 %v1428
  %1519 = vmatprep.subr.bf16.mxu0 0
  %1520 = vmatpush1.bf16.msra.mxu0 0
  %1521 = vmatprep.subr.bf16.mxu0 0
  %1522 = vmatpush1.bf16.msra.mxu0 0
  %1523 = vmatprep.subr.bf16.mxu0 0
  %1524 = vmatpush1.bf16.msra.mxu0 0
  %1525 = vmatprep.subr.bf16.mxu0 0
  %1526 = vmatpush1.bf16.msra.mxu0 0
  %1527 = vmatprep.subr.bf16.mxu0 0
  %1528 = vmatpush1.bf16.msra.mxu0 0
  %1529 = vmatprep.subr.bf16.mxu0 0
  %1530 = vmatpush1.bf16.msra.mxu0 0
  %1531 = vmatprep.subr.bf16.mxu0 0
  %1532 = vmatpush1.bf16.msra.mxu0 0
  %1533 = vmatprep.subr.bf16.mxu0 0
  %1534 = vmatpush1.bf16.msra.mxu0 0
  %1535 = vmatprep.mubr.bf16.mxu0 0
  %1536 = vmatmul.mubr.bf16.gmra.mrb[0].mxu0 %v1301
  %v1537 = vpop.f32.mrb[0].mxu0
  %v1538 = vadd.f32 0.0, %v1537
  %v1539 = vpop.f32.mrb[0].mxu0
  %v1540 = vadd.f32 0.0, %v1539
  %v1541 = vpop.f32.mrb[0].mxu0
  %v1542 = vpop.f32.mrb[0].mxu0
  %1543 = vdwg.mxu0
  %v1544 = vadd.f32 %v1263, %v1497
  %v1545 = vadd.f32 %v1264, %v1499
  %v1546 = vadd.f32 %v1265, %v1538
  %v1547 = vadd.f32 %v1266, %v1540
  %v1548 = vxor.u32 %v1544, 2147483648
  %v1549 = vxor.u32 %v1545, 2147483648
  %v1550 = vxor.u32 %v1546, 2147483648
  %v1551 = vmul.f32 %v1548, 1.442695
  %v1552 = vpow.pop %v1551
  %v1553 = vmul.f32 %v1549, 1.442695
  %v1554 = vpow.pop %v1553
  %v1555 = vmul.f32 %v1550, 1.442695
  %v1556 = vpow.pop %v1555
  %v1557 = vadd.f32 %v1552, 1.0
  %v1558 = vadd.f32 %v1554, 1.0
  %v1559 = vadd.f32 %v1556, 1.0
  %v1560 = vrcp.pop %v1557
  %v1561 = vmul.f32 1.0, %v1560
  %v1562 = vrcp.pop %v1558
  %v1563 = vmul.f32 1.0, %v1562
  %v1564 = vrcp.pop %v1559
  %v1565 = vmul.f32 1.0, %v1564
  %v1566 = vtanh.pop %v1547
  %v1567 = vmul.f32 %v1563, %v1268
  %v1568 = vmul.f32 %v1561, %v1566
  %v1569 = vadd.f32 %v1567, %v1568
  %v1570 = vtanh.pop %v1569
  %v1571 = vmul.f32 %v1565, %v1570
  %v1572 = vld [vmem:[#allocation5] sm:$0xff]
  %v1573 = vld [vmem:[#allocation5 + $0x8] sm:$0xff]
  %v1574 = vld [vmem:[#allocation5 + $0x10] sm:$0xff]
  %v1575 = vld [vmem:[#allocation5 + $0x18] sm:$0xff]
  %v1576 = vld [vmem:[#allocation6] sm:$0xff]
  %v1577 = vld [vmem:[#allocation7] sm:$0xff]
  %v1578 = vld [vmem:[%s5] sm:$0xff]
  %v1579 = vld [vmem:[%s5 + $0x8] sm:$0xff]
  %v1580 = vld [vmem:[%s5 + $0x10] sm:$0xff]
  %v1581 = vld [vmem:[%s5 + $0x18] sm:$0xff]
  %v1582 = vld [vmem:[%s5 + $0x20] sm:$0xff]
  %v1583 = vld [vmem:[%s5 + $0x28] sm:$0xff]
  %v1584 = vld [vmem:[%s5 + $0x30] sm:$0xff]
  %v1585 = vld [vmem:[%s5 + $0x38] sm:$0xff]
  %v1586 = vld [vmem:[%s5 + $0x40] sm:$0xff]
  %v1587 = vld [vmem:[%s5 + $0x48] sm:$0xff]
  %v1588 = vld [vmem:[%s5 + $0x50] sm:$0xff]
  %v1589 = vld [vmem:[%s5 + $0x58] sm:$0xff]
  %v1590 = vld [vmem:[%s5 + $0x60] sm:$0xff]
  %v1591 = vld [vmem:[%s5 + $0x68] sm:$0xff]
  %v1592 = vld [vmem:[%s5 + $0x70] sm:$0xff]
  %v1593 = vld [vmem:[%s5 + $0x78] sm:$0xff]
  %v1594 = vld [vmem:[%s5 + $0x80] sm:$0xff]
  %v1595 = vld [vmem:[%s5 + $0x88] sm:$0xff]
  %v1596 = vld [vmem:[%s5 + $0x90] sm:$0xff]
  %v1597 = vld [vmem:[%s5 + $0x98] sm:$0xff]
  %v1598 = vld [vmem:[%s5 + $0xa0] sm:$0xff]
  %v1599 = vld [vmem:[%s5 + $0xa8] sm:$0xff]
  %v1600 = vld [vmem:[%s5 + $0xb0] sm:$0xff]
  %v1601 = vld [vmem:[%s5 + $0xb8] sm:$0xff]
  %v1602 = vld [vmem:[%s5 + $0xc0] sm:$0xff]
  %v1603 = vld [vmem:[%s5 + $0xc8] sm:$0xff]
  %v1604 = vld [vmem:[%s5 + $0xd0] sm:$0xff]
  %v1605 = vld [vmem:[%s5 + $0xd8] sm:$0xff]
  %v1606 = vld [vmem:[%s5 + $0xe0] sm:$0xff]
  %v1607 = vld [vmem:[%s5 + $0xe8] sm:$0xff]
  %v1608 = vld [vmem:[%s5 + $0xf0] sm:$0xff]
  %v1609 = vld [vmem:[%s5 + $0xf8] sm:$0xff]
  %v1610 = vpack.c.bf16 %v1576, %v1576
  %v1643 = vunpack.c.l.b16 %v1578
  %v1644 = vunpack.c.h.b16 %v1578
  %v1645 = vunpack.c.l.b16 %v1579
  %v1646 = vunpack.c.h.b16 %v1579
  %v1647 = vunpack.c.l.b16 %v1580
  %v1648 = vunpack.c.h.b16 %v1580
  %v1649 = vunpack.c.l.b16 %v1581
  %v1650 = vunpack.c.h.b16 %v1581
  %v1651 = vunpack.c.l.b16 %v1582
  %v1652 = vunpack.c.h.b16 %v1582
  %v1653 = vunpack.c.l.b16 %v1583
  %v1654 = vunpack.c.h.b16 %v1583
  %v1655 = vunpack.c.l.b16 %v1584
  %v1656 = vunpack.c.h.b16 %v1584
  %v1657 = vunpack.c.l.b16 %v1585
  %v1658 = vunpack.c.h.b16 %v1585
  %v1659 = vunpack.c.l.b16 %v1586
  %v1660 = vunpack.c.h.b16 %v1586
  %v1661 = vunpack.c.l.b16 %v1587
  %v1662 = vunpack.c.h.b16 %v1587
  %v1663 = vunpack.c.l.b16 %v1588
  %v1664 = vunpack.c.h.b16 %v1588
  %v1665 = vunpack.c.l.b16 %v1589
  %v1666 = vunpack.c.h.b16 %v1589
  %v1667 = vunpack.c.l.b16 %v1590
  %v1668 = vunpack.c.h.b16 %v1590
  %v1669 = vunpack.c.l.b16 %v1591
  %v1670 = vunpack.c.h.b16 %v1591
  %v1671 = vunpack.c.l.b16 %v1592
  %v1672 = vunpack.c.h.b16 %v1592
  %v1673 = vunpack.c.l.b16 %v1593
  %v1674 = vunpack.c.h.b16 %v1593
  %v1675 = vunpack.c.l.b16 %v1594
  %v1676 = vunpack.c.h.b16 %v1594
  %v1677 = vunpack.c.l.b16 %v1595
  %v1678 = vunpack.c.h.b16 %v1595
  %v1679 = vunpack.c.l.b16 %v1596
  %v1680 = vunpack.c.h.b16 %v1596
  %v1681 = vunpack.c.l.b16 %v1597
  %v1682 = vunpack.c.h.b16 %v1597
  %v1683 = vunpack.c.l.b16 %v1598
  %v1684 = vunpack.c.h.b16 %v1598
  %v1685 = vunpack.c.l.b16 %v1599
  %v1686 = vunpack.c.h.b16 %v1599
  %v1687 = vunpack.c.l.b16 %v1600
  %v1688 = vunpack.c.h.b16 %v1600
  %v1689 = vunpack.c.l.b16 %v1601
  %v1690 = vunpack.c.h.b16 %v1601
  %v1691 = vunpack.c.l.b16 %v1602
  %v1692 = vunpack.c.h.b16 %v1602
  %v1693 = vunpack.c.l.b16 %v1603
  %v1694 = vunpack.c.h.b16 %v1603
  %v1695 = vunpack.c.l.b16 %v1604
  %v1696 = vunpack.c.h.b16 %v1604
  %v1697 = vunpack.c.l.b16 %v1605
  %v1698 = vunpack.c.h.b16 %v1605
  %v1699 = vunpack.c.l.b16 %v1606
  %v1700 = vunpack.c.h.b16 %v1606
  %v1701 = vunpack.c.l.b16 %v1607
  %v1702 = vunpack.c.h.b16 %v1607
  %v1703 = vunpack.c.l.b16 %v1608
  %v1704 = vunpack.c.h.b16 %v1608
  %v1705 = vunpack.c.l.b16 %v1609
  %v1706 = vunpack.c.h.b16 %v1609
  %v1707 = vpack.c.b16 %v1647, %v1643
  %v1708 = vpack.c.b16 %v1648, %v1644
  %v1709 = vpack.c.b16 %v1649, %v1645
  %v1710 = vpack.c.b16 %v1650, %v1646
  %v1711 = vpack.c.b16 %v1655, %v1651
  %v1712 = vpack.c.b16 %v1656, %v1652
  %v1713 = vpack.c.b16 %v1657, %v1653
  %v1714 = vpack.c.b16 %v1658, %v1654
  %v1715 = vpack.c.b16 %v1663, %v1659
  %v1716 = vpack.c.b16 %v1664, %v1660
  %v1717 = vpack.c.b16 %v1665, %v1661
  %v1718 = vpack.c.b16 %v1666, %v1662
  %v1719 = vpack.c.b16 %v1671, %v1667
  %v1720 = vpack.c.b16 %v1672, %v1668
  %v1721 = vpack.c.b16 %v1673, %v1669
  %v1722 = vpack.c.b16 %v1674, %v1670
  %v1723 = vpack.c.b16 %v1679, %v1675
  %v1724 = vpack.c.b16 %v1680, %v1676
  %v1725 = vpack.c.b16 %v1681, %v1677
  %v1726 = vpack.c.b16 %v1682, %v1678
  %v1727 = vpack.c.b16 %v1687, %v1683
  %v1728 = vpack.c.b16 %v1688, %v1684
  %v1729 = vpack.c.b16 %v1689, %v1685
  %v1730 = vpack.c.b16 %v1690, %v1686
  %v1731 = vpack.c.b16 %v1695, %v1691
  %v1732 = vpack.c.b16 %v1696, %v1692
  %v1733 = vpack.c.b16 %v1697, %v1693
  %v1734 = vpack.c.b16 %v1698, %v1694
  %v1735 = vpack.c.b16 %v1703, %v1699
  %v1736 = vpack.c.b16 %v1704, %v1700
  %v1737 = vpack.c.b16 %v1705, %v1701
  %v1738 = vpack.c.b16 %v1706, %v1702
  %1771 = vmatprep.subr.bf16.mxu0 %v1708
  %1772 = vmatpush1.bf16.msra.mxu0 %v1707
  %1773 = vmatprep.subr.bf16.mxu0 %v1712
  %1774 = vmatpush1.bf16.msra.mxu0 %v1711
  %1775 = vmatprep.subr.bf16.mxu0 %v1716
  %1776 = vmatpush1.bf16.msra.mxu0 %v1715
  %1777 = vmatprep.subr.bf16.mxu0 %v1720
  %1778 = vmatpush1.bf16.msra.mxu0 %v1719
  %1779 = vmatprep.subr.bf16.mxu0 %v1724
  %1780 = vmatpush1.bf16.msra.mxu0 %v1723
  %1781 = vmatprep.subr.bf16.mxu0 %v1728
  %1782 = vmatpush1.bf16.msra.mxu0 %v1727
  %1783 = vmatprep.subr.bf16.mxu0 %v1732
  %1784 = vmatpush1.bf16.msra.mxu0 %v1731
  %1785 = vmatprep.subr.bf16.mxu0 %v1736
  %1786 = vmatpush1.bf16.msra.mxu0 %v1735
  %1787 = vmatprep.subr.bf16.mxu0 0
  %1788 = vmatpush1.bf16.msra.mxu0 0
  %1789 = vmatprep.subr.bf16.mxu0 0
  %1790 = vmatpush1.bf16.msra.mxu0 0
  %1791 = vmatprep.subr.bf16.mxu0 0
  %1792 = vmatpush1.bf16.msra.mxu0 0
  %1793 = vmatprep.subr.bf16.mxu0 0
  %1794 = vmatpush1.bf16.msra.mxu0 0
  %1795 = vmatprep.subr.bf16.mxu0 0
  %1796 = vmatpush1.bf16.msra.mxu0 0
  %1797 = vmatprep.subr.bf16.mxu0 0
  %1798 = vmatpush1.bf16.msra.mxu0 0
  %1799 = vmatprep.subr.bf16.mxu0 0
  %1800 = vmatpush1.bf16.msra.mxu0 0
  %1801 = vmatprep.subr.bf16.mxu0 0
  %1802 = vmatpush1.bf16.msra.mxu0 0
  %1803 = vmatprep.mubr.bf16.mxu0 0
  %1804 = vmatmul.mubr.bf16.gmra.mrb[0].mxu0 %v1610
  %v1805 = vpop.f32.mrb[0].mxu0
  %v1806 = vadd.f32 0.0, %v1805
  %v1807 = vpop.f32.mrb[0].mxu0
  %v1808 = vadd.f32 0.0, %v1807
  %v1809 = vpop.f32.mrb[0].mxu0
  %v1810 = vpop.f32.mrb[0].mxu0
  %1811 = vdwg.mxu0
  %1812 = vmatprep.subr.bf16.mxu0 %v1710
  %1813 = vmatpush1.bf16.msra.mxu0 %v1709
  %1814 = vmatprep.subr.bf16.mxu0 %v1714
  %1815 = vmatpush1.bf16.msra.mxu0 %v1713
  %1816 = vmatprep.subr.bf16.mxu0 %v1718
  %1817 = vmatpush1.bf16.msra.mxu0 %v1717
  %1818 = vmatprep.subr.bf16.mxu0 %v1722
  %1819 = vmatpush1.bf16.msra.mxu0 %v1721
  %1820 = vmatprep.subr.bf16.mxu0 %v1726
  %1821 = vmatpush1.bf16.msra.mxu0 %v1725
  %1822 = vmatprep.subr.bf16.mxu0 %v1730
  %1823 = vmatpush1.bf16.msra.mxu0 %v1729
  %1824 = vmatprep.subr.bf16.mxu0 %v1734
  %1825 = vmatpush1.bf16.msra.mxu0 %v1733
  %1826 = vmatprep.subr.bf16.mxu0 %v1738
  %1827 = vmatpush1.bf16.msra.mxu0 %v1737
  %1828 = vmatprep.subr.bf16.mxu0 0
  %1829 = vmatpush1.bf16.msra.mxu0 0
  %1830 = vmatprep.subr.bf16.mxu0 0
  %1831 = vmatpush1.bf16.msra.mxu0 0
  %1832 = vmatprep.subr.bf16.mxu0 0
  %1833 = vmatpush1.bf16.msra.mxu0 0
  %1834 = vmatprep.subr.bf16.mxu0 0
  %1835 = vmatpush1.bf16.msra.mxu0 0
  %1836 = vmatprep.subr.bf16.mxu0 0
  %1837 = vmatpush1.bf16.msra.mxu0 0
  %1838 = vmatprep.subr.bf16.mxu0 0
  %1839 = vmatpush1.bf16.msra.mxu0 0
  %1840 = vmatprep.subr.bf16.mxu0 0
  %1841 = vmatpush1.bf16.msra.mxu0 0
  %1842 = vmatprep.subr.bf16.mxu0 0
  %1843 = vmatpush1.bf16.msra.mxu0 0
  %1844 = vmatprep.mubr.bf16.mxu0 0
  %1845 = vmatmul.mubr.bf16.gmra.mrb[0].mxu0 %v1610
  %v1846 = vpop.f32.mrb[0].mxu0
  %v1847 = vadd.f32 0.0, %v1846
  %v1848 = vpop.f32.mrb[0].mxu0
  %v1849 = vadd.f32 0.0, %v1848
  %v1850 = vpop.f32.mrb[0].mxu0
  %v1851 = vpop.f32.mrb[0].mxu0
  %1852 = vdwg.mxu0
  %v1853 = vadd.f32 %v1572, %v1806
  %v1854 = vadd.f32 %v1573, %v1808
  %v1855 = vadd.f32 %v1574, %v1847
  %v1856 = vadd.f32 %v1575, %v1849
  %v1857 = vxor.u32 %v1853, 2147483648
  %v1858 = vxor.u32 %v1854, 2147483648
  %v1859 = vxor.u32 %v1855, 2147483648
  %v1860 = vmul.f32 %v1857, 1.442695
  %v1861 = vpow.pop %v1860
  %v1862 = vmul.f32 %v1858, 1.442695
  %v1863 = vpow.pop %v1862
  %v1864 = vmul.f32 %v1859, 1.442695
  %v1865 = vpow.pop %v1864
  %v1866 = vadd.f32 %v1861, 1.0
  %v1867 = vadd.f32 %v1863, 1.0
  %v1868 = vadd.f32 %v1865, 1.0
  %v1869 = vrcp.pop %v1866
  %v1870 = vmul.f32 1.0, %v1869
  %v1871 = vrcp.pop %v1867
  %v1872 = vmul.f32 1.0, %v1871
  %v1873 = vrcp.pop %v1868
  %v1874 = vmul.f32 1.0, %v1873
  %v1875 = vtanh.pop %v1856
  %v1876 = vmul.f32 %v1872, %v1577
  %v1877 = vmul.f32 %v1870, %v1875
  %v1878 = vadd.f32 %v1876, %v1877
  %v1879 = vtanh.pop %v1878
  %v1880 = vmul.f32 %v1874, %v1879
  %1881 = vst [vmem:[#allocation3] sm:$0xff] %v1571
  %1882 = vst [vmem:[#allocation4] sm:$0xff] %v1569
  %1883 = vst [vmem:[#allocation6] sm:$0xff] %v1880
  %1884 = vst [vmem:[#allocation7] sm:$0xff] %v1878
  %s1885 = scalar_lea.vmem %s7, 8
  %1886 = vst [vmem:[%s1885] sm:$0xff] %v1571
  %s1887 = scalar_lea.vmem %s8, 8
  %1888 = vst [vmem:[%s1887] sm:$0xff] %v1880
  %v1889 = vld [vmem:[#allocation2] sm:$0xff]
  %v1890 = vld [vmem:[#allocation2 + $0x8] sm:$0xff]
  %v1891 = vld [vmem:[#allocation2 + $0x10] sm:$0xff]
  %v1892 = vld [vmem:[#allocation2 + $0x18] sm:$0xff]
  %v1893 = vld [vmem:[#allocation3] sm:$0xff]
  %v1894 = vld [vmem:[#allocation4] sm:$0xff]
  %v1895 = vld [vmem:[%s2] sm:$0xff]
  %v1896 = vld [vmem:[%s2 + $0x8] sm:$0xff]
  %v1897 = vld [vmem:[%s2 + $0x10] sm:$0xff]
  %v1898 = vld [vmem:[%s2 + $0x18] sm:$0xff]
  %v1899 = vld [vmem:[%s2 + $0x20] sm:$0xff]
  %v1900 = vld [vmem:[%s2 + $0x28] sm:$0xff]
  %v1901 = vld [vmem:[%s2 + $0x30] sm:$0xff]
  %v1902 = vld [vmem:[%s2 + $0x38] sm:$0xff]
  %v1903 = vld [vmem:[%s2 + $0x40] sm:$0xff]
  %v1904 = vld [vmem:[%s2 + $0x48] sm:$0xff]
  %v1905 = vld [vmem:[%s2 + $0x50] sm:$0xff]
  %v1906 = vld [vmem:[%s2 + $0x58] sm:$0xff]
  %v1907 = vld [vmem:[%s2 + $0x60] sm:$0xff]
  %v1908 = vld [vmem:[%s2 + $0x68] sm:$0xff]
  %v1909 = vld [vmem:[%s2 + $0x70] sm:$0xff]
  %v1910 = vld [vmem:[%s2 + $0x78] sm:$0xff]
  %v1911 = vld [vmem:[%s2 + $0x80] sm:$0xff]
  %v1912 = vld [vmem:[%s2 + $0x88] sm:$0xff]
  %v1913 = vld [vmem:[%s2 + $0x90] sm:$0xff]
  %v1914 = vld [vmem:[%s2 + $0x98] sm:$0xff]
  %v1915 = vld [vmem:[%s2 + $0xa0] sm:$0xff]
  %v1916 = vld [vmem:[%s2 + $0xa8] sm:$0xff]
  %v1917 = vld [vmem:[%s2 + $0xb0] sm:$0xff]
  %v1918 = vld [vmem:[%s2 + $0xb8] sm:$0xff]
  %v1919 = vld [vmem:[%s2 + $0xc0] sm:$0xff]
  %v1920 = vld [vmem:[%s2 + $0xc8] sm:$0xff]
  %v1921 = vld [vmem:[%s2 + $0xd0] sm:$0xff]
  %v1922 = vld [vmem:[%s2 + $0xd8] sm:$0xff]
  %v1923 = vld [vmem:[%s2 + $0xe0] sm:$0xff]
  %v1924 = vld [vmem:[%s2 + $0xe8] sm:$0xff]
  %v1925 = vld [vmem:[%s2 + $0xf0] sm:$0xff]
  %v1926 = vld [vmem:[%s2 + $0xf8] sm:$0xff]
  %v1927 = vpack.c.bf16 %v1893, %v1893
  %v1960 = vunpack.c.l.b16 %v1895
  %v1961 = vunpack.c.h.b16 %v1895
  %v1962 = vunpack.c.l.b16 %v1896
  %v1963 = vunpack.c.h.b16 %v1896
  %v1964 = vunpack.c.l.b16 %v1897
  %v1965 = vunpack.c.h.b16 %v1897
  %v1966 = vunpack.c.l.b16 %v1898
  %v1967 = vunpack.c.h.b16 %v1898
  %v1968 = vunpack.c.l.b16 %v1899
  %v1969 = vunpack.c.h.b16 %v1899
  %v1970 = vunpack.c.l.b16 %v1900
  %v1971 = vunpack.c.h.b16 %v1900
  %v1972 = vunpack.c.l.b16 %v1901
  %v1973 = vunpack.c.h.b16 %v1901
  %v1974 = vunpack.c.l.b16 %v1902
  %v1975 = vunpack.c.h.b16 %v1902
  %v1976 = vunpack.c.l.b16 %v1903
  %v1977 = vunpack.c.h.b16 %v1903
  %v1978 = vunpack.c.l.b16 %v1904
  %v1979 = vunpack.c.h.b16 %v1904
  %v1980 = vunpack.c.l.b16 %v1905
  %v1981 = vunpack.c.h.b16 %v1905
  %v1982 = vunpack.c.l.b16 %v1906
  %v1983 = vunpack.c.h.b16 %v1906
  %v1984 = vunpack.c.l.b16 %v1907
  %v1985 = vunpack.c.h.b16 %v1907
  %v1986 = vunpack.c.l.b16 %v1908
  %v1987 = vunpack.c.h.b16 %v1908
  %v1988 = vunpack.c.l.b16 %v1909
  %v1989 = vunpack.c.h.b16 %v1909
  %v1990 = vunpack.c.l.b16 %v1910
  %v1991 = vunpack.c.h.b16 %v1910
  %v1992 = vunpack.c.l.b16 %v1911
  %v1993 = vunpack.c.h.b16 %v1911
  %v1994 = vunpack.c.l.b16 %v1912
  %v1995 = vunpack.c.h.b16 %v1912
  %v1996 = vunpack.c.l.b16 %v1913
  %v1997 = vunpack.c.h.b16 %v1913
  %v1998 = vunpack.c.l.b16 %v1914
  %v1999 = vunpack.c.h.b16 %v1914
  %v2000 = vunpack.c.l.b16 %v1915
  %v2001 = vunpack.c.h.b16 %v1915
  %v2002 = vunpack.c.l.b16 %v1916
  %v2003 = vunpack.c.h.b16 %v1916
  %v2004 = vunpack.c.l.b16 %v1917
  %v2005 = vunpack.c.h.b16 %v1917
  %v2006 = vunpack.c.l.b16 %v1918
  %v2007 = vunpack.c.h.b16 %v1918
  %v2008 = vunpack.c.l.b16 %v1919
  %v2009 = vunpack.c.h.b16 %v1919
  %v2010 = vunpack.c.l.b16 %v1920
  %v2011 = vunpack.c.h.b16 %v1920
  %v2012 = vunpack.c.l.b16 %v1921
  %v2013 = vunpack.c.h.b16 %v1921
  %v2014 = vunpack.c.l.b16 %v1922
  %v2015 = vunpack.c.h.b16 %v1922
  %v2016 = vunpack.c.l.b16 %v1923
  %v2017 = vunpack.c.h.b16 %v1923
  %v2018 = vunpack.c.l.b16 %v1924
  %v2019 = vunpack.c.h.b16 %v1924
  %v2020 = vunpack.c.l.b16 %v1925
  %v2021 = vunpack.c.h.b16 %v1925
  %v2022 = vunpack.c.l.b16 %v1926
  %v2023 = vunpack.c.h.b16 %v1926
  %v2024 = vpack.c.b16 %v1964, %v1960
  %v2025 = vpack.c.b16 %v1965, %v1961
  %v2026 = vpack.c.b16 %v1966, %v1962
  %v2027 = vpack.c.b16 %v1967, %v1963
  %v2028 = vpack.c.b16 %v1972, %v1968
  %v2029 = vpack.c.b16 %v1973, %v1969
  %v2030 = vpack.c.b16 %v1974, %v1970
  %v2031 = vpack.c.b16 %v1975, %v1971
  %v2032 = vpack.c.b16 %v1980, %v1976
  %v2033 = vpack.c.b16 %v1981, %v1977
  %v2034 = vpack.c.b16 %v1982, %v1978
  %v2035 = vpack.c.b16 %v1983, %v1979
  %v2036 = vpack.c.b16 %v1988, %v1984
  %v2037 = vpack.c.b16 %v1989, %v1985
  %v2038 = vpack.c.b16 %v1990, %v1986
  %v2039 = vpack.c.b16 %v1991, %v1987
  %v2040 = vpack.c.b16 %v1996, %v1992
  %v2041 = vpack.c.b16 %v1997, %v1993
  %v2042 = vpack.c.b16 %v1998, %v1994
  %v2043 = vpack.c.b16 %v1999, %v1995
  %v2044 = vpack.c.b16 %v2004, %v2000
  %v2045 = vpack.c.b16 %v2005, %v2001
  %v2046 = vpack.c.b16 %v2006, %v2002
  %v2047 = vpack.c.b16 %v2007, %v2003
  %v2048 = vpack.c.b16 %v2012, %v2008
  %v2049 = vpack.c.b16 %v2013, %v2009
  %v2050 = vpack.c.b16 %v2014, %v2010
  %v2051 = vpack.c.b16 %v2015, %v2011
  %v2052 = vpack.c.b16 %v2020, %v2016
  %v2053 = vpack.c.b16 %v2021, %v2017
  %v2054 = vpack.c.b16 %v2022, %v2018
  %v2055 = vpack.c.b16 %v2023, %v2019
  %2088 = vmatprep.subr.bf16.mxu0 %v2025
  %2089 = vmatpush1.bf16.msra.mxu0 %v2024
  %2090 = vmatprep.subr.bf16.mxu0 %v2029
  %2091 = vmatpush1.bf16.msra.mxu0 %v2028
  %2092 = vmatprep.subr.bf16.mxu0 %v2033
  %2093 = vmatpush1.bf16.msra.mxu0 %v2032
  %2094 = vmatprep.subr.bf16.mxu0 %v2037
  %2095 = vmatpush1.bf16.msra.mxu0 %v2036
  %2096 = vmatprep.subr.bf16.mxu0 %v2041
  %2097 = vmatpush1.bf16.msra.mxu0 %v2040
  %2098 = vmatprep.subr.bf16.mxu0 %v2045
  %2099 = vmatpush1.bf16.msra.mxu0 %v2044
  %2100 = vmatprep.subr.bf16.mxu0 %v2049
  %2101 = vmatpush1.bf16.msra.mxu0 %v2048
  %2102 = vmatprep.subr.bf16.mxu0 %v2053
  %2103 = vmatpush1.bf16.msra.mxu0 %v2052
  %2104 = vmatprep.subr.bf16.mxu0 0
  %2105 = vmatpush1.bf16.msra.mxu0 0
  %2106 = vmatprep.subr.bf16.mxu0 0
  %2107 = vmatpush1.bf16.msra.mxu0 0
  %2108 = vmatprep.subr.bf16.mxu0 0
  %2109 = vmatpush1.bf16.msra.mxu0 0
  %2110 = vmatprep.subr.bf16.mxu0 0
  %2111 = vmatpush1.bf16.msra.mxu0 0
  %2112 = vmatprep.subr.bf16.mxu0 0
  %2113 = vmatpush1.bf16.msra.mxu0 0
  %2114 = vmatprep.subr.bf16.mxu0 0
  %2115 = vmatpush1.bf16.msra.mxu0 0
  %2116 = vmatprep.subr.bf16.mxu0 0
  %2117 = vmatpush1.bf16.msra.mxu0 0
  %2118 = vmatprep.subr.bf16.mxu0 0
  %2119 = vmatpush1.bf16.msra.mxu0 0
  %2120 = vmatprep.mubr.bf16.mxu0 0
  %2121 = vmatmul.mubr.bf16.gmra.mrb[0].mxu0 %v1927
  %v2122 = vpop.f32.mrb[0].mxu0
  %v2123 = vadd.f32 0.0, %v2122
  %v2124 = vpop.f32.mrb[0].mxu0
  %v2125 = vadd.f32 0.0, %v2124
  %v2126 = vpop.f32.mrb[0].mxu0
  %v2127 = vpop.f32.mrb[0].mxu0
  %2128 = vdwg.mxu0
  %2129 = vmatprep.subr.bf16.mxu0 %v2027
  %2130 = vmatpush1.bf16.msra.mxu0 %v2026
  %2131 = vmatprep.subr.bf16.mxu0 %v2031
  %2132 = vmatpush1.bf16.msra.mxu0 %v2030
  %2133 = vmatprep.subr.bf16.mxu0 %v2035
  %2134 = vmatpush1.bf16.msra.mxu0 %v2034
  %2135 = vmatprep.subr.bf16.mxu0 %v2039
  %2136 = vmatpush1.bf16.msra.mxu0 %v2038
  %2137 = vmatprep.subr.bf16.mxu0 %v2043
  %2138 = vmatpush1.bf16.msra.mxu0 %v2042
  %2139 = vmatprep.subr.bf16.mxu0 %v2047
  %2140 = vmatpush1.bf16.msra.mxu0 %v2046
  %2141 = vmatprep.subr.bf16.mxu0 %v2051
  %2142 = vmatpush1.bf16.msra.mxu0 %v2050
  %2143 = vmatprep.subr.bf16.mxu0 %v2055
  %2144 = vmatpush1.bf16.msra.mxu0 %v2054
  %2145 = vmatprep.subr.bf16.mxu0 0
  %2146 = vmatpush1.bf16.msra.mxu0 0
  %2147 = vmatprep.subr.bf16.mxu0 0
  %2148 = vmatpush1.bf16.msra.mxu0 0
  %2149 = vmatprep.subr.bf16.mxu0 0
  %2150 = vmatpush1.bf16.msra.mxu0 0
  %2151 = vmatprep.subr.bf16.mxu0 0
  %2152 = vmatpush1.bf16.msra.mxu0 0
  %2153 = vmatprep.subr.bf16.mxu0 0
  %2154 = vmatpush1.bf16.msra.mxu0 0
  %2155 = vmatprep.subr.bf16.mxu0 0
  %2156 = vmatpush1.bf16.msra.mxu0 0
  %2157 = vmatprep.subr.bf16.mxu0 0
  %2158 = vmatpush1.bf16.msra.mxu0 0
  %2159 = vmatprep.subr.bf16.mxu0 0
  %2160 = vmatpush1.bf16.msra.mxu0 0
  %2161 = vmatprep.mubr.bf16.mxu0 0
  %2162 = vmatmul.mubr.bf16.gmra.mrb[0].mxu0 %v1927
  %v2163 = vpop.f32.mrb[0].mxu0
  %v2164 = vadd.f32 0.0, %v2163
  %v2165 = vpop.f32.mrb[0].mxu0
  %v2166 = vadd.f32 0.0, %v2165
  %v2167 = vpop.f32.mrb[0].mxu0
  %v2168 = vpop.f32.mrb[0].mxu0
  %2169 = vdwg.mxu0
  %v2170 = vadd.f32 %v1889, %v2123
  %v2171 = vadd.f32 %v1890, %v2125
  %v2172 = vadd.f32 %v1891, %v2164
  %v2173 = vadd.f32 %v1892, %v2166
  %v2174 = vxor.u32 %v2170, 2147483648
  %v2175 = vxor.u32 %v2171, 2147483648
  %v2176 = vxor.u32 %v2172, 2147483648
  %v2177 = vmul.f32 %v2174, 1.442695
  %v2178 = vpow.pop %v2177
  %v2179 = vmul.f32 %v2175, 1.442695
  %v2180 = vpow.pop %v2179
  %v2181 = vmul.f32 %v2176, 1.442695
  %v2182 = vpow.pop %v2181
  %v2183 = vadd.f32 %v2178, 1.0
  %v2184 = vadd.f32 %v2180, 1.0
  %v2185 = vadd.f32 %v2182, 1.0
  %v2186 = vrcp.pop %v2183
  %v2187 = vmul.f32 1.0, %v2186
  %v2188 = vrcp.pop %v2184
  %v2189 = vmul.f32 1.0, %v2188
  %v2190 = vrcp.pop %v2185
  %v2191 = vmul.f32 1.0, %v2190
  %v2192 = vtanh.pop %v2173
  %v2193 = vmul.f32 %v2189, %v1894
  %v2194 = vmul.f32 %v2187, %v2192
  %v2195 = vadd.f32 %v2193, %v2194
  %v2196 = vtanh.pop %v2195
  %v2197 = vmul.f32 %v2191, %v2196
  %v2198 = vld [vmem:[#allocation5] sm:$0xff]
  %v2199 = vld [vmem:[#allocation5 + $0x8] sm:$0xff]
  %v2200 = vld [vmem:[#allocation5 + $0x10] sm:$0xff]
  %v2201 = vld [vmem:[#allocation5 + $0x18] sm:$0xff]
  %v2202 = vld [vmem:[#allocation6] sm:$0xff]
  %v2203 = vld [vmem:[#allocation7] sm:$0xff]
  %v2204 = vld [vmem:[%s5] sm:$0xff]
  %v2205 = vld [vmem:[%s5 + $0x8] sm:$0xff]
  %v2206 = vld [vmem:[%s5 + $0x10] sm:$0xff]
  %v2207 = vld [vmem:[%s5 + $0x18] sm:$0xff]
  %v2208 = vld [vmem:[%s5 + $0x20] sm:$0xff]
  %v2209 = vld [vmem:[%s5 + $0x28] sm:$0xff]
  %v2210 = vld [vmem:[%s5 + $0x30] sm:$0xff]
  %v2211 = vld [vmem:[%s5 + $0x38] sm:$0xff]
  %v2212 = vld [vmem:[%s5 + $0x40] sm:$0xff]
  %v2213 = vld [vmem:[%s5 + $0x48] sm:$0xff]
  %v2214 = vld [vmem:[%s5 + $0x50] sm:$0xff]
  %v2215 = vld [vmem:[%s5 + $0x58] sm:$0xff]
  %v2216 = vld [vmem:[%s5 + $0x60] sm:$0xff]
  %v2217 = vld [vmem:[%s5 + $0x68] sm:$0xff]
  %v2218 = vld [vmem:[%s5 + $0x70] sm:$0xff]
  %v2219 = vld [vmem:[%s5 + $0x78] sm:$0xff]
  %v2220 = vld [vmem:[%s5 + $0x80] sm:$0xff]
  %v2221 = vld [vmem:[%s5 + $0x88] sm:$0xff]
  %v2222 = vld [vmem:[%s5 + $0x90] sm:$0xff]
  %v2223 = vld [vmem:[%s5 + $0x98] sm:$0xff]
  %v2224 = vld [vmem:[%s5 + $0xa0] sm:$0xff]
  %v2225 = vld [vmem:[%s5 + $0xa8] sm:$0xff]
  %v2226 = vld [vmem:[%s5 + $0xb0] sm:$0xff]
  %v2227 = vld [vmem:[%s5 + $0xb8] sm:$0xff]
  %v2228 = vld [vmem:[%s5 + $0xc0] sm:$0xff]
  %v2229 = vld [vmem:[%s5 + $0xc8] sm:$0xff]
  %v2230 = vld [vmem:[%s5 + $0xd0] sm:$0xff]
  %v2231 = vld [vmem:[%s5 + $0xd8] sm:$0xff]
  %v2232 = vld [vmem:[%s5 + $0xe0] sm:$0xff]
  %v2233 = vld [vmem:[%s5 + $0xe8] sm:$0xff]
  %v2234 = vld [vmem:[%s5 + $0xf0] sm:$0xff]
  %v2235 = vld [vmem:[%s5 + $0xf8] sm:$0xff]
  %v2236 = vpack.c.bf16 %v2202, %v2202
  %v2269 = vunpack.c.l.b16 %v2204
  %v2270 = vunpack.c.h.b16 %v2204
  %v2271 = vunpack.c.l.b16 %v2205
  %v2272 = vunpack.c.h.b16 %v2205
  %v2273 = vunpack.c.l.b16 %v2206
  %v2274 = vunpack.c.h.b16 %v2206
  %v2275 = vunpack.c.l.b16 %v2207
  %v2276 = vunpack.c.h.b16 %v2207
  %v2277 = vunpack.c.l.b16 %v2208
  %v2278 = vunpack.c.h.b16 %v2208
  %v2279 = vunpack.c.l.b16 %v2209
  %v2280 = vunpack.c.h.b16 %v2209
  %v2281 = vunpack.c.l.b16 %v2210
  %v2282 = vunpack.c.h.b16 %v2210
  %v2283 = vunpack.c.l.b16 %v2211
  %v2284 = vunpack.c.h.b16 %v2211
  %v2285 = vunpack.c.l.b16 %v2212
  %v2286 = vunpack.c.h.b16 %v2212
  %v2287 = vunpack.c.l.b16 %v2213
  %v2288 = vunpack.c.h.b16 %v2213
  %v2289 = vunpack.c.l.b16 %v2214
  %v2290 = vunpack.c.h.b16 %v2214
  %v2291 = vunpack.c.l.b16 %v2215
  %v2292 = vunpack.c.h.b16 %v2215
  %v2293 = vunpack.c.l.b16 %v2216
  %v2294 = vunpack.c.h.b16 %v2216
  %v2295 = vunpack.c.l.b16 %v2217
  %v2296 = vunpack.c.h.b16 %v2217
  %v2297 = vunpack.c.l.b16 %v2218
  %v2298 = vunpack.c.h.b16 %v2218
  %v2299 = vunpack.c.l.b16 %v2219
  %v2300 = vunpack.c.h.b16 %v2219
  %v2301 = vunpack.c.l.b16 %v2220
  %v2302 = vunpack.c.h.b16 %v2220
  %v2303 = vunpack.c.l.b16 %v2221
  %v2304 = vunpack.c.h.b16 %v2221
  %v2305 = vunpack.c.l.b16 %v2222
  %v2306 = vunpack.c.h.b16 %v2222
  %v2307 = vunpack.c.l.b16 %v2223
  %v2308 = vunpack.c.h.b16 %v2223
  %v2309 = vunpack.c.l.b16 %v2224
  %v2310 = vunpack.c.h.b16 %v2224
  %v2311 = vunpack.c.l.b16 %v2225
  %v2312 = vunpack.c.h.b16 %v2225
  %v2313 = vunpack.c.l.b16 %v2226
  %v2314 = vunpack.c.h.b16 %v2226
  %v2315 = vunpack.c.l.b16 %v2227
  %v2316 = vunpack.c.h.b16 %v2227
  %v2317 = vunpack.c.l.b16 %v2228
  %v2318 = vunpack.c.h.b16 %v2228
  %v2319 = vunpack.c.l.b16 %v2229
  %v2320 = vunpack.c.h.b16 %v2229
  %v2321 = vunpack.c.l.b16 %v2230
  %v2322 = vunpack.c.h.b16 %v2230
  %v2323 = vunpack.c.l.b16 %v2231
  %v2324 = vunpack.c.h.b16 %v2231
  %v2325 = vunpack.c.l.b16 %v2232
  %v2326 = vunpack.c.h.b16 %v2232
  %v2327 = vunpack.c.l.b16 %v2233
  %v2328 = vunpack.c.h.b16 %v2233
  %v2329 = vunpack.c.l.b16 %v2234
  %v2330 = vunpack.c.h.b16 %v2234
  %v2331 = vunpack.c.l.b16 %v2235
  %v2332 = vunpack.c.h.b16 %v2235
  %v2333 = vpack.c.b16 %v2273, %v2269
  %v2334 = vpack.c.b16 %v2274, %v2270
  %v2335 = vpack.c.b16 %v2275, %v2271
  %v2336 = vpack.c.b16 %v2276, %v2272
  %v2337 = vpack.c.b16 %v2281, %v2277
  %v2338 = vpack.c.b16 %v2282, %v2278
  %v2339 = vpack.c.b16 %v2283, %v2279
  %v2340 = vpack.c.b16 %v2284, %v2280
  %v2341 = vpack.c.b16 %v2289, %v2285
  %v2342 = vpack.c.b16 %v2290, %v2286
  %v2343 = vpack.c.b16 %v2291, %v2287
  %v2344 = vpack.c.b16 %v2292, %v2288
  %v2345 = vpack.c.b16 %v2297, %v2293
  %v2346 = vpack.c.b16 %v2298, %v2294
  %v2347 = vpack.c.b16 %v2299, %v2295
  %v2348 = vpack.c.b16 %v2300, %v2296
  %v2349 = vpack.c.b16 %v2305, %v2301
  %v2350 = vpack.c.b16 %v2306, %v2302
  %v2351 = vpack.c.b16 %v2307, %v2303
  %v2352 = vpack.c.b16 %v2308, %v2304
  %v2353 = vpack.c.b16 %v2313, %v2309
  %v2354 = vpack.c.b16 %v2314, %v2310
  %v2355 = vpack.c.b16 %v2315, %v2311
  %v2356 = vpack.c.b16 %v2316, %v2312
  %v2357 = vpack.c.b16 %v2321, %v2317
  %v2358 = vpack.c.b16 %v2322, %v2318
  %v2359 = vpack.c.b16 %v2323, %v2319
  %v2360 = vpack.c.b16 %v2324, %v2320
  %v2361 = vpack.c.b16 %v2329, %v2325
  %v2362 = vpack.c.b16 %v2330, %v2326
  %v2363 = vpack.c.b16 %v2331, %v2327
  %v2364 = vpack.c.b16 %v2332, %v2328
  %2397 = vmatprep.subr.bf16.mxu0 %v2334
  %2398 = vmatpush1.bf16.msra.mxu0 %v2333
  %2399 = vmatprep.subr.bf16.mxu0 %v2338
  %2400 = vmatpush1.bf16.msra.mxu0 %v2337
  %2401 = vmatprep.subr.bf16.mxu0 %v2342
  %2402 = vmatpush1.bf16.msra.mxu0 %v2341
  %2403 = vmatprep.subr.bf16.mxu0 %v2346
  %2404 = vmatpush1.bf16.msra.mxu0 %v2345
  %2405 = vmatprep.subr.bf16.mxu0 %v2350
  %2406 = vmatpush1.bf16.msra.mxu0 %v2349
  %2407 = vmatprep.subr.bf16.mxu0 %v2354
  %2408 = vmatpush1.bf16.msra.mxu0 %v2353
  %2409 = vmatprep.subr.bf16.mxu0 %v2358
  %2410 = vmatpush1.bf16.msra.mxu0 %v2357
  %2411 = vmatprep.subr.bf16.mxu0 %v2362
  %2412 = vmatpush1.bf16.msra.mxu0 %v2361
  %2413 = vmatprep.subr.bf16.mxu0 0
  %2414 = vmatpush1.bf16.msra.mxu0 0
  %2415 = vmatprep.subr.bf16.mxu0 0
  %2416 = vmatpush1.bf16.msra.mxu0 0
  %2417 = vmatprep.subr.bf16.mxu0 0
  %2418 = vmatpush1.bf16.msra.mxu0 0
  %2419 = vmatprep.subr.bf16.mxu0 0
  %2420 = vmatpush1.bf16.msra.mxu0 0
  %2421 = vmatprep.subr.bf16.mxu0 0
  %2422 = vmatpush1.bf16.msra.mxu0 0
  %2423 = vmatprep.subr.bf16.mxu0 0
  %2424 = vmatpush1.bf16.msra.mxu0 0
  %2425 = vmatprep.subr.bf16.mxu0 0
  %2426 = vmatpush1.bf16.msra.mxu0 0
  %2427 = vmatprep.subr.bf16.mxu0 0
  %2428 = vmatpush1.bf16.msra.mxu0 0
  %2429 = vmatprep.mubr.bf16.mxu0 0
  %2430 = vmatmul.mubr.bf16.gmra.mrb[0].mxu0 %v2236
  %v2431 = vpop.f32.mrb[0].mxu0
  %v2432 = vadd.f32 0.0, %v2431
  %v2433 = vpop.f32.mrb[0].mxu0
  %v2434 = vadd.f32 0.0, %v2433
  %v2435 = vpop.f32.mrb[0].mxu0
  %v2436 = vpop.f32.mrb[0].mxu0
  %2437 = vdwg.mxu0
  %2438 = vmatprep.subr.bf16.mxu0 %v2336
  %2439 = vmatpush1.bf16.msra.mxu0 %v2335
  %2440 = vmatprep.subr.bf16.mxu0 %v2340
  %2441 = vmatpush1.bf16.msra.mxu0 %v2339
  %2442 = vmatprep.subr.bf16.mxu0 %v2344
  %2443 = vmatpush1.bf16.msra.mxu0 %v2343
  %2444 = vmatprep.subr.bf16.mxu0 %v2348
  %2445 = vmatpush1.bf16.msra.mxu0 %v2347
  %2446 = vmatprep.subr.bf16.mxu0 %v2352
  %2447 = vmatpush1.bf16.msra.mxu0 %v2351
  %2448 = vmatprep.subr.bf16.mxu0 %v2356
  %2449 = vmatpush1.bf16.msra.mxu0 %v2355
  %2450 = vmatprep.subr.bf16.mxu0 %v2360
  %2451 = vmatpush1.bf16.msra.mxu0 %v2359
  %2452 = vmatprep.subr.bf16.mxu0 %v2364
  %2453 = vmatpush1.bf16.msra.mxu0 %v2363
  %2454 = vmatprep.subr.bf16.mxu0 0
  %2455 = vmatpush1.bf16.msra.mxu0 0
  %2456 = vmatprep.subr.bf16.mxu0 0
  %2457 = vmatpush1.bf16.msra.mxu0 0
  %2458 = vmatprep.subr.bf16.mxu0 0
  %2459 = vmatpush1.bf16.msra.mxu0 0
  %2460 = vmatprep.subr.bf16.mxu0 0
  %2461 = vmatpush1.bf16.msra.mxu0 0
  %2462 = vmatprep.subr.bf16.mxu0 0
  %2463 = vmatpush1.bf16.msra.mxu0 0
  %2464 = vmatprep.subr.bf16.mxu0 0
  %2465 = vmatpush1.bf16.msra.mxu0 0
  %2466 = vmatprep.subr.bf16.mxu0 0
  %2467 = vmatpush1.bf16.msra.mxu0 0
  %2468 = vmatprep.subr.bf16.mxu0 0
  %2469 = vmatpush1.bf16.msra.mxu0 0
  %2470 = vmatprep.mubr.bf16.mxu0 0
  %2471 = vmatmul.mubr.bf16.gmra.mrb[0].mxu0 %v2236
  %v2472 = vpop.f32.mrb[0].mxu0
  %v2473 = vadd.f32 0.0, %v2472
  %v2474 = vpop.f32.mrb[0].mxu0
  %v2475 = vadd.f32 0.0, %v2474
  %v2476 = vpop.f32.mrb[0].mxu0
  %v2477 = vpop.f32.mrb[0].mxu0
  %2478 = vdwg.mxu0
  %v2479 = vadd.f32 %v2198, %v2432
  %v2480 = vadd.f32 %v2199, %v2434
  %v2481 = vadd.f32 %v2200, %v2473
  %v2482 = vadd.f32 %v2201, %v2475
  %v2483 = vxor.u32 %v2479, 2147483648
  %v2484 = vxor.u32 %v2480, 2147483648
  %v2485 = vxor.u32 %v2481, 2147483648
  %v2486 = vmul.f32 %v2483, 1.442695
  %v2487 = vpow.pop %v2486
  %v2488 = vmul.f32 %v2484, 1.442695
  %v2489 = vpow.pop %v2488
  %v2490 = vmul.f32 %v2485, 1.442695
  %v2491 = vpow.pop %v2490
  %v2492 = vadd.f32 %v2487, 1.0
  %v2493 = vadd.f32 %v2489, 1.0
  %v2494 = vadd.f32 %v2491, 1.0
  %v2495 = vrcp.pop %v2492
  %v2496 = vmul.f32 1.0, %v2495
  %v2497 = vrcp.pop %v2493
  %v2498 = vmul.f32 1.0, %v2497
  %v2499 = vrcp.pop %v2494
  %v2500 = vmul.f32 1.0, %v2499
  %v2501 = vtanh.pop %v2482
  %v2502 = vmul.f32 %v2498, %v2203
  %v2503 = vmul.f32 %v2496, %v2501
  %v2504 = vadd.f32 %v2502, %v2503
  %v2505 = vtanh.pop %v2504
  %v2506 = vmul.f32 %v2500, %v2505
  %2507 = vst [vmem:[#allocation3] sm:$0xff] %v2197
  %2508 = vst [vmem:[#allocation4] sm:$0xff] %v2195
  %2509 = vst [vmem:[#allocation6] sm:$0xff] %v2506
  %2510 = vst [vmem:[#allocation7] sm:$0xff] %v2504
  %s2511 = scalar_lea.vmem %s7, 16
  %2512 = vst [vmem:[%s2511] sm:$0xff] %v2197
  %s2513 = scalar_lea.vmem %s8, 16
  %2514 = vst [vmem:[%s2513] sm:$0xff] %v2506
  %v2515 = vld [vmem:[#allocation2] sm:$0xff]
  %v2516 = vld [vmem:[#allocation2 + $0x8] sm:$0xff]
  %v2517 = vld [vmem:[#allocation2 + $0x10] sm:$0xff]
  %v2518 = vld [vmem:[#allocation2 + $0x18] sm:$0xff]
  %v2519 = vld [vmem:[#allocation3] sm:$0xff]
  %v2520 = vld [vmem:[#allocation4] sm:$0xff]
  %v2521 = vld [vmem:[%s2] sm:$0xff]
  %v2522 = vld [vmem:[%s2 + $0x8] sm:$0xff]
  %v2523 = vld [vmem:[%s2 + $0x10] sm:$0xff]
  %v2524 = vld [vmem:[%s2 + $0x18] sm:$0xff]
  %v2525 = vld [vmem:[%s2 + $0x20] sm:$0xff]
  %v2526 = vld [vmem:[%s2 + $0x28] sm:$0xff]
  %v2527 = vld [vmem:[%s2 + $0x30] sm:$0xff]
  %v2528 = vld [vmem:[%s2 + $0x38] sm:$0xff]
  %v2529 = vld [vmem:[%s2 + $0x40] sm:$0xff]
  %v2530 = vld [vmem:[%s2 + $0x48] sm:$0xff]
  %v2531 = vld [vmem:[%s2 + $0x50] sm:$0xff]
  %v2532 = vld [vmem:[%s2 + $0x58] sm:$0xff]
  %v2533 = vld [vmem:[%s2 + $0x60] sm:$0xff]
  %v2534 = vld [vmem:[%s2 + $0x68] sm:$0xff]
  %v2535 = vld [vmem:[%s2 + $0x70] sm:$0xff]
  %v2536 = vld [vmem:[%s2 + $0x78] sm:$0xff]
  %v2537 = vld [vmem:[%s2 + $0x80] sm:$0xff]
  %v2538 = vld [vmem:[%s2 + $0x88] sm:$0xff]
  %v2539 = vld [vmem:[%s2 + $0x90] sm:$0xff]
  %v2540 = vld [vmem:[%s2 + $0x98] sm:$0xff]
  %v2541 = vld [vmem:[%s2 + $0xa0] sm:$0xff]
  %v2542 = vld [vmem:[%s2 + $0xa8] sm:$0xff]
  %v2543 = vld [vmem:[%s2 + $0xb0] sm:$0xff]
  %v2544 = vld [vmem:[%s2 + $0xb8] sm:$0xff]
  %v2545 = vld [vmem:[%s2 + $0xc0] sm:$0xff]
  %v2546 = vld [vmem:[%s2 + $0xc8] sm:$0xff]
  %v2547 = vld [vmem:[%s2 + $0xd0] sm:$0xff]
  %v2548 = vld [vmem:[%s2 + $0xd8] sm:$0xff]
  %v2549 = vld [vmem:[%s2 + $0xe0] sm:$0xff]
  %v2550 = vld [vmem:[%s2 + $0xe8] sm:$0xff]
  %v2551 = vld [vmem:[%s2 + $0xf0] sm:$0xff]
  %v2552 = vld [vmem:[%s2 + $0xf8] sm:$0xff]
  %v2553 = vpack.c.bf16 %v2519, %v2519
  %v2586 = vunpack.c.l.b16 %v2521
  %v2587 = vunpack.c.h.b16 %v2521
  %v2588 = vunpack.c.l.b16 %v2522
  %v2589 = vunpack.c.h.b16 %v2522
  %v2590 = vunpack.c.l.b16 %v2523
  %v2591 = vunpack.c.h.b16 %v2523
  %v2592 = vunpack.c.l.b16 %v2524
  %v2593 = vunpack.c.h.b16 %v2524
  %v2594 = vunpack.c.l.b16 %v2525
  %v2595 = vunpack.c.h.b16 %v2525
  %v2596 = vunpack.c.l.b16 %v2526
  %v2597 = vunpack.c.h.b16 %v2526
  %v2598 = vunpack.c.l.b16 %v2527
  %v2599 = vunpack.c.h.b16 %v2527
  %v2600 = vunpack.c.l.b16 %v2528
  %v2601 = vunpack.c.h.b16 %v2528
  %v2602 = vunpack.c.l.b16 %v2529
  %v2603 = vunpack.c.h.b16 %v2529
  %v2604 = vunpack.c.l.b16 %v2530
  %v2605 = vunpack.c.h.b16 %v2530
  %v2606 = vunpack.c.l.b16 %v2531
  %v2607 = vunpack.c.h.b16 %v2531
  %v2608 = vunpack.c.l.b16 %v2532
  %v2609 = vunpack.c.h.b16 %v2532
  %v2610 = vunpack.c.l.b16 %v2533
  %v2611 = vunpack.c.h.b16 %v2533
  %v2612 = vunpack.c.l.b16 %v2534
  %v2613 = vunpack.c.h.b16 %v2534
  %v2614 = vunpack.c.l.b16 %v2535
  %v2615 = vunpack.c.h.b16 %v2535
  %v2616 = vunpack.c.l.b16 %v2536
  %v2617 = vunpack.c.h.b16 %v2536
  %v2618 = vunpack.c.l.b16 %v2537
  %v2619 = vunpack.c.h.b16 %v2537
  %v2620 = vunpack.c.l.b16 %v2538
  %v2621 = vunpack.c.h.b16 %v2538
  %v2622 = vunpack.c.l.b16 %v2539
  %v2623 = vunpack.c.h.b16 %v2539
  %v2624 = vunpack.c.l.b16 %v2540
  %v2625 = vunpack.c.h.b16 %v2540
  %v2626 = vunpack.c.l.b16 %v2541
  %v2627 = vunpack.c.h.b16 %v2541
  %v2628 = vunpack.c.l.b16 %v2542
  %v2629 = vunpack.c.h.b16 %v2542
  %v2630 = vunpack.c.l.b16 %v2543
  %v2631 = vunpack.c.h.b16 %v2543
  %v2632 = vunpack.c.l.b16 %v2544
  %v2633 = vunpack.c.h.b16 %v2544
  %v2634 = vunpack.c.l.b16 %v2545
  %v2635 = vunpack.c.h.b16 %v2545
  %v2636 = vunpack.c.l.b16 %v2546
  %v2637 = vunpack.c.h.b16 %v2546
  %v2638 = vunpack.c.l.b16 %v2547
  %v2639 = vunpack.c.h.b16 %v2547
  %v2640 = vunpack.c.l.b16 %v2548
  %v2641 = vunpack.c.h.b16 %v2548
  %v2642 = vunpack.c.l.b16 %v2549
  %v2643 = vunpack.c.h.b16 %v2549
  %v2644 = vunpack.c.l.b16 %v2550
  %v2645 = vunpack.c.h.b16 %v2550
  %v2646 = vunpack.c.l.b16 %v2551
  %v2647 = vunpack.c.h.b16 %v2551
  %v2648 = vunpack.c.l.b16 %v2552
  %v2649 = vunpack.c.h.b16 %v2552
  %v2650 = vpack.c.b16 %v2590, %v2586
  %v2651 = vpack.c.b16 %v2591, %v2587
  %v2652 = vpack.c.b16 %v2592, %v2588
  %v2653 = vpack.c.b16 %v2593, %v2589
  %v2654 = vpack.c.b16 %v2598, %v2594
  %v2655 = vpack.c.b16 %v2599, %v2595
  %v2656 = vpack.c.b16 %v2600, %v2596
  %v2657 = vpack.c.b16 %v2601, %v2597
  %v2658 = vpack.c.b16 %v2606, %v2602
  %v2659 = vpack.c.b16 %v2607, %v2603
  %v2660 = vpack.c.b16 %v2608, %v2604
  %v2661 = vpack.c.b16 %v2609, %v2605
  %v2662 = vpack.c.b16 %v2614, %v2610
  %v2663 = vpack.c.b16 %v2615, %v2611
  %v2664 = vpack.c.b16 %v2616, %v2612
  %v2665 = vpack.c.b16 %v2617, %v2613
  %v2666 = vpack.c.b16 %v2622, %v2618
  %v2667 = vpack.c.b16 %v2623, %v2619
  %v2668 = vpack.c.b16 %v2624, %v2620
  %v2669 = vpack.c.b16 %v2625, %v2621
  %v2670 = vpack.c.b16 %v2630, %v2626
  %v2671 = vpack.c.b16 %v2631, %v2627
  %v2672 = vpack.c.b16 %v2632, %v2628
  %v2673 = vpack.c.b16 %v2633, %v2629
  %v2674 = vpack.c.b16 %v2638, %v2634
  %v2675 = vpack.c.b16 %v2639, %v2635
  %v2676 = vpack.c.b16 %v2640, %v2636
  %v2677 = vpack.c.b16 %v2641, %v2637
  %v2678 = vpack.c.b16 %v2646, %v2642
  %v2679 = vpack.c.b16 %v2647, %v2643
  %v2680 = vpack.c.b16 %v2648, %v2644
  %v2681 = vpack.c.b16 %v2649, %v2645
  %2714 = vmatprep.subr.bf16.mxu0 %v2651
  %2715 = vmatpush1.bf16.msra.mxu0 %v2650
  %2716 = vmatprep.subr.bf16.mxu0 %v2655
  %2717 = vmatpush1.bf16.msra.mxu0 %v2654
  %2718 = vmatprep.subr.bf16.mxu0 %v2659
  %2719 = vmatpush1.bf16.msra.mxu0 %v2658
  %2720 = vmatprep.subr.bf16.mxu0 %v2663
  %2721 = vmatpush1.bf16.msra.mxu0 %v2662
  %2722 = vmatprep.subr.bf16.mxu0 %v2667
  %2723 = vmatpush1.bf16.msra.mxu0 %v2666
  %2724 = vmatprep.subr.bf16.mxu0 %v2671
  %2725 = vmatpush1.bf16.msra.mxu0 %v2670
  %2726 = vmatprep.subr.bf16.mxu0 %v2675
  %2727 = vmatpush1.bf16.msra.mxu0 %v2674
  %2728 = vmatprep.subr.bf16.mxu0 %v2679
  %2729 = vmatpush1.bf16.msra.mxu0 %v2678
  %2730 = vmatprep.subr.bf16.mxu0 0
  %2731 = vmatpush1.bf16.msra.mxu0 0
  %2732 = vmatprep.subr.bf16.mxu0 0
  %2733 = vmatpush1.bf16.msra.mxu0 0
  %2734 = vmatprep.subr.bf16.mxu0 0
  %2735 = vmatpush1.bf16.msra.mxu0 0
  %2736 = vmatprep.subr.bf16.mxu0 0
  %2737 = vmatpush1.bf16.msra.mxu0 0
  %2738 = vmatprep.subr.bf16.mxu0 0
  %2739 = vmatpush1.bf16.msra.mxu0 0
  %2740 = vmatprep.subr.bf16.mxu0 0
  %2741 = vmatpush1.bf16.msra.mxu0 0
  %2742 = vmatprep.subr.bf16.mxu0 0
  %2743 = vmatpush1.bf16.msra.mxu0 0
  %2744 = vmatprep.subr.bf16.mxu0 0
  %2745 = vmatpush1.bf16.msra.mxu0 0
  %2746 = vmatprep.mubr.bf16.mxu0 0
  %2747 = vmatmul.mubr.bf16.gmra.mrb[0].mxu0 %v2553
  %v2748 = vpop.f32.mrb[0].mxu0
  %v2749 = vadd.f32 0.0, %v2748
  %v2750 = vpop.f32.mrb[0].mxu0
  %v2751 = vadd.f32 0.0, %v2750
  %v2752 = vpop.f32.mrb[0].mxu0
  %v2753 = vpop.f32.mrb[0].mxu0
  %2754 = vdwg.mxu0
  %2755 = vmatprep.subr.bf16.mxu0 %v2653
  %2756 = vmatpush1.bf16.msra.mxu0 %v2652
  %2757 = vmatprep.subr.bf16.mxu0 %v2657
  %2758 = vmatpush1.bf16.msra.mxu0 %v2656
  %2759 = vmatprep.subr.bf16.mxu0 %v2661
  %2760 = vmatpush1.bf16.msra.mxu0 %v2660
  %2761 = vmatprep.subr.bf16.mxu0 %v2665
  %2762 = vmatpush1.bf16.msra.mxu0 %v2664
  %2763 = vmatprep.subr.bf16.mxu0 %v2669
  %2764 = vmatpush1.bf16.msra.mxu0 %v2668
  %2765 = vmatprep.subr.bf16.mxu0 %v2673
  %2766 = vmatpush1.bf16.msra.mxu0 %v2672
  %2767 = vmatprep.subr.bf16.mxu0 %v2677
  %2768 = vmatpush1.bf16.msra.mxu0 %v2676
  %2769 = vmatprep.subr.bf16.mxu0 %v2681
  %2770 = vmatpush1.bf16.msra.mxu0 %v2680
  %2771 = vmatprep.subr.bf16.mxu0 0
  %2772 = vmatpush1.bf16.msra.mxu0 0
  %2773 = vmatprep.subr.bf16.mxu0 0
  %2774 = vmatpush1.bf16.msra.mxu0 0
  %2775 = vmatprep.subr.bf16.mxu0 0
  %2776 = vmatpush1.bf16.msra.mxu0 0
  %2777 = vmatprep.subr.bf16.mxu0 0
  %2778 = vmatpush1.bf16.msra.mxu0 0
  %2779 = vmatprep.subr.bf16.mxu0 0
  %2780 = vmatpush1.bf16.msra.mxu0 0
  %2781 = vmatprep.subr.bf16.mxu0 0
  %2782 = vmatpush1.bf16.msra.mxu0 0
  %2783 = vmatprep.subr.bf16.mxu0 0
  %2784 = vmatpush1.bf16.msra.mxu0 0
  %2785 = vmatprep.subr.bf16.mxu0 0
  %2786 = vmatpush1.bf16.msra.mxu0 0
  %2787 = vmatprep.mubr.bf16.mxu0 0
  %2788 = vmatmul.mubr.bf16.gmra.mrb[0].mxu0 %v2553
  %v2789 = vpop.f32.mrb[0].mxu0
  %v2790 = vadd.f32 0.0, %v2789
  %v2791 = vpop.f32.mrb[0].mxu0
  %v2792 = vadd.f32 0.0, %v2791
  %v2793 = vpop.f32.mrb[0].mxu0
  %v2794 = vpop.f32.mrb[0].mxu0
  %2795 = vdwg.mxu0
  %v2796 = vadd.f32 %v2515, %v2749
  %v2797 = vadd.f32 %v2516, %v2751
  %v2798 = vadd.f32 %v2517, %v2790
  %v2799 = vadd.f32 %v2518, %v2792
  %v2800 = vxor.u32 %v2796, 2147483648
  %v2801 = vxor.u32 %v2797, 2147483648
  %v2802 = vxor.u32 %v2798, 2147483648
  %v2803 = vmul.f32 %v2800, 1.442695
  %v2804 = vpow.pop %v2803
  %v2805 = vmul.f32 %v2801, 1.442695
  %v2806 = vpow.pop %v2805
  %v2807 = vmul.f32 %v2802, 1.442695
  %v2808 = vpow.pop %v2807
  %v2809 = vadd.f32 %v2804, 1.0
  %v2810 = vadd.f32 %v2806, 1.0
  %v2811 = vadd.f32 %v2808, 1.0
  %v2812 = vrcp.pop %v2809
  %v2813 = vmul.f32 1.0, %v2812
  %v2814 = vrcp.pop %v2810
  %v2815 = vmul.f32 1.0, %v2814
  %v2816 = vrcp.pop %v2811
  %v2817 = vmul.f32 1.0, %v2816
  %v2818 = vtanh.pop %v2799
  %v2819 = vmul.f32 %v2815, %v2520
  %v2820 = vmul.f32 %v2813, %v2818
  %v2821 = vadd.f32 %v2819, %v2820
  %v2822 = vtanh.pop %v2821
  %v2823 = vmul.f32 %v2817, %v2822
  %v2824 = vld [vmem:[#allocation5] sm:$0xff]
  %v2825 = vld [vmem:[#allocation5 + $0x8] sm:$0xff]
  %v2826 = vld [vmem:[#allocation5 + $0x10] sm:$0xff]
  %v2827 = vld [vmem:[#allocation5 + $0x18] sm:$0xff]
  %v2828 = vld [vmem:[#allocation6] sm:$0xff]
  %v2829 = vld [vmem:[#allocation7] sm:$0xff]
  %v2830 = vld [vmem:[%s5] sm:$0xff]
  %v2831 = vld [vmem:[%s5 + $0x8] sm:$0xff]
  %v2832 = vld [vmem:[%s5 + $0x10] sm:$0xff]
  %v2833 = vld [vmem:[%s5 + $0x18] sm:$0xff]
  %v2834 = vld [vmem:[%s5 + $0x20] sm:$0xff]
  %v2835 = vld [vmem:[%s5 + $0x28] sm:$0xff]
  %v2836 = vld [vmem:[%s5 + $0x30] sm:$0xff]
  %v2837 = vld [vmem:[%s5 + $0x38] sm:$0xff]
  %v2838 = vld [vmem:[%s5 + $0x40] sm:$0xff]
  %v2839 = vld [vmem:[%s5 + $0x48] sm:$0xff]
  %v2840 = vld [vmem:[%s5 + $0x50] sm:$0xff]
  %v2841 = vld [vmem:[%s5 + $0x58] sm:$0xff]
  %v2842 = vld [vmem:[%s5 + $0x60] sm:$0xff]
  %v2843 = vld [vmem:[%s5 + $0x68] sm:$0xff]
  %v2844 = vld [vmem:[%s5 + $0x70] sm:$0xff]
  %v2845 = vld [vmem:[%s5 + $0x78] sm:$0xff]
  %v2846 = vld [vmem:[%s5 + $0x80] sm:$0xff]
  %v2847 = vld [vmem:[%s5 + $0x88] sm:$0xff]
  %v2848 = vld [vmem:[%s5 + $0x90] sm:$0xff]
  %v2849 = vld [vmem:[%s5 + $0x98] sm:$0xff]
  %v2850 = vld [vmem:[%s5 + $0xa0] sm:$0xff]
  %v2851 = vld [vmem:[%s5 + $0xa8] sm:$0xff]
  %v2852 = vld [vmem:[%s5 + $0xb0] sm:$0xff]
  %v2853 = vld [vmem:[%s5 + $0xb8] sm:$0xff]
  %v2854 = vld [vmem:[%s5 + $0xc0] sm:$0xff]
  %v2855 = vld [vmem:[%s5 + $0xc8] sm:$0xff]
  %v2856 = vld [vmem:[%s5 + $0xd0] sm:$0xff]
  %v2857 = vld [vmem:[%s5 + $0xd8] sm:$0xff]
  %v2858 = vld [vmem:[%s5 + $0xe0] sm:$0xff]
  %v2859 = vld [vmem:[%s5 + $0xe8] sm:$0xff]
  %v2860 = vld [vmem:[%s5 + $0xf0] sm:$0xff]
  %v2861 = vld [vmem:[%s5 + $0xf8] sm:$0xff]
  %v2862 = vpack.c.bf16 %v2828, %v2828
  %v2895 = vunpack.c.l.b16 %v2830
  %v2896 = vunpack.c.h.b16 %v2830
  %v2897 = vunpack.c.l.b16 %v2831
  %v2898 = vunpack.c.h.b16 %v2831
  %v2899 = vunpack.c.l.b16 %v2832
  %v2900 = vunpack.c.h.b16 %v2832
  %v2901 = vunpack.c.l.b16 %v2833
  %v2902 = vunpack.c.h.b16 %v2833
  %v2903 = vunpack.c.l.b16 %v2834
  %v2904 = vunpack.c.h.b16 %v2834
  %v2905 = vunpack.c.l.b16 %v2835
  %v2906 = vunpack.c.h.b16 %v2835
  %v2907 = vunpack.c.l.b16 %v2836
  %v2908 = vunpack.c.h.b16 %v2836
  %v2909 = vunpack.c.l.b16 %v2837
  %v2910 = vunpack.c.h.b16 %v2837
  %v2911 = vunpack.c.l.b16 %v2838
  %v2912 = vunpack.c.h.b16 %v2838
  %v2913 = vunpack.c.l.b16 %v2839
  %v2914 = vunpack.c.h.b16 %v2839
  %v2915 = vunpack.c.l.b16 %v2840
  %v2916 = vunpack.c.h.b16 %v2840
  %v2917 = vunpack.c.l.b16 %v2841
  %v2918 = vunpack.c.h.b16 %v2841
  %v2919 = vunpack.c.l.b16 %v2842
  %v2920 = vunpack.c.h.b16 %v2842
  %v2921 = vunpack.c.l.b16 %v2843
  %v2922 = vunpack.c.h.b16 %v2843
  %v2923 = vunpack.c.l.b16 %v2844
  %v2924 = vunpack.c.h.b16 %v2844
  %v2925 = vunpack.c.l.b16 %v2845
  %v2926 = vunpack.c.h.b16 %v2845
  %v2927 = vunpack.c.l.b16 %v2846
  %v2928 = vunpack.c.h.b16 %v2846
  %v2929 = vunpack.c.l.b16 %v2847
  %v2930 = vunpack.c.h.b16 %v2847
  %v2931 = vunpack.c.l.b16 %v2848
  %v2932 = vunpack.c.h.b16 %v2848
  %v2933 = vunpack.c.l.b16 %v2849
  %v2934 = vunpack.c.h.b16 %v2849
  %v2935 = vunpack.c.l.b16 %v2850
  %v2936 = vunpack.c.h.b16 %v2850
  %v2937 = vunpack.c.l.b16 %v2851
  %v2938 = vunpack.c.h.b16 %v2851
  %v2939 = vunpack.c.l.b16 %v2852
  %v2940 = vunpack.c.h.b16 %v2852
  %v2941 = vunpack.c.l.b16 %v2853
  %v2942 = vunpack.c.h.b16 %v2853
  %v2943 = vunpack.c.l.b16 %v2854
  %v2944 = vunpack.c.h.b16 %v2854
  %v2945 = vunpack.c.l.b16 %v2855
  %v2946 = vunpack.c.h.b16 %v2855
  %v2947 = vunpack.c.l.b16 %v2856
  %v2948 = vunpack.c.h.b16 %v2856
  %v2949 = vunpack.c.l.b16 %v2857
  %v2950 = vunpack.c.h.b16 %v2857
  %v2951 = vunpack.c.l.b16 %v2858
  %v2952 = vunpack.c.h.b16 %v2858
  %v2953 = vunpack.c.l.b16 %v2859
  %v2954 = vunpack.c.h.b16 %v2859
  %v2955 = vunpack.c.l.b16 %v2860
  %v2956 = vunpack.c.h.b16 %v2860
  %v2957 = vunpack.c.l.b16 %v2861
  %v2958 = vunpack.c.h.b16 %v2861
  %v2959 = vpack.c.b16 %v2899, %v2895
  %v2960 = vpack.c.b16 %v2900, %v2896
  %v2961 = vpack.c.b16 %v2901, %v2897
  %v2962 = vpack.c.b16 %v2902, %v2898
  %v2963 = vpack.c.b16 %v2907, %v2903
  %v2964 = vpack.c.b16 %v2908, %v2904
  %v2965 = vpack.c.b16 %v2909, %v2905
  %v2966 = vpack.c.b16 %v2910, %v2906
  %v2967 = vpack.c.b16 %v2915, %v2911
  %v2968 = vpack.c.b16 %v2916, %v2912
  %v2969 = vpack.c.b16 %v2917, %v2913
  %v2970 = vpack.c.b16 %v2918, %v2914
  %v2971 = vpack.c.b16 %v2923, %v2919
  %v2972 = vpack.c.b16 %v2924, %v2920
  %v2973 = vpack.c.b16 %v2925, %v2921
  %v2974 = vpack.c.b16 %v2926, %v2922
  %v2975 = vpack.c.b16 %v2931, %v2927
  %v2976 = vpack.c.b16 %v2932, %v2928
  %v2977 = vpack.c.b16 %v2933, %v2929
  %v2978 = vpack.c.b16 %v2934, %v2930
  %v2979 = vpack.c.b16 %v2939, %v2935
  %v2980 = vpack.c.b16 %v2940, %v2936
  %v2981 = vpack.c.b16 %v2941, %v2937
  %v2982 = vpack.c.b16 %v2942, %v2938
  %v2983 = vpack.c.b16 %v2947, %v2943
  %v2984 = vpack.c.b16 %v2948, %v2944
  %v2985 = vpack.c.b16 %v2949, %v2945
  %v2986 = vpack.c.b16 %v2950, %v2946
  %v2987 = vpack.c.b16 %v2955, %v2951
  %v2988 = vpack.c.b16 %v2956, %v2952
  %v2989 = vpack.c.b16 %v2957, %v2953
  %v2990 = vpack.c.b16 %v2958, %v2954
  %3023 = vmatprep.subr.bf16.mxu0 %v2960
  %3024 = vmatpush1.bf16.msra.mxu0 %v2959
  %3025 = vmatprep.subr.bf16.mxu0 %v2964
  %3026 = vmatpush1.bf16.msra.mxu0 %v2963
  %3027 = vmatprep.subr.bf16.mxu0 %v2968
  %3028 = vmatpush1.bf16.msra.mxu0 %v2967
  %3029 = vmatprep.subr.bf16.mxu0 %v2972
  %3030 = vmatpush1.bf16.msra.mxu0 %v2971
  %3031 = vmatprep.subr.bf16.mxu0 %v2976
  %3032 = vmatpush1.bf16.msra.mxu0 %v2975
  %3033 = vmatprep.subr.bf16.mxu0 %v2980
  %3034 = vmatpush1.bf16.msra.mxu0 %v2979
  %3035 = vmatprep.subr.bf16.mxu0 %v2984
  %3036 = vmatpush1.bf16.msra.mxu0 %v2983
  %3037 = vmatprep.subr.bf16.mxu0 %v2988
  %3038 = vmatpush1.bf16.msra.mxu0 %v2987
  %3039 = vmatprep.subr.bf16.mxu0 0
  %3040 = vmatpush1.bf16.msra.mxu0 0
  %3041 = vmatprep.subr.bf16.mxu0 0
  %3042 = vmatpush1.bf16.msra.mxu0 0
  %3043 = vmatprep.subr.bf16.mxu0 0
  %3044 = vmatpush1.bf16.msra.mxu0 0
  %3045 = vmatprep.subr.bf16.mxu0 0
  %3046 = vmatpush1.bf16.msra.mxu0 0
  %3047 = vmatprep.subr.bf16.mxu0 0
  %3048 = vmatpush1.bf16.msra.mxu0 0
  %3049 = vmatprep.subr.bf16.mxu0 0
  %3050 = vmatpush1.bf16.msra.mxu0 0
  %3051 = vmatprep.subr.bf16.mxu0 0
  %3052 = vmatpush1.bf16.msra.mxu0 0
  %3053 = vmatprep.subr.bf16.mxu0 0
  %3054 = vmatpush1.bf16.msra.mxu0 0
  %3055 = vmatprep.mubr.bf16.mxu0 0
  %3056 = vmatmul.mubr.bf16.gmra.mrb[0].mxu0 %v2862
  %v3057 = vpop.f32.mrb[0].mxu0
  %v3058 = vadd.f32 0.0, %v3057
  %v3059 = vpop.f32.mrb[0].mxu0
  %v3060 = vadd.f32 0.0, %v3059
  %v3061 = vpop.f32.mrb[0].mxu0
  %v3062 = vpop.f32.mrb[0].mxu0
  %3063 = vdwg.mxu0
  %3064 = vmatprep.subr.bf16.mxu0 %v2962
  %3065 = vmatpush1.bf16.msra.mxu0 %v2961
  %3066 = vmatprep.subr.bf16.mxu0 %v2966
  %3067 = vmatpush1.bf16.msra.mxu0 %v2965
  %3068 = vmatprep.subr.bf16.mxu0 %v2970
  %3069 = vmatpush1.bf16.msra.mxu0 %v2969
  %3070 = vmatprep.subr.bf16.mxu0 %v2974
  %3071 = vmatpush1.bf16.msra.mxu0 %v2973
  %3072 = vmatprep.subr.bf16.mxu0 %v2978
  %3073 = vmatpush1.bf16.msra.mxu0 %v2977
  %3074 = vmatprep.subr.bf16.mxu0 %v2982
  %3075 = vmatpush1.bf16.msra.mxu0 %v2981
  %3076 = vmatprep.subr.bf16.mxu0 %v2986
  %3077 = vmatpush1.bf16.msra.mxu0 %v2985
  %3078 = vmatprep.subr.bf16.mxu0 %v2990
  %3079 = vmatpush1.bf16.msra.mxu0 %v2989
  %3080 = vmatprep.subr.bf16.mxu0 0
  %3081 = vmatpush1.bf16.msra.mxu0 0
  %3082 = vmatprep.subr.bf16.mxu0 0
  %3083 = vmatpush1.bf16.msra.mxu0 0
  %3084 = vmatprep.subr.bf16.mxu0 0
  %3085 = vmatpush1.bf16.msra.mxu0 0
  %3086 = vmatprep.subr.bf16.mxu0 0
  %3087 = vmatpush1.bf16.msra.mxu0 0
  %3088 = vmatprep.subr.bf16.mxu0 0
  %3089 = vmatpush1.bf16.msra.mxu0 0
  %3090 = vmatprep.subr.bf16.mxu0 0
  %3091 = vmatpush1.bf16.msra.mxu0 0
  %3092 = vmatprep.subr.bf16.mxu0 0
  %3093 = vmatpush1.bf16.msra.mxu0 0
  %3094 = vmatprep.subr.bf16.mxu0 0
  %3095 = vmatpush1.bf16.msra.mxu0 0
  %3096 = vmatprep.mubr.bf16.mxu0 0
  %3097 = vmatmul.mubr.bf16.gmra.mrb[0].mxu0 %v2862
  %v3098 = vpop.f32.mrb[0].mxu0
  %v3099 = vadd.f32 0.0, %v3098
  %v3100 = vpop.f32.mrb[0].mxu0
  %v3101 = vadd.f32 0.0, %v3100
  %v3102 = vpop.f32.mrb[0].mxu0
  %v3103 = vpop.f32.mrb[0].mxu0
  %3104 = vdwg.mxu0
  %v3105 = vadd.f32 %v2824, %v3058
  %v3106 = vadd.f32 %v2825, %v3060
  %v3107 = vadd.f32 %v2826, %v3099
  %v3108 = vadd.f32 %v2827, %v3101
  %v3109 = vxor.u32 %v3105, 2147483648
  %v3110 = vxor.u32 %v3106, 2147483648
  %v3111 = vxor.u32 %v3107, 2147483648
  %v3112 = vmul.f32 %v3109, 1.442695
  %v3113 = vpow.pop %v3112
  %v3114 = vmul.f32 %v3110, 1.442695
  %v3115 = vpow.pop %v3114
  %v3116 = vmul.f32 %v3111, 1.442695
  %v3117 = vpow.pop %v3116
  %v3118 = vadd.f32 %v3113, 1.0
  %v3119 = vadd.f32 %v3115, 1.0
  %v3120 = vadd.f32 %v3117, 1.0
  %v3121 = vrcp.pop %v3118
  %v3122 = vmul.f32 1.0, %v3121
  %v3123 = vrcp.pop %v3119
  %v3124 = vmul.f32 1.0, %v3123
  %v3125 = vrcp.pop %v3120
  %v3126 = vmul.f32 1.0, %v3125
  %v3127 = vtanh.pop %v3108
  %v3128 = vmul.f32 %v3124, %v2829
  %v3129 = vmul.f32 %v3122, %v3127
  %v3130 = vadd.f32 %v3128, %v3129
  %v3131 = vtanh.pop %v3130
  %v3132 = vmul.f32 %v3126, %v3131
  %3133 = vst [vmem:[#allocation3] sm:$0xff] %v2823
  %3134 = vst [vmem:[#allocation4] sm:$0xff] %v2821
  %3135 = vst [vmem:[#allocation6] sm:$0xff] %v3132
  %3136 = vst [vmem:[#allocation7] sm:$0xff] %v3130
  %s3137 = scalar_lea.vmem %s7, 24
  %3138 = vst [vmem:[%s3137] sm:$0xff] %v2823
  %s3139 = scalar_lea.vmem %s8, 24
  %3140 = vst [vmem:[%s3139] sm:$0xff] %v3132
  %v3141 = vld [vmem:[#allocation2] sm:$0xff]
  %v3142 = vld [vmem:[#allocation2 + $0x8] sm:$0xff]
  %v3143 = vld [vmem:[#allocation2 + $0x10] sm:$0xff]
  %v3144 = vld [vmem:[#allocation2 + $0x18] sm:$0xff]
  %v3145 = vld [vmem:[#allocation3] sm:$0xff]
  %v3146 = vld [vmem:[#allocation4] sm:$0xff]
  %v3147 = vld [vmem:[%s2] sm:$0xff]
  %v3148 = vld [vmem:[%s2 + $0x8] sm:$0xff]
  %v3149 = vld [vmem:[%s2 + $0x10] sm:$0xff]
  %v3150 = vld [vmem:[%s2 + $0x18] sm:$0xff]
  %v3151 = vld [vmem:[%s2 + $0x20] sm:$0xff]
  %v3152 = vld [vmem:[%s2 + $0x28] sm:$0xff]
  %v3153 = vld [vmem:[%s2 + $0x30] sm:$0xff]
  %v3154 = vld [vmem:[%s2 + $0x38] sm:$0xff]
  %v3155 = vld [vmem:[%s2 + $0x40] sm:$0xff]
  %v3156 = vld [vmem:[%s2 + $0x48] sm:$0xff]
  %v3157 = vld [vmem:[%s2 + $0x50] sm:$0xff]
  %v3158 = vld [vmem:[%s2 + $0x58] sm:$0xff]
  %v3159 = vld [vmem:[%s2 + $0x60] sm:$0xff]
  %v3160 = vld [vmem:[%s2 + $0x68] sm:$0xff]
  %v3161 = vld [vmem:[%s2 + $0x70] sm:$0xff]
  %v3162 = vld [vmem:[%s2 + $0x78] sm:$0xff]
  %v3163 = vld [vmem:[%s2 + $0x80] sm:$0xff]
  %v3164 = vld [vmem:[%s2 + $0x88] sm:$0xff]
  %v3165 = vld [vmem:[%s2 + $0x90] sm:$0xff]
  %v3166 = vld [vmem:[%s2 + $0x98] sm:$0xff]
  %v3167 = vld [vmem:[%s2 + $0xa0] sm:$0xff]
  %v3168 = vld [vmem:[%s2 + $0xa8] sm:$0xff]
  %v3169 = vld [vmem:[%s2 + $0xb0] sm:$0xff]
  %v3170 = vld [vmem:[%s2 + $0xb8] sm:$0xff]
  %v3171 = vld [vmem:[%s2 + $0xc0] sm:$0xff]
  %v3172 = vld [vmem:[%s2 + $0xc8] sm:$0xff]
  %v3173 = vld [vmem:[%s2 + $0xd0] sm:$0xff]
  %v3174 = vld [vmem:[%s2 + $0xd8] sm:$0xff]
  %v3175 = vld [vmem:[%s2 + $0xe0] sm:$0xff]
  %v3176 = vld [vmem:[%s2 + $0xe8] sm:$0xff]
  %v3177 = vld [vmem:[%s2 + $0xf0] sm:$0xff]
  %v3178 = vld [vmem:[%s2 + $0xf8] sm:$0xff]
  %v3179 = vpack.c.bf16 %v3145, %v3145
  %v3212 = vunpack.c.l.b16 %v3147
  %v3213 = vunpack.c.h.b16 %v3147
  %v3214 = vunpack.c.l.b16 %v3148
  %v3215 = vunpack.c.h.b16 %v3148
  %v3216 = vunpack.c.l.b16 %v3149
  %v3217 = vunpack.c.h.b16 %v3149
  %v3218 = vunpack.c.l.b16 %v3150
  %v3219 = vunpack.c.h.b16 %v3150
  %v3220 = vunpack.c.l.b16 %v3151
  %v3221 = vunpack.c.h.b16 %v3151
  %v3222 = vunpack.c.l.b16 %v3152
  %v3223 = vunpack.c.h.b16 %v3152
  %v3224 = vunpack.c.l.b16 %v3153
  %v3225 = vunpack.c.h.b16 %v3153
  %v3226 = vunpack.c.l.b16 %v3154
  %v3227 = vunpack.c.h.b16 %v3154
  %v3228 = vunpack.c.l.b16 %v3155
  %v3229 = vunpack.c.h.b16 %v3155
  %v3230 = vunpack.c.l.b16 %v3156
  %v3231 = vunpack.c.h.b16 %v3156
  %v3232 = vunpack.c.l.b16 %v3157
  %v3233 = vunpack.c.h.b16 %v3157
  %v3234 = vunpack.c.l.b16 %v3158
  %v3235 = vunpack.c.h.b16 %v3158
  %v3236 = vunpack.c.l.b16 %v3159
  %v3237 = vunpack.c.h.b16 %v3159
  %v3238 = vunpack.c.l.b16 %v3160
  %v3239 = vunpack.c.h.b16 %v3160
  %v3240 = vunpack.c.l.b16 %v3161
  %v3241 = vunpack.c.h.b16 %v3161
  %v3242 = vunpack.c.l.b16 %v3162
  %v3243 = vunpack.c.h.b16 %v3162
  %v3244 = vunpack.c.l.b16 %v3163
  %v3245 = vunpack.c.h.b16 %v3163
  %v3246 = vunpack.c.l.b16 %v3164
  %v3247 = vunpack.c.h.b16 %v3164
  %v3248 = vunpack.c.l.b16 %v3165
  %v3249 = vunpack.c.h.b16 %v3165
  %v3250 = vunpack.c.l.b16 %v3166
  %v3251 = vunpack.c.h.b16 %v3166
  %v3252 = vunpack.c.l.b16 %v3167
  %v3253 = vunpack.c.h.b16 %v3167
  %v3254 = vunpack.c.l.b16 %v3168
  %v3255 = vunpack.c.h.b16 %v3168
  %v3256 = vunpack.c.l.b16 %v3169
  %v3257 = vunpack.c.h.b16 %v3169
  %v3258 = vunpack.c.l.b16 %v3170
  %v3259 = vunpack.c.h.b16 %v3170
  %v3260 = vunpack.c.l.b16 %v3171
  %v3261 = vunpack.c.h.b16 %v3171
  %v3262 = vunpack.c.l.b16 %v3172
  %v3263 = vunpack.c.h.b16 %v3172
  %v3264 = vunpack.c.l.b16 %v3173
  %v3265 = vunpack.c.h.b16 %v3173
  %v3266 = vunpack.c.l.b16 %v3174
  %v3267 = vunpack.c.h.b16 %v3174
  %v3268 = vunpack.c.l.b16 %v3175
  %v3269 = vunpack.c.h.b16 %v3175
  %v3270 = vunpack.c.l.b16 %v3176
  %v3271 = vunpack.c.h.b16 %v3176
  %v3272 = vunpack.c.l.b16 %v3177
  %v3273 = vunpack.c.h.b16 %v3177
  %v3274 = vunpack.c.l.b16 %v3178
  %v3275 = vunpack.c.h.b16 %v3178
  %v3276 = vpack.c.b16 %v3216, %v3212
  %v3277 = vpack.c.b16 %v3217, %v3213
  %v3278 = vpack.c.b16 %v3218, %v3214
  %v3279 = vpack.c.b16 %v3219, %v3215
  %v3280 = vpack.c.b16 %v3224, %v3220
  %v3281 = vpack.c.b16 %v3225, %v3221
  %v3282 = vpack.c.b16 %v3226, %v3222
  %v3283 = vpack.c.b16 %v3227, %v3223
  %v3284 = vpack.c.b16 %v3232, %v3228
  %v3285 = vpack.c.b16 %v3233, %v3229
  %v3286 = vpack.c.b16 %v3234, %v3230
  %v3287 = vpack.c.b16 %v3235, %v3231
  %v3288 = vpack.c.b16 %v3240, %v3236
  %v3289 = vpack.c.b16 %v3241, %v3237
  %v3290 = vpack.c.b16 %v3242, %v3238
  %v3291 = vpack.c.b16 %v3243, %v3239
  %v3292 = vpack.c.b16 %v3248, %v3244
  %v3293 = vpack.c.b16 %v3249, %v3245
  %v3294 = vpack.c.b16 %v3250, %v3246
  %v3295 = vpack.c.b16 %v3251, %v3247
  %v3296 = vpack.c.b16 %v3256, %v3252
  %v3297 = vpack.c.b16 %v3257, %v3253
  %v3298 = vpack.c.b16 %v3258, %v3254
  %v3299 = vpack.c.b16 %v3259, %v3255
  %v3300 = vpack.c.b16 %v3264, %v3260
  %v3301 = vpack.c.b16 %v3265, %v3261
  %v3302 = vpack.c.b16 %v3266, %v3262
  %v3303 = vpack.c.b16 %v3267, %v3263
  %v3304 = vpack.c.b16 %v3272, %v3268
  %v3305 = vpack.c.b16 %v3273, %v3269
  %v3306 = vpack.c.b16 %v3274, %v3270
  %v3307 = vpack.c.b16 %v3275, %v3271
  %3340 = vmatprep.subr.bf16.mxu0 %v3277
  %3341 = vmatpush1.bf16.msra.mxu0 %v3276
  %3342 = vmatprep.subr.bf16.mxu0 %v3281
  %3343 = vmatpush1.bf16.msra.mxu0 %v3280
  %3344 = vmatprep.subr.bf16.mxu0 %v3285
  %3345 = vmatpush1.bf16.msra.mxu0 %v3284
  %3346 = vmatprep.subr.bf16.mxu0 %v3289
  %3347 = vmatpush1.bf16.msra.mxu0 %v3288
  %3348 = vmatprep.subr.bf16.mxu0 %v3293
  %3349 = vmatpush1.bf16.msra.mxu0 %v3292
  %3350 = vmatprep.subr.bf16.mxu0 %v3297
  %3351 = vmatpush1.bf16.msra.mxu0 %v3296
  %3352 = vmatprep.subr.bf16.mxu0 %v3301
  %3353 = vmatpush1.bf16.msra.mxu0 %v3300
  %3354 = vmatprep.subr.bf16.mxu0 %v3305
  %3355 = vmatpush1.bf16.msra.mxu0 %v3304
  %3356 = vmatprep.subr.bf16.mxu0 0
  %3357 = vmatpush1.bf16.msra.mxu0 0
  %3358 = vmatprep.subr.bf16.mxu0 0
  %3359 = vmatpush1.bf16.msra.mxu0 0
  %3360 = vmatprep.subr.bf16.mxu0 0
  %3361 = vmatpush1.bf16.msra.mxu0 0
  %3362 = vmatprep.subr.bf16.mxu0 0
  %3363 = vmatpush1.bf16.msra.mxu0 0
  %3364 = vmatprep.subr.bf16.mxu0 0
  %3365 = vmatpush1.bf16.msra.mxu0 0
  %3366 = vmatprep.subr.bf16.mxu0 0
  %3367 = vmatpush1.bf16.msra.mxu0 0
  %3368 = vmatprep.subr.bf16.mxu0 0
  %3369 = vmatpush1.bf16.msra.mxu0 0
  %3370 = vmatprep.subr.bf16.mxu0 0
  %3371 = vmatpush1.bf16.msra.mxu0 0
  %3372 = vmatprep.mubr.bf16.mxu0 0
  %3373 = vmatmul.mubr.bf16.gmra.mrb[0].mxu0 %v3179
  %v3374 = vpop.f32.mrb[0].mxu0
  %v3375 = vadd.f32 0.0, %v3374
  %v3376 = vpop.f32.mrb[0].mxu0
  %v3377 = vadd.f32 0.0, %v3376
  %v3378 = vpop.f32.mrb[0].mxu0
  %v3379 = vpop.f32.mrb[0].mxu0
  %3380 = vdwg.mxu0
  %3381 = vmatprep.subr.bf16.mxu0 %v3279
  %3382 = vmatpush1.bf16.msra.mxu0 %v3278
  %3383 = vmatprep.subr.bf16.mxu0 %v3283
  %3384 = vmatpush1.bf16.msra.mxu0 %v3282
  %3385 = vmatprep.subr.bf16.mxu0 %v3287
  %3386 = vmatpush1.bf16.msra.mxu0 %v3286
  %3387 = vmatprep.subr.bf16.mxu0 %v3291
  %3388 = vmatpush1.bf16.msra.mxu0 %v3290
  %3389 = vmatprep.subr.bf16.mxu0 %v3295
  %3390 = vmatpush1.bf16.msra.mxu0 %v3294
  %3391 = vmatprep.subr.bf16.mxu0 %v3299
  %3392 = vmatpush1.bf16.msra.mxu0 %v3298
  %3393 = vmatprep.subr.bf16.mxu0 %v3303
  %3394 = vmatpush1.bf16.msra.mxu0 %v3302
  %3395 = vmatprep.subr.bf16.mxu0 %v3307
  %3396 = vmatpush1.bf16.msra.mxu0 %v3306
  %3397 = vmatprep.subr.bf16.mxu0 0
  %3398 = vmatpush1.bf16.msra.mxu0 0
  %3399 = vmatprep.subr.bf16.mxu0 0
  %3400 = vmatpush1.bf16.msra.mxu0 0
  %3401 = vmatprep.subr.bf16.mxu0 0
  %3402 = vmatpush1.bf16.msra.mxu0 0
  %3403 = vmatprep.subr.bf16.mxu0 0
  %3404 = vmatpush1.bf16.msra.mxu0 0
  %3405 = vmatprep.subr.bf16.mxu0 0
  %3406 = vmatpush1.bf16.msra.mxu0 0
  %3407 = vmatprep.subr.bf16.mxu0 0
  %3408 = vmatpush1.bf16.msra.mxu0 0
  %3409 = vmatprep.subr.bf16.mxu0 0
  %3410 = vmatpush1.bf16.msra.mxu0 0
  %3411 = vmatprep.subr.bf16.mxu0 0
  %3412 = vmatpush1.bf16.msra.mxu0 0
  %3413 = vmatprep.mubr.bf16.mxu0 0
  %3414 = vmatmul.mubr.bf16.gmra.mrb[0].mxu0 %v3179
  %v3415 = vpop.f32.mrb[0].mxu0
  %v3416 = vadd.f32 0.0, %v3415
  %v3417 = vpop.f32.mrb[0].mxu0
  %v3418 = vadd.f32 0.0, %v3417
  %v3419 = vpop.f32.mrb[0].mxu0
  %v3420 = vpop.f32.mrb[0].mxu0
  %3421 = vdwg.mxu0
  %v3422 = vadd.f32 %v3141, %v3375
  %v3423 = vadd.f32 %v3142, %v3377
  %v3424 = vadd.f32 %v3143, %v3416
  %v3425 = vadd.f32 %v3144, %v3418
  %v3426 = vxor.u32 %v3422, 2147483648
  %v3427 = vxor.u32 %v3423, 2147483648
  %v3428 = vxor.u32 %v3424, 2147483648
  %v3429 = vmul.f32 %v3426, 1.442695
  %v3430 = vpow.pop %v3429
  %v3431 = vmul.f32 %v3427, 1.442695
  %v3432 = vpow.pop %v3431
  %v3433 = vmul.f32 %v3428, 1.442695
  %v3434 = vpow.pop %v3433
  %v3435 = vadd.f32 %v3430, 1.0
  %v3436 = vadd.f32 %v3432, 1.0
  %v3437 = vadd.f32 %v3434, 1.0
  %v3438 = vrcp.pop %v3435
  %v3439 = vmul.f32 1.0, %v3438
  %v3440 = vrcp.pop %v3436
  %v3441 = vmul.f32 1.0, %v3440
  %v3442 = vrcp.pop %v3437
  %v3443 = vmul.f32 1.0, %v3442
  %v3444 = vtanh.pop %v3425
  %v3445 = vmul.f32 %v3441, %v3146
  %v3446 = vmul.f32 %v3439, %v3444
  %v3447 = vadd.f32 %v3445, %v3446
  %v3448 = vtanh.pop %v3447
  %v3449 = vmul.f32 %v3443, %v3448
  %v3450 = vld [vmem:[#allocation5] sm:$0xff]
  %v3451 = vld [vmem:[#allocation5 + $0x8] sm:$0xff]
  %v3452 = vld [vmem:[#allocation5 + $0x10] sm:$0xff]
  %v3453 = vld [vmem:[#allocation5 + $0x18] sm:$0xff]
  %v3454 = vld [vmem:[#allocation6] sm:$0xff]
  %v3455 = vld [vmem:[#allocation7] sm:$0xff]
  %v3456 = vld [vmem:[%s5] sm:$0xff]
  %v3457 = vld [vmem:[%s5 + $0x8] sm:$0xff]
  %v3458 = vld [vmem:[%s5 + $0x10] sm:$0xff]
  %v3459 = vld [vmem:[%s5 + $0x18] sm:$0xff]
  %v3460 = vld [vmem:[%s5 + $0x20] sm:$0xff]
  %v3461 = vld [vmem:[%s5 + $0x28] sm:$0xff]
  %v3462 = vld [vmem:[%s5 + $0x30] sm:$0xff]
  %v3463 = vld [vmem:[%s5 + $0x38] sm:$0xff]
  %v3464 = vld [vmem:[%s5 + $0x40] sm:$0xff]
  %v3465 = vld [vmem:[%s5 + $0x48] sm:$0xff]
  %v3466 = vld [vmem:[%s5 + $0x50] sm:$0xff]
  %v3467 = vld [vmem:[%s5 + $0x58] sm:$0xff]
  %v3468 = vld [vmem:[%s5 + $0x60] sm:$0xff]
  %v3469 = vld [vmem:[%s5 + $0x68] sm:$0xff]
  %v3470 = vld [vmem:[%s5 + $0x70] sm:$0xff]
  %v3471 = vld [vmem:[%s5 + $0x78] sm:$0xff]
  %v3472 = vld [vmem:[%s5 + $0x80] sm:$0xff]
  %v3473 = vld [vmem:[%s5 + $0x88] sm:$0xff]
  %v3474 = vld [vmem:[%s5 + $0x90] sm:$0xff]
  %v3475 = vld [vmem:[%s5 + $0x98] sm:$0xff]
  %v3476 = vld [vmem:[%s5 + $0xa0] sm:$0xff]
  %v3477 = vld [vmem:[%s5 + $0xa8] sm:$0xff]
  %v3478 = vld [vmem:[%s5 + $0xb0] sm:$0xff]
  %v3479 = vld [vmem:[%s5 + $0xb8] sm:$0xff]
  %v3480 = vld [vmem:[%s5 + $0xc0] sm:$0xff]
  %v3481 = vld [vmem:[%s5 + $0xc8] sm:$0xff]
  %v3482 = vld [vmem:[%s5 + $0xd0] sm:$0xff]
  %v3483 = vld [vmem:[%s5 + $0xd8] sm:$0xff]
  %v3484 = vld [vmem:[%s5 + $0xe0] sm:$0xff]
  %v3485 = vld [vmem:[%s5 + $0xe8] sm:$0xff]
  %v3486 = vld [vmem:[%s5 + $0xf0] sm:$0xff]
  %v3487 = vld [vmem:[%s5 + $0xf8] sm:$0xff]
  %v3488 = vpack.c.bf16 %v3454, %v3454
  %v3521 = vunpack.c.l.b16 %v3456
  %v3522 = vunpack.c.h.b16 %v3456
  %v3523 = vunpack.c.l.b16 %v3457
  %v3524 = vunpack.c.h.b16 %v3457
  %v3525 = vunpack.c.l.b16 %v3458
  %v3526 = vunpack.c.h.b16 %v3458
  %v3527 = vunpack.c.l.b16 %v3459
  %v3528 = vunpack.c.h.b16 %v3459
  %v3529 = vunpack.c.l.b16 %v3460
  %v3530 = vunpack.c.h.b16 %v3460
  %v3531 = vunpack.c.l.b16 %v3461
  %v3532 = vunpack.c.h.b16 %v3461
  %v3533 = vunpack.c.l.b16 %v3462
  %v3534 = vunpack.c.h.b16 %v3462
  %v3535 = vunpack.c.l.b16 %v3463
  %v3536 = vunpack.c.h.b16 %v3463
  %v3537 = vunpack.c.l.b16 %v3464
  %v3538 = vunpack.c.h.b16 %v3464
  %v3539 = vunpack.c.l.b16 %v3465
  %v3540 = vunpack.c.h.b16 %v3465
  %v3541 = vunpack.c.l.b16 %v3466
  %v3542 = vunpack.c.h.b16 %v3466
  %v3543 = vunpack.c.l.b16 %v3467
  %v3544 = vunpack.c.h.b16 %v3467
  %v3545 = vunpack.c.l.b16 %v3468
  %v3546 = vunpack.c.h.b16 %v3468
  %v3547 = vunpack.c.l.b16 %v3469
  %v3548 = vunpack.c.h.b16 %v3469
  %v3549 = vunpack.c.l.b16 %v3470
  %v3550 = vunpack.c.h.b16 %v3470
  %v3551 = vunpack.c.l.b16 %v3471
  %v3552 = vunpack.c.h.b16 %v3471
  %v3553 = vunpack.c.l.b16 %v3472
  %v3554 = vunpack.c.h.b16 %v3472
  %v3555 = vunpack.c.l.b16 %v3473
  %v3556 = vunpack.c.h.b16 %v3473
  %v3557 = vunpack.c.l.b16 %v3474
  %v3558 = vunpack.c.h.b16 %v3474
  %v3559 = vunpack.c.l.b16 %v3475
  %v3560 = vunpack.c.h.b16 %v3475
  %v3561 = vunpack.c.l.b16 %v3476
  %v3562 = vunpack.c.h.b16 %v3476
  %v3563 = vunpack.c.l.b16 %v3477
  %v3564 = vunpack.c.h.b16 %v3477
  %v3565 = vunpack.c.l.b16 %v3478
  %v3566 = vunpack.c.h.b16 %v3478
  %v3567 = vunpack.c.l.b16 %v3479
  %v3568 = vunpack.c.h.b16 %v3479
  %v3569 = vunpack.c.l.b16 %v3480
  %v3570 = vunpack.c.h.b16 %v3480
  %v3571 = vunpack.c.l.b16 %v3481
  %v3572 = vunpack.c.h.b16 %v3481
  %v3573 = vunpack.c.l.b16 %v3482
  %v3574 = vunpack.c.h.b16 %v3482
  %v3575 = vunpack.c.l.b16 %v3483
  %v3576 = vunpack.c.h.b16 %v3483
  %v3577 = vunpack.c.l.b16 %v3484
  %v3578 = vunpack.c.h.b16 %v3484
  %v3579 = vunpack.c.l.b16 %v3485
  %v3580 = vunpack.c.h.b16 %v3485
  %v3581 = vunpack.c.l.b16 %v3486
  %v3582 = vunpack.c.h.b16 %v3486
  %v3583 = vunpack.c.l.b16 %v3487
  %v3584 = vunpack.c.h.b16 %v3487
  %v3585 = vpack.c.b16 %v3525, %v3521
  %v3586 = vpack.c.b16 %v3526, %v3522
  %v3587 = vpack.c.b16 %v3527, %v3523
  %v3588 = vpack.c.b16 %v3528, %v3524
  %v3589 = vpack.c.b16 %v3533, %v3529
  %v3590 = vpack.c.b16 %v3534, %v3530
  %v3591 = vpack.c.b16 %v3535, %v3531
  %v3592 = vpack.c.b16 %v3536, %v3532
  %v3593 = vpack.c.b16 %v3541, %v3537
  %v3594 = vpack.c.b16 %v3542, %v3538
  %v3595 = vpack.c.b16 %v3543, %v3539
  %v3596 = vpack.c.b16 %v3544, %v3540
  %v3597 = vpack.c.b16 %v3549, %v3545
  %v3598 = vpack.c.b16 %v3550, %v3546
  %v3599 = vpack.c.b16 %v3551, %v3547
  %v3600 = vpack.c.b16 %v3552, %v3548
  %v3601 = vpack.c.b16 %v3557, %v3553
  %v3602 = vpack.c.b16 %v3558, %v3554
  %v3603 = vpack.c.b16 %v3559, %v3555
  %v3604 = vpack.c.b16 %v3560, %v3556
  %v3605 = vpack.c.b16 %v3565, %v3561
  %v3606 = vpack.c.b16 %v3566, %v3562
  %v3607 = vpack.c.b16 %v3567, %v3563
  %v3608 = vpack.c.b16 %v3568, %v3564
  %v3609 = vpack.c.b16 %v3573, %v3569
  %v3610 = vpack.c.b16 %v3574, %v3570
  %v3611 = vpack.c.b16 %v3575, %v3571
  %v3612 = vpack.c.b16 %v3576, %v3572
  %v3613 = vpack.c.b16 %v3581, %v3577
  %v3614 = vpack.c.b16 %v3582, %v3578
  %v3615 = vpack.c.b16 %v3583, %v3579
  %v3616 = vpack.c.b16 %v3584, %v3580
  %3649 = vmatprep.subr.bf16.mxu0 %v3586
  %3650 = vmatpush1.bf16.msra.mxu0 %v3585
  %3651 = vmatprep.subr.bf16.mxu0 %v3590
  %3652 = vmatpush1.bf16.msra.mxu0 %v3589
  %3653 = vmatprep.subr.bf16.mxu0 %v3594
  %3654 = vmatpush1.bf16.msra.mxu0 %v3593
  %3655 = vmatprep.subr.bf16.mxu0 %v3598
  %3656 = vmatpush1.bf16.msra.mxu0 %v3597
  %3657 = vmatprep.subr.bf16.mxu0 %v3602
  %3658 = vmatpush1.bf16.msra.mxu0 %v3601
  %3659 = vmatprep.subr.bf16.mxu0 %v3606
  %3660 = vmatpush1.bf16.msra.mxu0 %v3605
  %3661 = vmatprep.subr.bf16.mxu0 %v3610
  %3662 = vmatpush1.bf16.msra.mxu0 %v3609
  %3663 = vmatprep.subr.bf16.mxu0 %v3614
  %3664 = vmatpush1.bf16.msra.mxu0 %v3613
  %3665 = vmatprep.subr.bf16.mxu0 0
  %3666 = vmatpush1.bf16.msra.mxu0 0
  %3667 = vmatprep.subr.bf16.mxu0 0
  %3668 = vmatpush1.bf16.msra.mxu0 0
  %3669 = vmatprep.subr.bf16.mxu0 0
  %3670 = vmatpush1.bf16.msra.mxu0 0
  %3671 = vmatprep.subr.bf16.mxu0 0
  %3672 = vmatpush1.bf16.msra.mxu0 0
  %3673 = vmatprep.subr.bf16.mxu0 0
  %3674 = vmatpush1.bf16.msra.mxu0 0
  %3675 = vmatprep.subr.bf16.mxu0 0
  %3676 = vmatpush1.bf16.msra.mxu0 0
  %3677 = vmatprep.subr.bf16.mxu0 0
  %3678 = vmatpush1.bf16.msra.mxu0 0
  %3679 = vmatprep.subr.bf16.mxu0 0
  %3680 = vmatpush1.bf16.msra.mxu0 0
  %3681 = vmatprep.mubr.bf16.mxu0 0
  %3682 = vmatmul.mubr.bf16.gmra.mrb[0].mxu0 %v3488
  %v3683 = vpop.f32.mrb[0].mxu0
  %v3684 = vadd.f32 0.0, %v3683
  %v3685 = vpop.f32.mrb[0].mxu0
  %v3686 = vadd.f32 0.0, %v3685
  %v3687 = vpop.f32.mrb[0].mxu0
  %v3688 = vpop.f32.mrb[0].mxu0
  %3689 = vdwg.mxu0
  %3690 = vmatprep.subr.bf16.mxu0 %v3588
  %3691 = vmatpush1.bf16.msra.mxu0 %v3587
  %3692 = vmatprep.subr.bf16.mxu0 %v3592
  %3693 = vmatpush1.bf16.msra.mxu0 %v3591
  %3694 = vmatprep.subr.bf16.mxu0 %v3596
  %3695 = vmatpush1.bf16.msra.mxu0 %v3595
  %3696 = vmatprep.subr.bf16.mxu0 %v3600
  %3697 = vmatpush1.bf16.msra.mxu0 %v3599
  %3698 = vmatprep.subr.bf16.mxu0 %v3604
  %3699 = vmatpush1.bf16.msra.mxu0 %v3603
  %3700 = vmatprep.subr.bf16.mxu0 %v3608
  %3701 = vmatpush1.bf16.msra.mxu0 %v3607
  %3702 = vmatprep.subr.bf16.mxu0 %v3612
  %3703 = vmatpush1.bf16.msra.mxu0 %v3611
  %3704 = vmatprep.subr.bf16.mxu0 %v3616
  %3705 = vmatpush1.bf16.msra.mxu0 %v3615
  %3706 = vmatprep.subr.bf16.mxu0 0
  %3707 = vmatpush1.bf16.msra.mxu0 0
  %3708 = vmatprep.subr.bf16.mxu0 0
  %3709 = vmatpush1.bf16.msra.mxu0 0
  %3710 = vmatprep.subr.bf16.mxu0 0
  %3711 = vmatpush1.bf16.msra.mxu0 0
  %3712 = vmatprep.subr.bf16.mxu0 0
  %3713 = vmatpush1.bf16.msra.mxu0 0
  %3714 = vmatprep.subr.bf16.mxu0 0
  %3715 = vmatpush1.bf16.msra.mxu0 0
  %3716 = vmatprep.subr.bf16.mxu0 0
  %3717 = vmatpush1.bf16.msra.mxu0 0
  %3718 = vmatprep.subr.bf16.mxu0 0
  %3719 = vmatpush1.bf16.msra.mxu0 0
  %3720 = vmatprep.subr.bf16.mxu0 0
  %3721 = vmatpush1.bf16.msra.mxu0 0
  %3722 = vmatprep.mubr.bf16.mxu0 0
  %3723 = vmatmul.mubr.bf16.gmra.mrb[0].mxu0 %v3488
  %v3724 = vpop.f32.mrb[0].mxu0
  %v3725 = vadd.f32 0.0, %v3724
  %v3726 = vpop.f32.mrb[0].mxu0
  %v3727 = vadd.f32 0.0, %v3726
  %v3728 = vpop.f32.mrb[0].mxu0
  %v3729 = vpop.f32.mrb[0].mxu0
  %3730 = vdwg.mxu0
  %v3731 = vadd.f32 %v3450, %v3684
  %v3732 = vadd.f32 %v3451, %v3686
  %v3733 = vadd.f32 %v3452, %v3725
  %v3734 = vadd.f32 %v3453, %v3727
  %v3735 = vxor.u32 %v3731, 2147483648
  %v3736 = vxor.u32 %v3732, 2147483648
  %v3737 = vxor.u32 %v3733, 2147483648
  %v3738 = vmul.f32 %v3735, 1.442695
  %v3739 = vpow.pop %v3738
  %v3740 = vmul.f32 %v3736, 1.442695
  %v3741 = vpow.pop %v3740
  %v3742 = vmul.f32 %v3737, 1.442695
  %v3743 = vpow.pop %v3742
  %v3744 = vadd.f32 %v3739, 1.0
  %v3745 = vadd.f32 %v3741, 1.0
  %v3746 = vadd.f32 %v3743, 1.0
  %v3747 = vrcp.pop %v3744
  %v3748 = vmul.f32 1.0, %v3747
  %v3749 = vrcp.pop %v3745
  %v3750 = vmul.f32 1.0, %v3749
  %v3751 = vrcp.pop %v3746
  %v3752 = vmul.f32 1.0, %v3751
  %v3753 = vtanh.pop %v3734
  %v3754 = vmul.f32 %v3750, %v3455
  %v3755 = vmul.f32 %v3748, %v3753
  %v3756 = vadd.f32 %v3754, %v3755
  %v3757 = vtanh.pop %v3756
  %v3758 = vmul.f32 %v3752, %v3757
  %3759 = vst [vmem:[#allocation3] sm:$0xff] %v3449
  %3760 = vst [vmem:[#allocation4] sm:$0xff] %v3447
  %3761 = vst [vmem:[#allocation6] sm:$0xff] %v3758
  %3762 = vst [vmem:[#allocation7] sm:$0xff] %v3756
  %s3763 = scalar_lea.vmem %s7, 32
  %3764 = vst [vmem:[%s3763] sm:$0xff] %v3449
  %s3765 = scalar_lea.vmem %s8, 32
  %3766 = vst [vmem:[%s3765] sm:$0xff] %v3758
  %v3767 = vld [vmem:[#allocation2] sm:$0xff]
  %v3768 = vld [vmem:[#allocation2 + $0x8] sm:$0xff]
  %v3769 = vld [vmem:[#allocation2 + $0x10] sm:$0xff]
  %v3770 = vld [vmem:[#allocation2 + $0x18] sm:$0xff]
  %v3771 = vld [vmem:[#allocation3] sm:$0xff]
  %v3772 = vld [vmem:[#allocation4] sm:$0xff]
  %v3773 = vld [vmem:[%s2] sm:$0xff]
  %v3774 = vld [vmem:[%s2 + $0x8] sm:$0xff]
  %v3775 = vld [vmem:[%s2 + $0x10] sm:$0xff]
  %v3776 = vld [vmem:[%s2 + $0x18] sm:$0xff]
  %v3777 = vld [vmem:[%s2 + $0x20] sm:$0xff]
  %v3778 = vld [vmem:[%s2 + $0x28] sm:$0xff]
  %v3779 = vld [vmem:[%s2 + $0x30] sm:$0xff]
  %v3780 = vld [vmem:[%s2 + $0x38] sm:$0xff]
  %v3781 = vld [vmem:[%s2 + $0x40] sm:$0xff]
  %v3782 = vld [vmem:[%s2 + $0x48] sm:$0xff]
  %v3783 = vld [vmem:[%s2 + $0x50] sm:$0xff]
  %v3784 = vld [vmem:[%s2 + $0x58] sm:$0xff]
  %v3785 = vld [vmem:[%s2 + $0x60] sm:$0xff]
  %v3786 = vld [vmem:[%s2 + $0x68] sm:$0xff]
  %v3787 = vld [vmem:[%s2 + $0x70] sm:$0xff]
  %v3788 = vld [vmem:[%s2 + $0x78] sm:$0xff]
  %v3789 = vld [vmem:[%s2 + $0x80] sm:$0xff]
  %v3790 = vld [vmem:[%s2 + $0x88] sm:$0xff]
  %v3791 = vld [vmem:[%s2 + $0x90] sm:$0xff]
  %v3792 = vld [vmem:[%s2 + $0x98] sm:$0xff]
  %v3793 = vld [vmem:[%s2 + $0xa0] sm:$0xff]
  %v3794 = vld [vmem:[%s2 + $0xa8] sm:$0xff]
  %v3795 = vld [vmem:[%s2 + $0xb0] sm:$0xff]
  %v3796 = vld [vmem:[%s2 + $0xb8] sm:$0xff]
  %v3797 = vld [vmem:[%s2 + $0xc0] sm:$0xff]
  %v3798 = vld [vmem:[%s2 + $0xc8] sm:$0xff]
  %v3799 = vld [vmem:[%s2 + $0xd0] sm:$0xff]
  %v3800 = vld [vmem:[%s2 + $0xd8] sm:$0xff]
  %v3801 = vld [vmem:[%s2 + $0xe0] sm:$0xff]
  %v3802 = vld [vmem:[%s2 + $0xe8] sm:$0xff]
  %v3803 = vld [vmem:[%s2 + $0xf0] sm:$0xff]
  %v3804 = vld [vmem:[%s2 + $0xf8] sm:$0xff]
  %v3805 = vpack.c.bf16 %v3771, %v3771
  %v3838 = vunpack.c.l.b16 %v3773
  %v3839 = vunpack.c.h.b16 %v3773
  %v3840 = vunpack.c.l.b16 %v3774
  %v3841 = vunpack.c.h.b16 %v3774
  %v3842 = vunpack.c.l.b16 %v3775
  %v3843 = vunpack.c.h.b16 %v3775
  %v3844 = vunpack.c.l.b16 %v3776
  %v3845 = vunpack.c.h.b16 %v3776
  %v3846 = vunpack.c.l.b16 %v3777
  %v3847 = vunpack.c.h.b16 %v3777
  %v3848 = vunpack.c.l.b16 %v3778
  %v3849 = vunpack.c.h.b16 %v3778
  %v3850 = vunpack.c.l.b16 %v3779
  %v3851 = vunpack.c.h.b16 %v3779
  %v3852 = vunpack.c.l.b16 %v3780
  %v3853 = vunpack.c.h.b16 %v3780
  %v3854 = vunpack.c.l.b16 %v3781
  %v3855 = vunpack.c.h.b16 %v3781
  %v3856 = vunpack.c.l.b16 %v3782
  %v3857 = vunpack.c.h.b16 %v3782
  %v3858 = vunpack.c.l.b16 %v3783
  %v3859 = vunpack.c.h.b16 %v3783
  %v3860 = vunpack.c.l.b16 %v3784
  %v3861 = vunpack.c.h.b16 %v3784
  %v3862 = vunpack.c.l.b16 %v3785
  %v3863 = vunpack.c.h.b16 %v3785
  %v3864 = vunpack.c.l.b16 %v3786
  %v3865 = vunpack.c.h.b16 %v3786
  %v3866 = vunpack.c.l.b16 %v3787
  %v3867 = vunpack.c.h.b16 %v3787
  %v3868 = vunpack.c.l.b16 %v3788
  %v3869 = vunpack.c.h.b16 %v3788
  %v3870 = vunpack.c.l.b16 %v3789
  %v3871 = vunpack.c.h.b16 %v3789
  %v3872 = vunpack.c.l.b16 %v3790
  %v3873 = vunpack.c.h.b16 %v3790
  %v3874 = vunpack.c.l.b16 %v3791
  %v3875 = vunpack.c.h.b16 %v3791
  %v3876 = vunpack.c.l.b16 %v3792
  %v3877 = vunpack.c.h.b16 %v3792
  %v3878 = vunpack.c.l.b16 %v3793
  %v3879 = vunpack.c.h.b16 %v3793
  %v3880 = vunpack.c.l.b16 %v3794
  %v3881 = vunpack.c.h.b16 %v3794
  %v3882 = vunpack.c.l.b16 %v3795
  %v3883 = vunpack.c.h.b16 %v3795
  %v3884 = vunpack.c.l.b16 %v3796
  %v3885 = vunpack.c.h.b16 %v3796
  %v3886 = vunpack.c.l.b16 %v3797
  %v3887 = vunpack.c.h.b16 %v3797
  %v3888 = vunpack.c.l.b16 %v3798
  %v3889 = vunpack.c.h.b16 %v3798
  %v3890 = vunpack.c.l.b16 %v3799
  %v3891 = vunpack.c.h.b16 %v3799
  %v3892 = vunpack.c.l.b16 %v3800
  %v3893 = vunpack.c.h.b16 %v3800
  %v3894 = vunpack.c.l.b16 %v3801
  %v3895 = vunpack.c.h.b16 %v3801
  %v3896 = vunpack.c.l.b16 %v3802
  %v3897 = vunpack.c.h.b16 %v3802
  %v3898 = vunpack.c.l.b16 %v3803
  %v3899 = vunpack.c.h.b16 %v3803
  %v3900 = vunpack.c.l.b16 %v3804
  %v3901 = vunpack.c.h.b16 %v3804
  %v3902 = vpack.c.b16 %v3842, %v3838
  %v3903 = vpack.c.b16 %v3843, %v3839
  %v3904 = vpack.c.b16 %v3844, %v3840
  %v3905 = vpack.c.b16 %v3845, %v3841
  %v3906 = vpack.c.b16 %v3850, %v3846
  %v3907 = vpack.c.b16 %v3851, %v3847
  %v3908 = vpack.c.b16 %v3852, %v3848
  %v3909 = vpack.c.b16 %v3853, %v3849
  %v3910 = vpack.c.b16 %v3858, %v3854
  %v3911 = vpack.c.b16 %v3859, %v3855
  %v3912 = vpack.c.b16 %v3860, %v3856
  %v3913 = vpack.c.b16 %v3861, %v3857
  %v3914 = vpack.c.b16 %v3866, %v3862
  %v3915 = vpack.c.b16 %v3867, %v3863
  %v3916 = vpack.c.b16 %v3868, %v3864
  %v3917 = vpack.c.b16 %v3869, %v3865
  %v3918 = vpack.c.b16 %v3874, %v3870
  %v3919 = vpack.c.b16 %v3875, %v3871
  %v3920 = vpack.c.b16 %v3876, %v3872
  %v3921 = vpack.c.b16 %v3877, %v3873
  %v3922 = vpack.c.b16 %v3882, %v3878
  %v3923 = vpack.c.b16 %v3883, %v3879
  %v3924 = vpack.c.b16 %v3884, %v3880
  %v3925 = vpack.c.b16 %v3885, %v3881
  %v3926 = vpack.c.b16 %v3890, %v3886
  %v3927 = vpack.c.b16 %v3891, %v3887
  %v3928 = vpack.c.b16 %v3892, %v3888
  %v3929 = vpack.c.b16 %v3893, %v3889
  %v3930 = vpack.c.b16 %v3898, %v3894
  %v3931 = vpack.c.b16 %v3899, %v3895
  %v3932 = vpack.c.b16 %v3900, %v3896
  %v3933 = vpack.c.b16 %v3901, %v3897
  %3966 = vmatprep.subr.bf16.mxu0 %v3903
  %3967 = vmatpush1.bf16.msra.mxu0 %v3902
  %3968 = vmatprep.subr.bf16.mxu0 %v3907
  %3969 = vmatpush1.bf16.msra.mxu0 %v3906
  %3970 = vmatprep.subr.bf16.mxu0 %v3911
  %3971 = vmatpush1.bf16.msra.mxu0 %v3910
  %3972 = vmatprep.subr.bf16.mxu0 %v3915
  %3973 = vmatpush1.bf16.msra.mxu0 %v3914
  %3974 = vmatprep.subr.bf16.mxu0 %v3919
  %3975 = vmatpush1.bf16.msra.mxu0 %v3918
  %3976 = vmatprep.subr.bf16.mxu0 %v3923
  %3977 = vmatpush1.bf16.msra.mxu0 %v3922
  %3978 = vmatprep.subr.bf16.mxu0 %v3927
  %3979 = vmatpush1.bf16.msra.mxu0 %v3926
  %3980 = vmatprep.subr.bf16.mxu0 %v3931
  %3981 = vmatpush1.bf16.msra.mxu0 %v3930
  %3982 = vmatprep.subr.bf16.mxu0 0
  %3983 = vmatpush1.bf16.msra.mxu0 0
  %3984 = vmatprep.subr.bf16.mxu0 0
  %3985 = vmatpush1.bf16.msra.mxu0 0
  %3986 = vmatprep.subr.bf16.mxu0 0
  %3987 = vmatpush1.bf16.msra.mxu0 0
  %3988 = vmatprep.subr.bf16.mxu0 0
  %3989 = vmatpush1.bf16.msra.mxu0 0
  %3990 = vmatprep.subr.bf16.mxu0 0
  %3991 = vmatpush1.bf16.msra.mxu0 0
  %3992 = vmatprep.subr.bf16.mxu0 0
  %3993 = vmatpush1.bf16.msra.mxu0 0
  %3994 = vmatprep.subr.bf16.mxu0 0
  %3995 = vmatpush1.bf16.msra.mxu0 0
  %3996 = vmatprep.subr.bf16.mxu0 0
  %3997 = vmatpush1.bf16.msra.mxu0 0
  %3998 = vmatprep.mubr.bf16.mxu0 0
  %3999 = vmatmul.mubr.bf16.gmra.mrb[0].mxu0 %v3805
  %v4000 = vpop.f32.mrb[0].mxu0
  %v4001 = vadd.f32 0.0, %v4000
  %v4002 = vpop.f32.mrb[0].mxu0
  %v4003 = vadd.f32 0.0, %v4002
  %v4004 = vpop.f32.mrb[0].mxu0
  %v4005 = vpop.f32.mrb[0].mxu0
  %4006 = vdwg.mxu0
  %4007 = vmatprep.subr.bf16.mxu0 %v3905
  %4008 = vmatpush1.bf16.msra.mxu0 %v3904
  %4009 = vmatprep.subr.bf16.mxu0 %v3909
  %4010 = vmatpush1.bf16.msra.mxu0 %v3908
  %4011 = vmatprep.subr.bf16.mxu0 %v3913
  %4012 = vmatpush1.bf16.msra.mxu0 %v3912
  %4013 = vmatprep.subr.bf16.mxu0 %v3917
  %4014 = vmatpush1.bf16.msra.mxu0 %v3916
  %4015 = vmatprep.subr.bf16.mxu0 %v3921
  %4016 = vmatpush1.bf16.msra.mxu0 %v3920
  %4017 = vmatprep.subr.bf16.mxu0 %v3925
  %4018 = vmatpush1.bf16.msra.mxu0 %v3924
  %4019 = vmatprep.subr.bf16.mxu0 %v3929
  %4020 = vmatpush1.bf16.msra.mxu0 %v3928
  %4021 = vmatprep.subr.bf16.mxu0 %v3933
  %4022 = vmatpush1.bf16.msra.mxu0 %v3932
  %4023 = vmatprep.subr.bf16.mxu0 0
  %4024 = vmatpush1.bf16.msra.mxu0 0
  %4025 = vmatprep.subr.bf16.mxu0 0
  %4026 = vmatpush1.bf16.msra.mxu0 0
  %4027 = vmatprep.subr.bf16.mxu0 0
  %4028 = vmatpush1.bf16.msra.mxu0 0
  %4029 = vmatprep.subr.bf16.mxu0 0
  %4030 = vmatpush1.bf16.msra.mxu0 0
  %4031 = vmatprep.subr.bf16.mxu0 0
  %4032 = vmatpush1.bf16.msra.mxu0 0
  %4033 = vmatprep.subr.bf16.mxu0 0
  %4034 = vmatpush1.bf16.msra.mxu0 0
  %4035 = vmatprep.subr.bf16.mxu0 0
  %4036 = vmatpush1.bf16.msra.mxu0 0
  %4037 = vmatprep.subr.bf16.mxu0 0
  %4038 = vmatpush1.bf16.msra.mxu0 0
  %4039 = vmatprep.mubr.bf16.mxu0 0
  %4040 = vmatmul.mubr.bf16.gmra.mrb[0].mxu0 %v3805
  %v4041 = vpop.f32.mrb[0].mxu0
  %v4042 = vadd.f32 0.0, %v4041
  %v4043 = vpop.f32.mrb[0].mxu0
  %v4044 = vadd.f32 0.0, %v4043
  %v4045 = vpop.f32.mrb[0].mxu0
  %v4046 = vpop.f32.mrb[0].mxu0
  %4047 = vdwg.mxu0
  %v4048 = vadd.f32 %v3767, %v4001
  %v4049 = vadd.f32 %v3768, %v4003
  %v4050 = vadd.f32 %v3769, %v4042
  %v4051 = vadd.f32 %v3770, %v4044
  %v4052 = vxor.u32 %v4048, 2147483648
  %v4053 = vxor.u32 %v4049, 2147483648
  %v4054 = vxor.u32 %v4050, 2147483648
  %v4055 = vmul.f32 %v4052, 1.442695
  %v4056 = vpow.pop %v4055
  %v4057 = vmul.f32 %v4053, 1.442695
  %v4058 = vpow.pop %v4057
  %v4059 = vmul.f32 %v4054, 1.442695
  %v4060 = vpow.pop %v4059
  %v4061 = vadd.f32 %v4056, 1.0
  %v4062 = vadd.f32 %v4058, 1.0
  %v4063 = vadd.f32 %v4060, 1.0
  %v4064 = vrcp.pop %v4061
  %v4065 = vmul.f32 1.0, %v4064
  %v4066 = vrcp.pop %v4062
  %v4067 = vmul.f32 1.0, %v4066
  %v4068 = vrcp.pop %v4063
  %v4069 = vmul.f32 1.0, %v4068
  %v4070 = vtanh.pop %v4051
  %v4071 = vmul.f32 %v4067, %v3772
  %v4072 = vmul.f32 %v4065, %v4070
  %v4073 = vadd.f32 %v4071, %v4072
  %v4074 = vtanh.pop %v4073
  %v4075 = vmul.f32 %v4069, %v4074
  %v4076 = vld [vmem:[#allocation5] sm:$0xff]
  %v4077 = vld [vmem:[#allocation5 + $0x8] sm:$0xff]
  %v4078 = vld [vmem:[#allocation5 + $0x10] sm:$0xff]
  %v4079 = vld [vmem:[#allocation5 + $0x18] sm:$0xff]
  %v4080 = vld [vmem:[#allocation6] sm:$0xff]
  %v4081 = vld [vmem:[#allocation7] sm:$0xff]
  %v4082 = vld [vmem:[%s5] sm:$0xff]
  %v4083 = vld [vmem:[%s5 + $0x8] sm:$0xff]
  %v4084 = vld [vmem:[%s5 + $0x10] sm:$0xff]
  %v4085 = vld [vmem:[%s5 + $0x18] sm:$0xff]
  %v4086 = vld [vmem:[%s5 + $0x20] sm:$0xff]
  %v4087 = vld [vmem:[%s5 + $0x28] sm:$0xff]
  %v4088 = vld [vmem:[%s5 + $0x30] sm:$0xff]
  %v4089 = vld [vmem:[%s5 + $0x38] sm:$0xff]
  %v4090 = vld [vmem:[%s5 + $0x40] sm:$0xff]
  %v4091 = vld [vmem:[%s5 + $0x48] sm:$0xff]
  %v4092 = vld [vmem:[%s5 + $0x50] sm:$0xff]
  %v4093 = vld [vmem:[%s5 + $0x58] sm:$0xff]
  %v4094 = vld [vmem:[%s5 + $0x60] sm:$0xff]
  %v4095 = vld [vmem:[%s5 + $0x68] sm:$0xff]
  %v4096 = vld [vmem:[%s5 + $0x70] sm:$0xff]
  %v4097 = vld [vmem:[%s5 + $0x78] sm:$0xff]
  %v4098 = vld [vmem:[%s5 + $0x80] sm:$0xff]
  %v4099 = vld [vmem:[%s5 + $0x88] sm:$0xff]
  %v4100 = vld [vmem:[%s5 + $0x90] sm:$0xff]
  %v4101 = vld [vmem:[%s5 + $0x98] sm:$0xff]
  %v4102 = vld [vmem:[%s5 + $0xa0] sm:$0xff]
  %v4103 = vld [vmem:[%s5 + $0xa8] sm:$0xff]
  %v4104 = vld [vmem:[%s5 + $0xb0] sm:$0xff]
  %v4105 = vld [vmem:[%s5 + $0xb8] sm:$0xff]
  %v4106 = vld [vmem:[%s5 + $0xc0] sm:$0xff]
  %v4107 = vld [vmem:[%s5 + $0xc8] sm:$0xff]
  %v4108 = vld [vmem:[%s5 + $0xd0] sm:$0xff]
  %v4109 = vld [vmem:[%s5 + $0xd8] sm:$0xff]
  %v4110 = vld [vmem:[%s5 + $0xe0] sm:$0xff]
  %v4111 = vld [vmem:[%s5 + $0xe8] sm:$0xff]
  %v4112 = vld [vmem:[%s5 + $0xf0] sm:$0xff]
  %v4113 = vld [vmem:[%s5 + $0xf8] sm:$0xff]
  %v4114 = vpack.c.bf16 %v4080, %v4080
  %v4147 = vunpack.c.l.b16 %v4082
  %v4148 = vunpack.c.h.b16 %v4082
  %v4149 = vunpack.c.l.b16 %v4083
  %v4150 = vunpack.c.h.b16 %v4083
  %v4151 = vunpack.c.l.b16 %v4084
  %v4152 = vunpack.c.h.b16 %v4084
  %v4153 = vunpack.c.l.b16 %v4085
  %v4154 = vunpack.c.h.b16 %v4085
  %v4155 = vunpack.c.l.b16 %v4086
  %v4156 = vunpack.c.h.b16 %v4086
  %v4157 = vunpack.c.l.b16 %v4087
  %v4158 = vunpack.c.h.b16 %v4087
  %v4159 = vunpack.c.l.b16 %v4088
  %v4160 = vunpack.c.h.b16 %v4088
  %v4161 = vunpack.c.l.b16 %v4089
  %v4162 = vunpack.c.h.b16 %v4089
  %v4163 = vunpack.c.l.b16 %v4090
  %v4164 = vunpack.c.h.b16 %v4090
  %v4165 = vunpack.c.l.b16 %v4091
  %v4166 = vunpack.c.h.b16 %v4091
  %v4167 = vunpack.c.l.b16 %v4092
  %v4168 = vunpack.c.h.b16 %v4092
  %v4169 = vunpack.c.l.b16 %v4093
  %v4170 = vunpack.c.h.b16 %v4093
  %v4171 = vunpack.c.l.b16 %v4094
  %v4172 = vunpack.c.h.b16 %v4094
  %v4173 = vunpack.c.l.b16 %v4095
  %v4174 = vunpack.c.h.b16 %v4095
  %v4175 = vunpack.c.l.b16 %v4096
  %v4176 = vunpack.c.h.b16 %v4096
  %v4177 = vunpack.c.l.b16 %v4097
  %v4178 = vunpack.c.h.b16 %v4097
  %v4179 = vunpack.c.l.b16 %v4098
  %v4180 = vunpack.c.h.b16 %v4098
  %v4181 = vunpack.c.l.b16 %v4099
  %v4182 = vunpack.c.h.b16 %v4099
  %v4183 = vunpack.c.l.b16 %v4100
  %v4184 = vunpack.c.h.b16 %v4100
  %v4185 = vunpack.c.l.b16 %v4101
  %v4186 = vunpack.c.h.b16 %v4101
  %v4187 = vunpack.c.l.b16 %v4102
  %v4188 = vunpack.c.h.b16 %v4102
  %v4189 = vunpack.c.l.b16 %v4103
  %v4190 = vunpack.c.h.b16 %v4103
  %v4191 = vunpack.c.l.b16 %v4104
  %v4192 = vunpack.c.h.b16 %v4104
  %v4193 = vunpack.c.l.b16 %v4105
  %v4194 = vunpack.c.h.b16 %v4105
  %v4195 = vunpack.c.l.b16 %v4106
  %v4196 = vunpack.c.h.b16 %v4106
  %v4197 = vunpack.c.l.b16 %v4107
  %v4198 = vunpack.c.h.b16 %v4107
  %v4199 = vunpack.c.l.b16 %v4108
  %v4200 = vunpack.c.h.b16 %v4108
  %v4201 = vunpack.c.l.b16 %v4109
  %v4202 = vunpack.c.h.b16 %v4109
  %v4203 = vunpack.c.l.b16 %v4110
  %v4204 = vunpack.c.h.b16 %v4110
  %v4205 = vunpack.c.l.b16 %v4111
  %v4206 = vunpack.c.h.b16 %v4111
  %v4207 = vunpack.c.l.b16 %v4112
  %v4208 = vunpack.c.h.b16 %v4112
  %v4209 = vunpack.c.l.b16 %v4113
  %v4210 = vunpack.c.h.b16 %v4113
  %v4211 = vpack.c.b16 %v4151, %v4147
  %v4212 = vpack.c.b16 %v4152, %v4148
  %v4213 = vpack.c.b16 %v4153, %v4149
  %v4214 = vpack.c.b16 %v4154, %v4150
  %v4215 = vpack.c.b16 %v4159, %v4155
  %v4216 = vpack.c.b16 %v4160, %v4156
  %v4217 = vpack.c.b16 %v4161, %v4157
  %v4218 = vpack.c.b16 %v4162, %v4158
  %v4219 = vpack.c.b16 %v4167, %v4163
  %v4220 = vpack.c.b16 %v4168, %v4164
  %v4221 = vpack.c.b16 %v4169, %v4165
  %v4222 = vpack.c.b16 %v4170, %v4166
  %v4223 = vpack.c.b16 %v4175, %v4171
  %v4224 = vpack.c.b16 %v4176, %v4172
  %v4225 = vpack.c.b16 %v4177, %v4173
  %v4226 = vpack.c.b16 %v4178, %v4174
  %v4227 = vpack.c.b16 %v4183, %v4179
  %v4228 = vpack.c.b16 %v4184, %v4180
  %v4229 = vpack.c.b16 %v4185, %v4181
  %v4230 = vpack.c.b16 %v4186, %v4182
  %v4231 = vpack.c.b16 %v4191, %v4187
  %v4232 = vpack.c.b16 %v4192, %v4188
  %v4233 = vpack.c.b16 %v4193, %v4189
  %v4234 = vpack.c.b16 %v4194, %v4190
  %v4235 = vpack.c.b16 %v4199, %v4195
  %v4236 = vpack.c.b16 %v4200, %v4196
  %v4237 = vpack.c.b16 %v4201, %v4197
  %v4238 = vpack.c.b16 %v4202, %v4198
  %v4239 = vpack.c.b16 %v4207, %v4203
  %v4240 = vpack.c.b16 %v4208, %v4204
  %v4241 = vpack.c.b16 %v4209, %v4205
  %v4242 = vpack.c.b16 %v4210, %v4206
  %4275 = vmatprep.subr.bf16.mxu0 %v4212
  %4276 = vmatpush1.bf16.msra.mxu0 %v4211
  %4277 = vmatprep.subr.bf16.mxu0 %v4216
  %4278 = vmatpush1.bf16.msra.mxu0 %v4215
  %4279 = vmatprep.subr.bf16.mxu0 %v4220
  %4280 = vmatpush1.bf16.msra.mxu0 %v4219
  %4281 = vmatprep.subr.bf16.mxu0 %v4224
  %4282 = vmatpush1.bf16.msra.mxu0 %v4223
  %4283 = vmatprep.subr.bf16.mxu0 %v4228
  %4284 = vmatpush1.bf16.msra.mxu0 %v4227
  %4285 = vmatprep.subr.bf16.mxu0 %v4232
  %4286 = vmatpush1.bf16.msra.mxu0 %v4231
  %4287 = vmatprep.subr.bf16.mxu0 %v4236
  %4288 = vmatpush1.bf16.msra.mxu0 %v4235
  %4289 = vmatprep.subr.bf16.mxu0 %v4240
  %4290 = vmatpush1.bf16.msra.mxu0 %v4239
  %4291 = vmatprep.subr.bf16.mxu0 0
  %4292 = vmatpush1.bf16.msra.mxu0 0
  %4293 = vmatprep.subr.bf16.mxu0 0
  %4294 = vmatpush1.bf16.msra.mxu0 0
  %4295 = vmatprep.subr.bf16.mxu0 0
  %4296 = vmatpush1.bf16.msra.mxu0 0
  %4297 = vmatprep.subr.bf16.mxu0 0
  %4298 = vmatpush1.bf16.msra.mxu0 0
  %4299 = vmatprep.subr.bf16.mxu0 0
  %4300 = vmatpush1.bf16.msra.mxu0 0
  %4301 = vmatprep.subr.bf16.mxu0 0
  %4302 = vmatpush1.bf16.msra.mxu0 0
  %4303 = vmatprep.subr.bf16.mxu0 0
  %4304 = vmatpush1.bf16.msra.mxu0 0
  %4305 = vmatprep.subr.bf16.mxu0 0
  %4306 = vmatpush1.bf16.msra.mxu0 0
  %4307 = vmatprep.mubr.bf16.mxu0 0
  %4308 = vmatmul.mubr.bf16.gmra.mrb[0].mxu0 %v4114
  %v4309 = vpop.f32.mrb[0].mxu0
  %v4310 = vadd.f32 0.0, %v4309
  %v4311 = vpop.f32.mrb[0].mxu0
  %v4312 = vadd.f32 0.0, %v4311
  %v4313 = vpop.f32.mrb[0].mxu0
  %v4314 = vpop.f32.mrb[0].mxu0
  %4315 = vdwg.mxu0
  %4316 = vmatprep.subr.bf16.mxu0 %v4214
  %4317 = vmatpush1.bf16.msra.mxu0 %v4213
  %4318 = vmatprep.subr.bf16.mxu0 %v4218
  %4319 = vmatpush1.bf16.msra.mxu0 %v4217
  %4320 = vmatprep.subr.bf16.mxu0 %v4222
  %4321 = vmatpush1.bf16.msra.mxu0 %v4221
  %4322 = vmatprep.subr.bf16.mxu0 %v4226
  %4323 = vmatpush1.bf16.msra.mxu0 %v4225
  %4324 = vmatprep.subr.bf16.mxu0 %v4230
  %4325 = vmatpush1.bf16.msra.mxu0 %v4229
  %4326 = vmatprep.subr.bf16.mxu0 %v4234
  %4327 = vmatpush1.bf16.msra.mxu0 %v4233
  %4328 = vmatprep.subr.bf16.mxu0 %v4238
  %4329 = vmatpush1.bf16.msra.mxu0 %v4237
  %4330 = vmatprep.subr.bf16.mxu0 %v4242
  %4331 = vmatpush1.bf16.msra.mxu0 %v4241
  %4332 = vmatprep.subr.bf16.mxu0 0
  %4333 = vmatpush1.bf16.msra.mxu0 0
  %4334 = vmatprep.subr.bf16.mxu0 0
  %4335 = vmatpush1.bf16.msra.mxu0 0
  %4336 = vmatprep.subr.bf16.mxu0 0
  %4337 = vmatpush1.bf16.msra.mxu0 0
  %4338 = vmatprep.subr.bf16.mxu0 0
  %4339 = vmatpush1.bf16.msra.mxu0 0
  %4340 = vmatprep.subr.bf16.mxu0 0
  %4341 = vmatpush1.bf16.msra.mxu0 0
  %4342 = vmatprep.subr.bf16.mxu0 0
  %4343 = vmatpush1.bf16.msra.mxu0 0
  %4344 = vmatprep.subr.bf16.mxu0 0
  %4345 = vmatpush1.bf16.msra.mxu0 0
  %4346 = vmatprep.subr.bf16.mxu0 0
  %4347 = vmatpush1.bf16.msra.mxu0 0
  %4348 = vmatprep.mubr.bf16.mxu0 0
  %4349 = vmatmul.mubr.bf16.gmra.mrb[0].mxu0 %v4114
  %v4350 = vpop.f32.mrb[0].mxu0
  %v4351 = vadd.f32 0.0, %v4350
  %v4352 = vpop.f32.mrb[0].mxu0
  %v4353 = vadd.f32 0.0, %v4352
  %v4354 = vpop.f32.mrb[0].mxu0
  %v4355 = vpop.f32.mrb[0].mxu0
  %4356 = vdwg.mxu0
  %v4357 = vadd.f32 %v4076, %v4310
  %v4358 = vadd.f32 %v4077, %v4312
  %v4359 = vadd.f32 %v4078, %v4351
  %v4360 = vadd.f32 %v4079, %v4353
  %v4361 = vxor.u32 %v4357, 2147483648
  %v4362 = vxor.u32 %v4358, 2147483648
  %v4363 = vxor.u32 %v4359, 2147483648
  %v4364 = vmul.f32 %v4361, 1.442695
  %v4365 = vpow.pop %v4364
  %v4366 = vmul.f32 %v4362, 1.442695
  %v4367 = vpow.pop %v4366
  %v4368 = vmul.f32 %v4363, 1.442695
  %v4369 = vpow.pop %v4368
  %v4370 = vadd.f32 %v4365, 1.0
  %v4371 = vadd.f32 %v4367, 1.0
  %v4372 = vadd.f32 %v4369, 1.0
  %v4373 = vrcp.pop %v4370
  %v4374 = vmul.f32 1.0, %v4373
  %v4375 = vrcp.pop %v4371
  %v4376 = vmul.f32 1.0, %v4375
  %v4377 = vrcp.pop %v4372
  %v4378 = vmul.f32 1.0, %v4377
  %v4379 = vtanh.pop %v4360
  %v4380 = vmul.f32 %v4376, %v4081
  %v4381 = vmul.f32 %v4374, %v4379
  %v4382 = vadd.f32 %v4380, %v4381
  %v4383 = vtanh.pop %v4382
  %v4384 = vmul.f32 %v4378, %v4383
  %4385 = vst [vmem:[#allocation3] sm:$0xff] %v4075
  %4386 = vst [vmem:[#allocation4] sm:$0xff] %v4073
  %4387 = vst [vmem:[#allocation6] sm:$0xff] %v4384
  %4388 = vst [vmem:[#allocation7] sm:$0xff] %v4382
  %s4389 = scalar_lea.vmem %s7, 40
  %4390 = vst [vmem:[%s4389] sm:$0xff] %v4075
  %s4391 = scalar_lea.vmem %s8, 40
  %4392 = vst [vmem:[%s4391] sm:$0xff] %v4384
  %v4393 = vld [vmem:[#allocation2] sm:$0xff]
  %v4394 = vld [vmem:[#allocation2 + $0x8] sm:$0xff]
  %v4395 = vld [vmem:[#allocation2 + $0x10] sm:$0xff]
  %v4396 = vld [vmem:[#allocation2 + $0x18] sm:$0xff]
  %v4397 = vld [vmem:[#allocation3] sm:$0xff]
  %v4398 = vld [vmem:[#allocation4] sm:$0xff]
  %v4399 = vld [vmem:[%s2] sm:$0xff]
  %v4400 = vld [vmem:[%s2 + $0x8] sm:$0xff]
  %v4401 = vld [vmem:[%s2 + $0x10] sm:$0xff]
  %v4402 = vld [vmem:[%s2 + $0x18] sm:$0xff]
  %v4403 = vld [vmem:[%s2 + $0x20] sm:$0xff]
  %v4404 = vld [vmem:[%s2 + $0x28] sm:$0xff]
  %v4405 = vld [vmem:[%s2 + $0x30] sm:$0xff]
  %v4406 = vld [vmem:[%s2 + $0x38] sm:$0xff]
  %v4407 = vld [vmem:[%s2 + $0x40] sm:$0xff]
  %v4408 = vld [vmem:[%s2 + $0x48] sm:$0xff]
  %v4409 = vld [vmem:[%s2 + $0x50] sm:$0xff]
  %v4410 = vld [vmem:[%s2 + $0x58] sm:$0xff]
  %v4411 = vld [vmem:[%s2 + $0x60] sm:$0xff]
  %v4412 = vld [vmem:[%s2 + $0x68] sm:$0xff]
  %v4413 = vld [vmem:[%s2 + $0x70] sm:$0xff]
  %v4414 = vld [vmem:[%s2 + $0x78] sm:$0xff]
  %v4415 = vld [vmem:[%s2 + $0x80] sm:$0xff]
  %v4416 = vld [vmem:[%s2 + $0x88] sm:$0xff]
  %v4417 = vld [vmem:[%s2 + $0x90] sm:$0xff]
  %v4418 = vld [vmem:[%s2 + $0x98] sm:$0xff]
  %v4419 = vld [vmem:[%s2 + $0xa0] sm:$0xff]
  %v4420 = vld [vmem:[%s2 + $0xa8] sm:$0xff]
  %v4421 = vld [vmem:[%s2 + $0xb0] sm:$0xff]
  %v4422 = vld [vmem:[%s2 + $0xb8] sm:$0xff]
  %v4423 = vld [vmem:[%s2 + $0xc0] sm:$0xff]
  %v4424 = vld [vmem:[%s2 + $0xc8] sm:$0xff]
  %v4425 = vld [vmem:[%s2 + $0xd0] sm:$0xff]
  %v4426 = vld [vmem:[%s2 + $0xd8] sm:$0xff]
  %v4427 = vld [vmem:[%s2 + $0xe0] sm:$0xff]
  %v4428 = vld [vmem:[%s2 + $0xe8] sm:$0xff]
  %v4429 = vld [vmem:[%s2 + $0xf0] sm:$0xff]
  %v4430 = vld [vmem:[%s2 + $0xf8] sm:$0xff]
  %v4431 = vpack.c.bf16 %v4397, %v4397
  %v4464 = vunpack.c.l.b16 %v4399
  %v4465 = vunpack.c.h.b16 %v4399
  %v4466 = vunpack.c.l.b16 %v4400
  %v4467 = vunpack.c.h.b16 %v4400
  %v4468 = vunpack.c.l.b16 %v4401
  %v4469 = vunpack.c.h.b16 %v4401
  %v4470 = vunpack.c.l.b16 %v4402
  %v4471 = vunpack.c.h.b16 %v4402
  %v4472 = vunpack.c.l.b16 %v4403
  %v4473 = vunpack.c.h.b16 %v4403
  %v4474 = vunpack.c.l.b16 %v4404
  %v4475 = vunpack.c.h.b16 %v4404
  %v4476 = vunpack.c.l.b16 %v4405
  %v4477 = vunpack.c.h.b16 %v4405
  %v4478 = vunpack.c.l.b16 %v4406
  %v4479 = vunpack.c.h.b16 %v4406
  %v4480 = vunpack.c.l.b16 %v4407
  %v4481 = vunpack.c.h.b16 %v4407
  %v4482 = vunpack.c.l.b16 %v4408
  %v4483 = vunpack.c.h.b16 %v4408
  %v4484 = vunpack.c.l.b16 %v4409
  %v4485 = vunpack.c.h.b16 %v4409
  %v4486 = vunpack.c.l.b16 %v4410
  %v4487 = vunpack.c.h.b16 %v4410
  %v4488 = vunpack.c.l.b16 %v4411
  %v4489 = vunpack.c.h.b16 %v4411
  %v4490 = vunpack.c.l.b16 %v4412
  %v4491 = vunpack.c.h.b16 %v4412
  %v4492 = vunpack.c.l.b16 %v4413
  %v4493 = vunpack.c.h.b16 %v4413
  %v4494 = vunpack.c.l.b16 %v4414
  %v4495 = vunpack.c.h.b16 %v4414
  %v4496 = vunpack.c.l.b16 %v4415
  %v4497 = vunpack.c.h.b16 %v4415
  %v4498 = vunpack.c.l.b16 %v4416
  %v4499 = vunpack.c.h.b16 %v4416
  %v4500 = vunpack.c.l.b16 %v4417
  %v4501 = vunpack.c.h.b16 %v4417
  %v4502 = vunpack.c.l.b16 %v4418
  %v4503 = vunpack.c.h.b16 %v4418
  %v4504 = vunpack.c.l.b16 %v4419
  %v4505 = vunpack.c.h.b16 %v4419
  %v4506 = vunpack.c.l.b16 %v4420
  %v4507 = vunpack.c.h.b16 %v4420
  %v4508 = vunpack.c.l.b16 %v4421
  %v4509 = vunpack.c.h.b16 %v4421
  %v4510 = vunpack.c.l.b16 %v4422
  %v4511 = vunpack.c.h.b16 %v4422
  %v4512 = vunpack.c.l.b16 %v4423
  %v4513 = vunpack.c.h.b16 %v4423
  %v4514 = vunpack.c.l.b16 %v4424
  %v4515 = vunpack.c.h.b16 %v4424
  %v4516 = vunpack.c.l.b16 %v4425
  %v4517 = vunpack.c.h.b16 %v4425
  %v4518 = vunpack.c.l.b16 %v4426
  %v4519 = vunpack.c.h.b16 %v4426
  %v4520 = vunpack.c.l.b16 %v4427
  %v4521 = vunpack.c.h.b16 %v4427
  %v4522 = vunpack.c.l.b16 %v4428
  %v4523 = vunpack.c.h.b16 %v4428
  %v4524 = vunpack.c.l.b16 %v4429
  %v4525 = vunpack.c.h.b16 %v4429
  %v4526 = vunpack.c.l.b16 %v4430
  %v4527 = vunpack.c.h.b16 %v4430
  %v4528 = vpack.c.b16 %v4468, %v4464
  %v4529 = vpack.c.b16 %v4469, %v4465
  %v4530 = vpack.c.b16 %v4470, %v4466
  %v4531 = vpack.c.b16 %v4471, %v4467
  %v4532 = vpack.c.b16 %v4476, %v4472
  %v4533 = vpack.c.b16 %v4477, %v4473
  %v4534 = vpack.c.b16 %v4478, %v4474
  %v4535 = vpack.c.b16 %v4479, %v4475
  %v4536 = vpack.c.b16 %v4484, %v4480
  %v4537 = vpack.c.b16 %v4485, %v4481
  %v4538 = vpack.c.b16 %v4486, %v4482
  %v4539 = vpack.c.b16 %v4487, %v4483
  %v4540 = vpack.c.b16 %v4492, %v4488
  %v4541 = vpack.c.b16 %v4493, %v4489
  %v4542 = vpack.c.b16 %v4494, %v4490
  %v4543 = vpack.c.b16 %v4495, %v4491
  %v4544 = vpack.c.b16 %v4500, %v4496
  %v4545 = vpack.c.b16 %v4501, %v4497
  %v4546 = vpack.c.b16 %v4502, %v4498
  %v4547 = vpack.c.b16 %v4503, %v4499
  %v4548 = vpack.c.b16 %v4508, %v4504
  %v4549 = vpack.c.b16 %v4509, %v4505
  %v4550 = vpack.c.b16 %v4510, %v4506
  %v4551 = vpack.c.b16 %v4511, %v4507
  %v4552 = vpack.c.b16 %v4516, %v4512
  %v4553 = vpack.c.b16 %v4517, %v4513
  %v4554 = vpack.c.b16 %v4518, %v4514
  %v4555 = vpack.c.b16 %v4519, %v4515
  %v4556 = vpack.c.b16 %v4524, %v4520
  %v4557 = vpack.c.b16 %v4525, %v4521
  %v4558 = vpack.c.b16 %v4526, %v4522
  %v4559 = vpack.c.b16 %v4527, %v4523
  %4592 = vmatprep.subr.bf16.mxu0 %v4529
  %4593 = vmatpush1.bf16.msra.mxu0 %v4528
  %4594 = vmatprep.subr.bf16.mxu0 %v4533
  %4595 = vmatpush1.bf16.msra.mxu0 %v4532
  %4596 = vmatprep.subr.bf16.mxu0 %v4537
  %4597 = vmatpush1.bf16.msra.mxu0 %v4536
  %4598 = vmatprep.subr.bf16.mxu0 %v4541
  %4599 = vmatpush1.bf16.msra.mxu0 %v4540
  %4600 = vmatprep.subr.bf16.mxu0 %v4545
  %4601 = vmatpush1.bf16.msra.mxu0 %v4544
  %4602 = vmatprep.subr.bf16.mxu0 %v4549
  %4603 = vmatpush1.bf16.msra.mxu0 %v4548
  %4604 = vmatprep.subr.bf16.mxu0 %v4553
  %4605 = vmatpush1.bf16.msra.mxu0 %v4552
  %4606 = vmatprep.subr.bf16.mxu0 %v4557
  %4607 = vmatpush1.bf16.msra.mxu0 %v4556
  %4608 = vmatprep.subr.bf16.mxu0 0
  %4609 = vmatpush1.bf16.msra.mxu0 0
  %4610 = vmatprep.subr.bf16.mxu0 0
  %4611 = vmatpush1.bf16.msra.mxu0 0
  %4612 = vmatprep.subr.bf16.mxu0 0
  %4613 = vmatpush1.bf16.msra.mxu0 0
  %4614 = vmatprep.subr.bf16.mxu0 0
  %4615 = vmatpush1.bf16.msra.mxu0 0
  %4616 = vmatprep.subr.bf16.mxu0 0
  %4617 = vmatpush1.bf16.msra.mxu0 0
  %4618 = vmatprep.subr.bf16.mxu0 0
  %4619 = vmatpush1.bf16.msra.mxu0 0
  %4620 = vmatprep.subr.bf16.mxu0 0
  %4621 = vmatpush1.bf16.msra.mxu0 0
  %4622 = vmatprep.subr.bf16.mxu0 0
  %4623 = vmatpush1.bf16.msra.mxu0 0
  %4624 = vmatprep.mubr.bf16.mxu0 0
  %4625 = vmatmul.mubr.bf16.gmra.mrb[0].mxu0 %v4431
  %v4626 = vpop.f32.mrb[0].mxu0
  %v4627 = vadd.f32 0.0, %v4626
  %v4628 = vpop.f32.mrb[0].mxu0
  %v4629 = vadd.f32 0.0, %v4628
  %v4630 = vpop.f32.mrb[0].mxu0
  %v4631 = vpop.f32.mrb[0].mxu0
  %4632 = vdwg.mxu0
  %4633 = vmatprep.subr.bf16.mxu0 %v4531
  %4634 = vmatpush1.bf16.msra.mxu0 %v4530
  %4635 = vmatprep.subr.bf16.mxu0 %v4535
  %4636 = vmatpush1.bf16.msra.mxu0 %v4534
  %4637 = vmatprep.subr.bf16.mxu0 %v4539
  %4638 = vmatpush1.bf16.msra.mxu0 %v4538
  %4639 = vmatprep.subr.bf16.mxu0 %v4543
  %4640 = vmatpush1.bf16.msra.mxu0 %v4542
  %4641 = vmatprep.subr.bf16.mxu0 %v4547
  %4642 = vmatpush1.bf16.msra.mxu0 %v4546
  %4643 = vmatprep.subr.bf16.mxu0 %v4551
  %4644 = vmatpush1.bf16.msra.mxu0 %v4550
  %4645 = vmatprep.subr.bf16.mxu0 %v4555
  %4646 = vmatpush1.bf16.msra.mxu0 %v4554
  %4647 = vmatprep.subr.bf16.mxu0 %v4559
  %4648 = vmatpush1.bf16.msra.mxu0 %v4558
  %4649 = vmatprep.subr.bf16.mxu0 0
  %4650 = vmatpush1.bf16.msra.mxu0 0
  %4651 = vmatprep.subr.bf16.mxu0 0
  %4652 = vmatpush1.bf16.msra.mxu0 0
  %4653 = vmatprep.subr.bf16.mxu0 0
  %4654 = vmatpush1.bf16.msra.mxu0 0
  %4655 = vmatprep.subr.bf16.mxu0 0
  %4656 = vmatpush1.bf16.msra.mxu0 0
  %4657 = vmatprep.subr.bf16.mxu0 0
  %4658 = vmatpush1.bf16.msra.mxu0 0
  %4659 = vmatprep.subr.bf16.mxu0 0
  %4660 = vmatpush1.bf16.msra.mxu0 0
  %4661 = vmatprep.subr.bf16.mxu0 0
  %4662 = vmatpush1.bf16.msra.mxu0 0
  %4663 = vmatprep.subr.bf16.mxu0 0
  %4664 = vmatpush1.bf16.msra.mxu0 0
  %4665 = vmatprep.mubr.bf16.mxu0 0
  %4666 = vmatmul.mubr.bf16.gmra.mrb[0].mxu0 %v4431
  %v4667 = vpop.f32.mrb[0].mxu0
  %v4668 = vadd.f32 0.0, %v4667
  %v4669 = vpop.f32.mrb[0].mxu0
  %v4670 = vadd.f32 0.0, %v4669
  %v4671 = vpop.f32.mrb[0].mxu0
  %v4672 = vpop.f32.mrb[0].mxu0
  %4673 = vdwg.mxu0
  %v4674 = vadd.f32 %v4393, %v4627
  %v4675 = vadd.f32 %v4394, %v4629
  %v4676 = vadd.f32 %v4395, %v4668
  %v4677 = vadd.f32 %v4396, %v4670
  %v4678 = vxor.u32 %v4674, 2147483648
  %v4679 = vxor.u32 %v4675, 2147483648
  %v4680 = vxor.u32 %v4676, 2147483648
  %v4681 = vmul.f32 %v4678, 1.442695
  %v4682 = vpow.pop %v4681
  %v4683 = vmul.f32 %v4679, 1.442695
  %v4684 = vpow.pop %v4683
  %v4685 = vmul.f32 %v4680, 1.442695
  %v4686 = vpow.pop %v4685
  %v4687 = vadd.f32 %v4682, 1.0
  %v4688 = vadd.f32 %v4684, 1.0
  %v4689 = vadd.f32 %v4686, 1.0
  %v4690 = vrcp.pop %v4687
  %v4691 = vmul.f32 1.0, %v4690
  %v4692 = vrcp.pop %v4688
  %v4693 = vmul.f32 1.0, %v4692
  %v4694 = vrcp.pop %v4689
  %v4695 = vmul.f32 1.0, %v4694
  %v4696 = vtanh.pop %v4677
  %v4697 = vmul.f32 %v4693, %v4398
  %v4698 = vmul.f32 %v4691, %v4696
  %v4699 = vadd.f32 %v4697, %v4698
  %v4700 = vtanh.pop %v4699
  %v4701 = vmul.f32 %v4695, %v4700
  %v4702 = vld [vmem:[#allocation5] sm:$0xff]
  %v4703 = vld [vmem:[#allocation5 + $0x8] sm:$0xff]
  %v4704 = vld [vmem:[#allocation5 + $0x10] sm:$0xff]
  %v4705 = vld [vmem:[#allocation5 + $0x18] sm:$0xff]
  %v4706 = vld [vmem:[#allocation6] sm:$0xff]
  %v4707 = vld [vmem:[#allocation7] sm:$0xff]
  %v4708 = vld [vmem:[%s5] sm:$0xff]
  %v4709 = vld [vmem:[%s5 + $0x8] sm:$0xff]
  %v4710 = vld [vmem:[%s5 + $0x10] sm:$0xff]
  %v4711 = vld [vmem:[%s5 + $0x18] sm:$0xff]
  %v4712 = vld [vmem:[%s5 + $0x20] sm:$0xff]
  %v4713 = vld [vmem:[%s5 + $0x28] sm:$0xff]
  %v4714 = vld [vmem:[%s5 + $0x30] sm:$0xff]
  %v4715 = vld [vmem:[%s5 + $0x38] sm:$0xff]
  %v4716 = vld [vmem:[%s5 + $0x40] sm:$0xff]
  %v4717 = vld [vmem:[%s5 + $0x48] sm:$0xff]
  %v4718 = vld [vmem:[%s5 + $0x50] sm:$0xff]
  %v4719 = vld [vmem:[%s5 + $0x58] sm:$0xff]
  %v4720 = vld [vmem:[%s5 + $0x60] sm:$0xff]
  %v4721 = vld [vmem:[%s5 + $0x68] sm:$0xff]
  %v4722 = vld [vmem:[%s5 + $0x70] sm:$0xff]
  %v4723 = vld [vmem:[%s5 + $0x78] sm:$0xff]
  %v4724 = vld [vmem:[%s5 + $0x80] sm:$0xff]
  %v4725 = vld [vmem:[%s5 + $0x88] sm:$0xff]
  %v4726 = vld [vmem:[%s5 + $0x90] sm:$0xff]
  %v4727 = vld [vmem:[%s5 + $0x98] sm:$0xff]
  %v4728 = vld [vmem:[%s5 + $0xa0] sm:$0xff]
  %v4729 = vld [vmem:[%s5 + $0xa8] sm:$0xff]
  %v4730 = vld [vmem:[%s5 + $0xb0] sm:$0xff]
  %v4731 = vld [vmem:[%s5 + $0xb8] sm:$0xff]
  %v4732 = vld [vmem:[%s5 + $0xc0] sm:$0xff]
  %v4733 = vld [vmem:[%s5 + $0xc8] sm:$0xff]
  %v4734 = vld [vmem:[%s5 + $0xd0] sm:$0xff]
  %v4735 = vld [vmem:[%s5 + $0xd8] sm:$0xff]
  %v4736 = vld [vmem:[%s5 + $0xe0] sm:$0xff]
  %v4737 = vld [vmem:[%s5 + $0xe8] sm:$0xff]
  %v4738 = vld [vmem:[%s5 + $0xf0] sm:$0xff]
  %v4739 = vld [vmem:[%s5 + $0xf8] sm:$0xff]
  %v4740 = vpack.c.bf16 %v4706, %v4706
  %v4773 = vunpack.c.l.b16 %v4708
  %v4774 = vunpack.c.h.b16 %v4708
  %v4775 = vunpack.c.l.b16 %v4709
  %v4776 = vunpack.c.h.b16 %v4709
  %v4777 = vunpack.c.l.b16 %v4710
  %v4778 = vunpack.c.h.b16 %v4710
  %v4779 = vunpack.c.l.b16 %v4711
  %v4780 = vunpack.c.h.b16 %v4711
  %v4781 = vunpack.c.l.b16 %v4712
  %v4782 = vunpack.c.h.b16 %v4712
  %v4783 = vunpack.c.l.b16 %v4713
  %v4784 = vunpack.c.h.b16 %v4713
  %v4785 = vunpack.c.l.b16 %v4714
  %v4786 = vunpack.c.h.b16 %v4714
  %v4787 = vunpack.c.l.b16 %v4715
  %v4788 = vunpack.c.h.b16 %v4715
  %v4789 = vunpack.c.l.b16 %v4716
  %v4790 = vunpack.c.h.b16 %v4716
  %v4791 = vunpack.c.l.b16 %v4717
  %v4792 = vunpack.c.h.b16 %v4717
  %v4793 = vunpack.c.l.b16 %v4718
  %v4794 = vunpack.c.h.b16 %v4718
  %v4795 = vunpack.c.l.b16 %v4719
  %v4796 = vunpack.c.h.b16 %v4719
  %v4797 = vunpack.c.l.b16 %v4720
  %v4798 = vunpack.c.h.b16 %v4720
  %v4799 = vunpack.c.l.b16 %v4721
  %v4800 = vunpack.c.h.b16 %v4721
  %v4801 = vunpack.c.l.b16 %v4722
  %v4802 = vunpack.c.h.b16 %v4722
  %v4803 = vunpack.c.l.b16 %v4723
  %v4804 = vunpack.c.h.b16 %v4723
  %v4805 = vunpack.c.l.b16 %v4724
  %v4806 = vunpack.c.h.b16 %v4724
  %v4807 = vunpack.c.l.b16 %v4725
  %v4808 = vunpack.c.h.b16 %v4725
  %v4809 = vunpack.c.l.b16 %v4726
  %v4810 = vunpack.c.h.b16 %v4726
  %v4811 = vunpack.c.l.b16 %v4727
  %v4812 = vunpack.c.h.b16 %v4727
  %v4813 = vunpack.c.l.b16 %v4728
  %v4814 = vunpack.c.h.b16 %v4728
  %v4815 = vunpack.c.l.b16 %v4729
  %v4816 = vunpack.c.h.b16 %v4729
  %v4817 = vunpack.c.l.b16 %v4730
  %v4818 = vunpack.c.h.b16 %v4730
  %v4819 = vunpack.c.l.b16 %v4731
  %v4820 = vunpack.c.h.b16 %v4731
  %v4821 = vunpack.c.l.b16 %v4732
  %v4822 = vunpack.c.h.b16 %v4732
  %v4823 = vunpack.c.l.b16 %v4733
  %v4824 = vunpack.c.h.b16 %v4733
  %v4825 = vunpack.c.l.b16 %v4734
  %v4826 = vunpack.c.h.b16 %v4734
  %v4827 = vunpack.c.l.b16 %v4735
  %v4828 = vunpack.c.h.b16 %v4735
  %v4829 = vunpack.c.l.b16 %v4736
  %v4830 = vunpack.c.h.b16 %v4736
  %v4831 = vunpack.c.l.b16 %v4737
  %v4832 = vunpack.c.h.b16 %v4737
  %v4833 = vunpack.c.l.b16 %v4738
  %v4834 = vunpack.c.h.b16 %v4738
  %v4835 = vunpack.c.l.b16 %v4739
  %v4836 = vunpack.c.h.b16 %v4739
  %v4837 = vpack.c.b16 %v4777, %v4773
  %v4838 = vpack.c.b16 %v4778, %v4774
  %v4839 = vpack.c.b16 %v4779, %v4775
  %v4840 = vpack.c.b16 %v4780, %v4776
  %v4841 = vpack.c.b16 %v4785, %v4781
  %v4842 = vpack.c.b16 %v4786, %v4782
  %v4843 = vpack.c.b16 %v4787, %v4783
  %v4844 = vpack.c.b16 %v4788, %v4784
  %v4845 = vpack.c.b16 %v4793, %v4789
  %v4846 = vpack.c.b16 %v4794, %v4790
  %v4847 = vpack.c.b16 %v4795, %v4791
  %v4848 = vpack.c.b16 %v4796, %v4792
  %v4849 = vpack.c.b16 %v4801, %v4797
  %v4850 = vpack.c.b16 %v4802, %v4798
  %v4851 = vpack.c.b16 %v4803, %v4799
  %v4852 = vpack.c.b16 %v4804, %v4800
  %v4853 = vpack.c.b16 %v4809, %v4805
  %v4854 = vpack.c.b16 %v4810, %v4806
  %v4855 = vpack.c.b16 %v4811, %v4807
  %v4856 = vpack.c.b16 %v4812, %v4808
  %v4857 = vpack.c.b16 %v4817, %v4813
  %v4858 = vpack.c.b16 %v4818, %v4814
  %v4859 = vpack.c.b16 %v4819, %v4815
  %v4860 = vpack.c.b16 %v4820, %v4816
  %v4861 = vpack.c.b16 %v4825, %v4821
  %v4862 = vpack.c.b16 %v4826, %v4822
  %v4863 = vpack.c.b16 %v4827, %v4823
  %v4864 = vpack.c.b16 %v4828, %v4824
  %v4865 = vpack.c.b16 %v4833, %v4829
  %v4866 = vpack.c.b16 %v4834, %v4830
  %v4867 = vpack.c.b16 %v4835, %v4831
  %v4868 = vpack.c.b16 %v4836, %v4832
  %4901 = vmatprep.subr.bf16.mxu0 %v4838
  %4902 = vmatpush1.bf16.msra.mxu0 %v4837
  %4903 = vmatprep.subr.bf16.mxu0 %v4842
  %4904 = vmatpush1.bf16.msra.mxu0 %v4841
  %4905 = vmatprep.subr.bf16.mxu0 %v4846
  %4906 = vmatpush1.bf16.msra.mxu0 %v4845
  %4907 = vmatprep.subr.bf16.mxu0 %v4850
  %4908 = vmatpush1.bf16.msra.mxu0 %v4849
  %4909 = vmatprep.subr.bf16.mxu0 %v4854
  %4910 = vmatpush1.bf16.msra.mxu0 %v4853
  %4911 = vmatprep.subr.bf16.mxu0 %v4858
  %4912 = vmatpush1.bf16.msra.mxu0 %v4857
  %4913 = vmatprep.subr.bf16.mxu0 %v4862
  %4914 = vmatpush1.bf16.msra.mxu0 %v4861
  %4915 = vmatprep.subr.bf16.mxu0 %v4866
  %4916 = vmatpush1.bf16.msra.mxu0 %v4865
  %4917 = vmatprep.subr.bf16.mxu0 0
  %4918 = vmatpush1.bf16.msra.mxu0 0
  %4919 = vmatprep.subr.bf16.mxu0 0
  %4920 = vmatpush1.bf16.msra.mxu0 0
  %4921 = vmatprep.subr.bf16.mxu0 0
  %4922 = vmatpush1.bf16.msra.mxu0 0
  %4923 = vmatprep.subr.bf16.mxu0 0
  %4924 = vmatpush1.bf16.msra.mxu0 0
  %4925 = vmatprep.subr.bf16.mxu0 0
  %4926 = vmatpush1.bf16.msra.mxu0 0
  %4927 = vmatprep.subr.bf16.mxu0 0
  %4928 = vmatpush1.bf16.msra.mxu0 0
  %4929 = vmatprep.subr.bf16.mxu0 0
  %4930 = vmatpush1.bf16.msra.mxu0 0
  %4931 = vmatprep.subr.bf16.mxu0 0
  %4932 = vmatpush1.bf16.msra.mxu0 0
  %4933 = vmatprep.mubr.bf16.mxu0 0
  %4934 = vmatmul.mubr.bf16.gmra.mrb[0].mxu0 %v4740
  %v4935 = vpop.f32.mrb[0].mxu0
  %v4936 = vadd.f32 0.0, %v4935
  %v4937 = vpop.f32.mrb[0].mxu0
  %v4938 = vadd.f32 0.0, %v4937
  %v4939 = vpop.f32.mrb[0].mxu0
  %v4940 = vpop.f32.mrb[0].mxu0
  %4941 = vdwg.mxu0
  %4942 = vmatprep.subr.bf16.mxu0 %v4840
  %4943 = vmatpush1.bf16.msra.mxu0 %v4839
  %4944 = vmatprep.subr.bf16.mxu0 %v4844
  %4945 = vmatpush1.bf16.msra.mxu0 %v4843
  %4946 = vmatprep.subr.bf16.mxu0 %v4848
  %4947 = vmatpush1.bf16.msra.mxu0 %v4847
  %4948 = vmatprep.subr.bf16.mxu0 %v4852
  %4949 = vmatpush1.bf16.msra.mxu0 %v4851
  %4950 = vmatprep.subr.bf16.mxu0 %v4856
  %4951 = vmatpush1.bf16.msra.mxu0 %v4855
  %4952 = vmatprep.subr.bf16.mxu0 %v4860
  %4953 = vmatpush1.bf16.msra.mxu0 %v4859
  %4954 = vmatprep.subr.bf16.mxu0 %v4864
  %4955 = vmatpush1.bf16.msra.mxu0 %v4863
  %4956 = vmatprep.subr.bf16.mxu0 %v4868
  %4957 = vmatpush1.bf16.msra.mxu0 %v4867
  %4958 = vmatprep.subr.bf16.mxu0 0
  %4959 = vmatpush1.bf16.msra.mxu0 0
  %4960 = vmatprep.subr.bf16.mxu0 0
  %4961 = vmatpush1.bf16.msra.mxu0 0
  %4962 = vmatprep.subr.bf16.mxu0 0
  %4963 = vmatpush1.bf16.msra.mxu0 0
  %4964 = vmatprep.subr.bf16.mxu0 0
  %4965 = vmatpush1.bf16.msra.mxu0 0
  %4966 = vmatprep.subr.bf16.mxu0 0
  %4967 = vmatpush1.bf16.msra.mxu0 0
  %4968 = vmatprep.subr.bf16.mxu0 0
  %4969 = vmatpush1.bf16.msra.mxu0 0
  %4970 = vmatprep.subr.bf16.mxu0 0
  %4971 = vmatpush1.bf16.msra.mxu0 0
  %4972 = vmatprep.subr.bf16.mxu0 0
  %4973 = vmatpush1.bf16.msra.mxu0 0
  %4974 = vmatprep.mubr.bf16.mxu0 0
  %4975 = vmatmul.mubr.bf16.gmra.mrb[0].mxu0 %v4740
  %v4976 = vpop.f32.mrb[0].mxu0
  %v4977 = vadd.f32 0.0, %v4976
  %v4978 = vpop.f32.mrb[0].mxu0
  %v4979 = vadd.f32 0.0, %v4978
  %v4980 = vpop.f32.mrb[0].mxu0
  %v4981 = vpop.f32.mrb[0].mxu0
  %4982 = vdwg.mxu0
  %v4983 = vadd.f32 %v4702, %v4936
  %v4984 = vadd.f32 %v4703, %v4938
  %v4985 = vadd.f32 %v4704, %v4977
  %v4986 = vadd.f32 %v4705, %v4979
  %v4987 = vxor.u32 %v4983, 2147483648
  %v4988 = vxor.u32 %v4984, 2147483648
  %v4989 = vxor.u32 %v4985, 2147483648
  %v4990 = vmul.f32 %v4987, 1.442695
  %v4991 = vpow.pop %v4990
  %v4992 = vmul.f32 %v4988, 1.442695
  %v4993 = vpow.pop %v4992
  %v4994 = vmul.f32 %v4989, 1.442695
  %v4995 = vpow.pop %v4994
  %v4996 = vadd.f32 %v4991, 1.0
  %v4997 = vadd.f32 %v4993, 1.0
  %v4998 = vadd.f32 %v4995, 1.0
  %v4999 = vrcp.pop %v4996
  %v5000 = vmul.f32 1.0, %v4999
  %v5001 = vrcp.pop %v4997
  %v5002 = vmul.f32 1.0, %v5001
  %v5003 = vrcp.pop %v4998
  %v5004 = vmul.f32 1.0, %v5003
  %v5005 = vtanh.pop %v4986
  %v5006 = vmul.f32 %v5002, %v4707
  %v5007 = vmul.f32 %v5000, %v5005
  %v5008 = vadd.f32 %v5006, %v5007
  %v5009 = vtanh.pop %v5008
  %v5010 = vmul.f32 %v5004, %v5009
  %5011 = vst [vmem:[#allocation3] sm:$0xff] %v4701
  %5012 = vst [vmem:[#allocation4] sm:$0xff] %v4699
  %5013 = vst [vmem:[#allocation6] sm:$0xff] %v5010
  %5014 = vst [vmem:[#allocation7] sm:$0xff] %v5008
  %s5015 = scalar_lea.vmem %s7, 48
  %5016 = vst [vmem:[%s5015] sm:$0xff] %v4701
  %s5017 = scalar_lea.vmem %s8, 48
  %5018 = vst [vmem:[%s5017] sm:$0xff] %v5010
  %v5019 = vld [vmem:[#allocation2] sm:$0xff]
  %v5020 = vld [vmem:[#allocation2 + $0x8] sm:$0xff]
  %v5021 = vld [vmem:[#allocation2 + $0x10] sm:$0xff]
  %v5022 = vld [vmem:[#allocation2 + $0x18] sm:$0xff]
  %v5023 = vld [vmem:[#allocation3] sm:$0xff]
  %v5024 = vld [vmem:[#allocation4] sm:$0xff]
  %v5025 = vld [vmem:[%s2] sm:$0xff]
  %v5026 = vld [vmem:[%s2 + $0x8] sm:$0xff]
  %v5027 = vld [vmem:[%s2 + $0x10] sm:$0xff]
  %v5028 = vld [vmem:[%s2 + $0x18] sm:$0xff]
  %v5029 = vld [vmem:[%s2 + $0x20] sm:$0xff]
  %v5030 = vld [vmem:[%s2 + $0x28] sm:$0xff]
  %v5031 = vld [vmem:[%s2 + $0x30] sm:$0xff]
  %v5032 = vld [vmem:[%s2 + $0x38] sm:$0xff]
  %v5033 = vld [vmem:[%s2 + $0x40] sm:$0xff]
  %v5034 = vld [vmem:[%s2 + $0x48] sm:$0xff]
  %v5035 = vld [vmem:[%s2 + $0x50] sm:$0xff]
  %v5036 = vld [vmem:[%s2 + $0x58] sm:$0xff]
  %v5037 = vld [vmem:[%s2 + $0x60] sm:$0xff]
  %v5038 = vld [vmem:[%s2 + $0x68] sm:$0xff]
  %v5039 = vld [vmem:[%s2 + $0x70] sm:$0xff]
  %v5040 = vld [vmem:[%s2 + $0x78] sm:$0xff]
  %v5041 = vld [vmem:[%s2 + $0x80] sm:$0xff]
  %v5042 = vld [vmem:[%s2 + $0x88] sm:$0xff]
  %v5043 = vld [vmem:[%s2 + $0x90] sm:$0xff]
  %v5044 = vld [vmem:[%s2 + $0x98] sm:$0xff]
  %v5045 = vld [vmem:[%s2 + $0xa0] sm:$0xff]
  %v5046 = vld [vmem:[%s2 + $0xa8] sm:$0xff]
  %v5047 = vld [vmem:[%s2 + $0xb0] sm:$0xff]
  %v5048 = vld [vmem:[%s2 + $0xb8] sm:$0xff]
  %v5049 = vld [vmem:[%s2 + $0xc0] sm:$0xff]
  %v5050 = vld [vmem:[%s2 + $0xc8] sm:$0xff]
  %v5051 = vld [vmem:[%s2 + $0xd0] sm:$0xff]
  %v5052 = vld [vmem:[%s2 + $0xd8] sm:$0xff]
  %v5053 = vld [vmem:[%s2 + $0xe0] sm:$0xff]
  %v5054 = vld [vmem:[%s2 + $0xe8] sm:$0xff]
  %v5055 = vld [vmem:[%s2 + $0xf0] sm:$0xff]
  %v5056 = vld [vmem:[%s2 + $0xf8] sm:$0xff]
  %v5057 = vpack.c.bf16 %v5023, %v5023
  %v5090 = vunpack.c.l.b16 %v5025
  %v5091 = vunpack.c.h.b16 %v5025
  %v5092 = vunpack.c.l.b16 %v5026
  %v5093 = vunpack.c.h.b16 %v5026
  %v5094 = vunpack.c.l.b16 %v5027
  %v5095 = vunpack.c.h.b16 %v5027
  %v5096 = vunpack.c.l.b16 %v5028
  %v5097 = vunpack.c.h.b16 %v5028
  %v5098 = vunpack.c.l.b16 %v5029
  %v5099 = vunpack.c.h.b16 %v5029
  %v5100 = vunpack.c.l.b16 %v5030
  %v5101 = vunpack.c.h.b16 %v5030
  %v5102 = vunpack.c.l.b16 %v5031
  %v5103 = vunpack.c.h.b16 %v5031
  %v5104 = vunpack.c.l.b16 %v5032
  %v5105 = vunpack.c.h.b16 %v5032
  %v5106 = vunpack.c.l.b16 %v5033
  %v5107 = vunpack.c.h.b16 %v5033
  %v5108 = vunpack.c.l.b16 %v5034
  %v5109 = vunpack.c.h.b16 %v5034
  %v5110 = vunpack.c.l.b16 %v5035
  %v5111 = vunpack.c.h.b16 %v5035
  %v5112 = vunpack.c.l.b16 %v5036
  %v5113 = vunpack.c.h.b16 %v5036
  %v5114 = vunpack.c.l.b16 %v5037
  %v5115 = vunpack.c.h.b16 %v5037
  %v5116 = vunpack.c.l.b16 %v5038
  %v5117 = vunpack.c.h.b16 %v5038
  %v5118 = vunpack.c.l.b16 %v5039
  %v5119 = vunpack.c.h.b16 %v5039
  %v5120 = vunpack.c.l.b16 %v5040
  %v5121 = vunpack.c.h.b16 %v5040
  %v5122 = vunpack.c.l.b16 %v5041
  %v5123 = vunpack.c.h.b16 %v5041
  %v5124 = vunpack.c.l.b16 %v5042
  %v5125 = vunpack.c.h.b16 %v5042
  %v5126 = vunpack.c.l.b16 %v5043
  %v5127 = vunpack.c.h.b16 %v5043
  %v5128 = vunpack.c.l.b16 %v5044
  %v5129 = vunpack.c.h.b16 %v5044
  %v5130 = vunpack.c.l.b16 %v5045
  %v5131 = vunpack.c.h.b16 %v5045
  %v5132 = vunpack.c.l.b16 %v5046
  %v5133 = vunpack.c.h.b16 %v5046
  %v5134 = vunpack.c.l.b16 %v5047
  %v5135 = vunpack.c.h.b16 %v5047
  %v5136 = vunpack.c.l.b16 %v5048
  %v5137 = vunpack.c.h.b16 %v5048
  %v5138 = vunpack.c.l.b16 %v5049
  %v5139 = vunpack.c.h.b16 %v5049
  %v5140 = vunpack.c.l.b16 %v5050
  %v5141 = vunpack.c.h.b16 %v5050
  %v5142 = vunpack.c.l.b16 %v5051
  %v5143 = vunpack.c.h.b16 %v5051
  %v5144 = vunpack.c.l.b16 %v5052
  %v5145 = vunpack.c.h.b16 %v5052
  %v5146 = vunpack.c.l.b16 %v5053
  %v5147 = vunpack.c.h.b16 %v5053
  %v5148 = vunpack.c.l.b16 %v5054
  %v5149 = vunpack.c.h.b16 %v5054
  %v5150 = vunpack.c.l.b16 %v5055
  %v5151 = vunpack.c.h.b16 %v5055
  %v5152 = vunpack.c.l.b16 %v5056
  %v5153 = vunpack.c.h.b16 %v5056
  %v5154 = vpack.c.b16 %v5094, %v5090
  %v5155 = vpack.c.b16 %v5095, %v5091
  %v5156 = vpack.c.b16 %v5096, %v5092
  %v5157 = vpack.c.b16 %v5097, %v5093
  %v5158 = vpack.c.b16 %v5102, %v5098
  %v5159 = vpack.c.b16 %v5103, %v5099
  %v5160 = vpack.c.b16 %v5104, %v5100
  %v5161 = vpack.c.b16 %v5105, %v5101
  %v5162 = vpack.c.b16 %v5110, %v5106
  %v5163 = vpack.c.b16 %v5111, %v5107
  %v5164 = vpack.c.b16 %v5112, %v5108
  %v5165 = vpack.c.b16 %v5113, %v5109
  %v5166 = vpack.c.b16 %v5118, %v5114
  %v5167 = vpack.c.b16 %v5119, %v5115
  %v5168 = vpack.c.b16 %v5120, %v5116
  %v5169 = vpack.c.b16 %v5121, %v5117
  %v5170 = vpack.c.b16 %v5126, %v5122
  %v5171 = vpack.c.b16 %v5127, %v5123
  %v5172 = vpack.c.b16 %v5128, %v5124
  %v5173 = vpack.c.b16 %v5129, %v5125
  %v5174 = vpack.c.b16 %v5134, %v5130
  %v5175 = vpack.c.b16 %v5135, %v5131
  %v5176 = vpack.c.b16 %v5136, %v5132
  %v5177 = vpack.c.b16 %v5137, %v5133
  %v5178 = vpack.c.b16 %v5142, %v5138
  %v5179 = vpack.c.b16 %v5143, %v5139
  %v5180 = vpack.c.b16 %v5144, %v5140
  %v5181 = vpack.c.b16 %v5145, %v5141
  %v5182 = vpack.c.b16 %v5150, %v5146
  %v5183 = vpack.c.b16 %v5151, %v5147
  %v5184 = vpack.c.b16 %v5152, %v5148
  %v5185 = vpack.c.b16 %v5153, %v5149
  %5218 = vmatprep.subr.bf16.mxu0 %v5155
  %5219 = vmatpush1.bf16.msra.mxu0 %v5154
  %5220 = vmatprep.subr.bf16.mxu0 %v5159
  %5221 = vmatpush1.bf16.msra.mxu0 %v5158
  %5222 = vmatprep.subr.bf16.mxu0 %v5163
  %5223 = vmatpush1.bf16.msra.mxu0 %v5162
  %5224 = vmatprep.subr.bf16.mxu0 %v5167
  %5225 = vmatpush1.bf16.msra.mxu0 %v5166
  %5226 = vmatprep.subr.bf16.mxu0 %v5171
  %5227 = vmatpush1.bf16.msra.mxu0 %v5170
  %5228 = vmatprep.subr.bf16.mxu0 %v5175
  %5229 = vmatpush1.bf16.msra.mxu0 %v5174
  %5230 = vmatprep.subr.bf16.mxu0 %v5179
  %5231 = vmatpush1.bf16.msra.mxu0 %v5178
  %5232 = vmatprep.subr.bf16.mxu0 %v5183
  %5233 = vmatpush1.bf16.msra.mxu0 %v5182
  %5234 = vmatprep.subr.bf16.mxu0 0
  %5235 = vmatpush1.bf16.msra.mxu0 0
  %5236 = vmatprep.subr.bf16.mxu0 0
  %5237 = vmatpush1.bf16.msra.mxu0 0
  %5238 = vmatprep.subr.bf16.mxu0 0
  %5239 = vmatpush1.bf16.msra.mxu0 0
  %5240 = vmatprep.subr.bf16.mxu0 0
  %5241 = vmatpush1.bf16.msra.mxu0 0
  %5242 = vmatprep.subr.bf16.mxu0 0
  %5243 = vmatpush1.bf16.msra.mxu0 0
  %5244 = vmatprep.subr.bf16.mxu0 0
  %5245 = vmatpush1.bf16.msra.mxu0 0
  %5246 = vmatprep.subr.bf16.mxu0 0
  %5247 = vmatpush1.bf16.msra.mxu0 0
  %5248 = vmatprep.subr.bf16.mxu0 0
  %5249 = vmatpush1.bf16.msra.mxu0 0
  %5250 = vmatprep.mubr.bf16.mxu0 0
  %5251 = vmatmul.mubr.bf16.gmra.mrb[0].mxu0 %v5057
  %v5252 = vpop.f32.mrb[0].mxu0
  %v5253 = vadd.f32 0.0, %v5252
  %v5254 = vpop.f32.mrb[0].mxu0
  %v5255 = vadd.f32 0.0, %v5254
  %v5256 = vpop.f32.mrb[0].mxu0
  %v5257 = vpop.f32.mrb[0].mxu0
  %5258 = vdwg.mxu0
  %5259 = vmatprep.subr.bf16.mxu0 %v5157
  %5260 = vmatpush1.bf16.msra.mxu0 %v5156
  %5261 = vmatprep.subr.bf16.mxu0 %v5161
  %5262 = vmatpush1.bf16.msra.mxu0 %v5160
  %5263 = vmatprep.subr.bf16.mxu0 %v5165
  %5264 = vmatpush1.bf16.msra.mxu0 %v5164
  %5265 = vmatprep.subr.bf16.mxu0 %v5169
  %5266 = vmatpush1.bf16.msra.mxu0 %v5168
  %5267 = vmatprep.subr.bf16.mxu0 %v5173
  %5268 = vmatpush1.bf16.msra.mxu0 %v5172
  %5269 = vmatprep.subr.bf16.mxu0 %v5177
  %5270 = vmatpush1.bf16.msra.mxu0 %v5176
  %5271 = vmatprep.subr.bf16.mxu0 %v5181
  %5272 = vmatpush1.bf16.msra.mxu0 %v5180
  %5273 = vmatprep.subr.bf16.mxu0 %v5185
  %5274 = vmatpush1.bf16.msra.mxu0 %v5184
  %5275 = vmatprep.subr.bf16.mxu0 0
  %5276 = vmatpush1.bf16.msra.mxu0 0
  %5277 = vmatprep.subr.bf16.mxu0 0
  %5278 = vmatpush1.bf16.msra.mxu0 0
  %5279 = vmatprep.subr.bf16.mxu0 0
  %5280 = vmatpush1.bf16.msra.mxu0 0
  %5281 = vmatprep.subr.bf16.mxu0 0
  %5282 = vmatpush1.bf16.msra.mxu0 0
  %5283 = vmatprep.subr.bf16.mxu0 0
  %5284 = vmatpush1.bf16.msra.mxu0 0
  %5285 = vmatprep.subr.bf16.mxu0 0
  %5286 = vmatpush1.bf16.msra.mxu0 0
  %5287 = vmatprep.subr.bf16.mxu0 0
  %5288 = vmatpush1.bf16.msra.mxu0 0
  %5289 = vmatprep.subr.bf16.mxu0 0
  %5290 = vmatpush1.bf16.msra.mxu0 0
  %5291 = vmatprep.mubr.bf16.mxu0 0
  %5292 = vmatmul.mubr.bf16.gmra.mrb[0].mxu0 %v5057
  %v5293 = vpop.f32.mrb[0].mxu0
  %v5294 = vadd.f32 0.0, %v5293
  %v5295 = vpop.f32.mrb[0].mxu0
  %v5296 = vadd.f32 0.0, %v5295
  %v5297 = vpop.f32.mrb[0].mxu0
  %v5298 = vpop.f32.mrb[0].mxu0
  %5299 = vdwg.mxu0
  %v5300 = vadd.f32 %v5019, %v5253
  %v5301 = vadd.f32 %v5020, %v5255
  %v5302 = vadd.f32 %v5021, %v5294
  %v5303 = vadd.f32 %v5022, %v5296
  %v5304 = vxor.u32 %v5300, 2147483648
  %v5305 = vxor.u32 %v5301, 2147483648
  %v5306 = vxor.u32 %v5302, 2147483648
  %v5307 = vmul.f32 %v5304, 1.442695
  %v5308 = vpow.pop %v5307
  %v5309 = vmul.f32 %v5305, 1.442695
  %v5310 = vpow.pop %v5309
  %v5311 = vmul.f32 %v5306, 1.442695
  %v5312 = vpow.pop %v5311
  %v5313 = vadd.f32 %v5308, 1.0
  %v5314 = vadd.f32 %v5310, 1.0
  %v5315 = vadd.f32 %v5312, 1.0
  %v5316 = vrcp.pop %v5313
  %v5317 = vmul.f32 1.0, %v5316
  %v5318 = vrcp.pop %v5314
  %v5319 = vmul.f32 1.0, %v5318
  %v5320 = vrcp.pop %v5315
  %v5321 = vmul.f32 1.0, %v5320
  %v5322 = vtanh.pop %v5303
  %v5323 = vmul.f32 %v5319, %v5024
  %v5324 = vmul.f32 %v5317, %v5322
  %v5325 = vadd.f32 %v5323, %v5324
  %v5326 = vtanh.pop %v5325
  %v5327 = vmul.f32 %v5321, %v5326
  %v5328 = vld [vmem:[#allocation5] sm:$0xff]
  %v5329 = vld [vmem:[#allocation5 + $0x8] sm:$0xff]
  %v5330 = vld [vmem:[#allocation5 + $0x10] sm:$0xff]
  %v5331 = vld [vmem:[#allocation5 + $0x18] sm:$0xff]
  %v5332 = vld [vmem:[#allocation6] sm:$0xff]
  %v5333 = vld [vmem:[#allocation7] sm:$0xff]
  %v5334 = vld [vmem:[%s5] sm:$0xff]
  %v5335 = vld [vmem:[%s5 + $0x8] sm:$0xff]
  %v5336 = vld [vmem:[%s5 + $0x10] sm:$0xff]
  %v5337 = vld [vmem:[%s5 + $0x18] sm:$0xff]
  %v5338 = vld [vmem:[%s5 + $0x20] sm:$0xff]
  %v5339 = vld [vmem:[%s5 + $0x28] sm:$0xff]
  %v5340 = vld [vmem:[%s5 + $0x30] sm:$0xff]
  %v5341 = vld [vmem:[%s5 + $0x38] sm:$0xff]
  %v5342 = vld [vmem:[%s5 + $0x40] sm:$0xff]
  %v5343 = vld [vmem:[%s5 + $0x48] sm:$0xff]
  %v5344 = vld [vmem:[%s5 + $0x50] sm:$0xff]
  %v5345 = vld [vmem:[%s5 + $0x58] sm:$0xff]
  %v5346 = vld [vmem:[%s5 + $0x60] sm:$0xff]
  %v5347 = vld [vmem:[%s5 + $0x68] sm:$0xff]
  %v5348 = vld [vmem:[%s5 + $0x70] sm:$0xff]
  %v5349 = vld [vmem:[%s5 + $0x78] sm:$0xff]
  %v5350 = vld [vmem:[%s5 + $0x80] sm:$0xff]
  %v5351 = vld [vmem:[%s5 + $0x88] sm:$0xff]
  %v5352 = vld [vmem:[%s5 + $0x90] sm:$0xff]
  %v5353 = vld [vmem:[%s5 + $0x98] sm:$0xff]
  %v5354 = vld [vmem:[%s5 + $0xa0] sm:$0xff]
  %v5355 = vld [vmem:[%s5 + $0xa8] sm:$0xff]
  %v5356 = vld [vmem:[%s5 + $0xb0] sm:$0xff]
  %v5357 = vld [vmem:[%s5 + $0xb8] sm:$0xff]
  %v5358 = vld [vmem:[%s5 + $0xc0] sm:$0xff]
  %v5359 = vld [vmem:[%s5 + $0xc8] sm:$0xff]
  %v5360 = vld [vmem:[%s5 + $0xd0] sm:$0xff]
  %v5361 = vld [vmem:[%s5 + $0xd8] sm:$0xff]
  %v5362 = vld [vmem:[%s5 + $0xe0] sm:$0xff]
  %v5363 = vld [vmem:[%s5 + $0xe8] sm:$0xff]
  %v5364 = vld [vmem:[%s5 + $0xf0] sm:$0xff]
  %v5365 = vld [vmem:[%s5 + $0xf8] sm:$0xff]
  %v5366 = vpack.c.bf16 %v5332, %v5332
  %v5399 = vunpack.c.l.b16 %v5334
  %v5400 = vunpack.c.h.b16 %v5334
  %v5401 = vunpack.c.l.b16 %v5335
  %v5402 = vunpack.c.h.b16 %v5335
  %v5403 = vunpack.c.l.b16 %v5336
  %v5404 = vunpack.c.h.b16 %v5336
  %v5405 = vunpack.c.l.b16 %v5337
  %v5406 = vunpack.c.h.b16 %v5337
  %v5407 = vunpack.c.l.b16 %v5338
  %v5408 = vunpack.c.h.b16 %v5338
  %v5409 = vunpack.c.l.b16 %v5339
  %v5410 = vunpack.c.h.b16 %v5339
  %v5411 = vunpack.c.l.b16 %v5340
  %v5412 = vunpack.c.h.b16 %v5340
  %v5413 = vunpack.c.l.b16 %v5341
  %v5414 = vunpack.c.h.b16 %v5341
  %v5415 = vunpack.c.l.b16 %v5342
  %v5416 = vunpack.c.h.b16 %v5342
  %v5417 = vunpack.c.l.b16 %v5343
  %v5418 = vunpack.c.h.b16 %v5343
  %v5419 = vunpack.c.l.b16 %v5344
  %v5420 = vunpack.c.h.b16 %v5344
  %v5421 = vunpack.c.l.b16 %v5345
  %v5422 = vunpack.c.h.b16 %v5345
  %v5423 = vunpack.c.l.b16 %v5346
  %v5424 = vunpack.c.h.b16 %v5346
  %v5425 = vunpack.c.l.b16 %v5347
  %v5426 = vunpack.c.h.b16 %v5347
  %v5427 = vunpack.c.l.b16 %v5348
  %v5428 = vunpack.c.h.b16 %v5348
  %v5429 = vunpack.c.l.b16 %v5349
  %v5430 = vunpack.c.h.b16 %v5349
  %v5431 = vunpack.c.l.b16 %v5350
  %v5432 = vunpack.c.h.b16 %v5350
  %v5433 = vunpack.c.l.b16 %v5351
  %v5434 = vunpack.c.h.b16 %v5351
  %v5435 = vunpack.c.l.b16 %v5352
  %v5436 = vunpack.c.h.b16 %v5352
  %v5437 = vunpack.c.l.b16 %v5353
  %v5438 = vunpack.c.h.b16 %v5353
  %v5439 = vunpack.c.l.b16 %v5354
  %v5440 = vunpack.c.h.b16 %v5354
  %v5441 = vunpack.c.l.b16 %v5355
  %v5442 = vunpack.c.h.b16 %v5355
  %v5443 = vunpack.c.l.b16 %v5356
  %v5444 = vunpack.c.h.b16 %v5356
  %v5445 = vunpack.c.l.b16 %v5357
  %v5446 = vunpack.c.h.b16 %v5357
  %v5447 = vunpack.c.l.b16 %v5358
  %v5448 = vunpack.c.h.b16 %v5358
  %v5449 = vunpack.c.l.b16 %v5359
  %v5450 = vunpack.c.h.b16 %v5359
  %v5451 = vunpack.c.l.b16 %v5360
  %v5452 = vunpack.c.h.b16 %v5360
  %v5453 = vunpack.c.l.b16 %v5361
  %v5454 = vunpack.c.h.b16 %v5361
  %v5455 = vunpack.c.l.b16 %v5362
  %v5456 = vunpack.c.h.b16 %v5362
  %v5457 = vunpack.c.l.b16 %v5363
  %v5458 = vunpack.c.h.b16 %v5363
  %v5459 = vunpack.c.l.b16 %v5364
  %v5460 = vunpack.c.h.b16 %v5364
  %v5461 = vunpack.c.l.b16 %v5365
  %v5462 = vunpack.c.h.b16 %v5365
  %v5463 = vpack.c.b16 %v5403, %v5399
  %v5464 = vpack.c.b16 %v5404, %v5400
  %v5465 = vpack.c.b16 %v5405, %v5401
  %v5466 = vpack.c.b16 %v5406, %v5402
  %v5467 = vpack.c.b16 %v5411, %v5407
  %v5468 = vpack.c.b16 %v5412, %v5408
  %v5469 = vpack.c.b16 %v5413, %v5409
  %v5470 = vpack.c.b16 %v5414, %v5410
  %v5471 = vpack.c.b16 %v5419, %v5415
  %v5472 = vpack.c.b16 %v5420, %v5416
  %v5473 = vpack.c.b16 %v5421, %v5417
  %v5474 = vpack.c.b16 %v5422, %v5418
  %v5475 = vpack.c.b16 %v5427, %v5423
  %v5476 = vpack.c.b16 %v5428, %v5424
  %v5477 = vpack.c.b16 %v5429, %v5425
  %v5478 = vpack.c.b16 %v5430, %v5426
  %v5479 = vpack.c.b16 %v5435, %v5431
  %v5480 = vpack.c.b16 %v5436, %v5432
  %v5481 = vpack.c.b16 %v5437, %v5433
  %v5482 = vpack.c.b16 %v5438, %v5434
  %v5483 = vpack.c.b16 %v5443, %v5439
  %v5484 = vpack.c.b16 %v5444, %v5440
  %v5485 = vpack.c.b16 %v5445, %v5441
  %v5486 = vpack.c.b16 %v5446, %v5442
  %v5487 = vpack.c.b16 %v5451, %v5447
  %v5488 = vpack.c.b16 %v5452, %v5448
  %v5489 = vpack.c.b16 %v5453, %v5449
  %v5490 = vpack.c.b16 %v5454, %v5450
  %v5491 = vpack.c.b16 %v5459, %v5455
  %v5492 = vpack.c.b16 %v5460, %v5456
  %v5493 = vpack.c.b16 %v5461, %v5457
  %v5494 = vpack.c.b16 %v5462, %v5458
  %5527 = vmatprep.subr.bf16.mxu0 %v5464
  %5528 = vmatpush1.bf16.msra.mxu0 %v5463
  %5529 = vmatprep.subr.bf16.mxu0 %v5468
  %5530 = vmatpush1.bf16.msra.mxu0 %v5467
  %5531 = vmatprep.subr.bf16.mxu0 %v5472
  %5532 = vmatpush1.bf16.msra.mxu0 %v5471
  %5533 = vmatprep.subr.bf16.mxu0 %v5476
  %5534 = vmatpush1.bf16.msra.mxu0 %v5475
  %5535 = vmatprep.subr.bf16.mxu0 %v5480
  %5536 = vmatpush1.bf16.msra.mxu0 %v5479
  %5537 = vmatprep.subr.bf16.mxu0 %v5484
  %5538 = vmatpush1.bf16.msra.mxu0 %v5483
  %5539 = vmatprep.subr.bf16.mxu0 %v5488
  %5540 = vmatpush1.bf16.msra.mxu0 %v5487
  %5541 = vmatprep.subr.bf16.mxu0 %v5492
  %5542 = vmatpush1.bf16.msra.mxu0 %v5491
  %5543 = vmatprep.subr.bf16.mxu0 0
  %5544 = vmatpush1.bf16.msra.mxu0 0
  %5545 = vmatprep.subr.bf16.mxu0 0
  %5546 = vmatpush1.bf16.msra.mxu0 0
  %5547 = vmatprep.subr.bf16.mxu0 0
  %5548 = vmatpush1.bf16.msra.mxu0 0
  %5549 = vmatprep.subr.bf16.mxu0 0
  %5550 = vmatpush1.bf16.msra.mxu0 0
  %5551 = vmatprep.subr.bf16.mxu0 0
  %5552 = vmatpush1.bf16.msra.mxu0 0
  %5553 = vmatprep.subr.bf16.mxu0 0
  %5554 = vmatpush1.bf16.msra.mxu0 0
  %5555 = vmatprep.subr.bf16.mxu0 0
  %5556 = vmatpush1.bf16.msra.mxu0 0
  %5557 = vmatprep.subr.bf16.mxu0 0
  %5558 = vmatpush1.bf16.msra.mxu0 0
  %5559 = vmatprep.mubr.bf16.mxu0 0
  %5560 = vmatmul.mubr.bf16.gmra.mrb[0].mxu0 %v5366
  %v5561 = vpop.f32.mrb[0].mxu0
  %v5562 = vadd.f32 0.0, %v5561
  %v5563 = vpop.f32.mrb[0].mxu0
  %v5564 = vadd.f32 0.0, %v5563
  %v5565 = vpop.f32.mrb[0].mxu0
  %v5566 = vpop.f32.mrb[0].mxu0
  %5567 = vdwg.mxu0
  %5568 = vmatprep.subr.bf16.mxu0 %v5466
  %5569 = vmatpush1.bf16.msra.mxu0 %v5465
  %5570 = vmatprep.subr.bf16.mxu0 %v5470
  %5571 = vmatpush1.bf16.msra.mxu0 %v5469
  %5572 = vmatprep.subr.bf16.mxu0 %v5474
  %5573 = vmatpush1.bf16.msra.mxu0 %v5473
  %5574 = vmatprep.subr.bf16.mxu0 %v5478
  %5575 = vmatpush1.bf16.msra.mxu0 %v5477
  %5576 = vmatprep.subr.bf16.mxu0 %v5482
  %5577 = vmatpush1.bf16.msra.mxu0 %v5481
  %5578 = vmatprep.subr.bf16.mxu0 %v5486
  %5579 = vmatpush1.bf16.msra.mxu0 %v5485
  %5580 = vmatprep.subr.bf16.mxu0 %v5490
  %5581 = vmatpush1.bf16.msra.mxu0 %v5489
  %5582 = vmatprep.subr.bf16.mxu0 %v5494
  %5583 = vmatpush1.bf16.msra.mxu0 %v5493
  %5584 = vmatprep.subr.bf16.mxu0 0
  %5585 = vmatpush1.bf16.msra.mxu0 0
  %5586 = vmatprep.subr.bf16.mxu0 0
  %5587 = vmatpush1.bf16.msra.mxu0 0
  %5588 = vmatprep.subr.bf16.mxu0 0
  %5589 = vmatpush1.bf16.msra.mxu0 0
  %5590 = vmatprep.subr.bf16.mxu0 0
  %5591 = vmatpush1.bf16.msra.mxu0 0
  %5592 = vmatprep.subr.bf16.mxu0 0
  %5593 = vmatpush1.bf16.msra.mxu0 0
  %5594 = vmatprep.subr.bf16.mxu0 0
  %5595 = vmatpush1.bf16.msra.mxu0 0
  %5596 = vmatprep.subr.bf16.mxu0 0
  %5597 = vmatpush1.bf16.msra.mxu0 0
  %5598 = vmatprep.subr.bf16.mxu0 0
  %5599 = vmatpush1.bf16.msra.mxu0 0
  %5600 = vmatprep.mubr.bf16.mxu0 0
  %5601 = vmatmul.mubr.bf16.gmra.mrb[0].mxu0 %v5366
  %v5602 = vpop.f32.mrb[0].mxu0
  %v5603 = vadd.f32 0.0, %v5602
  %v5604 = vpop.f32.mrb[0].mxu0
  %v5605 = vadd.f32 0.0, %v5604
  %v5606 = vpop.f32.mrb[0].mxu0
  %v5607 = vpop.f32.mrb[0].mxu0
  %5608 = vdwg.mxu0
  %v5609 = vadd.f32 %v5328, %v5562
  %v5610 = vadd.f32 %v5329, %v5564
  %v5611 = vadd.f32 %v5330, %v5603
  %v5612 = vadd.f32 %v5331, %v5605
  %v5613 = vxor.u32 %v5609, 2147483648
  %v5614 = vxor.u32 %v5610, 2147483648
  %v5615 = vxor.u32 %v5611, 2147483648
  %v5616 = vmul.f32 %v5613, 1.442695
  %v5617 = vpow.pop %v5616
  %v5618 = vmul.f32 %v5614, 1.442695
  %v5619 = vpow.pop %v5618
  %v5620 = vmul.f32 %v5615, 1.442695
  %v5621 = vpow.pop %v5620
  %v5622 = vadd.f32 %v5617, 1.0
  %v5623 = vadd.f32 %v5619, 1.0
  %v5624 = vadd.f32 %v5621, 1.0
  %v5625 = vrcp.pop %v5622
  %v5626 = vmul.f32 1.0, %v5625
  %v5627 = vrcp.pop %v5623
  %v5628 = vmul.f32 1.0, %v5627
  %v5629 = vrcp.pop %v5624
  %v5630 = vmul.f32 1.0, %v5629
  %v5631 = vtanh.pop %v5612
  %v5632 = vmul.f32 %v5628, %v5333
  %v5633 = vmul.f32 %v5626, %v5631
  %v5634 = vadd.f32 %v5632, %v5633
  %v5635 = vtanh.pop %v5634
  %v5636 = vmul.f32 %v5630, %v5635
  %5637 = vst [vmem:[#allocation3] sm:$0xff] %v5327
  %5638 = vst [vmem:[#allocation4] sm:$0xff] %v5325
  %5639 = vst [vmem:[#allocation6] sm:$0xff] %v5636
  %5640 = vst [vmem:[#allocation7] sm:$0xff] %v5634
  %s5641 = scalar_lea.vmem %s7, 56
  %5642 = vst [vmem:[%s5641] sm:$0xff] %v5327
  %s5643 = scalar_lea.vmem %s8, 56
  %5644 = vst [vmem:[%s5643] sm:$0xff] %v5636
  // Predicated region
  $region34: #{split_lstm_autoencoder_forward.3} parent=0 // pred_check
    _
  $region35: #{split_lstm_autoencoder_forward.3} parent=0 // pred_check_branch
    %5646 = sbr.rel (0) target = $region37
  $region36: #{split_lstm_autoencoder_forward.3} parent=0 // pred_region
    _
  $region37: #{split_lstm_autoencoder_forward.3} parent=0 // pred_fallthru
    _
  // Predicated region
  $region38: #{split_lstm_autoencoder_forward.3} parent=0 // pred_check
    _
  $region39: #{split_lstm_autoencoder_forward.3} parent=0 // pred_check_branch
    %5648 = sbr.rel (0) target = $region41
  $region40: #{split_lstm_autoencoder_forward.3} parent=0 // pred_region
    _
  $region41: #{split_lstm_autoencoder_forward.3} parent=0 // pred_fallthru
    _
  // Predicated region
  $region42: #{split_lstm_autoencoder_forward.3} parent=0 // pred_check
    _
  $region43: #{split_lstm_autoencoder_forward.3} parent=0 // pred_check_branch
    %5650 = sbr.rel (0) target = $region45
  $region44: #{split_lstm_autoencoder_forward.3} parent=0 // pred_region
    _
  $region45: #{split_lstm_autoencoder_forward.3} parent=0 // pred_fallthru
    _
  // Predicated region
  $region46: #{split_lstm_autoencoder_forward.3} parent=0 // pred_check
    _
  $region47: #{split_lstm_autoencoder_forward.3} parent=0 // pred_check_branch
    %5652 = sbr.rel (0) target = $region49
  $region48: #{split_lstm_autoencoder_forward.3} parent=0 // pred_region
    _
  $region49: #{split_lstm_autoencoder_forward.3} parent=0 // pred_fallthru
    _

</llo_original>
